<compile_context>
chip_gen: v5e
topology: v5e:2x2
jax: 0.10.0
libtpu: 0.0.40
codegen_flags: <defaults>
</compile_context>

<pallas_src>
import functools

import jax
import jax.numpy as jnp
from jax import lax
from jax.experimental import pallas as pl
from jax.experimental.pallas import tpu as pltpu

_LANE = 128
_VMEM_LIMIT = 48 * 1024 * 1024


def _round_up(x, m):
    return ((x + m - 1) // m) * m


def _pick_tile(hw, cap=512):
    for t in (512, 256, 128, 64, 32, 16, 8):
        if t <= cap and hw % t == 0:
            return t
    return hw


# ----------------------------- Pallas kernels -----------------------------

def _conv_bias_stats_kernel(x_ref, w_ref, b_ref, y_ref, sum_ref, ssq_ref):
    """bf16 GEMM tile + bias; emits activations and per-image channel stats."""
    acc = jnp.dot(x_ref[0], w_ref[...], preferred_element_type=jnp.float32)
    acc = acc + b_ref[...]                                    # (tm, N) f32
    y_ref[...] = acc[None].astype(y_ref.dtype)

    @pl.when(pl.program_id(1) == 0)
    def _():
        sum_ref[...] = jnp.zeros_like(sum_ref)
        ssq_ref[...] = jnp.zeros_like(ssq_ref)

    sum_ref[...] += jnp.sum(acc, axis=0, keepdims=True)[None]
    ssq_ref[...] += jnp.sum(acc * acc, axis=0, keepdims=True)[None]


def _conv_bias_tanh_kernel(x_ref, w_ref, b_ref, y_ref):
    """bf16 GEMM tile + bias + fused Tanh epilogue (final conv)."""
    acc = jnp.dot(x_ref[0], w_ref[...], preferred_element_type=jnp.float32)
    y_ref[...] = jnp.tanh(acc + b_ref[...])[None].astype(y_ref.dtype)


def _in_lrelu_kernel(y_ref, sum_ref, ssq_ref, o_ref, *, inv_n):
    """InstanceNorm2d(affine=False, eps=1e-5) + LeakyReLU(0.2), tiled over HW."""
    y = y_ref[0].astype(jnp.float32)                          # (tm, N)
    mean = sum_ref[0] * inv_n                                 # (1, N)
    var = jnp.maximum(ssq_ref[0] * inv_n - mean * mean, 0.0)
    z = (y - mean) * lax.rsqrt(var + 1e-5)
    o_ref[...] = jnp.where(z >= 0, z, 0.2 * z)[None].astype(o_ref.dtype)


def _region_pool_kernel(codes_ref, mask_ref, o_ref):
    """Per-region masked channel means:  mask^T @ codes / count."""
    codes = codes_ref[0].astype(jnp.float32)                  # (HW, C)
    mask = mask_ref[0].astype(jnp.float32)                    # (HW, S)
    sums = lax.dot_general(mask, codes, (((0,), (0,)), ((), ())),
                           preferred_element_type=jnp.float32)  # (S, C)
    counts = jnp.sum(mask, axis=0)[:, None]                   # (S, 1)
    mean = sums / jnp.maximum(counts, 1.0)
    o_ref[...] = jnp.where(counts > 0, mean, 0.0)[None].astype(o_ref.dtype)


# --------------------------- pallas_call wrappers --------------------------

def conv_gemm(patches, wmat, bias, *, stats):
    """(B, HW, K) bf16 @ (K, Npad) bf16 + bias, tiled over (batch, M)."""
    B, HW, K = patches.shape
    N = wmat.shape[1]
    tm = _pick_tile(HW)
    grid = (B, HW // tm)
    x_spec = pl.BlockSpec((1, tm, K), lambda b, m: (b, m, 0))
    w_spec = pl.BlockSpec((K, N), lambda b, m: (0, 0))
    b_spec = pl.BlockSpec((1, N), lambda b, m: (0, 0))
    y_spec = pl.BlockSpec((1, tm, N), lambda b, m: (b, m, 0))

    if stats:
        s_spec = pl.BlockSpec((1, 1, N), lambda b, m: (b, 0, 0))
        out_shape = (jax.ShapeDtypeStruct((B, HW, N), jnp.bfloat16),
                     jax.ShapeDtypeStruct((B, 1, N), jnp.float32),
                     jax.ShapeDtypeStruct((B, 1, N), jnp.float32))
        out_specs = (y_spec, s_spec, s_spec)
        kernel = _conv_bias_stats_kernel
        semantics = ("parallel", "arbitrary")     # stats accumulate over M tiles
    else:
        out_shape = jax.ShapeDtypeStruct((B, HW, N), jnp.float32)
        out_specs = y_spec
        kernel = _conv_bias_tanh_kernel
        semantics = ("parallel", "parallel")

    return pl.pallas_call(
        kernel,
        out_shape=out_shape,
        grid_spec=pltpu.PrefetchScalarGridSpec(
            num_scalar_prefetch=0, grid=grid,
            in_specs=[x_spec, w_spec, b_spec], out_specs=out_specs),
        compiler_params=pltpu.CompilerParams(
            dimension_semantics=semantics, vmem_limit_bytes=_VMEM_LIMIT),
    )(patches, wmat, bias.reshape(1, N).astype(jnp.float32))


def instance_norm_lrelu(y, ssum, ssq, n_spatial):
    B, HW, N = y.shape
    tm = _pick_tile(HW)
    kernel = functools.partial(_in_lrelu_kernel, inv_n=1.0 / float(n_spatial))
    s_spec = pl.BlockSpec((1, 1, N), lambda b, m: (b, 0, 0))
    return pl.pallas_call(
        kernel,
        out_shape=jax.ShapeDtypeStruct((B, HW, N), jnp.bfloat16),
        grid_spec=pltpu.PrefetchScalarGridSpec(
            num_scalar_prefetch=0, grid=(B, HW // tm),
            in_specs=[pl.BlockSpec((1, tm, N), lambda b, m: (b, m, 0)),
                      s_spec, s_spec],
            out_specs=pl.BlockSpec((1, tm, N), lambda b, m: (b, m, 0))),
        compiler_params=pltpu.CompilerParams(
            dimension_semantics=("parallel", "parallel"),
            vmem_limit_bytes=_VMEM_LIMIT),
    )(y, ssum, ssq)


def region_pool(codes, mask):
    B, HW, C = codes.shape
    S = mask.shape[-1]
    return pl.pallas_call(
        _region_pool_kernel,
        out_shape=jax.ShapeDtypeStruct((B, S, C), jnp.float32),
        grid_spec=pltpu.PrefetchScalarGridSpec(
            num_scalar_prefetch=0, grid=(B,),
            in_specs=[pl.BlockSpec((1, HW, C), lambda b: (b, 0, 0)),
                      pl.BlockSpec((1, HW, S), lambda b: (b, 0, 0))],
            out_specs=pl.BlockSpec((1, S, C), lambda b: (b, 0, 0))),
        compiler_params=pltpu.CompilerParams(
            dimension_semantics=("parallel",), vmem_limit_bytes=_VMEM_LIMIT),
    )(codes, mask)


# ------------------------------- JAX glue ----------------------------------

def reflect_pad(x):
    return jnp.pad(x, ((0, 0), (1, 1), (1, 1), (0, 0)), mode="reflect")


def im2col(x, k=3, stride=1):
    """(B, H, W, C) -> (B, Ho*Wo, k*k*C) bf16 patch matrix."""
    # TODO(synk): fold the k*k tap expansion into the conv kernel (Element-offset
    # BlockSpecs / in-kernel shifted accumulation) to avoid materializing the
    # duplicated patch matrix in HBM.
    B, H, W, C = x.shape
    Ho = (H - k) // stride + 1
    Wo = (W - k) // stride + 1
    cols = [x[:, ky:ky + stride * Ho:stride, kx:kx + stride * Wo:stride, :]
            for ky in range(k) for kx in range(k)]
    patches = jnp.concatenate(cols, axis=-1).reshape(B, Ho * Wo, k * k * C)
    return patches.astype(jnp.bfloat16), (Ho, Wo)


def _conv_weight_matrix(w_oihw):
    """PyTorch (Cout, Cin, kh, kw) -> (kh*kw*Cin, Npad) bf16 (N zero-padded)."""
    cout, cin, kh, kw = w_oihw.shape
    wmat = jnp.transpose(w_oihw, (2, 3, 1, 0)).reshape(kh * kw * cin, cout)
    npad = _round_up(cout, _LANE)
    if npad != cout:
        wmat = jnp.pad(wmat, ((0, 0), (0, npad - cout)))
    return wmat.astype(jnp.bfloat16), npad


def _pad_bias(b, npad):
    n = b.shape[0]
    if npad != n:
        b = jnp.pad(b, (0, npad - n))
    return b.astype(jnp.float32)


def conv_in_lrelu(x_bhwc, w, b, *, stride=1, zero_pad=0, reflect=False):
    """Conv2d -> InstanceNorm2d(affine=False) -> LeakyReLU(0.2).  Returns bf16
    (B, Ho, Wo, Cout); the 128-padded channels are sliced off here."""
    if reflect:
        xp = reflect_pad(x_bhwc)
    elif zero_pad:
        xp = jnp.pad(x_bhwc, ((0, 0), (zero_pad,) * 2, (zero_pad,) * 2, (0, 0)))
    else:
        xp = x_bhwc
    cout = w.shape[0]
    wmat, npad = _conv_weight_matrix(w)
    bias = _pad_bias(b, npad)
    patches, (Ho, Wo) = im2col(xp, k=w.shape[2], stride=stride)
    y, ssum, ssq = conv_gemm(patches, wmat, bias, stats=True)
    yn = instance_norm_lrelu(y, ssum, ssq, Ho * Wo)
    return yn.reshape(x_bhwc.shape[0], Ho, Wo, npad)[..., :cout]


# Stride-phase (sub-pixel) decomposition of ConvTranspose2d(k=3,s=2,p=1,op=1):
#   out[2m+ry, 2n+rx] = sum_taps xp[m+dy, n+dx] @ W[ky, kx]
_CONVT_TAPS = ((0, 0), (0, 1), (1, 0), (1, 1))
_CONVT_TABLE = {   # phase (ry, rx) -> {tap (dy, dx): (ky, kx)}
    (0, 0): {(0, 0): (1, 1)},
    (0, 1): {(0, 0): (1, 2), (0, 1): (1, 0)},
    (1, 0): {(0, 0): (2, 1), (1, 0): (0, 1)},
    (1, 1): {(0, 0): (2, 2), (0, 1): (2, 0), (1, 0): (0, 2), (1, 1): (0, 0)},
}


def conv_transpose_in_lrelu(x_bhwc, w_iohw, b):
    """ConvTranspose2d(3, s=2, p=1, op=1) -> IN -> LeakyReLU without the
    zero-dilated input: one GEMM against a (4*Cin, 4*Cout) phase weight."""
    B, H, W, Cin = x_bhwc.shape
    Cout = w_iohw.shape[1]
    # taps of the (right/bottom) zero-extended input
    xp = jnp.pad(x_bhwc, ((0, 0), (0, 1), (0, 1), (0, 0)))
    taps = [xp[:, dy:dy + H, dx:dx + W, :] for dy, dx in _CONVT_TAPS]
    patches = jnp.concatenate(taps, axis=-1).reshape(B, H * W, 4 * Cin)
    patches = patches.astype(jnp.bfloat16)

    zeros = jnp.zeros((Cin, Cout), jnp.float32)
    rows = []
    for tap in _CONVT_TAPS:
        row = []
        for phase in _CONVT_TAPS:
            kk = _CONVT_TABLE[phase].get(tap)
            row.append(zeros if kk is None else w_iohw[:, :, kk[0], kk[1]])
        rows.append(jnp.concatenate(row, axis=1))
    wmat = jnp.concatenate(rows, axis=0).astype(jnp.bfloat16)     # (4Cin, 4Cout)
    bias = jnp.tile(b, 4)                                         # (4Cout,)

    y, ssum, ssq = conv_gemm(patches, wmat, bias, stats=True)     # (B, HW, 4Cout)
    # fold per-phase column stats into true per-channel stats over (2H, 2W)
    ssum = jnp.tile(ssum.reshape(B, 1, 4, Cout).sum(axis=2), (1, 1, 4))
    ssq = jnp.tile(ssq.reshape(B, 1, 4, Cout).sum(axis=2), (1, 1, 4))
    yn = instance_norm_lrelu(y, ssum, ssq, 4 * H * W)             # (B, HW, 4Cout)
    # interleave the 4 phases -> (B, 2H, 2W, Cout)
    yn = yn.reshape(B, H, W, 2, 2, Cout).transpose(0, 1, 3, 2, 4, 5)
    return yn.reshape(B, 2 * H, 2 * W, Cout)


def conv_tanh(x_bhwc, w, b):
    """ReflectionPad2d(1) + Conv2d + fused Tanh (epilogue in the GEMM kernel)."""
    xp = reflect_pad(x_bhwc)
    cout = w.shape[0]
    wmat, npad = _conv_weight_matrix(w)
    bias = _pad_bias(b, npad)
    patches, (Ho, Wo) = im2col(xp, k=3, stride=1)
    codes = conv_gemm(patches, wmat, bias, stats=False)           # f32 (B,HW,npad)
    return codes, (Ho, Wo, cout)


def zencoder_forward(params, input_nchw, segmap_nchw):
    x = jnp.transpose(input_nchw, (0, 2, 3, 1)).astype(jnp.bfloat16)   # NHWC

    h = conv_in_lrelu(x, params["w0"], params["b0"], reflect=True)
    h = conv_in_lrelu(h, params["w1"], params["b1"], stride=2, zero_pad=1)
    h = conv_in_lrelu(h, params["w2"], params["b2"], stride=2, zero_pad=1)
    h = conv_transpose_in_lrelu(h, params["wt"], params["bt"])
    codes, (Hc, Wc, cnc) = conv_tanh(h, params["w3"], params["b3"])

    B = codes.shape[0]
    # F.interpolate(segmap, size=(Hc, Wc), mode='nearest'), integer index math
    seg = jnp.transpose(segmap_nchw, (0, 2, 3, 1))                # (B, Hs, Ws, S)
    Hs, Ws = seg.shape[1], seg.shape[2]
    yi = (jnp.arange(Hc) * Hs) // Hc
    xi = (jnp.arange(Wc) * Ws) // Wc
    seg = seg[:, yi][:, :, xi]                                    # (B, Hc, Wc, S)
    S = seg.shape[-1]

    mask = (seg != 0).astype(jnp.float32).reshape(B, Hc * Wc, S)
    pooled = region_pool(codes, mask)                             # (B, S, npad)
    return pooled[:, :, :cnc]                                     # (B, S, output_nc)


# --------------------------- parameter creation ----------------------------

def init_params(key, input_nc, output_nc, ngf=32):
    keys = jax.random.split(key, 10)

    def conv_w(k, cout, cin):
        return jax.random.normal(k, (cout, cin, 3, 3), jnp.float32) * 0.05

    return {
        # Conv2d weights: (Cout, Cin, kH, kW)  (PyTorch layout)
        "w0": conv_w(keys[0], ngf, input_nc),
        "b0": jax.random.normal(keys[1], (ngf,), jnp.float32) * 0.01,
        "w1": conv_w(keys[2], ngf * 2, ngf),
        "b1": jax.random.normal(keys[3], (ngf * 2,), jnp.float32) * 0.01,
        "w2": conv_w(keys[4], ngf * 4, ngf * 2),
        "b2": jax.random.normal(keys[5], (ngf * 4,), jnp.float32) * 0.01,
        # ConvTranspose2d weight: (Cin, Cout, kH, kW)  (PyTorch layout)
        "wt": jax.random.normal(keys[6], (ngf * 4, ngf * 8, 3, 3), jnp.float32) * 0.05,
        "bt": jax.random.normal(keys[7], (ngf * 8,), jnp.float32) * 0.01,
        "w3": conv_w(keys[8], output_nc, ngf * 8),                # 256 -> output_nc
        "b3": jax.random.normal(keys[9], (output_nc,), jnp.float32) * 0.01,
    }


# ---------------------------------- main -----------------------------------

if __name__ == "__main__":
    key = jax.random.PRNGKey(0)
    k_par, k_in, k_seg = jax.random.split(key, 3)

    B, input_nc, output_nc, H, W, S = 2, 4, 16, 16, 16, 8
    params = init_params(k_par, input_nc, output_nc, ngf=32)

    x = jax.random.normal(k_in, (B, input_nc, H, W), jnp.float32)     # NCHW
    labels = jax.random.randint(k_seg, (B, H, W), 0, S)
    segmap = jax.nn.one_hot(labels, S, axis=1, dtype=jnp.float32)     # (B, S, H, W)

    fwd = jax.jit(zencoder_forward)
    out = jax.block_until_ready(fwd(params, x, segmap))
    assert out.shape == (B, S, output_nc), out.shape
    assert bool(jnp.all(jnp.isfinite(out)))
    print("KERNEL_OK")
</pallas_src>

<mosaic_0001>
module attributes {stable_mosaic.version = 11 : i64} {
  func.func @_in_lrelu_kernel(%arg0: i32, %arg1: i32, %arg2: memref<1x256x128xbf16, #tpu.memory_space<vmem>>, %arg3: memref<1x1x128xf32, #tpu.memory_space<vmem>>, %arg4: memref<1x1x128xf32, #tpu.memory_space<vmem>>, %arg5: memref<1x256x128xbf16, #tpu.memory_space<vmem>>) attributes {dimension_semantics = [#tpu.dimension_semantics<parallel>, #tpu.dimension_semantics<parallel>], iteration_bounds = array<i64: 2, 1>, scalar_prefetch = 0 : i64, scratch_operands = 0 : i64, tpu.core_type = #tpu.core_type<tc>, window_params = [{transform_indices = @transform_0, window_bounds = array<i64: 1, 256, 128>}, {transform_indices = @transform_1, window_bounds = array<i64: 1, 1, 128>}, {transform_indices = @transform_2, window_bounds = array<i64: 1, 1, 128>}, {transform_indices = @transform_3, window_bounds = array<i64: 1, 256, 128>}]} {
    %c0 = arith.constant 0 : index
    %c0_0 = arith.constant 0 : index
    %c0_1 = arith.constant 0 : index
    %0 = vector.load %arg2[%c0, %c0_0, %c0_1] : memref<1x256x128xbf16, #tpu.memory_space<vmem>>, vector<1x256x128xbf16>
    %1 = vector.shape_cast %0 : vector<1x256x128xbf16> to vector<256x128xbf16>
    %2 = arith.extf %1 : vector<256x128xbf16> to vector<256x128xf32>
    %c0_2 = arith.constant 0 : index
    %c0_3 = arith.constant 0 : index
    %c0_4 = arith.constant 0 : index
    %3 = vector.load %arg3[%c0_2, %c0_3, %c0_4] : memref<1x1x128xf32, #tpu.memory_space<vmem>>, vector<1x1x128xf32>
    %4 = vector.shape_cast %3 : vector<1x1x128xf32> to vector<1x128xf32>
    %cst = arith.constant 3.906250e-03 : f32
    %5 = vector.broadcast %cst : f32 to vector<1x128xf32>
    %6 = arith.mulf %4, %5 : vector<1x128xf32>
    %c0_5 = arith.constant 0 : index
    %c0_6 = arith.constant 0 : index
    %c0_7 = arith.constant 0 : index
    %7 = vector.load %arg4[%c0_5, %c0_6, %c0_7] : memref<1x1x128xf32, #tpu.memory_space<vmem>>, vector<1x1x128xf32>
    %8 = vector.shape_cast %7 : vector<1x1x128xf32> to vector<1x128xf32>
    %cst_8 = arith.constant 3.906250e-03 : f32
    %9 = vector.broadcast %cst_8 : f32 to vector<1x128xf32>
    %10 = arith.mulf %8, %9 : vector<1x128xf32>
    %11 = arith.mulf %6, %6 : vector<1x128xf32>
    %12 = arith.subf %10, %11 : vector<1x128xf32>
    %cst_9 = arith.constant 0.000000e+00 : f32
    %13 = vector.broadcast %cst_9 : f32 to vector<1x128xf32>
    %14 = arith.maximumf %12, %13 : vector<1x128xf32>
    %15 = vector.broadcast %6 : vector<1x128xf32> to vector<256x128xf32>
    %16 = arith.subf %2, %15 : vector<256x128xf32>
    %cst_10 = arith.constant 9.99999974E-6 : f32
    %17 = vector.broadcast %cst_10 : f32 to vector<1x128xf32>
    %18 = arith.addf %14, %17 : vector<1x128xf32>
    %19 = math.rsqrt %18 : vector<1x128xf32>
    %20 = vector.broadcast %19 : vector<1x128xf32> to vector<256x128xf32>
    %21 = arith.mulf %16, %20 : vector<256x128xf32>
    %cst_11 = arith.constant 0.000000e+00 : f32
    %22 = vector.broadcast %cst_11 : f32 to vector<256x128xf32>
    %23 = arith.cmpf oge, %21, %22 : vector<256x128xf32>
    %cst_12 = arith.constant 2.000000e-01 : f32
    %24 = vector.broadcast %cst_12 : f32 to vector<256x128xf32>
    %25 = arith.mulf %24, %21 : vector<256x128xf32>
    %26 = arith.select %23, %21, %25 : vector<256x128xi1>, vector<256x128xf32>
    %27 = vector.shape_cast %26 : vector<256x128xf32> to vector<1x256x128xf32>
    %28 = arith.truncf %27 : vector<1x256x128xf32> to vector<1x256x128xbf16>
    %c0_13 = arith.constant 0 : index
    %c0_14 = arith.constant 0 : index
    %c0_15 = arith.constant 0 : index
    %29 = vector.load %arg5[%c0_13, %c0_14, %c0_15] : memref<1x256x128xbf16, #tpu.memory_space<vmem>>, vector<1x256x128xbf16>
    tpu.vector_store %arg5[%c0_13, %c0_14, %c0_15], %28 {strides = array<i32>} : memref<1x256x128xbf16, #tpu.memory_space<vmem>>, vector<1x256x128xbf16>,
    return
  }
  func.func @transform_0(%arg0: i32, %arg1: i32) -> (i32, i32, i32) {
    %c0_i32 = arith.constant 0 : i32
    %c0_i32_0 = arith.constant 0 : i32
    return %arg0, %arg1, %c0_i32 : i32, i32, i32
  }
  func.func @transform_1(%arg0: i32, %arg1: i32) -> (i32, i32, i32) {
    %c0_i32 = arith.constant 0 : i32
    %c0_i32_0 = arith.constant 0 : i32
    %c0_i32_1 = arith.constant 0 : i32
    return %arg0, %c0_i32, %c0_i32_0 : i32, i32, i32
  }
  func.func @transform_2(%arg0: i32, %arg1: i32) -> (i32, i32, i32) {
    %c0_i32 = arith.constant 0 : i32
    %c0_i32_0 = arith.constant 0 : i32
    %c0_i32_1 = arith.constant 0 : i32
    return %arg0, %c0_i32, %c0_i32_0 : i32, i32, i32
  }
  func.func @transform_3(%arg0: i32, %arg1: i32) -> (i32, i32, i32) {
    %c0_i32 = arith.constant 0 : i32
    %c0_i32_0 = arith.constant 0 : i32
    return %arg0, %arg1, %c0_i32 : i32, i32, i32
  }
}

module attributes {stable_mosaic.version = 11 : i64} {
  func.func @_conv_bias_stats_kernel(%arg0: i32, %arg1: i32, %arg2: memref<1x256x36xbf16, #tpu.memory_space<vmem>>, %arg3: memref<36x128xbf16, #tpu.memory_space<vmem>>, %arg4: memref<1x128xf32, #tpu.memory_space<vmem>>, %arg5: memref<1x256x128xbf16, #tpu.memory_space<vmem>>, %arg6: memref<1x1x128xf32, #tpu.memory_space<vmem>>, %arg7: memref<1x1x128xf32, #tpu.memory_space<vmem>>) attributes {dimension_semantics = [#tpu.dimension_semantics<parallel>, #tpu.dimension_semantics<arbitrary>], iteration_bounds = array<i64: 2, 1>, scalar_prefetch = 0 : i64, scratch_operands = 0 : i64, tpu.core_type = #tpu.core_type<tc>, window_params = [{transform_indices = @transform_0, window_bounds = array<i64: 1, 256, 36>}, {pipeline_mode = #tpu.pipeline_mode<synchronous>, transform_indices = @transform_1, window_bounds = array<i64: 36, 128>}, {pipeline_mode = #tpu.pipeline_mode<synchronous>, transform_indices = @transform_2, window_bounds = array<i64: 1, 128>}, {transform_indices = @transform_3, window_bounds = array<i64: 1, 256, 128>}, {transform_indices = @transform_4, window_bounds = array<i64: 1, 1, 128>}, {transform_indices = @transform_5, window_bounds = array<i64: 1, 1, 128>}]} {
    %c0 = arith.constant 0 : index
    %c0_0 = arith.constant 0 : index
    %c0_1 = arith.constant 0 : index
    %0 = vector.load %arg2[%c0, %c0_0, %c0_1] : memref<1x256x36xbf16, #tpu.memory_space<vmem>>, vector<1x256x36xbf16>
    %1 = vector.shape_cast %0 : vector<1x256x36xbf16> to vector<256x36xbf16>
    %c0_2 = arith.constant 0 : index
    %c0_3 = arith.constant 0 : index
    %2 = vector.load %arg3[%c0_2, %c0_3] : memref<36x128xbf16, #tpu.memory_space<vmem>>, vector<36x128xbf16>
    %cst = arith.constant dense<0.000000e+00> : vector<256x128xf32>
    %3 = tpu.matmul %1, %2, %cst {dimension_numbers = #tpu.dot_dimension_numbers<[1], [0], [0], [1], [0, 0, 1, 1], [], []>} : vector<256x36xbf16>, vector<36x128xbf16>, vector<256x128xf32> -> vector<256x128xf32>
    %c0_4 = arith.constant 0 : index
    %c0_5 = arith.constant 0 : index
    %4 = vector.load %arg4[%c0_4, %c0_5] : memref<1x128xf32, #tpu.memory_space<vmem>>, vector<1x128xf32>
    %5 = vector.broadcast %4 : vector<1x128xf32> to vector<256x128xf32>
    %6 = arith.addf %3, %5 : vector<256x128xf32>
    %7 = vector.shape_cast %6 : vector<256x128xf32> to vector<1x256x128xf32>
    %8 = arith.truncf %7 : vector<1x256x128xf32> to vector<1x256x128xbf16>
    %c0_6 = arith.constant 0 : index
    %c0_7 = arith.constant 0 : index
    %c0_8 = arith.constant 0 : index
    %9 = vector.load %arg5[%c0_6, %c0_7, %c0_8] : memref<1x256x128xbf16, #tpu.memory_space<vmem>>, vector<1x256x128xbf16>
    tpu.vector_store %arg5[%c0_6, %c0_7, %c0_8], %8 {strides = array<i32>} : memref<1x256x128xbf16, #tpu.memory_space<vmem>>, vector<1x256x128xbf16>,
    %c0_i32 = arith.constant 0 : i32
    %10 = arith.cmpi eq, %arg1, %c0_i32 : i32
    %11 = arith.extui %10 : i1 to i32
    %c0_i32_9 = arith.constant 0 : i32
    %12 = arith.cmpi ne, %11, %c0_i32_9 : i32
    scf.if %12 {
      %cst_24 = arith.constant 0.000000e+00 : f32
      %26 = vector.broadcast %cst_24 : f32 to vector<1x1x128xf32>
      %c0_25 = arith.constant 0 : index
      %c0_26 = arith.constant 0 : index
      %c0_27 = arith.constant 0 : index
      %27 = vector.load %arg6[%c0_25, %c0_26, %c0_27] : memref<1x1x128xf32, #tpu.memory_space<vmem>>, vector<1x1x128xf32>
      tpu.vector_store %arg6[%c0_25, %c0_26, %c0_27], %26 {strides = array<i32>} : memref<1x1x128xf32, #tpu.memory_space<vmem>>, vector<1x1x128xf32>,
      %cst_28 = arith.constant 0.000000e+00 : f32
      %28 = vector.broadcast %cst_28 : f32 to vector<1x1x128xf32>
      %c0_29 = arith.constant 0 : index
      %c0_30 = arith.constant 0 : index
      %c0_31 = arith.constant 0 : index
      %29 = vector.load %arg7[%c0_29, %c0_30, %c0_31] : memref<1x1x128xf32, #tpu.memory_space<vmem>>, vector<1x1x128xf32>
      tpu.vector_store %arg7[%c0_29, %c0_30, %c0_31], %28 {strides = array<i32>} : memref<1x1x128xf32, #tpu.memory_space<vmem>>, vector<1x1x128xf32>,
    } else {
    }
    %c0_10 = arith.constant 0 : index
    %c0_11 = arith.constant 0 : index
    %c0_12 = arith.constant 0 : index
    %13 = vector.load %arg6[%c0_10, %c0_11, %c0_12] : memref<1x1x128xf32, #tpu.memory_space<vmem>>, vector<1x1x128xf32>
    %cst_13 = arith.constant dense<0.000000e+00> : vector<128xf32>
    %14 = vector.multi_reduction <add>, %6, %cst_13 [0] : vector<256x128xf32> to vector<128xf32>
    %15 = vector.shape_cast %14 : vector<128xf32> to vector<1x128xf32>
    %16 = vector.shape_cast %15 : vector<1x128xf32> to vector<1x1x128xf32>
    %17 = arith.addf %13, %16 : vector<1x1x128xf32>
    %c0_14 = arith.constant 0 : index
    %c0_15 = arith.constant 0 : index
    %c0_16 = arith.constant 0 : index
    %18 = vector.load %arg6[%c0_14, %c0_15, %c0_16] : memref<1x1x128xf32, #tpu.memory_space<vmem>>, vector<1x1x128xf32>
    tpu.vector_store %arg6[%c0_14, %c0_15, %c0_16], %17 {strides = array<i32>} : memref<1x1x128xf32, #tpu.memory_space<vmem>>, vector<1x1x128xf32>,
    %c0_17 = arith.constant 0 : index
    %c0_18 = arith.constant 0 : index
    %c0_19 = arith.constant 0 : index
    %19 = vector.load %arg7[%c0_17, %c0_18, %c0_19] : memref<1x1x128xf32, #tpu.memory_space<vmem>>, vector<1x1x128xf32>
    %20 = arith.mulf %6, %6 : vector<256x128xf32>
    %cst_20 = arith.constant dense<0.000000e+00> : vector<128xf32>
    %21 = vector.multi_reduction <add>, %20, %cst_20 [0] : vector<256x128xf32> to vector<128xf32>
    %22 = vector.shape_cast %21 : vector<128xf32> to vector<1x128xf32>
    %23 = vector.shape_cast %22 : vector<1x128xf32> to vector<1x1x128xf32>
    %24 = arith.addf %19, %23 : vector<1x1x128xf32>
    %c0_21 = arith.constant 0 : index
    %c0_22 = arith.constant 0 : index
    %c0_23 = arith.constant 0 : index
    %25 = vector.load %arg7[%c0_21, %c0_22, %c0_23] : memref<1x1x128xf32, #tpu.memory_space<vmem>>, vector<1x1x128xf32>
    tpu.vector_store %arg7[%c0_21, %c0_22, %c0_23], %24 {strides = array<i32>} : memref<1x1x128xf32, #tpu.memory_space<vmem>>, vector<1x1x128xf32>,
    return
  }
  func.func @transform_0(%arg0: i32, %arg1: i32) -> (i32, i32, i32) {
    %c0_i32 = arith.constant 0 : i32
    %c0_i32_0 = arith.constant 0 : i32
    return %arg0, %arg1, %c0_i32 : i32, i32, i32
  }
  func.func @transform_1(%arg0: i32, %arg1: i32) -> (i32, i32) {
    %c0_i32 = arith.constant 0 : i32
    %c0_i32_0 = arith.constant 0 : i32
    %c0_i32_1 = arith.constant 0 : i32
    return %c0_i32, %c0_i32_0 : i32, i32
  }
  func.func @transform_2(%arg0: i32, %arg1: i32) -> (i32, i32) {
    %c0_i32 = arith.constant 0 : i32
    %c0_i32_0 = arith.constant 0 : i32
    %c0_i32_1 = arith.constant 0 : i32
    return %c0_i32, %c0_i32_0 : i32, i32
  }
  func.func @transform_3(%arg0: i32, %arg1: i32) -> (i32, i32, i32) {
    %c0_i32 = arith.constant 0 : i32
    %c0_i32_0 = arith.constant 0 : i32
    return %arg0, %arg1, %c0_i32 : i32, i32, i32
  }
  func.func @transform_4(%arg0: i32, %arg1: i32) -> (i32, i32, i32) {
    %c0_i32 = arith.constant 0 : i32
    %c0_i32_0 = arith.constant 0 : i32
    %c0_i32_1 = arith.constant 0 : i32
    return %arg0, %c0_i32, %c0_i32_0 : i32, i32, i32
  }
  func.func @transform_5(%arg0: i32, %arg1: i32) -> (i32, i32, i32) {
    %c0_i32 = arith.constant 0 : i32
    %c0_i32_0 = arith.constant 0 : i32
    %c0_i32_1 = arith.constant 0 : i32
    return %arg0, %c0_i32, %c0_i32_0 : i32, i32, i32
  }
}

module attributes {stable_mosaic.version = 11 : i64} {
  func.func @_conv_bias_stats_kernel(%arg0: i32, %arg1: i32, %arg2: memref<1x64x288xbf16, #tpu.memory_space<vmem>>, %arg3: memref<288x128xbf16, #tpu.memory_space<vmem>>, %arg4: memref<1x128xf32, #tpu.memory_space<vmem>>, %arg5: memref<1x64x128xbf16, #tpu.memory_space<vmem>>, %arg6: memref<1x1x128xf32, #tpu.memory_space<vmem>>, %arg7: memref<1x1x128xf32, #tpu.memory_space<vmem>>) attributes {dimension_semantics = [#tpu.dimension_semantics<parallel>, #tpu.dimension_semantics<arbitrary>], iteration_bounds = array<i64: 2, 1>, scalar_prefetch = 0 : i64, scratch_operands = 0 : i64, tpu.core_type = #tpu.core_type<tc>, window_params = [{transform_indices = @transform_0, window_bounds = array<i64: 1, 64, 288>}, {pipeline_mode = #tpu.pipeline_mode<synchronous>, transform_indices = @transform_1, window_bounds = array<i64: 288, 128>}, {pipeline_mode = #tpu.pipeline_mode<synchronous>, transform_indices = @transform_2, window_bounds = array<i64: 1, 128>}, {transform_indices = @transform_3, window_bounds = array<i64: 1, 64, 128>}, {transform_indices = @transform_4, window_bounds = array<i64: 1, 1, 128>}, {transform_indices = @transform_5, window_bounds = array<i64: 1, 1, 128>}]} {
    %c0 = arith.constant 0 : index
    %c0_0 = arith.constant 0 : index
    %c0_1 = arith.constant 0 : index
    %0 = vector.load %arg2[%c0, %c0_0, %c0_1] : memref<1x64x288xbf16, #tpu.memory_space<vmem>>, vector<1x64x288xbf16>
    %1 = vector.shape_cast %0 : vector<1x64x288xbf16> to vector<64x288xbf16>
    %c0_2 = arith.constant 0 : index
    %c0_3 = arith.constant 0 : index
    %2 = vector.load %arg3[%c0_2, %c0_3] : memref<288x128xbf16, #tpu.memory_space<vmem>>, vector<288x128xbf16>
    %cst = arith.constant dense<0.000000e+00> : vector<64x128xf32>
    %3 = tpu.matmul %1, %2, %cst {dimension_numbers = #tpu.dot_dimension_numbers<[1], [0], [0], [1], [0, 0, 1, 1], [], []>} : vector<64x288xbf16>, vector<288x128xbf16>, vector<64x128xf32> -> vector<64x128xf32>
    %c0_4 = arith.constant 0 : index
    %c0_5 = arith.constant 0 : index
    %4 = vector.load %arg4[%c0_4, %c0_5] : memref<1x128xf32, #tpu.memory_space<vmem>>, vector<1x128xf32>
    %5 = vector.broadcast %4 : vector<1x128xf32> to vector<64x128xf32>
    %6 = arith.addf %3, %5 : vector<64x128xf32>
    %7 = vector.shape_cast %6 : vector<64x128xf32> to vector<1x64x128xf32>
    %8 = arith.truncf %7 : vector<1x64x128xf32> to vector<1x64x128xbf16>
    %c0_6 = arith.constant 0 : index
    %c0_7 = arith.constant 0 : index
    %c0_8 = arith.constant 0 : index
    %9 = vector.load %arg5[%c0_6, %c0_7, %c0_8] : memref<1x64x128xbf16, #tpu.memory_space<vmem>>, vector<1x64x128xbf16>
    tpu.vector_store %arg5[%c0_6, %c0_7, %c0_8], %8 {strides = array<i32>} : memref<1x64x128xbf16, #tpu.memory_space<vmem>>, vector<1x64x128xbf16>,
    %c0_i32 = arith.constant 0 : i32
    %10 = arith.cmpi eq, %arg1, %c0_i32 : i32
    %11 = arith.extui %10 : i1 to i32
    %c0_i32_9 = arith.constant 0 : i32
    %12 = arith.cmpi ne, %11, %c0_i32_9 : i32
    scf.if %12 {
      %cst_24 = arith.constant 0.000000e+00 : f32
      %26 = vector.broadcast %cst_24 : f32 to vector<1x1x128xf32>
      %c0_25 = arith.constant 0 : index
      %c0_26 = arith.constant 0 : index
      %c0_27 = arith.constant 0 : index
      %27 = vector.load %arg6[%c0_25, %c0_26, %c0_27] : memref<1x1x128xf32, #tpu.memory_space<vmem>>, vector<1x1x128xf32>
      tpu.vector_store %arg6[%c0_25, %c0_26, %c0_27], %26 {strides = array<i32>} : memref<1x1x128xf32, #tpu.memory_space<vmem>>, vector<1x1x128xf32>,
      %cst_28 = arith.constant 0.000000e+00 : f32
      %28 = vector.broadcast %cst_28 : f32 to vector<1x1x128xf32>
      %c0_29 = arith.constant 0 : index
      %c0_30 = arith.constant 0 : index
      %c0_31 = arith.constant 0 : index
      %29 = vector.load %arg7[%c0_29, %c0_30, %c0_31] : memref<1x1x128xf32, #tpu.memory_space<vmem>>, vector<1x1x128xf32>
      tpu.vector_store %arg7[%c0_29, %c0_30, %c0_31], %28 {strides = array<i32>} : memref<1x1x128xf32, #tpu.memory_space<vmem>>, vector<1x1x128xf32>,
    } else {
    }
    %c0_10 = arith.constant 0 : index
    %c0_11 = arith.constant 0 : index
    %c0_12 = arith.constant 0 : index
    %13 = vector.load %arg6[%c0_10, %c0_11, %c0_12] : memref<1x1x128xf32, #tpu.memory_space<vmem>>, vector<1x1x128xf32>
    %cst_13 = arith.constant dense<0.000000e+00> : vector<128xf32>
    %14 = vector.multi_reduction <add>, %6, %cst_13 [0] : vector<64x128xf32> to vector<128xf32>
    %15 = vector.shape_cast %14 : vector<128xf32> to vector<1x128xf32>
    %16 = vector.shape_cast %15 : vector<1x128xf32> to vector<1x1x128xf32>
    %17 = arith.addf %13, %16 : vector<1x1x128xf32>
    %c0_14 = arith.constant 0 : index
    %c0_15 = arith.constant 0 : index
    %c0_16 = arith.constant 0 : index
    %18 = vector.load %arg6[%c0_14, %c0_15, %c0_16] : memref<1x1x128xf32, #tpu.memory_space<vmem>>, vector<1x1x128xf32>
    tpu.vector_store %arg6[%c0_14, %c0_15, %c0_16], %17 {strides = array<i32>} : memref<1x1x128xf32, #tpu.memory_space<vmem>>, vector<1x1x128xf32>,
    %c0_17 = arith.constant 0 : index
    %c0_18 = arith.constant 0 : index
    %c0_19 = arith.constant 0 : index
    %19 = vector.load %arg7[%c0_17, %c0_18, %c0_19] : memref<1x1x128xf32, #tpu.memory_space<vmem>>, vector<1x1x128xf32>
    %20 = arith.mulf %6, %6 : vector<64x128xf32>
    %cst_20 = arith.constant dense<0.000000e+00> : vector<128xf32>
    %21 = vector.multi_reduction <add>, %20, %cst_20 [0] : vector<64x128xf32> to vector<128xf32>
    %22 = vector.shape_cast %21 : vector<128xf32> to vector<1x128xf32>
    %23 = vector.shape_cast %22 : vector<1x128xf32> to vector<1x1x128xf32>
    %24 = arith.addf %19, %23 : vector<1x1x128xf32>
    %c0_21 = arith.constant 0 : index
    %c0_22 = arith.constant 0 : index
    %c0_23 = arith.constant 0 : index
    %25 = vector.load %arg7[%c0_21, %c0_22, %c0_23] : memref<1x1x128xf32, #tpu.memory_space<vmem>>, vector<1x1x128xf32>
    tpu.vector_store %arg7[%c0_21, %c0_22, %c0_23], %24 {strides = array<i32>} : memref<1x1x128xf32, #tpu.memory_space<vmem>>, vector<1x1x128xf32>,
    return
  }
  func.func @transform_0(%arg0: i32, %arg1: i32) -> (i32, i32, i32) {
    %c0_i32 = arith.constant 0 : i32
    %c0_i32_0 = arith.constant 0 : i32
    return %arg0, %arg1, %c0_i32 : i32, i32, i32
  }
  func.func @transform_1(%arg0: i32, %arg1: i32) -> (i32, i32) {
    %c0_i32 = arith.constant 0 : i32
    %c0_i32_0 = arith.constant 0 : i32
    %c0_i32_1 = arith.constant 0 : i32
    return %c0_i32, %c0_i32_0 : i32, i32
  }
  func.func @transform_2(%arg0: i32, %arg1: i32) -> (i32, i32) {
    %c0_i32 = arith.constant 0 : i32
    %c0_i32_0 = arith.constant 0 : i32
    %c0_i32_1 = arith.constant 0 : i32
    return %c0_i32, %c0_i32_0 : i32, i32
  }
  func.func @transform_3(%arg0: i32, %arg1: i32) -> (i32, i32, i32) {
    %c0_i32 = arith.constant 0 : i32
    %c0_i32_0 = arith.constant 0 : i32
    return %arg0, %arg1, %c0_i32 : i32, i32, i32
  }
  func.func @transform_4(%arg0: i32, %arg1: i32) -> (i32, i32, i32) {
    %c0_i32 = arith.constant 0 : i32
    %c0_i32_0 = arith.constant 0 : i32
    %c0_i32_1 = arith.constant 0 : i32
    return %arg0, %c0_i32, %c0_i32_0 : i32, i32, i32
  }
  func.func @transform_5(%arg0: i32, %arg1: i32) -> (i32, i32, i32) {
    %c0_i32 = arith.constant 0 : i32
    %c0_i32_0 = arith.constant 0 : i32
    %c0_i32_1 = arith.constant 0 : i32
    return %arg0, %c0_i32, %c0_i32_0 : i32, i32, i32
  }
}

module attributes {stable_mosaic.version = 11 : i64} {
  func.func @_in_lrelu_kernel(%arg0: i32, %arg1: i32, %arg2: memref<1x64x128xbf16, #tpu.memory_space<vmem>>, %arg3: memref<1x1x128xf32, #tpu.memory_space<vmem>>, %arg4: memref<1x1x128xf32, #tpu.memory_space<vmem>>, %arg5: memref<1x64x128xbf16, #tpu.memory_space<vmem>>) attributes {dimension_semantics = [#tpu.dimension_semantics<parallel>, #tpu.dimension_semantics<parallel>], iteration_bounds = array<i64: 2, 1>, scalar_prefetch = 0 : i64, scratch_operands = 0 : i64, tpu.core_type = #tpu.core_type<tc>, window_params = [{transform_indices = @transform_0, window_bounds = array<i64: 1, 64, 128>}, {transform_indices = @transform_1, window_bounds = array<i64: 1, 1, 128>}, {transform_indices = @transform_2, window_bounds = array<i64: 1, 1, 128>}, {transform_indices = @transform_3, window_bounds = array<i64: 1, 64, 128>}]} {
    %c0 = arith.constant 0 : index
    %c0_0 = arith.constant 0 : index
    %c0_1 = arith.constant 0 : index
    %0 = vector.load %arg2[%c0, %c0_0, %c0_1] : memref<1x64x128xbf16, #tpu.memory_space<vmem>>, vector<1x64x128xbf16>
    %1 = vector.shape_cast %0 : vector<1x64x128xbf16> to vector<64x128xbf16>
    %2 = arith.extf %1 : vector<64x128xbf16> to vector<64x128xf32>
    %c0_2 = arith.constant 0 : index
    %c0_3 = arith.constant 0 : index
    %c0_4 = arith.constant 0 : index
    %3 = vector.load %arg3[%c0_2, %c0_3, %c0_4] : memref<1x1x128xf32, #tpu.memory_space<vmem>>, vector<1x1x128xf32>
    %4 = vector.shape_cast %3 : vector<1x1x128xf32> to vector<1x128xf32>
    %cst = arith.constant 1.562500e-02 : f32
    %5 = vector.broadcast %cst : f32 to vector<1x128xf32>
    %6 = arith.mulf %4, %5 : vector<1x128xf32>
    %c0_5 = arith.constant 0 : index
    %c0_6 = arith.constant 0 : index
    %c0_7 = arith.constant 0 : index
    %7 = vector.load %arg4[%c0_5, %c0_6, %c0_7] : memref<1x1x128xf32, #tpu.memory_space<vmem>>, vector<1x1x128xf32>
    %8 = vector.shape_cast %7 : vector<1x1x128xf32> to vector<1x128xf32>
    %cst_8 = arith.constant 1.562500e-02 : f32
    %9 = vector.broadcast %cst_8 : f32 to vector<1x128xf32>
    %10 = arith.mulf %8, %9 : vector<1x128xf32>
    %11 = arith.mulf %6, %6 : vector<1x128xf32>
    %12 = arith.subf %10, %11 : vector<1x128xf32>
    %cst_9 = arith.constant 0.000000e+00 : f32
    %13 = vector.broadcast %cst_9 : f32 to vector<1x128xf32>
    %14 = arith.maximumf %12, %13 : vector<1x128xf32>
    %15 = vector.broadcast %6 : vector<1x128xf32> to vector<64x128xf32>
    %16 = arith.subf %2, %15 : vector<64x128xf32>
    %cst_10 = arith.constant 9.99999974E-6 : f32
    %17 = vector.broadcast %cst_10 : f32 to vector<1x128xf32>
    %18 = arith.addf %14, %17 : vector<1x128xf32>
    %19 = math.rsqrt %18 : vector<1x128xf32>
    %20 = vector.broadcast %19 : vector<1x128xf32> to vector<64x128xf32>
    %21 = arith.mulf %16, %20 : vector<64x128xf32>
    %cst_11 = arith.constant 0.000000e+00 : f32
    %22 = vector.broadcast %cst_11 : f32 to vector<64x128xf32>
    %23 = arith.cmpf oge, %21, %22 : vector<64x128xf32>
    %cst_12 = arith.constant 2.000000e-01 : f32
    %24 = vector.broadcast %cst_12 : f32 to vector<64x128xf32>
    %25 = arith.mulf %24, %21 : vector<64x128xf32>
    %26 = arith.select %23, %21, %25 : vector<64x128xi1>, vector<64x128xf32>
    %27 = vector.shape_cast %26 : vector<64x128xf32> to vector<1x64x128xf32>
    %28 = arith.truncf %27 : vector<1x64x128xf32> to vector<1x64x128xbf16>
    %c0_13 = arith.constant 0 : index
    %c0_14 = arith.constant 0 : index
    %c0_15 = arith.constant 0 : index
    %29 = vector.load %arg5[%c0_13, %c0_14, %c0_15] : memref<1x64x128xbf16, #tpu.memory_space<vmem>>, vector<1x64x128xbf16>
    tpu.vector_store %arg5[%c0_13, %c0_14, %c0_15], %28 {strides = array<i32>} : memref<1x64x128xbf16, #tpu.memory_space<vmem>>, vector<1x64x128xbf16>,
    return
  }
  func.func @transform_0(%arg0: i32, %arg1: i32) -> (i32, i32, i32) {
    %c0_i32 = arith.constant 0 : i32
    %c0_i32_0 = arith.constant 0 : i32
    return %arg0, %arg1, %c0_i32 : i32, i32, i32
  }
  func.func @transform_1(%arg0: i32, %arg1: i32) -> (i32, i32, i32) {
    %c0_i32 = arith.constant 0 : i32
    %c0_i32_0 = arith.constant 0 : i32
    %c0_i32_1 = arith.constant 0 : i32
    return %arg0, %c0_i32, %c0_i32_0 : i32, i32, i32
  }
  func.func @transform_2(%arg0: i32, %arg1: i32) -> (i32, i32, i32) {
    %c0_i32 = arith.constant 0 : i32
    %c0_i32_0 = arith.constant 0 : i32
    %c0_i32_1 = arith.constant 0 : i32
    return %arg0, %c0_i32, %c0_i32_0 : i32, i32, i32
  }
  func.func @transform_3(%arg0: i32, %arg1: i32) -> (i32, i32, i32) {
    %c0_i32 = arith.constant 0 : i32
    %c0_i32_0 = arith.constant 0 : i32
    return %arg0, %arg1, %c0_i32 : i32, i32, i32
  }
}

module attributes {stable_mosaic.version = 11 : i64} {
  func.func @_conv_bias_stats_kernel(%arg0: i32, %arg1: i32, %arg2: memref<1x16x576xbf16, #tpu.memory_space<vmem>>, %arg3: memref<576x128xbf16, #tpu.memory_space<vmem>>, %arg4: memref<1x128xf32, #tpu.memory_space<vmem>>, %arg5: memref<1x16x128xbf16, #tpu.memory_space<vmem>>, %arg6: memref<1x1x128xf32, #tpu.memory_space<vmem>>, %arg7: memref<1x1x128xf32, #tpu.memory_space<vmem>>) attributes {dimension_semantics = [#tpu.dimension_semantics<parallel>, #tpu.dimension_semantics<arbitrary>], iteration_bounds = array<i64: 2, 1>, scalar_prefetch = 0 : i64, scratch_operands = 0 : i64, tpu.core_type = #tpu.core_type<tc>, window_params = [{transform_indices = @transform_0, window_bounds = array<i64: 1, 16, 576>}, {pipeline_mode = #tpu.pipeline_mode<synchronous>, transform_indices = @transform_1, window_bounds = array<i64: 576, 128>}, {pipeline_mode = #tpu.pipeline_mode<synchronous>, transform_indices = @transform_2, window_bounds = array<i64: 1, 128>}, {transform_indices = @transform_3, window_bounds = array<i64: 1, 16, 128>}, {transform_indices = @transform_4, window_bounds = array<i64: 1, 1, 128>}, {transform_indices = @transform_5, window_bounds = array<i64: 1, 1, 128>}]} {
    %c0 = arith.constant 0 : index
    %c0_0 = arith.constant 0 : index
    %c0_1 = arith.constant 0 : index
    %0 = vector.load %arg2[%c0, %c0_0, %c0_1] : memref<1x16x576xbf16, #tpu.memory_space<vmem>>, vector<1x16x576xbf16>
    %1 = vector.shape_cast %0 : vector<1x16x576xbf16> to vector<16x576xbf16>
    %c0_2 = arith.constant 0 : index
    %c0_3 = arith.constant 0 : index
    %2 = vector.load %arg3[%c0_2, %c0_3] : memref<576x128xbf16, #tpu.memory_space<vmem>>, vector<576x128xbf16>
    %cst = arith.constant dense<0.000000e+00> : vector<16x128xf32>
    %3 = tpu.matmul %1, %2, %cst {dimension_numbers = #tpu.dot_dimension_numbers<[1], [0], [0], [1], [0, 0, 1, 1], [], []>} : vector<16x576xbf16>, vector<576x128xbf16>, vector<16x128xf32> -> vector<16x128xf32>
    %c0_4 = arith.constant 0 : index
    %c0_5 = arith.constant 0 : index
    %4 = vector.load %arg4[%c0_4, %c0_5] : memref<1x128xf32, #tpu.memory_space<vmem>>, vector<1x128xf32>
    %5 = vector.broadcast %4 : vector<1x128xf32> to vector<16x128xf32>
    %6 = arith.addf %3, %5 : vector<16x128xf32>
    %7 = vector.shape_cast %6 : vector<16x128xf32> to vector<1x16x128xf32>
    %8 = arith.truncf %7 : vector<1x16x128xf32> to vector<1x16x128xbf16>
    %c0_6 = arith.constant 0 : index
    %c0_7 = arith.constant 0 : index
    %c0_8 = arith.constant 0 : index
    %9 = vector.load %arg5[%c0_6, %c0_7, %c0_8] : memref<1x16x128xbf16, #tpu.memory_space<vmem>>, vector<1x16x128xbf16>
    tpu.vector_store %arg5[%c0_6, %c0_7, %c0_8], %8 {strides = array<i32>} : memref<1x16x128xbf16, #tpu.memory_space<vmem>>, vector<1x16x128xbf16>,
    %c0_i32 = arith.constant 0 : i32
    %10 = arith.cmpi eq, %arg1, %c0_i32 : i32
    %11 = arith.extui %10 : i1 to i32
    %c0_i32_9 = arith.constant 0 : i32
    %12 = arith.cmpi ne, %11, %c0_i32_9 : i32
    scf.if %12 {
      %cst_24 = arith.constant 0.000000e+00 : f32
      %26 = vector.broadcast %cst_24 : f32 to vector<1x1x128xf32>
      %c0_25 = arith.constant 0 : index
      %c0_26 = arith.constant 0 : index
      %c0_27 = arith.constant 0 : index
      %27 = vector.load %arg6[%c0_25, %c0_26, %c0_27] : memref<1x1x128xf32, #tpu.memory_space<vmem>>, vector<1x1x128xf32>
      tpu.vector_store %arg6[%c0_25, %c0_26, %c0_27], %26 {strides = array<i32>} : memref<1x1x128xf32, #tpu.memory_space<vmem>>, vector<1x1x128xf32>,
      %cst_28 = arith.constant 0.000000e+00 : f32
      %28 = vector.broadcast %cst_28 : f32 to vector<1x1x128xf32>
      %c0_29 = arith.constant 0 : index
      %c0_30 = arith.constant 0 : index
      %c0_31 = arith.constant 0 : index
      %29 = vector.load %arg7[%c0_29, %c0_30, %c0_31] : memref<1x1x128xf32, #tpu.memory_space<vmem>>, vector<1x1x128xf32>
      tpu.vector_store %arg7[%c0_29, %c0_30, %c0_31], %28 {strides = array<i32>} : memref<1x1x128xf32, #tpu.memory_space<vmem>>, vector<1x1x128xf32>,
    } else {
    }
    %c0_10 = arith.constant 0 : index
    %c0_11 = arith.constant 0 : index
    %c0_12 = arith.constant 0 : index
    %13 = vector.load %arg6[%c0_10, %c0_11, %c0_12] : memref<1x1x128xf32, #tpu.memory_space<vmem>>, vector<1x1x128xf32>
    %cst_13 = arith.constant dense<0.000000e+00> : vector<128xf32>
    %14 = vector.multi_reduction <add>, %6, %cst_13 [0] : vector<16x128xf32> to vector<128xf32>
    %15 = vector.shape_cast %14 : vector<128xf32> to vector<1x128xf32>
    %16 = vector.shape_cast %15 : vector<1x128xf32> to vector<1x1x128xf32>
    %17 = arith.addf %13, %16 : vector<1x1x128xf32>
    %c0_14 = arith.constant 0 : index
    %c0_15 = arith.constant 0 : index
    %c0_16 = arith.constant 0 : index
    %18 = vector.load %arg6[%c0_14, %c0_15, %c0_16] : memref<1x1x128xf32, #tpu.memory_space<vmem>>, vector<1x1x128xf32>
    tpu.vector_store %arg6[%c0_14, %c0_15, %c0_16], %17 {strides = array<i32>} : memref<1x1x128xf32, #tpu.memory_space<vmem>>, vector<1x1x128xf32>,
    %c0_17 = arith.constant 0 : index
    %c0_18 = arith.constant 0 : index
    %c0_19 = arith.constant 0 : index
    %19 = vector.load %arg7[%c0_17, %c0_18, %c0_19] : memref<1x1x128xf32, #tpu.memory_space<vmem>>, vector<1x1x128xf32>
    %20 = arith.mulf %6, %6 : vector<16x128xf32>
    %cst_20 = arith.constant dense<0.000000e+00> : vector<128xf32>
    %21 = vector.multi_reduction <add>, %20, %cst_20 [0] : vector<16x128xf32> to vector<128xf32>
    %22 = vector.shape_cast %21 : vector<128xf32> to vector<1x128xf32>
    %23 = vector.shape_cast %22 : vector<1x128xf32> to vector<1x1x128xf32>
    %24 = arith.addf %19, %23 : vector<1x1x128xf32>
    %c0_21 = arith.constant 0 : index
    %c0_22 = arith.constant 0 : index
    %c0_23 = arith.constant 0 : index
    %25 = vector.load %arg7[%c0_21, %c0_22, %c0_23] : memref<1x1x128xf32, #tpu.memory_space<vmem>>, vector<1x1x128xf32>
    tpu.vector_store %arg7[%c0_21, %c0_22, %c0_23], %24 {strides = array<i32>} : memref<1x1x128xf32, #tpu.memory_space<vmem>>, vector<1x1x128xf32>,
    return
  }
  func.func @transform_0(%arg0: i32, %arg1: i32) -> (i32, i32, i32) {
    %c0_i32 = arith.constant 0 : i32
    %c0_i32_0 = arith.constant 0 : i32
    return %arg0, %arg1, %c0_i32 : i32, i32, i32
  }
  func.func @transform_1(%arg0: i32, %arg1: i32) -> (i32, i32) {
    %c0_i32 = arith.constant 0 : i32
    %c0_i32_0 = arith.constant 0 : i32
    %c0_i32_1 = arith.constant 0 : i32
    return %c0_i32, %c0_i32_0 : i32, i32
  }
  func.func @transform_2(%arg0: i32, %arg1: i32) -> (i32, i32) {
    %c0_i32 = arith.constant 0 : i32
    %c0_i32_0 = arith.constant 0 : i32
    %c0_i32_1 = arith.constant 0 : i32
    return %c0_i32, %c0_i32_0 : i32, i32
  }
  func.func @transform_3(%arg0: i32, %arg1: i32) -> (i32, i32, i32) {
    %c0_i32 = arith.constant 0 : i32
    %c0_i32_0 = arith.constant 0 : i32
    return %arg0, %arg1, %c0_i32 : i32, i32, i32
  }
  func.func @transform_4(%arg0: i32, %arg1: i32) -> (i32, i32, i32) {
    %c0_i32 = arith.constant 0 : i32
    %c0_i32_0 = arith.constant 0 : i32
    %c0_i32_1 = arith.constant 0 : i32
    return %arg0, %c0_i32, %c0_i32_0 : i32, i32, i32
  }
  func.func @transform_5(%arg0: i32, %arg1: i32) -> (i32, i32, i32) {
    %c0_i32 = arith.constant 0 : i32
    %c0_i32_0 = arith.constant 0 : i32
    %c0_i32_1 = arith.constant 0 : i32
    return %arg0, %c0_i32, %c0_i32_0 : i32, i32, i32
  }
}

module attributes {stable_mosaic.version = 11 : i64} {
  func.func @_in_lrelu_kernel(%arg0: i32, %arg1: i32, %arg2: memref<1x16x128xbf16, #tpu.memory_space<vmem>>, %arg3: memref<1x1x128xf32, #tpu.memory_space<vmem>>, %arg4: memref<1x1x128xf32, #tpu.memory_space<vmem>>, %arg5: memref<1x16x128xbf16, #tpu.memory_space<vmem>>) attributes {dimension_semantics = [#tpu.dimension_semantics<parallel>, #tpu.dimension_semantics<parallel>], iteration_bounds = array<i64: 2, 1>, scalar_prefetch = 0 : i64, scratch_operands = 0 : i64, tpu.core_type = #tpu.core_type<tc>, window_params = [{transform_indices = @transform_0, window_bounds = array<i64: 1, 16, 128>}, {transform_indices = @transform_1, window_bounds = array<i64: 1, 1, 128>}, {transform_indices = @transform_2, window_bounds = array<i64: 1, 1, 128>}, {transform_indices = @transform_3, window_bounds = array<i64: 1, 16, 128>}]} {
    %c0 = arith.constant 0 : index
    %c0_0 = arith.constant 0 : index
    %c0_1 = arith.constant 0 : index
    %0 = vector.load %arg2[%c0, %c0_0, %c0_1] : memref<1x16x128xbf16, #tpu.memory_space<vmem>>, vector<1x16x128xbf16>
    %1 = vector.shape_cast %0 : vector<1x16x128xbf16> to vector<16x128xbf16>
    %2 = arith.extf %1 : vector<16x128xbf16> to vector<16x128xf32>
    %c0_2 = arith.constant 0 : index
    %c0_3 = arith.constant 0 : index
    %c0_4 = arith.constant 0 : index
    %3 = vector.load %arg3[%c0_2, %c0_3, %c0_4] : memref<1x1x128xf32, #tpu.memory_space<vmem>>, vector<1x1x128xf32>
    %4 = vector.shape_cast %3 : vector<1x1x128xf32> to vector<1x128xf32>
    %cst = arith.constant 6.250000e-02 : f32
    %5 = vector.broadcast %cst : f32 to vector<1x128xf32>
    %6 = arith.mulf %4, %5 : vector<1x128xf32>
    %c0_5 = arith.constant 0 : index
    %c0_6 = arith.constant 0 : index
    %c0_7 = arith.constant 0 : index
    %7 = vector.load %arg4[%c0_5, %c0_6, %c0_7] : memref<1x1x128xf32, #tpu.memory_space<vmem>>, vector<1x1x128xf32>
    %8 = vector.shape_cast %7 : vector<1x1x128xf32> to vector<1x128xf32>
    %cst_8 = arith.constant 6.250000e-02 : f32
    %9 = vector.broadcast %cst_8 : f32 to vector<1x128xf32>
    %10 = arith.mulf %8, %9 : vector<1x128xf32>
    %11 = arith.mulf %6, %6 : vector<1x128xf32>
    %12 = arith.subf %10, %11 : vector<1x128xf32>
    %cst_9 = arith.constant 0.000000e+00 : f32
    %13 = vector.broadcast %cst_9 : f32 to vector<1x128xf32>
    %14 = arith.maximumf %12, %13 : vector<1x128xf32>
    %15 = vector.broadcast %6 : vector<1x128xf32> to vector<16x128xf32>
    %16 = arith.subf %2, %15 : vector<16x128xf32>
    %cst_10 = arith.constant 9.99999974E-6 : f32
    %17 = vector.broadcast %cst_10 : f32 to vector<1x128xf32>
    %18 = arith.addf %14, %17 : vector<1x128xf32>
    %19 = math.rsqrt %18 : vector<1x128xf32>
    %20 = vector.broadcast %19 : vector<1x128xf32> to vector<16x128xf32>
    %21 = arith.mulf %16, %20 : vector<16x128xf32>
    %cst_11 = arith.constant 0.000000e+00 : f32
    %22 = vector.broadcast %cst_11 : f32 to vector<16x128xf32>
    %23 = arith.cmpf oge, %21, %22 : vector<16x128xf32>
    %cst_12 = arith.constant 2.000000e-01 : f32
    %24 = vector.broadcast %cst_12 : f32 to vector<16x128xf32>
    %25 = arith.mulf %24, %21 : vector<16x128xf32>
    %26 = arith.select %23, %21, %25 : vector<16x128xi1>, vector<16x128xf32>
    %27 = vector.shape_cast %26 : vector<16x128xf32> to vector<1x16x128xf32>
    %28 = arith.truncf %27 : vector<1x16x128xf32> to vector<1x16x128xbf16>
    %c0_13 = arith.constant 0 : index
    %c0_14 = arith.constant 0 : index
    %c0_15 = arith.constant 0 : index
    %29 = vector.load %arg5[%c0_13, %c0_14, %c0_15] : memref<1x16x128xbf16, #tpu.memory_space<vmem>>, vector<1x16x128xbf16>
    tpu.vector_store %arg5[%c0_13, %c0_14, %c0_15], %28 {strides = array<i32>} : memref<1x16x128xbf16, #tpu.memory_space<vmem>>, vector<1x16x128xbf16>,
    return
  }
  func.func @transform_0(%arg0: i32, %arg1: i32) -> (i32, i32, i32) {
    %c0_i32 = arith.constant 0 : i32
    %c0_i32_0 = arith.constant 0 : i32
    return %arg0, %arg1, %c0_i32 : i32, i32, i32
  }
  func.func @transform_1(%arg0: i32, %arg1: i32) -> (i32, i32, i32) {
    %c0_i32 = arith.constant 0 : i32
    %c0_i32_0 = arith.constant 0 : i32
    %c0_i32_1 = arith.constant 0 : i32
    return %arg0, %c0_i32, %c0_i32_0 : i32, i32, i32
  }
  func.func @transform_2(%arg0: i32, %arg1: i32) -> (i32, i32, i32) {
    %c0_i32 = arith.constant 0 : i32
    %c0_i32_0 = arith.constant 0 : i32
    %c0_i32_1 = arith.constant 0 : i32
    return %arg0, %c0_i32, %c0_i32_0 : i32, i32, i32
  }
  func.func @transform_3(%arg0: i32, %arg1: i32) -> (i32, i32, i32) {
    %c0_i32 = arith.constant 0 : i32
    %c0_i32_0 = arith.constant 0 : i32
    return %arg0, %arg1, %c0_i32 : i32, i32, i32
  }
}

module attributes {stable_mosaic.version = 11 : i64} {
  func.func @_conv_bias_stats_kernel(%arg0: i32, %arg1: i32, %arg2: memref<1x16x512xbf16, #tpu.memory_space<vmem>>, %arg3: memref<512x1024xbf16, #tpu.memory_space<vmem>>, %arg4: memref<1x1024xf32, #tpu.memory_space<vmem>>, %arg5: memref<1x16x1024xbf16, #tpu.memory_space<vmem>>, %arg6: memref<1x1x1024xf32, #tpu.memory_space<vmem>>, %arg7: memref<1x1x1024xf32, #tpu.memory_space<vmem>>) attributes {dimension_semantics = [#tpu.dimension_semantics<parallel>, #tpu.dimension_semantics<arbitrary>], iteration_bounds = array<i64: 2, 1>, scalar_prefetch = 0 : i64, scratch_operands = 0 : i64, tpu.core_type = #tpu.core_type<tc>, window_params = [{transform_indices = @transform_0, window_bounds = array<i64: 1, 16, 512>}, {pipeline_mode = #tpu.pipeline_mode<synchronous>, transform_indices = @transform_1, window_bounds = array<i64: 512, 1024>}, {pipeline_mode = #tpu.pipeline_mode<synchronous>, transform_indices = @transform_2, window_bounds = array<i64: 1, 1024>}, {transform_indices = @transform_3, window_bounds = array<i64: 1, 16, 1024>}, {transform_indices = @transform_4, window_bounds = array<i64: 1, 1, 1024>}, {transform_indices = @transform_5, window_bounds = array<i64: 1, 1, 1024>}]} {
    %c0 = arith.constant 0 : index
    %c0_0 = arith.constant 0 : index
    %c0_1 = arith.constant 0 : index
    %0 = vector.load %arg2[%c0, %c0_0, %c0_1] : memref<1x16x512xbf16, #tpu.memory_space<vmem>>, vector<1x16x512xbf16>
    %1 = vector.shape_cast %0 : vector<1x16x512xbf16> to vector<16x512xbf16>
    %c0_2 = arith.constant 0 : index
    %c0_3 = arith.constant 0 : index
    %2 = vector.load %arg3[%c0_2, %c0_3] : memref<512x1024xbf16, #tpu.memory_space<vmem>>, vector<512x1024xbf16>
    %cst = arith.constant dense<0.000000e+00> : vector<16x1024xf32>
    %3 = tpu.matmul %1, %2, %cst {dimension_numbers = #tpu.dot_dimension_numbers<[1], [0], [0], [1], [0, 0, 1, 1], [], []>} : vector<16x512xbf16>, vector<512x1024xbf16>, vector<16x1024xf32> -> vector<16x1024xf32>
    %c0_4 = arith.constant 0 : index
    %c0_5 = arith.constant 0 : index
    %4 = vector.load %arg4[%c0_4, %c0_5] : memref<1x1024xf32, #tpu.memory_space<vmem>>, vector<1x1024xf32>
    %5 = vector.broadcast %4 : vector<1x1024xf32> to vector<16x1024xf32>
    %6 = arith.addf %3, %5 : vector<16x1024xf32>
    %7 = vector.shape_cast %6 : vector<16x1024xf32> to vector<1x16x1024xf32>
    %8 = arith.truncf %7 : vector<1x16x1024xf32> to vector<1x16x1024xbf16>
    %c0_6 = arith.constant 0 : index
    %c0_7 = arith.constant 0 : index
    %c0_8 = arith.constant 0 : index
    %9 = vector.load %arg5[%c0_6, %c0_7, %c0_8] : memref<1x16x1024xbf16, #tpu.memory_space<vmem>>, vector<1x16x1024xbf16>
    tpu.vector_store %arg5[%c0_6, %c0_7, %c0_8], %8 {strides = array<i32>} : memref<1x16x1024xbf16, #tpu.memory_space<vmem>>, vector<1x16x1024xbf16>,
    %c0_i32 = arith.constant 0 : i32
    %10 = arith.cmpi eq, %arg1, %c0_i32 : i32
    %11 = arith.extui %10 : i1 to i32
    %c0_i32_9 = arith.constant 0 : i32
    %12 = arith.cmpi ne, %11, %c0_i32_9 : i32
    scf.if %12 {
      %cst_24 = arith.constant 0.000000e+00 : f32
      %26 = vector.broadcast %cst_24 : f32 to vector<1x1x1024xf32>
      %c0_25 = arith.constant 0 : index
      %c0_26 = arith.constant 0 : index
      %c0_27 = arith.constant 0 : index
      %27 = vector.load %arg6[%c0_25, %c0_26, %c0_27] : memref<1x1x1024xf32, #tpu.memory_space<vmem>>, vector<1x1x1024xf32>
      tpu.vector_store %arg6[%c0_25, %c0_26, %c0_27], %26 {strides = array<i32>} : memref<1x1x1024xf32, #tpu.memory_space<vmem>>, vector<1x1x1024xf32>,
      %cst_28 = arith.constant 0.000000e+00 : f32
      %28 = vector.broadcast %cst_28 : f32 to vector<1x1x1024xf32>
      %c0_29 = arith.constant 0 : index
      %c0_30 = arith.constant 0 : index
      %c0_31 = arith.constant 0 : index
      %29 = vector.load %arg7[%c0_29, %c0_30, %c0_31] : memref<1x1x1024xf32, #tpu.memory_space<vmem>>, vector<1x1x1024xf32>
      tpu.vector_store %arg7[%c0_29, %c0_30, %c0_31], %28 {strides = array<i32>} : memref<1x1x1024xf32, #tpu.memory_space<vmem>>, vector<1x1x1024xf32>,
    } else {
    }
    %c0_10 = arith.constant 0 : index
    %c0_11 = arith.constant 0 : index
    %c0_12 = arith.constant 0 : index
    %13 = vector.load %arg6[%c0_10, %c0_11, %c0_12] : memref<1x1x1024xf32, #tpu.memory_space<vmem>>, vector<1x1x1024xf32>
    %cst_13 = arith.constant dense<0.000000e+00> : vector<1024xf32>
    %14 = vector.multi_reduction <add>, %6, %cst_13 [0] : vector<16x1024xf32> to vector<1024xf32>
    %15 = vector.shape_cast %14 : vector<1024xf32> to vector<1x1024xf32>
    %16 = vector.shape_cast %15 : vector<1x1024xf32> to vector<1x1x1024xf32>
    %17 = arith.addf %13, %16 : vector<1x1x1024xf32>
    %c0_14 = arith.constant 0 : index
    %c0_15 = arith.constant 0 : index
    %c0_16 = arith.constant 0 : index
    %18 = vector.load %arg6[%c0_14, %c0_15, %c0_16] : memref<1x1x1024xf32, #tpu.memory_space<vmem>>, vector<1x1x1024xf32>
    tpu.vector_store %arg6[%c0_14, %c0_15, %c0_16], %17 {strides = array<i32>} : memref<1x1x1024xf32, #tpu.memory_space<vmem>>, vector<1x1x1024xf32>,
    %c0_17 = arith.constant 0 : index
    %c0_18 = arith.constant 0 : index
    %c0_19 = arith.constant 0 : index
    %19 = vector.load %arg7[%c0_17, %c0_18, %c0_19] : memref<1x1x1024xf32, #tpu.memory_space<vmem>>, vector<1x1x1024xf32>
    %20 = arith.mulf %6, %6 : vector<16x1024xf32>
    %cst_20 = arith.constant dense<0.000000e+00> : vector<1024xf32>
    %21 = vector.multi_reduction <add>, %20, %cst_20 [0] : vector<16x1024xf32> to vector<1024xf32>
    %22 = vector.shape_cast %21 : vector<1024xf32> to vector<1x1024xf32>
    %23 = vector.shape_cast %22 : vector<1x1024xf32> to vector<1x1x1024xf32>
    %24 = arith.addf %19, %23 : vector<1x1x1024xf32>
    %c0_21 = arith.constant 0 : index
    %c0_22 = arith.constant 0 : index
    %c0_23 = arith.constant 0 : index
    %25 = vector.load %arg7[%c0_21, %c0_22, %c0_23] : memref<1x1x1024xf32, #tpu.memory_space<vmem>>, vector<1x1x1024xf32>
    tpu.vector_store %arg7[%c0_21, %c0_22, %c0_23], %24 {strides = array<i32>} : memref<1x1x1024xf32, #tpu.memory_space<vmem>>, vector<1x1x1024xf32>,
    return
  }
  func.func @transform_0(%arg0: i32, %arg1: i32) -> (i32, i32, i32) {
    %c0_i32 = arith.constant 0 : i32
    %c0_i32_0 = arith.constant 0 : i32
    return %arg0, %arg1, %c0_i32 : i32, i32, i32
  }
  func.func @transform_1(%arg0: i32, %arg1: i32) -> (i32, i32) {
    %c0_i32 = arith.constant 0 : i32
    %c0_i32_0 = arith.constant 0 : i32
    %c0_i32_1 = arith.constant 0 : i32
    return %c0_i32, %c0_i32_0 : i32, i32
  }
  func.func @transform_2(%arg0: i32, %arg1: i32) -> (i32, i32) {
    %c0_i32 = arith.constant 0 : i32
    %c0_i32_0 = arith.constant 0 : i32
    %c0_i32_1 = arith.constant 0 : i32
    return %c0_i32, %c0_i32_0 : i32, i32
  }
  func.func @transform_3(%arg0: i32, %arg1: i32) -> (i32, i32, i32) {
    %c0_i32 = arith.constant 0 : i32
    %c0_i32_0 = arith.constant 0 : i32
    return %arg0, %arg1, %c0_i32 : i32, i32, i32
  }
  func.func @transform_4(%arg0: i32, %arg1: i32) -> (i32, i32, i32) {
    %c0_i32 = arith.constant 0 : i32
    %c0_i32_0 = arith.constant 0 : i32
    %c0_i32_1 = arith.constant 0 : i32
    return %arg0, %c0_i32, %c0_i32_0 : i32, i32, i32
  }
  func.func @transform_5(%arg0: i32, %arg1: i32) -> (i32, i32, i32) {
    %c0_i32 = arith.constant 0 : i32
    %c0_i32_0 = arith.constant 0 : i32
    %c0_i32_1 = arith.constant 0 : i32
    return %arg0, %c0_i32, %c0_i32_0 : i32, i32, i32
  }
}

module attributes {stable_mosaic.version = 11 : i64} {
  func.func @_in_lrelu_kernel(%arg0: i32, %arg1: i32, %arg2: memref<1x16x1024xbf16, #tpu.memory_space<vmem>>, %arg3: memref<1x1x1024xf32, #tpu.memory_space<vmem>>, %arg4: memref<1x1x1024xf32, #tpu.memory_space<vmem>>, %arg5: memref<1x16x1024xbf16, #tpu.memory_space<vmem>>) attributes {dimension_semantics = [#tpu.dimension_semantics<parallel>, #tpu.dimension_semantics<parallel>], iteration_bounds = array<i64: 2, 1>, scalar_prefetch = 0 : i64, scratch_operands = 0 : i64, tpu.core_type = #tpu.core_type<tc>, window_params = [{transform_indices = @transform_0, window_bounds = array<i64: 1, 16, 1024>}, {transform_indices = @transform_1, window_bounds = array<i64: 1, 1, 1024>}, {transform_indices = @transform_2, window_bounds = array<i64: 1, 1, 1024>}, {transform_indices = @transform_3, window_bounds = array<i64: 1, 16, 1024>}]} {
    %c0 = arith.constant 0 : index
    %c0_0 = arith.constant 0 : index
    %c0_1 = arith.constant 0 : index
    %0 = vector.load %arg2[%c0, %c0_0, %c0_1] : memref<1x16x1024xbf16, #tpu.memory_space<vmem>>, vector<1x16x1024xbf16>
    %1 = vector.shape_cast %0 : vector<1x16x1024xbf16> to vector<16x1024xbf16>
    %2 = arith.extf %1 : vector<16x1024xbf16> to vector<16x1024xf32>
    %c0_2 = arith.constant 0 : index
    %c0_3 = arith.constant 0 : index
    %c0_4 = arith.constant 0 : index
    %3 = vector.load %arg3[%c0_2, %c0_3, %c0_4] : memref<1x1x1024xf32, #tpu.memory_space<vmem>>, vector<1x1x1024xf32>
    %4 = vector.shape_cast %3 : vector<1x1x1024xf32> to vector<1x1024xf32>
    %cst = arith.constant 1.562500e-02 : f32
    %5 = vector.broadcast %cst : f32 to vector<1x1024xf32>
    %6 = arith.mulf %4, %5 : vector<1x1024xf32>
    %c0_5 = arith.constant 0 : index
    %c0_6 = arith.constant 0 : index
    %c0_7 = arith.constant 0 : index
    %7 = vector.load %arg4[%c0_5, %c0_6, %c0_7] : memref<1x1x1024xf32, #tpu.memory_space<vmem>>, vector<1x1x1024xf32>
    %8 = vector.shape_cast %7 : vector<1x1x1024xf32> to vector<1x1024xf32>
    %cst_8 = arith.constant 1.562500e-02 : f32
    %9 = vector.broadcast %cst_8 : f32 to vector<1x1024xf32>
    %10 = arith.mulf %8, %9 : vector<1x1024xf32>
    %11 = arith.mulf %6, %6 : vector<1x1024xf32>
    %12 = arith.subf %10, %11 : vector<1x1024xf32>
    %cst_9 = arith.constant 0.000000e+00 : f32
    %13 = vector.broadcast %cst_9 : f32 to vector<1x1024xf32>
    %14 = arith.maximumf %12, %13 : vector<1x1024xf32>
    %15 = vector.broadcast %6 : vector<1x1024xf32> to vector<16x1024xf32>
    %16 = arith.subf %2, %15 : vector<16x1024xf32>
    %cst_10 = arith.constant 9.99999974E-6 : f32
    %17 = vector.broadcast %cst_10 : f32 to vector<1x1024xf32>
    %18 = arith.addf %14, %17 : vector<1x1024xf32>
    %19 = math.rsqrt %18 : vector<1x1024xf32>
    %20 = vector.broadcast %19 : vector<1x1024xf32> to vector<16x1024xf32>
    %21 = arith.mulf %16, %20 : vector<16x1024xf32>
    %cst_11 = arith.constant 0.000000e+00 : f32
    %22 = vector.broadcast %cst_11 : f32 to vector<16x1024xf32>
    %23 = arith.cmpf oge, %21, %22 : vector<16x1024xf32>
    %cst_12 = arith.constant 2.000000e-01 : f32
    %24 = vector.broadcast %cst_12 : f32 to vector<16x1024xf32>
    %25 = arith.mulf %24, %21 : vector<16x1024xf32>
    %26 = arith.select %23, %21, %25 : vector<16x1024xi1>, vector<16x1024xf32>
    %27 = vector.shape_cast %26 : vector<16x1024xf32> to vector<1x16x1024xf32>
    %28 = arith.truncf %27 : vector<1x16x1024xf32> to vector<1x16x1024xbf16>
    %c0_13 = arith.constant 0 : index
    %c0_14 = arith.constant 0 : index
    %c0_15 = arith.constant 0 : index
    %29 = vector.load %arg5[%c0_13, %c0_14, %c0_15] : memref<1x16x1024xbf16, #tpu.memory_space<vmem>>, vector<1x16x1024xbf16>
    tpu.vector_store %arg5[%c0_13, %c0_14, %c0_15], %28 {strides = array<i32>} : memref<1x16x1024xbf16, #tpu.memory_space<vmem>>, vector<1x16x1024xbf16>,
    return
  }
  func.func @transform_0(%arg0: i32, %arg1: i32) -> (i32, i32, i32) {
    %c0_i32 = arith.constant 0 : i32
    %c0_i32_0 = arith.constant 0 : i32
    return %arg0, %arg1, %c0_i32 : i32, i32, i32
  }
  func.func @transform_1(%arg0: i32, %arg1: i32) -> (i32, i32, i32) {
    %c0_i32 = arith.constant 0 : i32
    %c0_i32_0 = arith.constant 0 : i32
    %c0_i32_1 = arith.constant 0 : i32
    return %arg0, %c0_i32, %c0_i32_0 : i32, i32, i32
  }
  func.func @transform_2(%arg0: i32, %arg1: i32) -> (i32, i32, i32) {
    %c0_i32 = arith.constant 0 : i32
    %c0_i32_0 = arith.constant 0 : i32
    %c0_i32_1 = arith.constant 0 : i32
    return %arg0, %c0_i32, %c0_i32_0 : i32, i32, i32
  }
  func.func @transform_3(%arg0: i32, %arg1: i32) -> (i32, i32, i32) {
    %c0_i32 = arith.constant 0 : i32
    %c0_i32_0 = arith.constant 0 : i32
    return %arg0, %arg1, %c0_i32 : i32, i32, i32
  }
}

module attributes {stable_mosaic.version = 11 : i64} {
  func.func @_conv_bias_tanh_kernel(%arg0: i32, %arg1: i32, %arg2: memref<1x64x2304xbf16, #tpu.memory_space<vmem>>, %arg3: memref<2304x128xbf16, #tpu.memory_space<vmem>>, %arg4: memref<1x128xf32, #tpu.memory_space<vmem>>, %arg5: memref<1x64x128xf32, #tpu.memory_space<vmem>>) attributes {dimension_semantics = [#tpu.dimension_semantics<parallel>, #tpu.dimension_semantics<parallel>], iteration_bounds = array<i64: 2, 1>, scalar_prefetch = 0 : i64, scratch_operands = 0 : i64, tpu.core_type = #tpu.core_type<tc>, window_params = [{transform_indices = @transform_0, window_bounds = array<i64: 1, 64, 2304>}, {pipeline_mode = #tpu.pipeline_mode<synchronous>, transform_indices = @transform_1, window_bounds = array<i64: 2304, 128>}, {pipeline_mode = #tpu.pipeline_mode<synchronous>, transform_indices = @transform_2, window_bounds = array<i64: 1, 128>}, {transform_indices = @transform_3, window_bounds = array<i64: 1, 64, 128>}]} {
    %c0 = arith.constant 0 : index
    %c0_0 = arith.constant 0 : index
    %c0_1 = arith.constant 0 : index
    %0 = vector.load %arg2[%c0, %c0_0, %c0_1] : memref<1x64x2304xbf16, #tpu.memory_space<vmem>>, vector<1x64x2304xbf16>
    %1 = vector.shape_cast %0 : vector<1x64x2304xbf16> to vector<64x2304xbf16>
    %c0_2 = arith.constant 0 : index
    %c0_3 = arith.constant 0 : index
    %2 = vector.load %arg3[%c0_2, %c0_3] : memref<2304x128xbf16, #tpu.memory_space<vmem>>, vector<2304x128xbf16>
    %cst = arith.constant dense<0.000000e+00> : vector<64x128xf32>
    %3 = tpu.matmul %1, %2, %cst {dimension_numbers = #tpu.dot_dimension_numbers<[1], [0], [0], [1], [0, 0, 1, 1], [], []>} : vector<64x2304xbf16>, vector<2304x128xbf16>, vector<64x128xf32> -> vector<64x128xf32>
    %c0_4 = arith.constant 0 : index
    %c0_5 = arith.constant 0 : index
    %4 = vector.load %arg4[%c0_4, %c0_5] : memref<1x128xf32, #tpu.memory_space<vmem>>, vector<1x128xf32>
    %5 = vector.broadcast %4 : vector<1x128xf32> to vector<64x128xf32>
    %6 = arith.addf %3, %5 : vector<64x128xf32>
    %7 = math.tanh %6 : vector<64x128xf32>
    %8 = vector.shape_cast %7 : vector<64x128xf32> to vector<1x64x128xf32>
    %c0_6 = arith.constant 0 : index
    %c0_7 = arith.constant 0 : index
    %c0_8 = arith.constant 0 : index
    %9 = vector.load %arg5[%c0_6, %c0_7, %c0_8] : memref<1x64x128xf32, #tpu.memory_space<vmem>>, vector<1x64x128xf32>
    tpu.vector_store %arg5[%c0_6, %c0_7, %c0_8], %8 {strides = array<i32>} : memref<1x64x128xf32, #tpu.memory_space<vmem>>, vector<1x64x128xf32>,
    return
  }
  func.func @transform_0(%arg0: i32, %arg1: i32) -> (i32, i32, i32) {
    %c0_i32 = arith.constant 0 : i32
    %c0_i32_0 = arith.constant 0 : i32
    return %arg0, %arg1, %c0_i32 : i32, i32, i32
  }
  func.func @transform_1(%arg0: i32, %arg1: i32) -> (i32, i32) {
    %c0_i32 = arith.constant 0 : i32
    %c0_i32_0 = arith.constant 0 : i32
    %c0_i32_1 = arith.constant 0 : i32
    return %c0_i32, %c0_i32_0 : i32, i32
  }
  func.func @transform_2(%arg0: i32, %arg1: i32) -> (i32, i32) {
    %c0_i32 = arith.constant 0 : i32
    %c0_i32_0 = arith.constant 0 : i32
    %c0_i32_1 = arith.constant 0 : i32
    return %c0_i32, %c0_i32_0 : i32, i32
  }
  func.func @transform_3(%arg0: i32, %arg1: i32) -> (i32, i32, i32) {
    %c0_i32 = arith.constant 0 : i32
    %c0_i32_0 = arith.constant 0 : i32
    return %arg0, %arg1, %c0_i32 : i32, i32, i32
  }
}

module attributes {stable_mosaic.version = 11 : i64} {
  func.func @_region_pool_kernel(%arg0: i32, %arg1: memref<1x64x128xf32, #tpu.memory_space<vmem>>, %arg2: memref<1x64x8xf32, #tpu.memory_space<vmem>>, %arg3: memref<1x8x128xf32, #tpu.memory_space<vmem>>) attributes {dimension_semantics = [#tpu.dimension_semantics<parallel>], iteration_bounds = array<i64: 2>, scalar_prefetch = 0 : i64, scratch_operands = 0 : i64, tpu.core_type = #tpu.core_type<tc>, window_params = [{transform_indices = @transform_0, window_bounds = array<i64: 1, 64, 128>}, {transform_indices = @transform_1, window_bounds = array<i64: 1, 64, 8>}, {transform_indices = @transform_2, window_bounds = array<i64: 1, 8, 128>}]} {
    %c0 = arith.constant 0 : index
    %c0_0 = arith.constant 0 : index
    %c0_1 = arith.constant 0 : index
    %0 = vector.load %arg1[%c0, %c0_0, %c0_1] : memref<1x64x128xf32, #tpu.memory_space<vmem>>, vector<1x64x128xf32>
    %1 = vector.shape_cast %0 : vector<1x64x128xf32> to vector<64x128xf32>
    %c0_2 = arith.constant 0 : index
    %c0_3 = arith.constant 0 : index
    %c0_4 = arith.constant 0 : index
    %2 = vector.load %arg2[%c0_2, %c0_3, %c0_4] : memref<1x64x8xf32, #tpu.memory_space<vmem>>, vector<1x64x8xf32>
    %3 = vector.shape_cast %2 : vector<1x64x8xf32> to vector<64x8xf32>
    %cst = arith.constant dense<0.000000e+00> : vector<8x128xf32>
    %4 = tpu.matmul %3, %1, %cst {dimension_numbers = #tpu.dot_dimension_numbers<[0], [0], [1], [1], [0, 1, 1, 1], [], []>} : vector<64x8xf32>, vector<64x128xf32>, vector<8x128xf32> -> vector<8x128xf32>
    %cst_5 = arith.constant dense<0.000000e+00> : vector<8xf32>
    %5 = vector.multi_reduction <add>, %3, %cst_5 [0] : vector<64x8xf32> to vector<8xf32>
    %6 = vector.shape_cast %5 : vector<8xf32> to vector<8x1xf32>
    %cst_6 = arith.constant 1.000000e+00 : f32
    %7 = vector.broadcast %cst_6 : f32 to vector<8x1xf32>
    %8 = arith.maximumf %6, %7 : vector<8x1xf32>
    %9 = vector.broadcast %8 : vector<8x1xf32> to vector<8x128xf32>
    %10 = arith.divf %4, %9 : vector<8x128xf32>
    %cst_7 = arith.constant 0.000000e+00 : f32
    %11 = vector.broadcast %cst_7 : f32 to vector<8x1xf32>
    %12 = arith.cmpf ogt, %6, %11 : vector<8x1xf32>
    %cst_8 = arith.constant 0.000000e+00 : f32
    %13 = vector.shape_cast %12 : vector<8x1xi1> to vector<8x1xi1>
    %14 = vector.broadcast %13 : vector<8x1xi1> to vector<8x128xi1>
    %15 = vector.broadcast %cst_8 : f32 to vector<8x128xf32>
    %16 = arith.select %14, %10, %15 : vector<8x128xi1>, vector<8x128xf32>
    %17 = vector.shape_cast %16 : vector<8x128xf32> to vector<1x8x128xf32>
    %c0_9 = arith.constant 0 : index
    %c0_10 = arith.constant 0 : index
    %c0_11 = arith.constant 0 : index
    %18 = vector.load %arg3[%c0_9, %c0_10, %c0_11] : memref<1x8x128xf32, #tpu.memory_space<vmem>>, vector<1x8x128xf32>
    tpu.vector_store %arg3[%c0_9, %c0_10, %c0_11], %17 {strides = array<i32>} : memref<1x8x128xf32, #tpu.memory_space<vmem>>, vector<1x8x128xf32>,
    return
  }
  func.func @transform_0(%arg0: i32) -> (i32, i32, i32) {
    %c0_i32 = arith.constant 0 : i32
    %c0_i32_0 = arith.constant 0 : i32
    %c0_i32_1 = arith.constant 0 : i32
    return %arg0, %c0_i32, %c0_i32_0 : i32, i32, i32
  }
  func.func @transform_1(%arg0: i32) -> (i32, i32, i32) {
    %c0_i32 = arith.constant 0 : i32
    %c0_i32_0 = arith.constant 0 : i32
    %c0_i32_1 = arith.constant 0 : i32
    return %arg0, %c0_i32, %c0_i32_0 : i32, i32, i32
  }
  func.func @transform_2(%arg0: i32) -> (i32, i32, i32) {
    %c0_i32 = arith.constant 0 : i32
    %c0_i32_0 = arith.constant 0 : i32
    %c0_i32_1 = arith.constant 0 : i32
    return %arg0, %c0_i32, %c0_i32_0 : i32, i32, i32
  }
}

</mosaic_0001>

<llo_original>
// kernel: zencoder_forward.11
$region0: #{zencoder_forward.11}
  #allocation0 [shape = 'u32[]', space=smem, size = 0x4, offset = 0x4, fixed_abs, tag = 'smem constant byte address 0x4 - core index']
  #allocation1 [shape = 'u32[72,128]{1,0:T(1,128)}', space=vmem, size = 0x9000, scoped, tag = 'internal scratch']
  %s0 = inlined_call_operand.vmem [shape: bf16[2,256,128], index: 0, kind: input, shape index: {}]
  %s1 = inlined_call_operand.vmem [shape: f32[2,1,128], index: 1, kind: input, shape index: {}]
  %s2 = inlined_call_operand.vmem [shape: f32[2,1,128], index: 2, kind: input, shape index: {}]
  %s3 = inlined_call_operand.vmem [shape: bf16[2,256,128], index: 3, kind: output, shape index: {}]
  %s4 = sld [smem:[#allocation0]]
  $region45: #{zencoder_forward.11} parent=0
    _
  %s6 = ssub.s32 1, %s4
  %s7 = scalar_select 0, %s6, %s4
  loop: start=0, step=1, limit=4
  $region2: #{zencoder_forward.11} parent=0 // loop_pre_header
    _
  $region3: #{zencoder_forward.11} parent=0 // loop_header
    %s9 = sphi 0, %s13
    %p10 = scmp.ge.s32.totalorder %s9, 4
    %s16 = sphi 0, %s28
    %s17 = sphi 0, %s24
    %s18 = sphi 0, %s16
    %s19 = sphi 0, %s17
    %s20 = sphi 0, %s18
    %s21 = sphi 0, %s19
    %s33 = sphi 0, %s35
    %s36 = sphi 0, %s33
    %s37 = sphi 0, %s36
    %s53 = sphi 0, %s37
    %s59 = sphi 0, %s61
    %s62 = sphi 0, %s59
    %s63 = sphi 0, %s62
    %s79 = sphi 0, %s63
    %s85 = sphi 0, %s87
    %s88 = sphi 0, %s85
    %s89 = sphi 0, %s88
    %s105 = sphi 0, %s89
    %s113 = sphi 0, %s115
    %s116 = sphi 0, %s113
    %s117 = sphi 0, %s116
    %s133 = sphi 0, %s117
  $region4: #{zencoder_forward.11} parent=0 // loop_header_branch
    %12 = sbr.rel (%p10) target = $region8
  $region5: #{zencoder_forward.11} parent=0 // loop_body
    %s14 = ssub.s32 %s9, 1
    %s15 = ssub.s32 %s9, 2
    %s22 = sadd.s32 1, %s17
    %p23 = scmp.ge.s32.totalorder %s22, 1
    %s24 = scalar_select %p23, 0, %s22
    %s25 = sadd.s32 1, %s16
    %s26 = scalar_select %p23, %s25, %s16
    %p27 = scmp.ge.s32.totalorder %s26, 2
    %s28 = scalar_select %p27, 0, %s26
    %s29 = ssub.s32 %s16, %s28
    %s30 = ssub.s32 %s17, %s24
    %s31 = sor.u32 %s29, %s30
    %p32 = scmp.eq.s32.totalorder %s31, 0
    %s34 = sadd.s32 %s33, 1
    %s35 = scalar_select %p32, %s33, %s34
    %p38 = pneg %p32
    %p39 = scmp.eq.s32.totalorder %s9, 1
    %p40 = por %p38, %p39
    %p41 = scmp.ne.s32.totalorder %s33, %s36
    %p42 = scmp.eq.s32.totalorder %s9, 0
    %p43 = por %p41, %p42
    %p44 = scmp.ne.s32.totalorder %s33, %s36
    %p45 = scmp.eq.s32.totalorder %s14, 1
    %p46 = por %p44, %p45
    %p47 = scmp.ne.s32.totalorder %s36, %s37
    %p48 = scmp.eq.s32.totalorder %s14, 0
    %p49 = por %p47, %p48
    %p50 = scmp.ne.s32.totalorder %s36, %s37
    %p51 = scmp.eq.s32.totalorder %s15, 1
    %p52 = por %p50, %p51
    %p54 = scmp.ne.s32.totalorder %s37, %s53
    %p55 = scmp.eq.s32.totalorder %s15, 0
    %p56 = por %p54, %p55
    %s57 = ssub.s32 %s16, %s28
    %p58 = scmp.eq.s32.totalorder %s57, 0
    %s60 = sadd.s32 %s59, 1
    %s61 = scalar_select %p58, %s59, %s60
    %p64 = pneg %p58
    %p65 = scmp.eq.s32.totalorder %s9, 1
    %p66 = por %p64, %p65
    %p67 = scmp.ne.s32.totalorder %s59, %s62
    %p68 = scmp.eq.s32.totalorder %s9, 0
    %p69 = por %p67, %p68
    %p70 = scmp.ne.s32.totalorder %s59, %s62
    %p71 = scmp.eq.s32.totalorder %s14, 1
    %p72 = por %p70, %p71
    %p73 = scmp.ne.s32.totalorder %s62, %s63
    %p74 = scmp.eq.s32.totalorder %s14, 0
    %p75 = por %p73, %p74
    %p76 = scmp.ne.s32.totalorder %s62, %s63
    %p77 = scmp.eq.s32.totalorder %s15, 1
    %p78 = por %p76, %p77
    %p80 = scmp.ne.s32.totalorder %s63, %s79
    %p81 = scmp.eq.s32.totalorder %s15, 0
    %p82 = por %p80, %p81
    %s83 = ssub.s32 %s16, %s28
    %p84 = scmp.eq.s32.totalorder %s83, 0
    %s86 = sadd.s32 %s85, 1
    %s87 = scalar_select %p84, %s85, %s86
    %p90 = pneg %p84
    %p91 = scmp.eq.s32.totalorder %s9, 1
    %p92 = por %p90, %p91
    %p93 = scmp.ne.s32.totalorder %s85, %s88
    %p94 = scmp.eq.s32.totalorder %s9, 0
    %p95 = por %p93, %p94
    %p96 = scmp.ne.s32.totalorder %s85, %s88
    %p97 = scmp.eq.s32.totalorder %s14, 1
    %p98 = por %p96, %p97
    %p99 = scmp.ne.s32.totalorder %s88, %s89
    %p100 = scmp.eq.s32.totalorder %s14, 0
    %p101 = por %p99, %p100
    %p102 = scmp.ne.s32.totalorder %s88, %s89
    %p103 = scmp.eq.s32.totalorder %s15, 1
    %p104 = por %p102, %p103
    %p106 = scmp.ne.s32.totalorder %s89, %s105
    %p107 = scmp.eq.s32.totalorder %s15, 0
    %p108 = por %p106, %p107
    %s109 = ssub.s32 %s16, %s28
    %s110 = ssub.s32 %s17, %s24
    %s111 = sor.u32 %s109, %s110
    %p112 = scmp.eq.s32.totalorder %s111, 0
    %s114 = sadd.s32 %s113, 1
    %s115 = scalar_select %p112, %s113, %s114
    %p118 = pneg %p112
    %p119 = scmp.eq.s32.totalorder %s9, 1
    %p120 = por %p118, %p119
    %p121 = scmp.ne.s32.totalorder %s113, %s116
    %p122 = scmp.eq.s32.totalorder %s9, 0
    %p123 = por %p121, %p122
    %p124 = scmp.ne.s32.totalorder %s113, %s116
    %p125 = scmp.eq.s32.totalorder %s14, 1
    %p126 = por %p124, %p125
    %p127 = scmp.ne.s32.totalorder %s116, %s117
    %p128 = scmp.eq.s32.totalorder %s14, 0
    %p129 = por %p127, %p128
    %p130 = scmp.ne.s32.totalorder %s116, %s117
    %p131 = scmp.eq.s32.totalorder %s15, 1
    %p132 = por %p130, %p131
    %p134 = scmp.ne.s32.totalorder %s117, %s133
    %p135 = scmp.eq.s32.totalorder %s15, 0
    %p136 = por %p134, %p135
    %p137 = scmp.le.s32.totalorder 1, %s9
    %p138 = scmp.lt.s32.totalorder %s9, 3
    %p139 = pnand %p137, %p138
    %p140 = pneg %p139
    // Predicated region
    $region9: #{zencoder_forward.11} parent=5 // pred_check
      _
    $region10: #{zencoder_forward.11} parent=5 // pred_check_branch
      %142 = sbr.rel (%p139) target = $region12
    $region11: #{zencoder_forward.11} parent=5 // pred_region
      %s143 = ssub.s32 %s9, 1
    $region12: #{zencoder_forward.11} parent=5 // pred_fallthru
      _
    %p144 = scmp.lt.s32.totalorder %s9, 2
    // Predicated region
    $region13: #{zencoder_forward.11} parent=5 // pred_check
      %p145 = pneg %p144
    $region14: #{zencoder_forward.11} parent=5 // pred_check_branch
      %147 = sbr.rel (%p145) target = $region16
    $region15: #{zencoder_forward.11} parent=5 // pred_region
      // Predicated region
      $region17: #{zencoder_forward.11} parent=15 // pred_check
        %p148 = pneg %p43
      $region18: #{zencoder_forward.11} parent=15 // pred_check_branch
        %150 = sbr.rel (%p148) target = $region20
      $region19: #{zencoder_forward.11} parent=15 // pred_region
        %s151 = smul.u32 32, %s17
        %p152 = scmp.lt.s32.totalorder %s16, 1
        %s153 = scalar_select %p152, %s16, 1
        %p154 = scmp.lt.s32.totalorder %s151, 31
        %s155 = scalar_select %p154, %s151, 31
        %s156 = smul.addr %s153, 32
        %s157 = sadd.s32 %s155, %s156
        %s158 = smul.addr %s157, 4
        %s159 = scalar_lea.vmem %s0, %s158
        %s160 = smul.u32 32, %s17
      $region20: #{zencoder_forward.11} parent=15 // pred_fallthru
        _
      // Predicated region
      $region21: #{zencoder_forward.11} parent=15 // pred_check
        %p161 = pneg %p69
      $region22: #{zencoder_forward.11} parent=15 // pred_check_branch
        %163 = sbr.rel (%p161) target = $region24
      $region23: #{zencoder_forward.11} parent=15 // pred_region
        %p164 = scmp.lt.s32.totalorder %s16, 1
        %s165 = scalar_select %p164, %s16, 1
        %s166 = scalar_lea.vmem %s1, %s165
      $region24: #{zencoder_forward.11} parent=15 // pred_fallthru
        _
      // Predicated region
      $region25: #{zencoder_forward.11} parent=15 // pred_check
        %p167 = pneg %p95
      $region26: #{zencoder_forward.11} parent=15 // pred_check_branch
        %169 = sbr.rel (%p167) target = $region28
      $region27: #{zencoder_forward.11} parent=15 // pred_region
        %p170 = scmp.lt.s32.totalorder %s16, 1
        %s171 = scalar_select %p170, %s16, 1
        %s172 = scalar_lea.vmem %s2, %s171
      $region28: #{zencoder_forward.11} parent=15 // pred_fallthru
        _
    $region16: #{zencoder_forward.11} parent=5 // pred_fallthru
      _
    %p173 = scmp.le.s32.totalorder 1, %s9
    %p174 = scmp.lt.s32.totalorder %s9, 3
    %p175 = pnand %p173, %p174
    %p176 = pneg %p175
    // Predicated region
    $region29: #{zencoder_forward.11} parent=5 // pred_check
      _
    $region30: #{zencoder_forward.11} parent=5 // pred_check_branch
      %178 = sbr.rel (%p175) target = $region32
    $region31: #{zencoder_forward.11} parent=5 // pred_region
      %s179 = ssub.s32 %s9, 1
      %s180 = smul.u32 32, %s19
      %p181 = scmp.lt.s32.totalorder %s18, 1
      %s182 = scalar_select %p181, %s18, 1
      %p183 = scmp.lt.s32.totalorder %s180, 31
      %s184 = scalar_select %p183, %s180, 31
      %s185 = smul.addr %s182, 32
      %s186 = sadd.s32 %s184, %s185
      %s187 = smul.addr %s186, 4
      %s188 = scalar_lea.vmem %s0, %s187
      %p189 = pneg %p49
      %p190 = pneg %p46
      %p191 = scmp.lt.s32.totalorder %s18, 1
      %s192 = scalar_select %p191, %s18, 1
      %s193 = scalar_lea.vmem %s1, %s192
      %p194 = pneg %p75
      %p195 = pneg %p72
      %p196 = scmp.lt.s32.totalorder %s18, 1
      %s197 = scalar_select %p196, %s18, 1
      %s198 = scalar_lea.vmem %s2, %s197
      %p199 = pneg %p101
      %p200 = pneg %p98
      %p201 = pneg %p129
      %p202 = pneg %p126
      %s203 = smul.u32 32, %s19
      %p204 = scmp.lt.s32.totalorder %s18, 1
      %s205 = scalar_select %p204, %s18, 1
      %p206 = scmp.lt.s32.totalorder %s203, 31
      %s207 = scalar_select %p206, %s203, 31
      %s208 = smul.addr %s205, 32
      %s209 = sadd.s32 %s207, %s208
      %s210 = smul.addr %s209, 4
      %s211 = scalar_lea.vmem %s3, %s210
      %s212 = smul.u32 32, %s19
      %p213 = scmp.lt.s32.totalorder %s18, 1
      %s214 = scalar_select %p213, %s18, 1
      %p215 = scmp.lt.s32.totalorder %s212, 31
      %s216 = scalar_select %p215, %s212, 31
      %s217 = smul.addr %s214, 32
      %s218 = sadd.s32 %s216, %s217
      %s219 = smul.addr %s218, 4
      %s220 = scalar_lea.vmem %s0, %s219
      %s221 = smul.u32 32, %s19
      %p222 = scmp.lt.s32.totalorder %s18, 1
      %s223 = scalar_select %p222, %s18, 1
      %s224 = scalar_lea.vmem %s1, %s223
      %p225 = scmp.lt.s32.totalorder %s18, 1
      %s226 = scalar_select %p225, %s18, 1
      %s227 = scalar_lea.vmem %s2, %s226
      %s228 = smul.u32 32, %s19
      %p229 = scmp.lt.s32.totalorder %s18, 1
      %s230 = scalar_select %p229, %s18, 1
      %p231 = scmp.lt.s32.totalorder %s228, 31
      %s232 = scalar_select %p231, %s228, 31
      %s233 = smul.addr %s230, 32
      %s234 = sadd.s32 %s232, %s233
      %s235 = smul.addr %s234, 4
      %s236 = scalar_lea.vmem %s3, %s235
      %s237 = smul.u32 32, %s19
      %v238 = vld [vmem:[%s220] sm:$0xf]
      %v239 = vld [vmem:[%s220 + $0x4] sm:$0xf]
      %v240 = vld [vmem:[%s220 + $0x8] sm:$0xf]
      %v241 = vld [vmem:[%s220 + $0xc] sm:$0xf]
      %v242 = vld [vmem:[%s220 + $0x10] sm:$0xf]
      %v243 = vld [vmem:[%s220 + $0x14] sm:$0xf]
      %v244 = vld [vmem:[%s220 + $0x18] sm:$0xf]
      %v245 = vld [vmem:[%s220 + $0x1c] sm:$0xf]
      %v246 = vld [vmem:[%s220 + $0x20] sm:$0xf]
      %v247 = vld [vmem:[%s220 + $0x24] sm:$0xf]
      %v248 = vld [vmem:[%s220 + $0x28] sm:$0xf]
      %v249 = vld [vmem:[%s220 + $0x2c] sm:$0xf]
      %v250 = vld [vmem:[%s220 + $0x30] sm:$0xf]
      %v251 = vld [vmem:[%s220 + $0x34] sm:$0xf]
      %v252 = vld [vmem:[%s220 + $0x38] sm:$0xf]
      %v253 = vld [vmem:[%s220 + $0x3c] sm:$0xf]
      %v254 = vld [vmem:[%s220 + $0x40] sm:$0xf]
      %v255 = vld [vmem:[%s220 + $0x44] sm:$0xf]
      %v256 = vld [vmem:[%s220 + $0x48] sm:$0xf]
      %v257 = vld [vmem:[%s220 + $0x4c] sm:$0xf]
      %v258 = vld [vmem:[%s220 + $0x50] sm:$0xf]
      %v259 = vld [vmem:[%s220 + $0x54] sm:$0xf]
      %v260 = vld [vmem:[%s220 + $0x58] sm:$0xf]
      %v261 = vld [vmem:[%s220 + $0x5c] sm:$0xf]
      %v262 = vld [vmem:[%s220 + $0x60] sm:$0xf]
      %v263 = vld [vmem:[%s220 + $0x64] sm:$0xf]
      %v264 = vld [vmem:[%s220 + $0x68] sm:$0xf]
      %v265 = vld [vmem:[%s220 + $0x6c] sm:$0xf]
      %v266 = vld [vmem:[%s220 + $0x70] sm:$0xf]
      %v267 = vld [vmem:[%s220 + $0x74] sm:$0xf]
      %v268 = vld [vmem:[%s220 + $0x78] sm:$0xf]
      %v269 = vld [vmem:[%s220 + $0x7c] sm:$0xf]
      %v270 = vunpack.c.l.bf16 %v238
      %v271 = vunpack.c.l.bf16 %v239
      %v272 = vunpack.c.l.bf16 %v240
      %v273 = vunpack.c.l.bf16 %v241
      %v274 = vunpack.c.l.bf16 %v242
      %v275 = vunpack.c.l.bf16 %v243
      %v276 = vunpack.c.l.bf16 %v244
      %v277 = vunpack.c.l.bf16 %v245
      %v278 = vunpack.c.l.bf16 %v246
      %v279 = vunpack.c.l.bf16 %v247
      %v280 = vunpack.c.l.bf16 %v248
      %v281 = vunpack.c.l.bf16 %v249
      %v282 = vunpack.c.l.bf16 %v250
      %v283 = vunpack.c.l.bf16 %v251
      %v284 = vunpack.c.l.bf16 %v252
      %v285 = vunpack.c.l.bf16 %v253
      %v286 = vunpack.c.l.bf16 %v254
      %v287 = vunpack.c.l.bf16 %v255
      %v288 = vunpack.c.l.bf16 %v256
      %v289 = vunpack.c.l.bf16 %v257
      %v290 = vunpack.c.l.bf16 %v258
      %v291 = vunpack.c.l.bf16 %v259
      %v292 = vunpack.c.l.bf16 %v260
      %v293 = vunpack.c.l.bf16 %v261
      %v294 = vunpack.c.l.bf16 %v262
      %v295 = vunpack.c.l.bf16 %v263
      %v296 = vunpack.c.l.bf16 %v264
      %v297 = vunpack.c.l.bf16 %v265
      %v298 = vunpack.c.l.bf16 %v266
      %v299 = vunpack.c.l.bf16 %v267
      %v300 = vunpack.c.l.bf16 %v268
      %v301 = vunpack.c.l.bf16 %v269
      %v302 = vld [vmem:[%s224] sm:$0x1]
      %v303 = vmul.f32 %v302, 0.00390625
      %v304 = vld [vmem:[%s227] sm:$0x1]
      %v305 = vmul.f32 %v304, 0.00390625
      %v306 = vmul.f32 %v303, %v303
      %v307 = vsub.f32 %v305, %v306
      %v308 = vmax.f32 %v307, 0.0
      %v310 = vperm.slane %v303, 0
      %v312 = vsub.f32 %v270, %v310
      %v313 = vsub.f32 %v271, %v310
      %v314 = vsub.f32 %v272, %v310
      %v315 = vsub.f32 %v273, %v310
      %v316 = vsub.f32 %v274, %v310
      %v317 = vsub.f32 %v275, %v310
      %v318 = vsub.f32 %v276, %v310
      %v319 = vsub.f32 %v277, %v310
      %v320 = vsub.f32 %v278, %v310
      %v321 = vsub.f32 %v279, %v310
      %v322 = vsub.f32 %v280, %v310
      %v323 = vsub.f32 %v281, %v310
      %v324 = vsub.f32 %v282, %v310
      %v325 = vsub.f32 %v283, %v310
      %v326 = vsub.f32 %v284, %v310
      %v327 = vsub.f32 %v285, %v310
      %v328 = vsub.f32 %v286, %v310
      %v329 = vsub.f32 %v287, %v310
      %v330 = vsub.f32 %v288, %v310
      %v331 = vsub.f32 %v289, %v310
      %v332 = vsub.f32 %v290, %v310
      %v333 = vsub.f32 %v291, %v310
      %v334 = vsub.f32 %v292, %v310
      %v335 = vsub.f32 %v293, %v310
      %v336 = vsub.f32 %v294, %v310
      %v337 = vsub.f32 %v295, %v310
      %v338 = vsub.f32 %v296, %v310
      %v339 = vsub.f32 %v297, %v310
      %v340 = vsub.f32 %v298, %v310
      %v341 = vsub.f32 %v299, %v310
      %v342 = vsub.f32 %v300, %v310
      %v343 = vsub.f32 %v301, %v310
      %v344 = vadd.f32 %v308, 1e-05
      %v345 = vrsqrt.pop %v344
      %v346 = vmul.f32 %v345, %v344
      %v347 = vmul.f32 %v346, %v345
      %v348 = vmul.f32 0.5, %v347
      %v349 = vsub.f32 1.5, %v348
      %v350 = vmul.f32 %v345, %v349
      %vm351 = vweird.f32 %v344
      %vm352 = vweird.f32 %v345
      %vm353 = vmor %vm351, %vm352
      %v354 = vsel %vm353, %v345, %v350
      %v356 = vperm.slane %v354, 0
      %v358 = vmul.f32 %v312, %v356
      %v359 = vmul.f32 %v313, %v356
      %v360 = vmul.f32 %v314, %v356
      %v361 = vmul.f32 %v315, %v356
      %v362 = vmul.f32 %v316, %v356
      %v363 = vmul.f32 %v317, %v356
      %v364 = vmul.f32 %v318, %v356
      %v365 = vmul.f32 %v319, %v356
      %v366 = vmul.f32 %v320, %v356
      %v367 = vmul.f32 %v321, %v356
      %v368 = vmul.f32 %v322, %v356
      %v369 = vmul.f32 %v323, %v356
      %v370 = vmul.f32 %v324, %v356
      %v371 = vmul.f32 %v325, %v356
      %v372 = vmul.f32 %v326, %v356
      %v373 = vmul.f32 %v327, %v356
      %v374 = vmul.f32 %v328, %v356
      %v375 = vmul.f32 %v329, %v356
      %v376 = vmul.f32 %v330, %v356
      %v377 = vmul.f32 %v331, %v356
      %v378 = vmul.f32 %v332, %v356
      %v379 = vmul.f32 %v333, %v356
      %v380 = vmul.f32 %v334, %v356
      %v381 = vmul.f32 %v335, %v356
      %v382 = vmul.f32 %v336, %v356
      %v383 = vmul.f32 %v337, %v356
      %v384 = vmul.f32 %v338, %v356
      %v385 = vmul.f32 %v339, %v356
      %v386 = vmul.f32 %v340, %v356
      %v387 = vmul.f32 %v341, %v356
      %v388 = vmul.f32 %v342, %v356
      %v389 = vmul.f32 %v343, %v356
      %vm390 = vcmp.ge.f32.partialorder %v358, 0.0
      %vm391 = vcmp.ge.f32.partialorder %v359, 0.0
      %vm392 = vcmp.ge.f32.partialorder %v360, 0.0
      %vm393 = vcmp.ge.f32.partialorder %v361, 0.0
      %vm394 = vcmp.ge.f32.partialorder %v362, 0.0
      %vm395 = vcmp.ge.f32.partialorder %v363, 0.0
      %vm396 = vcmp.ge.f32.partialorder %v364, 0.0
      %vm397 = vcmp.ge.f32.partialorder %v365, 0.0
      %vm398 = vcmp.ge.f32.partialorder %v366, 0.0
      %vm399 = vcmp.ge.f32.partialorder %v367, 0.0
      %vm400 = vcmp.ge.f32.partialorder %v368, 0.0
      %vm401 = vcmp.ge.f32.partialorder %v369, 0.0
      %vm402 = vcmp.ge.f32.partialorder %v370, 0.0
      %vm403 = vcmp.ge.f32.partialorder %v371, 0.0
      %vm404 = vcmp.ge.f32.partialorder %v372, 0.0
      %vm405 = vcmp.ge.f32.partialorder %v373, 0.0
      %vm406 = vcmp.ge.f32.partialorder %v374, 0.0
      %vm407 = vcmp.ge.f32.partialorder %v375, 0.0
      %vm408 = vcmp.ge.f32.partialorder %v376, 0.0
      %vm409 = vcmp.ge.f32.partialorder %v377, 0.0
      %vm410 = vcmp.ge.f32.partialorder %v378, 0.0
      %vm411 = vcmp.ge.f32.partialorder %v379, 0.0
      %vm412 = vcmp.ge.f32.partialorder %v380, 0.0
      %vm413 = vcmp.ge.f32.partialorder %v381, 0.0
      %vm414 = vcmp.ge.f32.partialorder %v382, 0.0
      %vm415 = vcmp.ge.f32.partialorder %v383, 0.0
      %vm416 = vcmp.ge.f32.partialorder %v384, 0.0
      %vm417 = vcmp.ge.f32.partialorder %v385, 0.0
      %vm418 = vcmp.ge.f32.partialorder %v386, 0.0
      %vm419 = vcmp.ge.f32.partialorder %v387, 0.0
      %vm420 = vcmp.ge.f32.partialorder %v388, 0.0
      %vm421 = vcmp.ge.f32.partialorder %v389, 0.0
      %v422 = vmul.f32 %v358, 0.2
      %v423 = vmul.f32 %v359, 0.2
      %v424 = vmul.f32 %v360, 0.2
      %v425 = vmul.f32 %v361, 0.2
      %v426 = vmul.f32 %v362, 0.2
      %v427 = vmul.f32 %v363, 0.2
      %v428 = vmul.f32 %v364, 0.2
      %v429 = vmul.f32 %v365, 0.2
      %v430 = vmul.f32 %v366, 0.2
      %v431 = vmul.f32 %v367, 0.2
      %v432 = vmul.f32 %v368, 0.2
      %v433 = vmul.f32 %v369, 0.2
      %v434 = vmul.f32 %v370, 0.2
      %v435 = vmul.f32 %v371, 0.2
      %v436 = vmul.f32 %v372, 0.2
      %v437 = vmul.f32 %v373, 0.2
      %v438 = vmul.f32 %v374, 0.2
      %v439 = vmul.f32 %v375, 0.2
      %v440 = vmul.f32 %v376, 0.2
      %v441 = vmul.f32 %v377, 0.2
      %v442 = vmul.f32 %v378, 0.2
      %v443 = vmul.f32 %v379, 0.2
      %v444 = vmul.f32 %v380, 0.2
      %v445 = vmul.f32 %v381, 0.2
      %v446 = vmul.f32 %v382, 0.2
      %v447 = vmul.f32 %v383, 0.2
      %v448 = vmul.f32 %v384, 0.2
      %v449 = vmul.f32 %v385, 0.2
      %v450 = vmul.f32 %v386, 0.2
      %v451 = vmul.f32 %v387, 0.2
      %v452 = vmul.f32 %v388, 0.2
      %v453 = vmul.f32 %v389, 0.2
      %v454 = vsel %vm390, %v358, %v422
      %v455 = vsel %vm391, %v359, %v423
      %v456 = vsel %vm392, %v360, %v424
      %v457 = vsel %vm393, %v361, %v425
      %v458 = vsel %vm394, %v362, %v426
      %v459 = vsel %vm395, %v363, %v427
      %v460 = vsel %vm396, %v364, %v428
      %v461 = vsel %vm397, %v365, %v429
      %v462 = vsel %vm398, %v366, %v430
      %v463 = vsel %vm399, %v367, %v431
      %v464 = vsel %vm400, %v368, %v432
      %v465 = vsel %vm401, %v369, %v433
      %v466 = vsel %vm402, %v370, %v434
      %v467 = vsel %vm403, %v371, %v435
      %v468 = vsel %vm404, %v372, %v436
      %v469 = vsel %vm405, %v373, %v437
      %v470 = vsel %vm406, %v374, %v438
      %v471 = vsel %vm407, %v375, %v439
      %v472 = vsel %vm408, %v376, %v440
      %v473 = vsel %vm409, %v377, %v441
      %v474 = vsel %vm410, %v378, %v442
      %v475 = vsel %vm411, %v379, %v443
      %v476 = vsel %vm412, %v380, %v444
      %v477 = vsel %vm413, %v381, %v445
      %v478 = vsel %vm414, %v382, %v446
      %v479 = vsel %vm415, %v383, %v447
      %v480 = vsel %vm416, %v384, %v448
      %v481 = vsel %vm417, %v385, %v449
      %v482 = vsel %vm418, %v386, %v450
      %v483 = vsel %vm419, %v387, %v451
      %v484 = vsel %vm420, %v388, %v452
      %v485 = vsel %vm421, %v389, %v453
      %v486 = vpack.c.bf16 %v454, %v454
      %v487 = vpack.c.bf16 %v455, %v455
      %v488 = vpack.c.bf16 %v456, %v456
      %v489 = vpack.c.bf16 %v457, %v457
      %v490 = vpack.c.bf16 %v458, %v458
      %v491 = vpack.c.bf16 %v459, %v459
      %v492 = vpack.c.bf16 %v460, %v460
      %v493 = vpack.c.bf16 %v461, %v461
      %v494 = vpack.c.bf16 %v462, %v462
      %v495 = vpack.c.bf16 %v463, %v463
      %v496 = vpack.c.bf16 %v464, %v464
      %v497 = vpack.c.bf16 %v465, %v465
      %v498 = vpack.c.bf16 %v466, %v466
      %v499 = vpack.c.bf16 %v467, %v467
      %v500 = vpack.c.bf16 %v468, %v468
      %v501 = vpack.c.bf16 %v469, %v469
      %v502 = vpack.c.bf16 %v470, %v470
      %v503 = vpack.c.bf16 %v471, %v471
      %v504 = vpack.c.bf16 %v472, %v472
      %v505 = vpack.c.bf16 %v473, %v473
      %v506 = vpack.c.bf16 %v474, %v474
      %v507 = vpack.c.bf16 %v475, %v475
      %v508 = vpack.c.bf16 %v476, %v476
      %v509 = vpack.c.bf16 %v477, %v477
      %v510 = vpack.c.bf16 %v478, %v478
      %v511 = vpack.c.bf16 %v479, %v479
      %v512 = vpack.c.bf16 %v480, %v480
      %v513 = vpack.c.bf16 %v481, %v481
      %v514 = vpack.c.bf16 %v482, %v482
      %v515 = vpack.c.bf16 %v483, %v483
      %v516 = vpack.c.bf16 %v484, %v484
      %v517 = vpack.c.bf16 %v485, %v485
      %518 = vst [vmem:[%s236] sm:$0xf] %v486
      %519 = vst [vmem:[%s236 + $0x4] sm:$0xf] %v487
      %520 = vst [vmem:[%s236 + $0x8] sm:$0xf] %v488
      %521 = vst [vmem:[%s236 + $0xc] sm:$0xf] %v489
      %522 = vst [vmem:[%s236 + $0x10] sm:$0xf] %v490
      %523 = vst [vmem:[%s236 + $0x14] sm:$0xf] %v491
      %524 = vst [vmem:[%s236 + $0x18] sm:$0xf] %v492
      %525 = vst [vmem:[%s236 + $0x1c] sm:$0xf] %v493
      %526 = vst [vmem:[%s236 + $0x20] sm:$0xf] %v494
      %527 = vst [vmem:[%s236 + $0x24] sm:$0xf] %v495
      %528 = vst [vmem:[%s236 + $0x28] sm:$0xf] %v496
      %529 = vst [vmem:[%s236 + $0x2c] sm:$0xf] %v497
      %530 = vst [vmem:[%s236 + $0x30] sm:$0xf] %v498
      %531 = vst [vmem:[%s236 + $0x34] sm:$0xf] %v499
      %532 = vst [vmem:[%s236 + $0x38] sm:$0xf] %v500
      %533 = vst [vmem:[%s236 + $0x3c] sm:$0xf] %v501
      %534 = vst [vmem:[%s236 + $0x40] sm:$0xf] %v502
      %535 = vst [vmem:[%s236 + $0x44] sm:$0xf] %v503
      %536 = vst [vmem:[%s236 + $0x48] sm:$0xf] %v504
      %537 = vst [vmem:[%s236 + $0x4c] sm:$0xf] %v505
      %538 = vst [vmem:[%s236 + $0x50] sm:$0xf] %v506
      %539 = vst [vmem:[%s236 + $0x54] sm:$0xf] %v507
      %540 = vst [vmem:[%s236 + $0x58] sm:$0xf] %v508
      %541 = vst [vmem:[%s236 + $0x5c] sm:$0xf] %v509
      %542 = vst [vmem:[%s236 + $0x60] sm:$0xf] %v510
      %543 = vst [vmem:[%s236 + $0x64] sm:$0xf] %v511
      %544 = vst [vmem:[%s236 + $0x68] sm:$0xf] %v512
      %545 = vst [vmem:[%s236 + $0x6c] sm:$0xf] %v513
      %546 = vst [vmem:[%s236 + $0x70] sm:$0xf] %v514
      %547 = vst [vmem:[%s236 + $0x74] sm:$0xf] %v515
      %548 = vst [vmem:[%s236 + $0x78] sm:$0xf] %v516
      %549 = vst [vmem:[%s236 + $0x7c] sm:$0xf] %v517
      %s550 = smul.u32 32, %s19
      %p551 = scmp.lt.s32.totalorder %s18, 1
      %s552 = scalar_select %p551, %s18, 1
      %p553 = scmp.lt.s32.totalorder %s550, 31
      %s554 = scalar_select %p553, %s550, 31
      %s555 = smul.addr %s552, 32
      %s556 = sadd.s32 %s554, %s555
      %s557 = smul.addr %s556, 4
      %s558 = scalar_lea.vmem %s3, %s557
      // Predicated region
      $region33: #{zencoder_forward.11} parent=31 // pred_check
        %p559 = pneg %p126
      $region34: #{zencoder_forward.11} parent=31 // pred_check_branch
        %561 = sbr.rel (%p559) target = $region36
      $region35: #{zencoder_forward.11} parent=31 // pred_region
        %s562 = smul.u32 32, %s19
      $region36: #{zencoder_forward.11} parent=31 // pred_fallthru
        _
    $region32: #{zencoder_forward.11} parent=5 // pred_fallthru
      _
    %p563 = scmp.le.s32.totalorder 2, %s9
    // Predicated region
    $region37: #{zencoder_forward.11} parent=5 // pred_check
      %p564 = pneg %p563
    $region38: #{zencoder_forward.11} parent=5 // pred_check_branch
      %566 = sbr.rel (%p564) target = $region40
    $region39: #{zencoder_forward.11} parent=5 // pred_region
      %s567 = ssub.s32 %s9, 2
      // Predicated region
      $region41: #{zencoder_forward.11} parent=39 // pred_check
        %p568 = pneg %p132
      $region42: #{zencoder_forward.11} parent=39 // pred_check_branch
        %570 = sbr.rel (%p568) target = $region44
      $region43: #{zencoder_forward.11} parent=39 // pred_region
        %s571 = smul.u32 32, %s21
        %p572 = scmp.lt.s32.totalorder %s20, 1
        %s573 = scalar_select %p572, %s20, 1
        %p574 = scmp.lt.s32.totalorder %s571, 31
        %s575 = scalar_select %p574, %s571, 31
        %s576 = smul.addr %s573, 32
        %s577 = sadd.s32 %s575, %s576
        %s578 = smul.addr %s577, 4
        %s579 = scalar_lea.vmem %s3, %s578
      $region44: #{zencoder_forward.11} parent=39 // pred_fallthru
        _
    $region40: #{zencoder_forward.11} parent=5 // pred_fallthru
      _
  $region6: #{zencoder_forward.11} parent=0 // loop_footer
    %s13 = sadd.s32 1, %s9
  $region7: #{zencoder_forward.11} parent=0 // loop_footer_branch
    %8 = sbr.rel target = $region3
  $region8: #{zencoder_forward.11} parent=0 // loop_exit
    _

// kernel: zencoder_forward.10
$region0: #{zencoder_forward.10}
  #allocation0 [shape = 'u32[]', space=smem, size = 0x4, offset = 0x4, fixed_abs, tag = 'smem constant byte address 0x4 - core index']
  #allocation1 [shape = 'u32[72,128]{1,0:T(1,128)}', space=vmem, size = 0x9000, scoped, tag = 'internal scratch']
  %s0 = inlined_call_operand.vmem [shape: bf16[2,256,36], index: 0, kind: input, shape index: {}]
  %s1 = inlined_call_operand.vmem [shape: bf16[36,128], index: 1, kind: input, shape index: {}]
  %s2 = inlined_call_operand.vmem [shape: f32[1,128], index: 2, kind: input, shape index: {}]
  %s3 = inlined_call_operand.vmem [shape: bf16[2,256,128], index: 3, kind: output, shape index: {0}]
  %s4 = inlined_call_operand.vmem [shape: f32[2,1,128], index: 4, kind: output, shape index: {1}]
  %s5 = inlined_call_operand.vmem [shape: f32[2,1,128], index: 5, kind: output, shape index: {2}]
  %6 = xla_tuple %s3, %s4, %s5
  %s7 = sld [smem:[#allocation0]]
  $region65: #{zencoder_forward.10} parent=0
    _
  %s9 = ssub.s32 1, %s7
  %s10 = scalar_select 0, %s9, %s7
  loop: start=0, step=1, limit=4
  $region2: #{zencoder_forward.10} parent=0 // loop_pre_header
    _
  $region3: #{zencoder_forward.10} parent=0 // loop_header
    %s12 = sphi 0, %s16
    %p13 = scmp.ge.s32.totalorder %s12, 4
    %s19 = sphi 0, %s31
    %s20 = sphi 0, %s27
    %s21 = sphi 0, %s19
    %s22 = sphi 0, %s20
    %s23 = sphi 0, %s21
    %s24 = sphi 0, %s22
    %s36 = sphi 0, %s38
    %s39 = sphi 0, %s36
    %s40 = sphi 0, %s39
    %s56 = sphi 0, %s40
    %s60 = sphi 0, %s60
    %s62 = sphi 0, %s60
    %s63 = sphi 0, %s62
    %s77 = sphi 0, %s63
    %s81 = sphi 0, %s81
    %s83 = sphi 0, %s81
    %s84 = sphi 0, %s83
    %s98 = sphi 0, %s84
    %s106 = sphi 0, %s108
    %s109 = sphi 0, %s106
    %s110 = sphi 0, %s109
    %s126 = sphi 0, %s110
    %s132 = sphi 0, %s134
    %s135 = sphi 0, %s132
    %s136 = sphi 0, %s135
    %s152 = sphi 0, %s136
    %s158 = sphi 0, %s160
    %s161 = sphi 0, %s158
    %s162 = sphi 0, %s161
    %s178 = sphi 0, %s162
  $region4: #{zencoder_forward.10} parent=0 // loop_header_branch
    %15 = sbr.rel (%p13) target = $region8
  $region5: #{zencoder_forward.10} parent=0 // loop_body
    %s17 = ssub.s32 %s12, 1
    %s18 = ssub.s32 %s12, 2
    %s25 = sadd.s32 1, %s20
    %p26 = scmp.ge.s32.totalorder %s25, 1
    %s27 = scalar_select %p26, 0, %s25
    %s28 = sadd.s32 1, %s19
    %s29 = scalar_select %p26, %s28, %s19
    %p30 = scmp.ge.s32.totalorder %s29, 2
    %s31 = scalar_select %p30, 0, %s29
    %s32 = ssub.s32 %s19, %s31
    %s33 = ssub.s32 %s20, %s27
    %s34 = sor.u32 %s32, %s33
    %p35 = scmp.eq.s32.totalorder %s34, 0
    %s37 = sadd.s32 %s36, 1
    %s38 = scalar_select %p35, %s36, %s37
    %p41 = pneg %p35
    %p42 = scmp.eq.s32.totalorder %s12, 1
    %p43 = por %p41, %p42
    %p44 = scmp.ne.s32.totalorder %s36, %s39
    %p45 = scmp.eq.s32.totalorder %s12, 0
    %p46 = por %p44, %p45
    %p47 = scmp.ne.s32.totalorder %s36, %s39
    %p48 = scmp.eq.s32.totalorder %s17, 1
    %p49 = por %p47, %p48
    %p50 = scmp.ne.s32.totalorder %s39, %s40
    %p51 = scmp.eq.s32.totalorder %s17, 0
    %p52 = por %p50, %p51
    %p53 = scmp.ne.s32.totalorder %s39, %s40
    %p54 = scmp.eq.s32.totalorder %s18, 1
    %p55 = por %p53, %p54
    %p57 = scmp.ne.s32.totalorder %s40, %s56
    %p58 = scmp.eq.s32.totalorder %s18, 0
    %p59 = por %p57, %p58
    %s61 = sadd.s32 %s60, 1
    %p64 = scmp.eq.s32.totalorder %s12, 1
    %p65 = scmp.ne.s32.totalorder %s60, %s62
    %p66 = scmp.eq.s32.totalorder %s12, 0
    %p67 = por %p65, %p66
    %p68 = scmp.ne.s32.totalorder %s60, %s62
    %p69 = scmp.eq.s32.totalorder %s17, 1
    %p70 = por %p68, %p69
    %p71 = scmp.ne.s32.totalorder %s62, %s63
    %p72 = scmp.eq.s32.totalorder %s17, 0
    %p73 = por %p71, %p72
    %p74 = scmp.ne.s32.totalorder %s62, %s63
    %p75 = scmp.eq.s32.totalorder %s18, 1
    %p76 = por %p74, %p75
    %p78 = scmp.ne.s32.totalorder %s63, %s77
    %p79 = scmp.eq.s32.totalorder %s18, 0
    %p80 = por %p78, %p79
    %s82 = sadd.s32 %s81, 1
    %p85 = scmp.eq.s32.totalorder %s12, 1
    %p86 = scmp.ne.s32.totalorder %s81, %s83
    %p87 = scmp.eq.s32.totalorder %s12, 0
    %p88 = por %p86, %p87
    %p89 = scmp.ne.s32.totalorder %s81, %s83
    %p90 = scmp.eq.s32.totalorder %s17, 1
    %p91 = por %p89, %p90
    %p92 = scmp.ne.s32.totalorder %s83, %s84
    %p93 = scmp.eq.s32.totalorder %s17, 0
    %p94 = por %p92, %p93
    %p95 = scmp.ne.s32.totalorder %s83, %s84
    %p96 = scmp.eq.s32.totalorder %s18, 1
    %p97 = por %p95, %p96
    %p99 = scmp.ne.s32.totalorder %s84, %s98
    %p100 = scmp.eq.s32.totalorder %s18, 0
    %p101 = por %p99, %p100
    %s102 = ssub.s32 %s19, %s31
    %s103 = ssub.s32 %s20, %s27
    %s104 = sor.u32 %s102, %s103
    %p105 = scmp.eq.s32.totalorder %s104, 0
    %s107 = sadd.s32 %s106, 1
    %s108 = scalar_select %p105, %s106, %s107
    %p111 = pneg %p105
    %p112 = scmp.eq.s32.totalorder %s12, 1
    %p113 = por %p111, %p112
    %p114 = scmp.ne.s32.totalorder %s106, %s109
    %p115 = scmp.eq.s32.totalorder %s12, 0
    %p116 = por %p114, %p115
    %p117 = scmp.ne.s32.totalorder %s106, %s109
    %p118 = scmp.eq.s32.totalorder %s17, 1
    %p119 = por %p117, %p118
    %p120 = scmp.ne.s32.totalorder %s109, %s110
    %p121 = scmp.eq.s32.totalorder %s17, 0
    %p122 = por %p120, %p121
    %p123 = scmp.ne.s32.totalorder %s109, %s110
    %p124 = scmp.eq.s32.totalorder %s18, 1
    %p125 = por %p123, %p124
    %p127 = scmp.ne.s32.totalorder %s110, %s126
    %p128 = scmp.eq.s32.totalorder %s18, 0
    %p129 = por %p127, %p128
    %s130 = ssub.s32 %s19, %s31
    %p131 = scmp.eq.s32.totalorder %s130, 0
    %s133 = sadd.s32 %s132, 1
    %s134 = scalar_select %p131, %s132, %s133
    %p137 = pneg %p131
    %p138 = scmp.eq.s32.totalorder %s12, 1
    %p139 = por %p137, %p138
    %p140 = scmp.ne.s32.totalorder %s132, %s135
    %p141 = scmp.eq.s32.totalorder %s12, 0
    %p142 = por %p140, %p141
    %p143 = scmp.ne.s32.totalorder %s132, %s135
    %p144 = scmp.eq.s32.totalorder %s17, 1
    %p145 = por %p143, %p144
    %p146 = scmp.ne.s32.totalorder %s135, %s136
    %p147 = scmp.eq.s32.totalorder %s17, 0
    %p148 = por %p146, %p147
    %p149 = scmp.ne.s32.totalorder %s135, %s136
    %p150 = scmp.eq.s32.totalorder %s18, 1
    %p151 = por %p149, %p150
    %p153 = scmp.ne.s32.totalorder %s136, %s152
    %p154 = scmp.eq.s32.totalorder %s18, 0
    %p155 = por %p153, %p154
    %s156 = ssub.s32 %s19, %s31
    %p157 = scmp.eq.s32.totalorder %s156, 0
    %s159 = sadd.s32 %s158, 1
    %s160 = scalar_select %p157, %s158, %s159
    %p163 = pneg %p157
    %p164 = scmp.eq.s32.totalorder %s12, 1
    %p165 = por %p163, %p164
    %p166 = scmp.ne.s32.totalorder %s158, %s161
    %p167 = scmp.eq.s32.totalorder %s12, 0
    %p168 = por %p166, %p167
    %p169 = scmp.ne.s32.totalorder %s158, %s161
    %p170 = scmp.eq.s32.totalorder %s17, 1
    %p171 = por %p169, %p170
    %p172 = scmp.ne.s32.totalorder %s161, %s162
    %p173 = scmp.eq.s32.totalorder %s17, 0
    %p174 = por %p172, %p173
    %p175 = scmp.ne.s32.totalorder %s161, %s162
    %p176 = scmp.eq.s32.totalorder %s18, 1
    %p177 = por %p175, %p176
    %p179 = scmp.ne.s32.totalorder %s162, %s178
    %p180 = scmp.eq.s32.totalorder %s18, 0
    %p181 = por %p179, %p180
    %p182 = scmp.le.s32.totalorder 1, %s12
    %p183 = scmp.lt.s32.totalorder %s12, 3
    %p184 = pnand %p182, %p183
    %p185 = pneg %p184
    // Predicated region
    $region9: #{zencoder_forward.10} parent=5 // pred_check
      _
    $region10: #{zencoder_forward.10} parent=5 // pred_check_branch
      %187 = sbr.rel (%p184) target = $region12
    $region11: #{zencoder_forward.10} parent=5 // pred_region
      %s188 = ssub.s32 %s12, 1
      // Predicated region
      $region13: #{zencoder_forward.10} parent=11 // pred_check
        %p189 = pneg %p73
      $region14: #{zencoder_forward.10} parent=11 // pred_check_branch
        %191 = sbr.rel (%p189) target = $region16
      $region15: #{zencoder_forward.10} parent=11 // pred_region
        _
      $region16: #{zencoder_forward.10} parent=11 // pred_fallthru
        _
      // Predicated region
      $region17: #{zencoder_forward.10} parent=11 // pred_check
        %p192 = pneg %p94
      $region18: #{zencoder_forward.10} parent=11 // pred_check_branch
        %194 = sbr.rel (%p192) target = $region20
      $region19: #{zencoder_forward.10} parent=11 // pred_region
        _
      $region20: #{zencoder_forward.10} parent=11 // pred_fallthru
        _
    $region12: #{zencoder_forward.10} parent=5 // pred_fallthru
      _
    %p195 = scmp.lt.s32.totalorder %s12, 2
    // Predicated region
    $region21: #{zencoder_forward.10} parent=5 // pred_check
      %p196 = pneg %p195
    $region22: #{zencoder_forward.10} parent=5 // pred_check_branch
      %198 = sbr.rel (%p196) target = $region24
    $region23: #{zencoder_forward.10} parent=5 // pred_region
      // Predicated region
      $region25: #{zencoder_forward.10} parent=23 // pred_check
        %p199 = pneg %p46
      $region26: #{zencoder_forward.10} parent=23 // pred_check_branch
        %201 = sbr.rel (%p199) target = $region28
      $region27: #{zencoder_forward.10} parent=23 // pred_region
        %s202 = smul.u32 32, %s20
        %p203 = scmp.lt.s32.totalorder %s19, 1
        %s204 = scalar_select %p203, %s19, 1
        %p205 = scmp.lt.s32.totalorder %s202, 31
        %s206 = scalar_select %p205, %s202, 31
        %s207 = smul.addr %s204, 32
        %s208 = sadd.s32 %s206, %s207
        %s209 = smul.addr %s208, 4
        %s210 = scalar_lea.vmem %s0, %s209
        %s211 = smul.u32 32, %s20
      $region28: #{zencoder_forward.10} parent=23 // pred_fallthru
        _
    $region24: #{zencoder_forward.10} parent=5 // pred_fallthru
      _
    %p212 = scmp.le.s32.totalorder 1, %s12
    %p213 = scmp.lt.s32.totalorder %s12, 3
    %p214 = pnand %p212, %p213
    %p215 = pneg %p214
    // Predicated region
    $region29: #{zencoder_forward.10} parent=5 // pred_check
      _
    $region30: #{zencoder_forward.10} parent=5 // pred_check_branch
      %217 = sbr.rel (%p214) target = $region32
    $region31: #{zencoder_forward.10} parent=5 // pred_region
      %s218 = ssub.s32 %s12, 1
      %s219 = smul.u32 32, %s22
      %p220 = scmp.lt.s32.totalorder %s21, 1
      %s221 = scalar_select %p220, %s21, 1
      %p222 = scmp.lt.s32.totalorder %s219, 31
      %s223 = scalar_select %p222, %s219, 31
      %s224 = smul.addr %s221, 32
      %s225 = sadd.s32 %s223, %s224
      %s226 = smul.addr %s225, 4
      %s227 = scalar_lea.vmem %s0, %s226
      %p228 = pneg %p52
      %p229 = pneg %p49
      %p230 = pneg %p73
      %p231 = pneg %p70
      %p232 = pneg %p94
      %p233 = pneg %p91
      %p234 = pneg %p122
      %p235 = pneg %p119
      %s236 = smul.u32 32, %s22
      %p237 = scmp.lt.s32.totalorder %s21, 1
      %s238 = scalar_select %p237, %s21, 1
      %p239 = scmp.lt.s32.totalorder %s236, 31
      %s240 = scalar_select %p239, %s236, 31
      %s241 = smul.addr %s238, 32
      %s242 = sadd.s32 %s240, %s241
      %s243 = smul.addr %s242, 4
      %s244 = scalar_lea.vmem %s3, %s243
      %p245 = pneg %p148
      %p246 = pneg %p145
      %p247 = scmp.lt.s32.totalorder %s21, 1
      %s248 = scalar_select %p247, %s21, 1
      %s249 = scalar_lea.vmem %s4, %s248
      %p250 = pneg %p174
      %p251 = pneg %p171
      %p252 = scmp.lt.s32.totalorder %s21, 1
      %s253 = scalar_select %p252, %s21, 1
      %s254 = scalar_lea.vmem %s5, %s253
      %s255 = smul.u32 32, %s22
      %p256 = scmp.lt.s32.totalorder %s21, 1
      %s257 = scalar_select %p256, %s21, 1
      %p258 = scmp.lt.s32.totalorder %s255, 31
      %s259 = scalar_select %p258, %s255, 31
      %s260 = smul.addr %s257, 32
      %s261 = sadd.s32 %s259, %s260
      %s262 = smul.addr %s261, 4
      %s263 = scalar_lea.vmem %s0, %s262
      %s264 = smul.u32 32, %s22
      %s265 = smul.u32 32, %s22
      %p266 = scmp.lt.s32.totalorder %s21, 1
      %s267 = scalar_select %p266, %s21, 1
      %p268 = scmp.lt.s32.totalorder %s265, 31
      %s269 = scalar_select %p268, %s265, 31
      %s270 = smul.addr %s267, 32
      %s271 = sadd.s32 %s269, %s270
      %s272 = smul.addr %s271, 4
      %s273 = scalar_lea.vmem %s3, %s272
      %s274 = smul.u32 32, %s22
      %p275 = scmp.lt.s32.totalorder %s21, 1
      %s276 = scalar_select %p275, %s21, 1
      %s277 = scalar_lea.vmem %s4, %s276
      %p278 = scmp.lt.s32.totalorder %s21, 1
      %s279 = scalar_select %p278, %s21, 1
      %s280 = scalar_lea.vmem %s5, %s279
      %v282 = vld [vmem:[%s263] sm:$0xf]
      %v283 = vld [vmem:[%s263 + $0x4] sm:$0xf]
      %v284 = vld [vmem:[%s263 + $0x8] sm:$0xf]
      %v285 = vld [vmem:[%s263 + $0xc] sm:$0xf]
      %v286 = vld [vmem:[%s263 + $0x10] sm:$0xf]
      %v287 = vld [vmem:[%s263 + $0x14] sm:$0xf]
      %v288 = vld [vmem:[%s263 + $0x18] sm:$0xf]
      %v289 = vld [vmem:[%s263 + $0x1c] sm:$0xf]
      %v290 = vld [vmem:[%s263 + $0x20] sm:$0xf]
      %v291 = vld [vmem:[%s263 + $0x24] sm:$0xf]
      %v292 = vld [vmem:[%s263 + $0x28] sm:$0xf]
      %v293 = vld [vmem:[%s263 + $0x2c] sm:$0xf]
      %v294 = vld [vmem:[%s263 + $0x30] sm:$0xf]
      %v295 = vld [vmem:[%s263 + $0x34] sm:$0xf]
      %v296 = vld [vmem:[%s263 + $0x38] sm:$0xf]
      %v297 = vld [vmem:[%s263 + $0x3c] sm:$0xf]
      %v298 = vld [vmem:[%s263 + $0x40] sm:$0xf]
      %v299 = vld [vmem:[%s263 + $0x44] sm:$0xf]
      %v300 = vld [vmem:[%s263 + $0x48] sm:$0xf]
      %v301 = vld [vmem:[%s263 + $0x4c] sm:$0xf]
      %v302 = vld [vmem:[%s263 + $0x50] sm:$0xf]
      %v303 = vld [vmem:[%s263 + $0x54] sm:$0xf]
      %v304 = vld [vmem:[%s263 + $0x58] sm:$0xf]
      %v305 = vld [vmem:[%s263 + $0x5c] sm:$0xf]
      %v306 = vld [vmem:[%s263 + $0x60] sm:$0xf]
      %v307 = vld [vmem:[%s263 + $0x64] sm:$0xf]
      %v308 = vld [vmem:[%s263 + $0x68] sm:$0xf]
      %v309 = vld [vmem:[%s263 + $0x6c] sm:$0xf]
      %v310 = vld [vmem:[%s263 + $0x70] sm:$0xf]
      %v311 = vld [vmem:[%s263 + $0x74] sm:$0xf]
      %v312 = vld [vmem:[%s263 + $0x78] sm:$0xf]
      %v313 = vld [vmem:[%s263 + $0x7c] sm:$0xf]
      %v314 = vld [vmem:[%s1] sm:$0xf]
      %v315 = vld [vmem:[%s1 + $0x4] sm:$0xf]
      %v316 = vld [vmem:[%s1 + $0x8] sm:$0xf]
      %v317 = vld [vmem:[%s1 + $0xc] sm:$0xf]
      %v318 = vld [vmem:[%s1 + $0x10] sm:$0x3]
      %v319 = vld [vmem:[%s2] sm:$0x1]
      %v321 = vperm.slane %v319, 0
      %v355 = vunpack.c.l.b16 %v282
      %v356 = vunpack.c.l.b16 %v283
      %v357 = vunpack.c.l.b16 %v284
      %v358 = vunpack.c.l.b16 %v285
      %v359 = vunpack.c.l.b16 %v286
      %v360 = vunpack.c.l.b16 %v287
      %v361 = vunpack.c.l.b16 %v288
      %v362 = vunpack.c.l.b16 %v289
      %v363 = vunpack.c.l.b16 %v290
      %v364 = vunpack.c.l.b16 %v291
      %v365 = vunpack.c.l.b16 %v292
      %v366 = vunpack.c.l.b16 %v293
      %v367 = vunpack.c.l.b16 %v294
      %v368 = vunpack.c.l.b16 %v295
      %v369 = vunpack.c.l.b16 %v296
      %v370 = vunpack.c.l.b16 %v297
      %v371 = vunpack.c.l.b16 %v298
      %v372 = vunpack.c.l.b16 %v299
      %v373 = vunpack.c.l.b16 %v300
      %v374 = vunpack.c.l.b16 %v301
      %v375 = vunpack.c.l.b16 %v302
      %v376 = vunpack.c.l.b16 %v303
      %v377 = vunpack.c.l.b16 %v304
      %v378 = vunpack.c.l.b16 %v305
      %v379 = vunpack.c.l.b16 %v306
      %v380 = vunpack.c.l.b16 %v307
      %v381 = vunpack.c.l.b16 %v308
      %v382 = vunpack.c.l.b16 %v309
      %v383 = vunpack.c.l.b16 %v310
      %v384 = vunpack.c.l.b16 %v311
      %v385 = vunpack.c.l.b16 %v312
      %v386 = vunpack.c.l.b16 %v313
      %v387 = vpack.c.b16 %v356, %v355
      %v388 = vpack.c.b16 %v358, %v357
      %v389 = vpack.c.b16 %v360, %v359
      %v390 = vpack.c.b16 %v362, %v361
      %v391 = vpack.c.b16 %v364, %v363
      %v392 = vpack.c.b16 %v366, %v365
      %v393 = vpack.c.b16 %v368, %v367
      %v394 = vpack.c.b16 %v370, %v369
      %v395 = vpack.c.b16 %v372, %v371
      %v396 = vpack.c.b16 %v374, %v373
      %v397 = vpack.c.b16 %v376, %v375
      %v398 = vpack.c.b16 %v378, %v377
      %v399 = vpack.c.b16 %v380, %v379
      %v400 = vpack.c.b16 %v382, %v381
      %v401 = vpack.c.b16 %v384, %v383
      %v402 = vpack.c.b16 %v386, %v385
      %v408 = vunpack.c.l.b16 %v314
      %v409 = vunpack.c.l.b16 %v315
      %v410 = vunpack.c.l.b16 %v316
      %v411 = vunpack.c.l.b16 %v317
      %v412 = vunpack.c.l.b16 %v318
      %v413 = vpack.c.b16 %v409, %v408
      %v414 = vpack.c.b16 %v411, %v410
      %v415 = vpack.c.b16 %v412, %v412
      %vm418 = vcmask 293888
      %v420 = vsel %vm418, %v387, 0
      %v423 = vsel %vm418, %v388, 0
      %v426 = vsel %vm418, %v389, 0
      %v429 = vsel %vm418, %v390, 0
      %v432 = vsel %vm418, %v391, 0
      %v435 = vsel %vm418, %v392, 0
      %v438 = vsel %vm418, %v393, 0
      %v441 = vsel %vm418, %v394, 0
      %v444 = vsel %vm418, %v395, 0
      %v447 = vsel %vm418, %v396, 0
      %v450 = vsel %vm418, %v397, 0
      %v453 = vsel %vm418, %v398, 0
      %v456 = vsel %vm418, %v399, 0
      %v459 = vsel %vm418, %v400, 0
      %v462 = vsel %vm418, %v401, 0
      %v465 = vsel %vm418, %v402, 0
      %vm467 = vcmask 1041408
      %v469 = vsel %vm467, %v415, 0
      %471 = vmatpush.bf16.msra.mxu0 0
      %472 = vmatpush.bf16.msra.mxu0 0
      %473 = vmatpush.bf16.msra.mxu0 0
      %474 = vmatpush.bf16.msra.mxu0 0
      %475 = vmatpush.bf16.msra.mxu0 0
      %476 = vmatpush.bf16.msra.mxu0 %v469
      %477 = vmatpush.bf16.msra.mxu0 %v414
      %478 = vmatpush.bf16.msra.mxu0 %v413
      %479 = vmatmul.bf16.gmra.mxu0 %v420
      %v480 = vpop.f32.mrf.mxu0
      %v481 = vadd.f32 %v321, %v480
      %v482 = vpop.f32.mrf.mxu0
      %v483 = vadd.f32 %v321, %v482
      %484 = vmatmul.bf16.gmra.mxu0 %v423
      %v485 = vpop.f32.mrf.mxu0
      %v486 = vadd.f32 %v321, %v485
      %v487 = vpop.f32.mrf.mxu0
      %v488 = vadd.f32 %v321, %v487
      %489 = vmatmul.bf16.gmra.mxu0 %v426
      %v490 = vpop.f32.mrf.mxu0
      %v491 = vadd.f32 %v321, %v490
      %v492 = vpop.f32.mrf.mxu0
      %v493 = vadd.f32 %v321, %v492
      %494 = vmatmul.bf16.gmra.mxu0 %v429
      %v495 = vpop.f32.mrf.mxu0
      %v496 = vadd.f32 %v321, %v495
      %v497 = vpop.f32.mrf.mxu0
      %v498 = vadd.f32 %v321, %v497
      %499 = vmatmul.bf16.gmra.mxu0 %v432
      %v500 = vpop.f32.mrf.mxu0
      %v501 = vadd.f32 %v321, %v500
      %v502 = vpop.f32.mrf.mxu0
      %v503 = vadd.f32 %v321, %v502
      %504 = vmatmul.bf16.gmra.mxu0 %v435
      %v505 = vpop.f32.mrf.mxu0
      %v506 = vadd.f32 %v321, %v505
      %v507 = vpop.f32.mrf.mxu0
      %v508 = vadd.f32 %v321, %v507
      %509 = vmatmul.bf16.gmra.mxu0 %v438
      %v510 = vpop.f32.mrf.mxu0
      %v511 = vadd.f32 %v321, %v510
      %v512 = vpop.f32.mrf.mxu0
      %v513 = vadd.f32 %v321, %v512
      %514 = vmatmul.bf16.gmra.mxu0 %v441
      %v515 = vpop.f32.mrf.mxu0
      %v516 = vadd.f32 %v321, %v515
      %v517 = vpop.f32.mrf.mxu0
      %v518 = vadd.f32 %v321, %v517
      %519 = vmatmul.bf16.gmra.mxu0 %v444
      %v520 = vpop.f32.mrf.mxu0
      %v521 = vadd.f32 %v321, %v520
      %v522 = vpop.f32.mrf.mxu0
      %v523 = vadd.f32 %v321, %v522
      %524 = vmatmul.bf16.gmra.mxu0 %v447
      %v525 = vpop.f32.mrf.mxu0
      %v526 = vadd.f32 %v321, %v525
      %v527 = vpop.f32.mrf.mxu0
      %v528 = vadd.f32 %v321, %v527
      %529 = vmatmul.bf16.gmra.mxu0 %v450
      %v530 = vpop.f32.mrf.mxu0
      %v531 = vadd.f32 %v321, %v530
      %v532 = vpop.f32.mrf.mxu0
      %v533 = vadd.f32 %v321, %v532
      %534 = vmatmul.bf16.gmra.mxu0 %v453
      %v535 = vpop.f32.mrf.mxu0
      %v536 = vadd.f32 %v321, %v535
      %v537 = vpop.f32.mrf.mxu0
      %v538 = vadd.f32 %v321, %v537
      %539 = vmatmul.bf16.gmra.mxu0 %v456
      %v540 = vpop.f32.mrf.mxu0
      %v541 = vadd.f32 %v321, %v540
      %v542 = vpop.f32.mrf.mxu0
      %v543 = vadd.f32 %v321, %v542
      %544 = vmatmul.bf16.gmra.mxu0 %v459
      %v545 = vpop.f32.mrf.mxu0
      %v546 = vadd.f32 %v321, %v545
      %v547 = vpop.f32.mrf.mxu0
      %v548 = vadd.f32 %v321, %v547
      %549 = vmatmul.bf16.gmra.mxu0 %v462
      %v550 = vpop.f32.mrf.mxu0
      %v551 = vadd.f32 %v321, %v550
      %v552 = vpop.f32.mrf.mxu0
      %v553 = vadd.f32 %v321, %v552
      %554 = vmatmul.bf16.gmra.mxu0 %v465
      %v555 = vpop.f32.mrf.mxu0
      %v556 = vadd.f32 %v321, %v555
      %v557 = vpop.f32.mrf.mxu0
      %v558 = vadd.f32 %v321, %v557
      %559 = vdwg.mxu0
      %v560 = vpack.c.bf16 %v481, %v481
      %v561 = vpack.c.bf16 %v483, %v483
      %v562 = vpack.c.bf16 %v486, %v486
      %v563 = vpack.c.bf16 %v488, %v488
      %v564 = vpack.c.bf16 %v491, %v491
      %v565 = vpack.c.bf16 %v493, %v493
      %v566 = vpack.c.bf16 %v496, %v496
      %v567 = vpack.c.bf16 %v498, %v498
      %v568 = vpack.c.bf16 %v501, %v501
      %v569 = vpack.c.bf16 %v503, %v503
      %v570 = vpack.c.bf16 %v506, %v506
      %v571 = vpack.c.bf16 %v508, %v508
      %v572 = vpack.c.bf16 %v511, %v511
      %v573 = vpack.c.bf16 %v513, %v513
      %v574 = vpack.c.bf16 %v516, %v516
      %v575 = vpack.c.bf16 %v518, %v518
      %v576 = vpack.c.bf16 %v521, %v521
      %v577 = vpack.c.bf16 %v523, %v523
      %v578 = vpack.c.bf16 %v526, %v526
      %v579 = vpack.c.bf16 %v528, %v528
      %v580 = vpack.c.bf16 %v531, %v531
      %v581 = vpack.c.bf16 %v533, %v533
      %v582 = vpack.c.bf16 %v536, %v536
      %v583 = vpack.c.bf16 %v538, %v538
      %v584 = vpack.c.bf16 %v541, %v541
      %v585 = vpack.c.bf16 %v543, %v543
      %v586 = vpack.c.bf16 %v546, %v546
      %v587 = vpack.c.bf16 %v548, %v548
      %v588 = vpack.c.bf16 %v551, %v551
      %v589 = vpack.c.bf16 %v553, %v553
      %v590 = vpack.c.bf16 %v556, %v556
      %v591 = vpack.c.bf16 %v558, %v558
      %592 = vst [vmem:[%s273] sm:$0xf] %v560
      %593 = vst [vmem:[%s273 + $0x4] sm:$0xf] %v561
      %594 = vst [vmem:[%s273 + $0x8] sm:$0xf] %v562
      %595 = vst [vmem:[%s273 + $0xc] sm:$0xf] %v563
      %596 = vst [vmem:[%s273 + $0x10] sm:$0xf] %v564
      %597 = vst [vmem:[%s273 + $0x14] sm:$0xf] %v565
      %598 = vst [vmem:[%s273 + $0x18] sm:$0xf] %v566
      %599 = vst [vmem:[%s273 + $0x1c] sm:$0xf] %v567
      %600 = vst [vmem:[%s273 + $0x20] sm:$0xf] %v568
      %601 = vst [vmem:[%s273 + $0x24] sm:$0xf] %v569
      %602 = vst [vmem:[%s273 + $0x28] sm:$0xf] %v570
      %603 = vst [vmem:[%s273 + $0x2c] sm:$0xf] %v571
      %604 = vst [vmem:[%s273 + $0x30] sm:$0xf] %v572
      %605 = vst [vmem:[%s273 + $0x34] sm:$0xf] %v573
      %606 = vst [vmem:[%s273 + $0x38] sm:$0xf] %v574
      %607 = vst [vmem:[%s273 + $0x3c] sm:$0xf] %v575
      %608 = vst [vmem:[%s273 + $0x40] sm:$0xf] %v576
      %609 = vst [vmem:[%s273 + $0x44] sm:$0xf] %v577
      %610 = vst [vmem:[%s273 + $0x48] sm:$0xf] %v578
      %611 = vst [vmem:[%s273 + $0x4c] sm:$0xf] %v579
      %612 = vst [vmem:[%s273 + $0x50] sm:$0xf] %v580
      %613 = vst [vmem:[%s273 + $0x54] sm:$0xf] %v581
      %614 = vst [vmem:[%s273 + $0x58] sm:$0xf] %v582
      %615 = vst [vmem:[%s273 + $0x5c] sm:$0xf] %v583
      %616 = vst [vmem:[%s273 + $0x60] sm:$0xf] %v584
      %617 = vst [vmem:[%s273 + $0x64] sm:$0xf] %v585
      %618 = vst [vmem:[%s273 + $0x68] sm:$0xf] %v586
      %619 = vst [vmem:[%s273 + $0x6c] sm:$0xf] %v587
      %620 = vst [vmem:[%s273 + $0x70] sm:$0xf] %v588
      %621 = vst [vmem:[%s273 + $0x74] sm:$0xf] %v589
      %622 = vst [vmem:[%s273 + $0x78] sm:$0xf] %v590
      %623 = vst [vmem:[%s273 + $0x7c] sm:$0xf] %v591
      %p624 = scmp.eq.s32.totalorder %s22, 0
      // Predicated region
      $region33: #{zencoder_forward.10} parent=31 // pred_check
        %p625 = pneg %p624
      $region34: #{zencoder_forward.10} parent=31 // pred_check_branch
        %627 = sbr.rel (%p625) target = $region36
      $region35: #{zencoder_forward.10} parent=31 // pred_region
        %628 = vst [vmem:[%s277] sm:$0x1] 0.0
        %629 = vst [vmem:[%s280] sm:$0x1] 0.0
      $region36: #{zencoder_forward.10} parent=31 // pred_fallthru
        _
      %v630 = vld [vmem:[%s277] sm:$0x1]
      %v631 = vadd.f32 %v481, %v483
      %v632 = vadd.f32 %v631, %v486
      %v633 = vadd.f32 %v632, %v488
      %v634 = vadd.f32 %v633, %v491
      %v635 = vadd.f32 %v634, %v493
      %v636 = vadd.f32 %v635, %v496
      %v637 = vadd.f32 %v636, %v498
      %v638 = vadd.f32 %v637, %v501
      %v639 = vadd.f32 %v638, %v503
      %v640 = vadd.f32 %v639, %v506
      %v641 = vadd.f32 %v640, %v508
      %v642 = vadd.f32 %v641, %v511
      %v643 = vadd.f32 %v642, %v513
      %v644 = vadd.f32 %v643, %v516
      %v645 = vadd.f32 %v644, %v518
      %v646 = vadd.f32 %v645, %v521
      %v647 = vadd.f32 %v646, %v523
      %v648 = vadd.f32 %v647, %v526
      %v649 = vadd.f32 %v648, %v528
      %v650 = vadd.f32 %v649, %v531
      %v651 = vadd.f32 %v650, %v533
      %v652 = vadd.f32 %v651, %v536
      %v653 = vadd.f32 %v652, %v538
      %v654 = vadd.f32 %v653, %v541
      %v655 = vadd.f32 %v654, %v543
      %v656 = vadd.f32 %v655, %v546
      %v657 = vadd.f32 %v656, %v548
      %v658 = vadd.f32 %v657, %v551
      %v659 = vadd.f32 %v658, %v553
      %v660 = vadd.f32 %v659, %v556
      %v661 = vadd.f32 %v660, %v558
      %v662 = vrot.slane %v661, 4
      %v663 = vadd.f32 %v661, %v662
      %v664 = vrot.slane %v663, 2
      %v665 = vadd.f32 %v663, %v664
      %v666 = vrot.slane %v665, 1
      %v667 = vadd.f32 %v665, %v666
      %v668 = vadd.f32 %v630, %v667
      %669 = vst [vmem:[%s277] sm:$0x1] %v668
      %v670 = vld [vmem:[%s280] sm:$0x1]
      %v671 = vmul.f32 %v481, %v481
      %v672 = vmul.f32 %v483, %v483
      %v673 = vmul.f32 %v486, %v486
      %v674 = vmul.f32 %v488, %v488
      %v675 = vmul.f32 %v491, %v491
      %v676 = vmul.f32 %v493, %v493
      %v677 = vmul.f32 %v496, %v496
      %v678 = vmul.f32 %v498, %v498
      %v679 = vmul.f32 %v501, %v501
      %v680 = vmul.f32 %v503, %v503
      %v681 = vmul.f32 %v506, %v506
      %v682 = vmul.f32 %v508, %v508
      %v683 = vmul.f32 %v511, %v511
      %v684 = vmul.f32 %v513, %v513
      %v685 = vmul.f32 %v516, %v516
      %v686 = vmul.f32 %v518, %v518
      %v687 = vmul.f32 %v521, %v521
      %v688 = vmul.f32 %v523, %v523
      %v689 = vmul.f32 %v526, %v526
      %v690 = vmul.f32 %v528, %v528
      %v691 = vmul.f32 %v531, %v531
      %v692 = vmul.f32 %v533, %v533
      %v693 = vmul.f32 %v536, %v536
      %v694 = vmul.f32 %v538, %v538
      %v695 = vmul.f32 %v541, %v541
      %v696 = vmul.f32 %v543, %v543
      %v697 = vmul.f32 %v546, %v546
      %v698 = vmul.f32 %v548, %v548
      %v699 = vmul.f32 %v551, %v551
      %v700 = vmul.f32 %v553, %v553
      %v701 = vmul.f32 %v556, %v556
      %v702 = vmul.f32 %v558, %v558
      %v703 = vadd.f32 %v671, %v672
      %v704 = vadd.f32 %v703, %v673
      %v705 = vadd.f32 %v704, %v674
      %v706 = vadd.f32 %v705, %v675
      %v707 = vadd.f32 %v706, %v676
      %v708 = vadd.f32 %v707, %v677
      %v709 = vadd.f32 %v708, %v678
      %v710 = vadd.f32 %v709, %v679
      %v711 = vadd.f32 %v710, %v680
      %v712 = vadd.f32 %v711, %v681
      %v713 = vadd.f32 %v712, %v682
      %v714 = vadd.f32 %v713, %v683
      %v715 = vadd.f32 %v714, %v684
      %v716 = vadd.f32 %v715, %v685
      %v717 = vadd.f32 %v716, %v686
      %v718 = vadd.f32 %v717, %v687
      %v719 = vadd.f32 %v718, %v688
      %v720 = vadd.f32 %v719, %v689
      %v721 = vadd.f32 %v720, %v690
      %v722 = vadd.f32 %v721, %v691
      %v723 = vadd.f32 %v722, %v692
      %v724 = vadd.f32 %v723, %v693
      %v725 = vadd.f32 %v724, %v694
      %v726 = vadd.f32 %v725, %v695
      %v727 = vadd.f32 %v726, %v696
      %v728 = vadd.f32 %v727, %v697
      %v729 = vadd.f32 %v728, %v698
      %v730 = vadd.f32 %v729, %v699
      %v731 = vadd.f32 %v730, %v700
      %v732 = vadd.f32 %v731, %v701
      %v733 = vadd.f32 %v732, %v702
      %v734 = vrot.slane %v733, 4
      %v735 = vadd.f32 %v733, %v734
      %v736 = vrot.slane %v735, 2
      %v737 = vadd.f32 %v735, %v736
      %v738 = vrot.slane %v737, 1
      %v739 = vadd.f32 %v737, %v738
      %v740 = vadd.f32 %v670, %v739
      %741 = vst [vmem:[%s280] sm:$0x1] %v740
      %s742 = smul.u32 32, %s22
      %p743 = scmp.lt.s32.totalorder %s21, 1
      %s744 = scalar_select %p743, %s21, 1
      %p745 = scmp.lt.s32.totalorder %s742, 31
      %s746 = scalar_select %p745, %s742, 31
      %s747 = smul.addr %s744, 32
      %s748 = sadd.s32 %s746, %s747
      %s749 = smul.addr %s748, 4
      %s750 = scalar_lea.vmem %s3, %s749
      %p751 = scmp.lt.s32.totalorder %s21, 1
      %s752 = scalar_select %p751, %s21, 1
      %s753 = scalar_lea.vmem %s4, %s752
      %p754 = scmp.lt.s32.totalorder %s21, 1
      %s755 = scalar_select %p754, %s21, 1
      %s756 = scalar_lea.vmem %s5, %s755
      // Predicated region
      $region37: #{zencoder_forward.10} parent=31 // pred_check
        %p757 = pneg %p119
      $region38: #{zencoder_forward.10} parent=31 // pred_check_branch
        %759 = sbr.rel (%p757) target = $region40
      $region39: #{zencoder_forward.10} parent=31 // pred_region
        %s760 = smul.u32 32, %s22
      $region40: #{zencoder_forward.10} parent=31 // pred_fallthru
        _
      // Predicated region
      $region41: #{zencoder_forward.10} parent=31 // pred_check
        %p761 = pneg %p145
      $region42: #{zencoder_forward.10} parent=31 // pred_check_branch
        %763 = sbr.rel (%p761) target = $region44
      $region43: #{zencoder_forward.10} parent=31 // pred_region
        _
      $region44: #{zencoder_forward.10} parent=31 // pred_fallthru
        _
      // Predicated region
      $region45: #{zencoder_forward.10} parent=31 // pred_check
        %p764 = pneg %p171
      $region46: #{zencoder_forward.10} parent=31 // pred_check_branch
        %766 = sbr.rel (%p764) target = $region48
      $region47: #{zencoder_forward.10} parent=31 // pred_region
        _
      $region48: #{zencoder_forward.10} parent=31 // pred_fallthru
        _
    $region32: #{zencoder_forward.10} parent=5 // pred_fallthru
      _
    %p767 = scmp.le.s32.totalorder 2, %s12
    // Predicated region
    $region49: #{zencoder_forward.10} parent=5 // pred_check
      %p768 = pneg %p767
    $region50: #{zencoder_forward.10} parent=5 // pred_check_branch
      %770 = sbr.rel (%p768) target = $region52
    $region51: #{zencoder_forward.10} parent=5 // pred_region
      %s771 = ssub.s32 %s12, 2
      // Predicated region
      $region53: #{zencoder_forward.10} parent=51 // pred_check
        %p772 = pneg %p125
      $region54: #{zencoder_forward.10} parent=51 // pred_check_branch
        %774 = sbr.rel (%p772) target = $region56
      $region55: #{zencoder_forward.10} parent=51 // pred_region
        %s775 = smul.u32 32, %s24
        %p776 = scmp.lt.s32.totalorder %s23, 1
        %s777 = scalar_select %p776, %s23, 1
        %p778 = scmp.lt.s32.totalorder %s775, 31
        %s779 = scalar_select %p778, %s775, 31
        %s780 = smul.addr %s777, 32
        %s781 = sadd.s32 %s779, %s780
        %s782 = smul.addr %s781, 4
        %s783 = scalar_lea.vmem %s3, %s782
      $region56: #{zencoder_forward.10} parent=51 // pred_fallthru
        _
      // Predicated region
      $region57: #{zencoder_forward.10} parent=51 // pred_check
        %p784 = pneg %p151
      $region58: #{zencoder_forward.10} parent=51 // pred_check_branch
        %786 = sbr.rel (%p784) target = $region60
      $region59: #{zencoder_forward.10} parent=51 // pred_region
        %p787 = scmp.lt.s32.totalorder %s23, 1
        %s788 = scalar_select %p787, %s23, 1
        %s789 = scalar_lea.vmem %s4, %s788
      $region60: #{zencoder_forward.10} parent=51 // pred_fallthru
        _
      // Predicated region
      $region61: #{zencoder_forward.10} parent=51 // pred_check
        %p790 = pneg %p177
      $region62: #{zencoder_forward.10} parent=51 // pred_check_branch
        %792 = sbr.rel (%p790) target = $region64
      $region63: #{zencoder_forward.10} parent=51 // pred_region
        %p793 = scmp.lt.s32.totalorder %s23, 1
        %s794 = scalar_select %p793, %s23, 1
        %s795 = scalar_lea.vmem %s5, %s794
      $region64: #{zencoder_forward.10} parent=51 // pred_fallthru
        _
    $region52: #{zencoder_forward.10} parent=5 // pred_fallthru
      _
  $region6: #{zencoder_forward.10} parent=0 // loop_footer
    %s16 = sadd.s32 1, %s12
  $region7: #{zencoder_forward.10} parent=0 // loop_footer_branch
    %11 = sbr.rel target = $region3
  $region8: #{zencoder_forward.10} parent=0 // loop_exit
    _

// kernel: zencoder_forward.13
$region0: #{zencoder_forward.13}
  #allocation0 [shape = 'u32[]', space=smem, size = 0x4, offset = 0x4, fixed_abs, tag = 'smem constant byte address 0x4 - core index']
  #allocation1 [shape = 'u32[72,128]{1,0:T(1,128)}', space=vmem, size = 0x9000, scoped, tag = 'internal scratch']
  %s0 = inlined_call_operand.vmem [shape: bf16[2,64,128], index: 0, kind: input, shape index: {}]
  %s1 = inlined_call_operand.vmem [shape: f32[2,1,128], index: 1, kind: input, shape index: {}]
  %s2 = inlined_call_operand.vmem [shape: f32[2,1,128], index: 2, kind: input, shape index: {}]
  %s3 = inlined_call_operand.vmem [shape: bf16[2,64,128], index: 3, kind: output, shape index: {}]
  %s4 = sld [smem:[#allocation0]]
  $region45: #{zencoder_forward.13} parent=0
    _
  %s6 = ssub.s32 1, %s4
  %s7 = scalar_select 0, %s6, %s4
  loop: start=0, step=1, limit=4
  $region2: #{zencoder_forward.13} parent=0 // loop_pre_header
    _
  $region3: #{zencoder_forward.13} parent=0 // loop_header
    %s9 = sphi 0, %s13
    %p10 = scmp.ge.s32.totalorder %s9, 4
    %s16 = sphi 0, %s28
    %s17 = sphi 0, %s24
    %s18 = sphi 0, %s16
    %s19 = sphi 0, %s17
    %s20 = sphi 0, %s18
    %s21 = sphi 0, %s19
    %s33 = sphi 0, %s35
    %s36 = sphi 0, %s33
    %s37 = sphi 0, %s36
    %s53 = sphi 0, %s37
    %s59 = sphi 0, %s61
    %s62 = sphi 0, %s59
    %s63 = sphi 0, %s62
    %s79 = sphi 0, %s63
    %s85 = sphi 0, %s87
    %s88 = sphi 0, %s85
    %s89 = sphi 0, %s88
    %s105 = sphi 0, %s89
    %s113 = sphi 0, %s115
    %s116 = sphi 0, %s113
    %s117 = sphi 0, %s116
    %s133 = sphi 0, %s117
  $region4: #{zencoder_forward.13} parent=0 // loop_header_branch
    %12 = sbr.rel (%p10) target = $region8
  $region5: #{zencoder_forward.13} parent=0 // loop_body
    %s14 = ssub.s32 %s9, 1
    %s15 = ssub.s32 %s9, 2
    %s22 = sadd.s32 1, %s17
    %p23 = scmp.ge.s32.totalorder %s22, 1
    %s24 = scalar_select %p23, 0, %s22
    %s25 = sadd.s32 1, %s16
    %s26 = scalar_select %p23, %s25, %s16
    %p27 = scmp.ge.s32.totalorder %s26, 2
    %s28 = scalar_select %p27, 0, %s26
    %s29 = ssub.s32 %s16, %s28
    %s30 = ssub.s32 %s17, %s24
    %s31 = sor.u32 %s29, %s30
    %p32 = scmp.eq.s32.totalorder %s31, 0
    %s34 = sadd.s32 %s33, 1
    %s35 = scalar_select %p32, %s33, %s34
    %p38 = pneg %p32
    %p39 = scmp.eq.s32.totalorder %s9, 1
    %p40 = por %p38, %p39
    %p41 = scmp.ne.s32.totalorder %s33, %s36
    %p42 = scmp.eq.s32.totalorder %s9, 0
    %p43 = por %p41, %p42
    %p44 = scmp.ne.s32.totalorder %s33, %s36
    %p45 = scmp.eq.s32.totalorder %s14, 1
    %p46 = por %p44, %p45
    %p47 = scmp.ne.s32.totalorder %s36, %s37
    %p48 = scmp.eq.s32.totalorder %s14, 0
    %p49 = por %p47, %p48
    %p50 = scmp.ne.s32.totalorder %s36, %s37
    %p51 = scmp.eq.s32.totalorder %s15, 1
    %p52 = por %p50, %p51
    %p54 = scmp.ne.s32.totalorder %s37, %s53
    %p55 = scmp.eq.s32.totalorder %s15, 0
    %p56 = por %p54, %p55
    %s57 = ssub.s32 %s16, %s28
    %p58 = scmp.eq.s32.totalorder %s57, 0
    %s60 = sadd.s32 %s59, 1
    %s61 = scalar_select %p58, %s59, %s60
    %p64 = pneg %p58
    %p65 = scmp.eq.s32.totalorder %s9, 1
    %p66 = por %p64, %p65
    %p67 = scmp.ne.s32.totalorder %s59, %s62
    %p68 = scmp.eq.s32.totalorder %s9, 0
    %p69 = por %p67, %p68
    %p70 = scmp.ne.s32.totalorder %s59, %s62
    %p71 = scmp.eq.s32.totalorder %s14, 1
    %p72 = por %p70, %p71
    %p73 = scmp.ne.s32.totalorder %s62, %s63
    %p74 = scmp.eq.s32.totalorder %s14, 0
    %p75 = por %p73, %p74
    %p76 = scmp.ne.s32.totalorder %s62, %s63
    %p77 = scmp.eq.s32.totalorder %s15, 1
    %p78 = por %p76, %p77
    %p80 = scmp.ne.s32.totalorder %s63, %s79
    %p81 = scmp.eq.s32.totalorder %s15, 0
    %p82 = por %p80, %p81
    %s83 = ssub.s32 %s16, %s28
    %p84 = scmp.eq.s32.totalorder %s83, 0
    %s86 = sadd.s32 %s85, 1
    %s87 = scalar_select %p84, %s85, %s86
    %p90 = pneg %p84
    %p91 = scmp.eq.s32.totalorder %s9, 1
    %p92 = por %p90, %p91
    %p93 = scmp.ne.s32.totalorder %s85, %s88
    %p94 = scmp.eq.s32.totalorder %s9, 0
    %p95 = por %p93, %p94
    %p96 = scmp.ne.s32.totalorder %s85, %s88
    %p97 = scmp.eq.s32.totalorder %s14, 1
    %p98 = por %p96, %p97
    %p99 = scmp.ne.s32.totalorder %s88, %s89
    %p100 = scmp.eq.s32.totalorder %s14, 0
    %p101 = por %p99, %p100
    %p102 = scmp.ne.s32.totalorder %s88, %s89
    %p103 = scmp.eq.s32.totalorder %s15, 1
    %p104 = por %p102, %p103
    %p106 = scmp.ne.s32.totalorder %s89, %s105
    %p107 = scmp.eq.s32.totalorder %s15, 0
    %p108 = por %p106, %p107
    %s109 = ssub.s32 %s16, %s28
    %s110 = ssub.s32 %s17, %s24
    %s111 = sor.u32 %s109, %s110
    %p112 = scmp.eq.s32.totalorder %s111, 0
    %s114 = sadd.s32 %s113, 1
    %s115 = scalar_select %p112, %s113, %s114
    %p118 = pneg %p112
    %p119 = scmp.eq.s32.totalorder %s9, 1
    %p120 = por %p118, %p119
    %p121 = scmp.ne.s32.totalorder %s113, %s116
    %p122 = scmp.eq.s32.totalorder %s9, 0
    %p123 = por %p121, %p122
    %p124 = scmp.ne.s32.totalorder %s113, %s116
    %p125 = scmp.eq.s32.totalorder %s14, 1
    %p126 = por %p124, %p125
    %p127 = scmp.ne.s32.totalorder %s116, %s117
    %p128 = scmp.eq.s32.totalorder %s14, 0
    %p129 = por %p127, %p128
    %p130 = scmp.ne.s32.totalorder %s116, %s117
    %p131 = scmp.eq.s32.totalorder %s15, 1
    %p132 = por %p130, %p131
    %p134 = scmp.ne.s32.totalorder %s117, %s133
    %p135 = scmp.eq.s32.totalorder %s15, 0
    %p136 = por %p134, %p135
    %p137 = scmp.le.s32.totalorder 1, %s9
    %p138 = scmp.lt.s32.totalorder %s9, 3
    %p139 = pnand %p137, %p138
    %p140 = pneg %p139
    // Predicated region
    $region9: #{zencoder_forward.13} parent=5 // pred_check
      _
    $region10: #{zencoder_forward.13} parent=5 // pred_check_branch
      %142 = sbr.rel (%p139) target = $region12
    $region11: #{zencoder_forward.13} parent=5 // pred_region
      %s143 = ssub.s32 %s9, 1
    $region12: #{zencoder_forward.13} parent=5 // pred_fallthru
      _
    %p144 = scmp.lt.s32.totalorder %s9, 2
    // Predicated region
    $region13: #{zencoder_forward.13} parent=5 // pred_check
      %p145 = pneg %p144
    $region14: #{zencoder_forward.13} parent=5 // pred_check_branch
      %147 = sbr.rel (%p145) target = $region16
    $region15: #{zencoder_forward.13} parent=5 // pred_region
      // Predicated region
      $region17: #{zencoder_forward.13} parent=15 // pred_check
        %p148 = pneg %p43
      $region18: #{zencoder_forward.13} parent=15 // pred_check_branch
        %150 = sbr.rel (%p148) target = $region20
      $region19: #{zencoder_forward.13} parent=15 // pred_region
        %s151 = smul.u32 8, %s17
        %p152 = scmp.lt.s32.totalorder %s16, 1
        %s153 = scalar_select %p152, %s16, 1
        %p154 = scmp.lt.s32.totalorder %s151, 7
        %s155 = scalar_select %p154, %s151, 7
        %s156 = smul.addr %s153, 8
        %s157 = sadd.s32 %s155, %s156
        %s158 = smul.addr %s157, 4
        %s159 = scalar_lea.vmem %s0, %s158
        %s160 = smul.u32 8, %s17
      $region20: #{zencoder_forward.13} parent=15 // pred_fallthru
        _
      // Predicated region
      $region21: #{zencoder_forward.13} parent=15 // pred_check
        %p161 = pneg %p69
      $region22: #{zencoder_forward.13} parent=15 // pred_check_branch
        %163 = sbr.rel (%p161) target = $region24
      $region23: #{zencoder_forward.13} parent=15 // pred_region
        %p164 = scmp.lt.s32.totalorder %s16, 1
        %s165 = scalar_select %p164, %s16, 1
        %s166 = scalar_lea.vmem %s1, %s165
      $region24: #{zencoder_forward.13} parent=15 // pred_fallthru
        _
      // Predicated region
      $region25: #{zencoder_forward.13} parent=15 // pred_check
        %p167 = pneg %p95
      $region26: #{zencoder_forward.13} parent=15 // pred_check_branch
        %169 = sbr.rel (%p167) target = $region28
      $region27: #{zencoder_forward.13} parent=15 // pred_region
        %p170 = scmp.lt.s32.totalorder %s16, 1
        %s171 = scalar_select %p170, %s16, 1
        %s172 = scalar_lea.vmem %s2, %s171
      $region28: #{zencoder_forward.13} parent=15 // pred_fallthru
        _
    $region16: #{zencoder_forward.13} parent=5 // pred_fallthru
      _
    %p173 = scmp.le.s32.totalorder 1, %s9
    %p174 = scmp.lt.s32.totalorder %s9, 3
    %p175 = pnand %p173, %p174
    %p176 = pneg %p175
    // Predicated region
    $region29: #{zencoder_forward.13} parent=5 // pred_check
      _
    $region30: #{zencoder_forward.13} parent=5 // pred_check_branch
      %178 = sbr.rel (%p175) target = $region32
    $region31: #{zencoder_forward.13} parent=5 // pred_region
      %s179 = ssub.s32 %s9, 1
      %s180 = smul.u32 8, %s19
      %p181 = scmp.lt.s32.totalorder %s18, 1
      %s182 = scalar_select %p181, %s18, 1
      %p183 = scmp.lt.s32.totalorder %s180, 7
      %s184 = scalar_select %p183, %s180, 7
      %s185 = smul.addr %s182, 8
      %s186 = sadd.s32 %s184, %s185
      %s187 = smul.addr %s186, 4
      %s188 = scalar_lea.vmem %s0, %s187
      %p189 = pneg %p49
      %p190 = pneg %p46
      %p191 = scmp.lt.s32.totalorder %s18, 1
      %s192 = scalar_select %p191, %s18, 1
      %s193 = scalar_lea.vmem %s1, %s192
      %p194 = pneg %p75
      %p195 = pneg %p72
      %p196 = scmp.lt.s32.totalorder %s18, 1
      %s197 = scalar_select %p196, %s18, 1
      %s198 = scalar_lea.vmem %s2, %s197
      %p199 = pneg %p101
      %p200 = pneg %p98
      %p201 = pneg %p129
      %p202 = pneg %p126
      %s203 = smul.u32 8, %s19
      %p204 = scmp.lt.s32.totalorder %s18, 1
      %s205 = scalar_select %p204, %s18, 1
      %p206 = scmp.lt.s32.totalorder %s203, 7
      %s207 = scalar_select %p206, %s203, 7
      %s208 = smul.addr %s205, 8
      %s209 = sadd.s32 %s207, %s208
      %s210 = smul.addr %s209, 4
      %s211 = scalar_lea.vmem %s3, %s210
      %s212 = smul.u32 8, %s19
      %p213 = scmp.lt.s32.totalorder %s18, 1
      %s214 = scalar_select %p213, %s18, 1
      %p215 = scmp.lt.s32.totalorder %s212, 7
      %s216 = scalar_select %p215, %s212, 7
      %s217 = smul.addr %s214, 8
      %s218 = sadd.s32 %s216, %s217
      %s219 = smul.addr %s218, 4
      %s220 = scalar_lea.vmem %s0, %s219
      %s221 = smul.u32 8, %s19
      %p222 = scmp.lt.s32.totalorder %s18, 1
      %s223 = scalar_select %p222, %s18, 1
      %s224 = scalar_lea.vmem %s1, %s223
      %p225 = scmp.lt.s32.totalorder %s18, 1
      %s226 = scalar_select %p225, %s18, 1
      %s227 = scalar_lea.vmem %s2, %s226
      %s228 = smul.u32 8, %s19
      %p229 = scmp.lt.s32.totalorder %s18, 1
      %s230 = scalar_select %p229, %s18, 1
      %p231 = scmp.lt.s32.totalorder %s228, 7
      %s232 = scalar_select %p231, %s228, 7
      %s233 = smul.addr %s230, 8
      %s234 = sadd.s32 %s232, %s233
      %s235 = smul.addr %s234, 4
      %s236 = scalar_lea.vmem %s3, %s235
      %s237 = smul.u32 8, %s19
      %v238 = vld [vmem:[%s220] sm:$0xf]
      %v239 = vld [vmem:[%s220 + $0x4] sm:$0xf]
      %v240 = vld [vmem:[%s220 + $0x8] sm:$0xf]
      %v241 = vld [vmem:[%s220 + $0xc] sm:$0xf]
      %v242 = vld [vmem:[%s220 + $0x10] sm:$0xf]
      %v243 = vld [vmem:[%s220 + $0x14] sm:$0xf]
      %v244 = vld [vmem:[%s220 + $0x18] sm:$0xf]
      %v245 = vld [vmem:[%s220 + $0x1c] sm:$0xf]
      %v246 = vunpack.c.l.bf16 %v238
      %v247 = vunpack.c.l.bf16 %v239
      %v248 = vunpack.c.l.bf16 %v240
      %v249 = vunpack.c.l.bf16 %v241
      %v250 = vunpack.c.l.bf16 %v242
      %v251 = vunpack.c.l.bf16 %v243
      %v252 = vunpack.c.l.bf16 %v244
      %v253 = vunpack.c.l.bf16 %v245
      %v254 = vld [vmem:[%s224] sm:$0x1]
      %v255 = vmul.f32 %v254, 0.015625
      %v256 = vld [vmem:[%s227] sm:$0x1]
      %v257 = vmul.f32 %v256, 0.015625
      %v258 = vmul.f32 %v255, %v255
      %v259 = vsub.f32 %v257, %v258
      %v260 = vmax.f32 %v259, 0.0
      %v262 = vperm.slane %v255, 0
      %v264 = vsub.f32 %v246, %v262
      %v265 = vsub.f32 %v247, %v262
      %v266 = vsub.f32 %v248, %v262
      %v267 = vsub.f32 %v249, %v262
      %v268 = vsub.f32 %v250, %v262
      %v269 = vsub.f32 %v251, %v262
      %v270 = vsub.f32 %v252, %v262
      %v271 = vsub.f32 %v253, %v262
      %v272 = vadd.f32 %v260, 1e-05
      %v273 = vrsqrt.pop %v272
      %v274 = vmul.f32 %v273, %v272
      %v275 = vmul.f32 %v274, %v273
      %v276 = vmul.f32 0.5, %v275
      %v277 = vsub.f32 1.5, %v276
      %v278 = vmul.f32 %v273, %v277
      %vm279 = vweird.f32 %v272
      %vm280 = vweird.f32 %v273
      %vm281 = vmor %vm279, %vm280
      %v282 = vsel %vm281, %v273, %v278
      %v284 = vperm.slane %v282, 0
      %v286 = vmul.f32 %v264, %v284
      %v287 = vmul.f32 %v265, %v284
      %v288 = vmul.f32 %v266, %v284
      %v289 = vmul.f32 %v267, %v284
      %v290 = vmul.f32 %v268, %v284
      %v291 = vmul.f32 %v269, %v284
      %v292 = vmul.f32 %v270, %v284
      %v293 = vmul.f32 %v271, %v284
      %vm294 = vcmp.ge.f32.partialorder %v286, 0.0
      %vm295 = vcmp.ge.f32.partialorder %v287, 0.0
      %vm296 = vcmp.ge.f32.partialorder %v288, 0.0
      %vm297 = vcmp.ge.f32.partialorder %v289, 0.0
      %vm298 = vcmp.ge.f32.partialorder %v290, 0.0
      %vm299 = vcmp.ge.f32.partialorder %v291, 0.0
      %vm300 = vcmp.ge.f32.partialorder %v292, 0.0
      %vm301 = vcmp.ge.f32.partialorder %v293, 0.0
      %v302 = vmul.f32 %v286, 0.2
      %v303 = vmul.f32 %v287, 0.2
      %v304 = vmul.f32 %v288, 0.2
      %v305 = vmul.f32 %v289, 0.2
      %v306 = vmul.f32 %v290, 0.2
      %v307 = vmul.f32 %v291, 0.2
      %v308 = vmul.f32 %v292, 0.2
      %v309 = vmul.f32 %v293, 0.2
      %v310 = vsel %vm294, %v286, %v302
      %v311 = vsel %vm295, %v287, %v303
      %v312 = vsel %vm296, %v288, %v304
      %v313 = vsel %vm297, %v289, %v305
      %v314 = vsel %vm298, %v290, %v306
      %v315 = vsel %vm299, %v291, %v307
      %v316 = vsel %vm300, %v292, %v308
      %v317 = vsel %vm301, %v293, %v309
      %v318 = vpack.c.bf16 %v310, %v310
      %v319 = vpack.c.bf16 %v311, %v311
      %v320 = vpack.c.bf16 %v312, %v312
      %v321 = vpack.c.bf16 %v313, %v313
      %v322 = vpack.c.bf16 %v314, %v314
      %v323 = vpack.c.bf16 %v315, %v315
      %v324 = vpack.c.bf16 %v316, %v316
      %v325 = vpack.c.bf16 %v317, %v317
      %326 = vst [vmem:[%s236] sm:$0xf] %v318
      %327 = vst [vmem:[%s236 + $0x4] sm:$0xf] %v319
      %328 = vst [vmem:[%s236 + $0x8] sm:$0xf] %v320
      %329 = vst [vmem:[%s236 + $0xc] sm:$0xf] %v321
      %330 = vst [vmem:[%s236 + $0x10] sm:$0xf] %v322
      %331 = vst [vmem:[%s236 + $0x14] sm:$0xf] %v323
      %332 = vst [vmem:[%s236 + $0x18] sm:$0xf] %v324
      %333 = vst [vmem:[%s236 + $0x1c] sm:$0xf] %v325
      %s334 = smul.u32 8, %s19
      %p335 = scmp.lt.s32.totalorder %s18, 1
      %s336 = scalar_select %p335, %s18, 1
      %p337 = scmp.lt.s32.totalorder %s334, 7
      %s338 = scalar_select %p337, %s334, 7
      %s339 = smul.addr %s336, 8
      %s340 = sadd.s32 %s338, %s339
      %s341 = smul.addr %s340, 4
      %s342 = scalar_lea.vmem %s3, %s341
      // Predicated region
      $region33: #{zencoder_forward.13} parent=31 // pred_check
        %p343 = pneg %p126
      $region34: #{zencoder_forward.13} parent=31 // pred_check_branch
        %345 = sbr.rel (%p343) target = $region36
      $region35: #{zencoder_forward.13} parent=31 // pred_region
        %s346 = smul.u32 8, %s19
      $region36: #{zencoder_forward.13} parent=31 // pred_fallthru
        _
    $region32: #{zencoder_forward.13} parent=5 // pred_fallthru
      _
    %p347 = scmp.le.s32.totalorder 2, %s9
    // Predicated region
    $region37: #{zencoder_forward.13} parent=5 // pred_check
      %p348 = pneg %p347
    $region38: #{zencoder_forward.13} parent=5 // pred_check_branch
      %350 = sbr.rel (%p348) target = $region40
    $region39: #{zencoder_forward.13} parent=5 // pred_region
      %s351 = ssub.s32 %s9, 2
      // Predicated region
      $region41: #{zencoder_forward.13} parent=39 // pred_check
        %p352 = pneg %p132
      $region42: #{zencoder_forward.13} parent=39 // pred_check_branch
        %354 = sbr.rel (%p352) target = $region44
      $region43: #{zencoder_forward.13} parent=39 // pred_region
        %s355 = smul.u32 8, %s21
        %p356 = scmp.lt.s32.totalorder %s20, 1
        %s357 = scalar_select %p356, %s20, 1
        %p358 = scmp.lt.s32.totalorder %s355, 7
        %s359 = scalar_select %p358, %s355, 7
        %s360 = smul.addr %s357, 8
        %s361 = sadd.s32 %s359, %s360
        %s362 = smul.addr %s361, 4
        %s363 = scalar_lea.vmem %s3, %s362
      $region44: #{zencoder_forward.13} parent=39 // pred_fallthru
        _
    $region40: #{zencoder_forward.13} parent=5 // pred_fallthru
      _
  $region6: #{zencoder_forward.13} parent=0 // loop_footer
    %s13 = sadd.s32 1, %s9
  $region7: #{zencoder_forward.13} parent=0 // loop_footer_branch
    %8 = sbr.rel target = $region3
  $region8: #{zencoder_forward.13} parent=0 // loop_exit
    _

// kernel: zencoder_forward.12
$region0: #{zencoder_forward.12}
  #allocation0 [shape = 'u32[]', space=smem, size = 0x4, offset = 0x4, fixed_abs, tag = 'smem constant byte address 0x4 - core index']
  #allocation1 [shape = 'u32[72,128]{1,0:T(1,128)}', space=vmem, size = 0x9000, scoped, tag = 'internal scratch']
  %s0 = inlined_call_operand.vmem [shape: bf16[2,64,288], index: 0, kind: input, shape index: {}]
  %s1 = inlined_call_operand.vmem [shape: bf16[288,128], index: 1, kind: input, shape index: {}]
  %s2 = inlined_call_operand.vmem [shape: f32[1,128], index: 2, kind: input, shape index: {}]
  %s3 = inlined_call_operand.vmem [shape: bf16[2,64,128], index: 3, kind: output, shape index: {0}]
  %s4 = inlined_call_operand.vmem [shape: f32[2,1,128], index: 4, kind: output, shape index: {1}]
  %s5 = inlined_call_operand.vmem [shape: f32[2,1,128], index: 5, kind: output, shape index: {2}]
  %6 = xla_tuple %s3, %s4, %s5
  %s7 = sld [smem:[#allocation0]]
  $region65: #{zencoder_forward.12} parent=0
    _
  %s9 = ssub.s32 1, %s7
  %s10 = scalar_select 0, %s9, %s7
  loop: start=0, step=1, limit=4
  $region2: #{zencoder_forward.12} parent=0 // loop_pre_header
    _
  $region3: #{zencoder_forward.12} parent=0 // loop_header
    %s12 = sphi 0, %s16
    %p13 = scmp.ge.s32.totalorder %s12, 4
    %s19 = sphi 0, %s31
    %s20 = sphi 0, %s27
    %s21 = sphi 0, %s19
    %s22 = sphi 0, %s20
    %s23 = sphi 0, %s21
    %s24 = sphi 0, %s22
    %s36 = sphi 0, %s38
    %s39 = sphi 0, %s36
    %s40 = sphi 0, %s39
    %s56 = sphi 0, %s40
    %s60 = sphi 0, %s60
    %s62 = sphi 0, %s60
    %s63 = sphi 0, %s62
    %s77 = sphi 0, %s63
    %s81 = sphi 0, %s81
    %s83 = sphi 0, %s81
    %s84 = sphi 0, %s83
    %s98 = sphi 0, %s84
    %s106 = sphi 0, %s108
    %s109 = sphi 0, %s106
    %s110 = sphi 0, %s109
    %s126 = sphi 0, %s110
    %s132 = sphi 0, %s134
    %s135 = sphi 0, %s132
    %s136 = sphi 0, %s135
    %s152 = sphi 0, %s136
    %s158 = sphi 0, %s160
    %s161 = sphi 0, %s158
    %s162 = sphi 0, %s161
    %s178 = sphi 0, %s162
  $region4: #{zencoder_forward.12} parent=0 // loop_header_branch
    %15 = sbr.rel (%p13) target = $region8
  $region5: #{zencoder_forward.12} parent=0 // loop_body
    %s17 = ssub.s32 %s12, 1
    %s18 = ssub.s32 %s12, 2
    %s25 = sadd.s32 1, %s20
    %p26 = scmp.ge.s32.totalorder %s25, 1
    %s27 = scalar_select %p26, 0, %s25
    %s28 = sadd.s32 1, %s19
    %s29 = scalar_select %p26, %s28, %s19
    %p30 = scmp.ge.s32.totalorder %s29, 2
    %s31 = scalar_select %p30, 0, %s29
    %s32 = ssub.s32 %s19, %s31
    %s33 = ssub.s32 %s20, %s27
    %s34 = sor.u32 %s32, %s33
    %p35 = scmp.eq.s32.totalorder %s34, 0
    %s37 = sadd.s32 %s36, 1
    %s38 = scalar_select %p35, %s36, %s37
    %p41 = pneg %p35
    %p42 = scmp.eq.s32.totalorder %s12, 1
    %p43 = por %p41, %p42
    %p44 = scmp.ne.s32.totalorder %s36, %s39
    %p45 = scmp.eq.s32.totalorder %s12, 0
    %p46 = por %p44, %p45
    %p47 = scmp.ne.s32.totalorder %s36, %s39
    %p48 = scmp.eq.s32.totalorder %s17, 1
    %p49 = por %p47, %p48
    %p50 = scmp.ne.s32.totalorder %s39, %s40
    %p51 = scmp.eq.s32.totalorder %s17, 0
    %p52 = por %p50, %p51
    %p53 = scmp.ne.s32.totalorder %s39, %s40
    %p54 = scmp.eq.s32.totalorder %s18, 1
    %p55 = por %p53, %p54
    %p57 = scmp.ne.s32.totalorder %s40, %s56
    %p58 = scmp.eq.s32.totalorder %s18, 0
    %p59 = por %p57, %p58
    %s61 = sadd.s32 %s60, 1
    %p64 = scmp.eq.s32.totalorder %s12, 1
    %p65 = scmp.ne.s32.totalorder %s60, %s62
    %p66 = scmp.eq.s32.totalorder %s12, 0
    %p67 = por %p65, %p66
    %p68 = scmp.ne.s32.totalorder %s60, %s62
    %p69 = scmp.eq.s32.totalorder %s17, 1
    %p70 = por %p68, %p69
    %p71 = scmp.ne.s32.totalorder %s62, %s63
    %p72 = scmp.eq.s32.totalorder %s17, 0
    %p73 = por %p71, %p72
    %p74 = scmp.ne.s32.totalorder %s62, %s63
    %p75 = scmp.eq.s32.totalorder %s18, 1
    %p76 = por %p74, %p75
    %p78 = scmp.ne.s32.totalorder %s63, %s77
    %p79 = scmp.eq.s32.totalorder %s18, 0
    %p80 = por %p78, %p79
    %s82 = sadd.s32 %s81, 1
    %p85 = scmp.eq.s32.totalorder %s12, 1
    %p86 = scmp.ne.s32.totalorder %s81, %s83
    %p87 = scmp.eq.s32.totalorder %s12, 0
    %p88 = por %p86, %p87
    %p89 = scmp.ne.s32.totalorder %s81, %s83
    %p90 = scmp.eq.s32.totalorder %s17, 1
    %p91 = por %p89, %p90
    %p92 = scmp.ne.s32.totalorder %s83, %s84
    %p93 = scmp.eq.s32.totalorder %s17, 0
    %p94 = por %p92, %p93
    %p95 = scmp.ne.s32.totalorder %s83, %s84
    %p96 = scmp.eq.s32.totalorder %s18, 1
    %p97 = por %p95, %p96
    %p99 = scmp.ne.s32.totalorder %s84, %s98
    %p100 = scmp.eq.s32.totalorder %s18, 0
    %p101 = por %p99, %p100
    %s102 = ssub.s32 %s19, %s31
    %s103 = ssub.s32 %s20, %s27
    %s104 = sor.u32 %s102, %s103
    %p105 = scmp.eq.s32.totalorder %s104, 0
    %s107 = sadd.s32 %s106, 1
    %s108 = scalar_select %p105, %s106, %s107
    %p111 = pneg %p105
    %p112 = scmp.eq.s32.totalorder %s12, 1
    %p113 = por %p111, %p112
    %p114 = scmp.ne.s32.totalorder %s106, %s109
    %p115 = scmp.eq.s32.totalorder %s12, 0
    %p116 = por %p114, %p115
    %p117 = scmp.ne.s32.totalorder %s106, %s109
    %p118 = scmp.eq.s32.totalorder %s17, 1
    %p119 = por %p117, %p118
    %p120 = scmp.ne.s32.totalorder %s109, %s110
    %p121 = scmp.eq.s32.totalorder %s17, 0
    %p122 = por %p120, %p121
    %p123 = scmp.ne.s32.totalorder %s109, %s110
    %p124 = scmp.eq.s32.totalorder %s18, 1
    %p125 = por %p123, %p124
    %p127 = scmp.ne.s32.totalorder %s110, %s126
    %p128 = scmp.eq.s32.totalorder %s18, 0
    %p129 = por %p127, %p128
    %s130 = ssub.s32 %s19, %s31
    %p131 = scmp.eq.s32.totalorder %s130, 0
    %s133 = sadd.s32 %s132, 1
    %s134 = scalar_select %p131, %s132, %s133
    %p137 = pneg %p131
    %p138 = scmp.eq.s32.totalorder %s12, 1
    %p139 = por %p137, %p138
    %p140 = scmp.ne.s32.totalorder %s132, %s135
    %p141 = scmp.eq.s32.totalorder %s12, 0
    %p142 = por %p140, %p141
    %p143 = scmp.ne.s32.totalorder %s132, %s135
    %p144 = scmp.eq.s32.totalorder %s17, 1
    %p145 = por %p143, %p144
    %p146 = scmp.ne.s32.totalorder %s135, %s136
    %p147 = scmp.eq.s32.totalorder %s17, 0
    %p148 = por %p146, %p147
    %p149 = scmp.ne.s32.totalorder %s135, %s136
    %p150 = scmp.eq.s32.totalorder %s18, 1
    %p151 = por %p149, %p150
    %p153 = scmp.ne.s32.totalorder %s136, %s152
    %p154 = scmp.eq.s32.totalorder %s18, 0
    %p155 = por %p153, %p154
    %s156 = ssub.s32 %s19, %s31
    %p157 = scmp.eq.s32.totalorder %s156, 0
    %s159 = sadd.s32 %s158, 1
    %s160 = scalar_select %p157, %s158, %s159
    %p163 = pneg %p157
    %p164 = scmp.eq.s32.totalorder %s12, 1
    %p165 = por %p163, %p164
    %p166 = scmp.ne.s32.totalorder %s158, %s161
    %p167 = scmp.eq.s32.totalorder %s12, 0
    %p168 = por %p166, %p167
    %p169 = scmp.ne.s32.totalorder %s158, %s161
    %p170 = scmp.eq.s32.totalorder %s17, 1
    %p171 = por %p169, %p170
    %p172 = scmp.ne.s32.totalorder %s161, %s162
    %p173 = scmp.eq.s32.totalorder %s17, 0
    %p174 = por %p172, %p173
    %p175 = scmp.ne.s32.totalorder %s161, %s162
    %p176 = scmp.eq.s32.totalorder %s18, 1
    %p177 = por %p175, %p176
    %p179 = scmp.ne.s32.totalorder %s162, %s178
    %p180 = scmp.eq.s32.totalorder %s18, 0
    %p181 = por %p179, %p180
    %p182 = scmp.le.s32.totalorder 1, %s12
    %p183 = scmp.lt.s32.totalorder %s12, 3
    %p184 = pnand %p182, %p183
    %p185 = pneg %p184
    // Predicated region
    $region9: #{zencoder_forward.12} parent=5 // pred_check
      _
    $region10: #{zencoder_forward.12} parent=5 // pred_check_branch
      %187 = sbr.rel (%p184) target = $region12
    $region11: #{zencoder_forward.12} parent=5 // pred_region
      %s188 = ssub.s32 %s12, 1
      // Predicated region
      $region13: #{zencoder_forward.12} parent=11 // pred_check
        %p189 = pneg %p73
      $region14: #{zencoder_forward.12} parent=11 // pred_check_branch
        %191 = sbr.rel (%p189) target = $region16
      $region15: #{zencoder_forward.12} parent=11 // pred_region
        _
      $region16: #{zencoder_forward.12} parent=11 // pred_fallthru
        _
      // Predicated region
      $region17: #{zencoder_forward.12} parent=11 // pred_check
        %p192 = pneg %p94
      $region18: #{zencoder_forward.12} parent=11 // pred_check_branch
        %194 = sbr.rel (%p192) target = $region20
      $region19: #{zencoder_forward.12} parent=11 // pred_region
        _
      $region20: #{zencoder_forward.12} parent=11 // pred_fallthru
        _
    $region12: #{zencoder_forward.12} parent=5 // pred_fallthru
      _
    %p195 = scmp.lt.s32.totalorder %s12, 2
    // Predicated region
    $region21: #{zencoder_forward.12} parent=5 // pred_check
      %p196 = pneg %p195
    $region22: #{zencoder_forward.12} parent=5 // pred_check_branch
      %198 = sbr.rel (%p196) target = $region24
    $region23: #{zencoder_forward.12} parent=5 // pred_region
      // Predicated region
      $region25: #{zencoder_forward.12} parent=23 // pred_check
        %p199 = pneg %p46
      $region26: #{zencoder_forward.12} parent=23 // pred_check_branch
        %201 = sbr.rel (%p199) target = $region28
      $region27: #{zencoder_forward.12} parent=23 // pred_region
        %s202 = smul.u32 8, %s20
        %p203 = scmp.lt.s32.totalorder %s19, 1
        %s204 = scalar_select %p203, %s19, 1
        %p205 = scmp.lt.s32.totalorder %s202, 7
        %s206 = scalar_select %p205, %s202, 7
        %s207 = smul.addr %s206, 3
        %s208 = smul.addr %s204, 24
        %s209 = sadd.s32 %s207, %s208
        %s210 = smul.addr %s209, 4
        %s211 = scalar_lea.vmem %s0, %s210
        %s212 = smul.u32 8, %s20
      $region28: #{zencoder_forward.12} parent=23 // pred_fallthru
        _
    $region24: #{zencoder_forward.12} parent=5 // pred_fallthru
      _
    %p213 = scmp.le.s32.totalorder 1, %s12
    %p214 = scmp.lt.s32.totalorder %s12, 3
    %p215 = pnand %p213, %p214
    %p216 = pneg %p215
    // Predicated region
    $region29: #{zencoder_forward.12} parent=5 // pred_check
      _
    $region30: #{zencoder_forward.12} parent=5 // pred_check_branch
      %218 = sbr.rel (%p215) target = $region32
    $region31: #{zencoder_forward.12} parent=5 // pred_region
      %s219 = ssub.s32 %s12, 1
      %s220 = smul.u32 8, %s22
      %p221 = scmp.lt.s32.totalorder %s21, 1
      %s222 = scalar_select %p221, %s21, 1
      %p223 = scmp.lt.s32.totalorder %s220, 7
      %s224 = scalar_select %p223, %s220, 7
      %s225 = smul.addr %s224, 3
      %s226 = smul.addr %s222, 24
      %s227 = sadd.s32 %s225, %s226
      %s228 = smul.addr %s227, 4
      %s229 = scalar_lea.vmem %s0, %s228
      %p230 = pneg %p52
      %p231 = pneg %p49
      %p232 = pneg %p73
      %p233 = pneg %p70
      %p234 = pneg %p94
      %p235 = pneg %p91
      %p236 = pneg %p122
      %p237 = pneg %p119
      %s238 = smul.u32 8, %s22
      %p239 = scmp.lt.s32.totalorder %s21, 1
      %s240 = scalar_select %p239, %s21, 1
      %p241 = scmp.lt.s32.totalorder %s238, 7
      %s242 = scalar_select %p241, %s238, 7
      %s243 = smul.addr %s240, 8
      %s244 = sadd.s32 %s242, %s243
      %s245 = smul.addr %s244, 4
      %s246 = scalar_lea.vmem %s3, %s245
      %p247 = pneg %p148
      %p248 = pneg %p145
      %p249 = scmp.lt.s32.totalorder %s21, 1
      %s250 = scalar_select %p249, %s21, 1
      %s251 = scalar_lea.vmem %s4, %s250
      %p252 = pneg %p174
      %p253 = pneg %p171
      %p254 = scmp.lt.s32.totalorder %s21, 1
      %s255 = scalar_select %p254, %s21, 1
      %s256 = scalar_lea.vmem %s5, %s255
      %s257 = smul.u32 8, %s22
      %p258 = scmp.lt.s32.totalorder %s21, 1
      %s259 = scalar_select %p258, %s21, 1
      %p260 = scmp.lt.s32.totalorder %s257, 7
      %s261 = scalar_select %p260, %s257, 7
      %s262 = smul.addr %s261, 3
      %s263 = smul.addr %s259, 24
      %s264 = sadd.s32 %s262, %s263
      %s265 = smul.addr %s264, 4
      %s266 = scalar_lea.vmem %s0, %s265
      %s267 = smul.u32 8, %s22
      %s268 = smul.u32 8, %s22
      %p269 = scmp.lt.s32.totalorder %s21, 1
      %s270 = scalar_select %p269, %s21, 1
      %p271 = scmp.lt.s32.totalorder %s268, 7
      %s272 = scalar_select %p271, %s268, 7
      %s273 = smul.addr %s270, 8
      %s274 = sadd.s32 %s272, %s273
      %s275 = smul.addr %s274, 4
      %s276 = scalar_lea.vmem %s3, %s275
      %s277 = smul.u32 8, %s22
      %p278 = scmp.lt.s32.totalorder %s21, 1
      %s279 = scalar_select %p278, %s21, 1
      %s280 = scalar_lea.vmem %s4, %s279
      %p281 = scmp.lt.s32.totalorder %s21, 1
      %s282 = scalar_select %p281, %s21, 1
      %s283 = scalar_lea.vmem %s5, %s282
      %v285 = vld [vmem:[%s266] sm:$0xff]
      %v286 = vld [vmem:[%s266 + $0x8] sm:$0xf]
      %v287 = vld [vmem:[%s266 + $0xc] sm:$0xff]
      %v288 = vld [vmem:[%s266 + $0x14] sm:$0xf]
      %v289 = vld [vmem:[%s266 + $0x18] sm:$0xff]
      %v290 = vld [vmem:[%s266 + $0x20] sm:$0xf]
      %v291 = vld [vmem:[%s266 + $0x24] sm:$0xff]
      %v292 = vld [vmem:[%s266 + $0x2c] sm:$0xf]
      %v293 = vld [vmem:[%s266 + $0x30] sm:$0xff]
      %v294 = vld [vmem:[%s266 + $0x38] sm:$0xf]
      %v295 = vld [vmem:[%s266 + $0x3c] sm:$0xff]
      %v296 = vld [vmem:[%s266 + $0x44] sm:$0xf]
      %v297 = vld [vmem:[%s266 + $0x48] sm:$0xff]
      %v298 = vld [vmem:[%s266 + $0x50] sm:$0xf]
      %v299 = vld [vmem:[%s266 + $0x54] sm:$0xff]
      %v300 = vld [vmem:[%s266 + $0x5c] sm:$0xf]
      %v301 = vld [vmem:[%s1] sm:$0xf]
      %v302 = vld [vmem:[%s1 + $0x4] sm:$0xf]
      %v303 = vld [vmem:[%s1 + $0x8] sm:$0xf]
      %v304 = vld [vmem:[%s1 + $0xc] sm:$0xf]
      %v305 = vld [vmem:[%s1 + $0x10] sm:$0xf]
      %v306 = vld [vmem:[%s1 + $0x14] sm:$0xf]
      %v307 = vld [vmem:[%s1 + $0x18] sm:$0xf]
      %v308 = vld [vmem:[%s1 + $0x1c] sm:$0xf]
      %v309 = vld [vmem:[%s1 + $0x20] sm:$0xf]
      %v310 = vld [vmem:[%s1 + $0x24] sm:$0xf]
      %v311 = vld [vmem:[%s1 + $0x28] sm:$0xf]
      %v312 = vld [vmem:[%s1 + $0x2c] sm:$0xf]
      %v313 = vld [vmem:[%s1 + $0x30] sm:$0xf]
      %v314 = vld [vmem:[%s1 + $0x34] sm:$0xf]
      %v315 = vld [vmem:[%s1 + $0x38] sm:$0xf]
      %v316 = vld [vmem:[%s1 + $0x3c] sm:$0xf]
      %v317 = vld [vmem:[%s1 + $0x40] sm:$0xf]
      %v318 = vld [vmem:[%s1 + $0x44] sm:$0xf]
      %v319 = vld [vmem:[%s1 + $0x48] sm:$0xf]
      %v320 = vld [vmem:[%s1 + $0x4c] sm:$0xf]
      %v321 = vld [vmem:[%s1 + $0x50] sm:$0xf]
      %v322 = vld [vmem:[%s1 + $0x54] sm:$0xf]
      %v323 = vld [vmem:[%s1 + $0x58] sm:$0xf]
      %v324 = vld [vmem:[%s1 + $0x5c] sm:$0xf]
      %v325 = vld [vmem:[%s1 + $0x60] sm:$0xf]
      %v326 = vld [vmem:[%s1 + $0x64] sm:$0xf]
      %v327 = vld [vmem:[%s1 + $0x68] sm:$0xf]
      %v328 = vld [vmem:[%s1 + $0x6c] sm:$0xf]
      %v329 = vld [vmem:[%s1 + $0x70] sm:$0xf]
      %v330 = vld [vmem:[%s1 + $0x74] sm:$0xf]
      %v331 = vld [vmem:[%s1 + $0x78] sm:$0xf]
      %v332 = vld [vmem:[%s1 + $0x7c] sm:$0xf]
      %v333 = vld [vmem:[%s1 + $0x80] sm:$0xf]
      %v334 = vld [vmem:[%s1 + $0x84] sm:$0xf]
      %v335 = vld [vmem:[%s1 + $0x88] sm:$0xf]
      %v336 = vld [vmem:[%s1 + $0x8c] sm:$0xf]
      %v337 = vld [vmem:[%s2] sm:$0x1]
      %v339 = vperm.slane %v337, 0
      %v357 = vunpack.c.l.b16 %v285
      %v358 = vunpack.c.h.b16 %v285
      %v359 = vunpack.c.l.b16 %v286
      %v360 = vunpack.c.l.b16 %v287
      %v361 = vunpack.c.h.b16 %v287
      %v362 = vunpack.c.l.b16 %v288
      %v363 = vunpack.c.l.b16 %v289
      %v364 = vunpack.c.h.b16 %v289
      %v365 = vunpack.c.l.b16 %v290
      %v366 = vunpack.c.l.b16 %v291
      %v367 = vunpack.c.h.b16 %v291
      %v368 = vunpack.c.l.b16 %v292
      %v369 = vunpack.c.l.b16 %v293
      %v370 = vunpack.c.h.b16 %v293
      %v371 = vunpack.c.l.b16 %v294
      %v372 = vunpack.c.l.b16 %v295
      %v373 = vunpack.c.h.b16 %v295
      %v374 = vunpack.c.l.b16 %v296
      %v375 = vunpack.c.l.b16 %v297
      %v376 = vunpack.c.h.b16 %v297
      %v377 = vunpack.c.l.b16 %v298
      %v378 = vunpack.c.l.b16 %v299
      %v379 = vunpack.c.h.b16 %v299
      %v380 = vunpack.c.l.b16 %v300
      %v381 = vpack.c.b16 %v360, %v357
      %v382 = vpack.c.b16 %v361, %v358
      %v383 = vpack.c.b16 %v362, %v359
      %v384 = vpack.c.b16 %v366, %v363
      %v385 = vpack.c.b16 %v367, %v364
      %v386 = vpack.c.b16 %v368, %v365
      %v387 = vpack.c.b16 %v372, %v369
      %v388 = vpack.c.b16 %v373, %v370
      %v389 = vpack.c.b16 %v374, %v371
      %v390 = vpack.c.b16 %v378, %v375
      %v391 = vpack.c.b16 %v379, %v376
      %v392 = vpack.c.b16 %v380, %v377
      %v437 = vunpack.c.l.b16 %v301
      %v438 = vunpack.c.l.b16 %v302
      %v439 = vunpack.c.l.b16 %v303
      %v440 = vunpack.c.l.b16 %v304
      %v441 = vunpack.c.l.b16 %v305
      %v442 = vunpack.c.l.b16 %v306
      %v443 = vunpack.c.l.b16 %v307
      %v444 = vunpack.c.l.b16 %v308
      %v445 = vunpack.c.l.b16 %v309
      %v446 = vunpack.c.l.b16 %v310
      %v447 = vunpack.c.l.b16 %v311
      %v448 = vunpack.c.l.b16 %v312
      %v449 = vunpack.c.l.b16 %v313
      %v450 = vunpack.c.l.b16 %v314
      %v451 = vunpack.c.l.b16 %v315
      %v452 = vunpack.c.l.b16 %v316
      %v453 = vunpack.c.l.b16 %v317
      %v454 = vunpack.c.l.b16 %v318
      %v455 = vunpack.c.l.b16 %v319
      %v456 = vunpack.c.l.b16 %v320
      %v457 = vunpack.c.l.b16 %v321
      %v458 = vunpack.c.l.b16 %v322
      %v459 = vunpack.c.l.b16 %v323
      %v460 = vunpack.c.l.b16 %v324
      %v461 = vunpack.c.l.b16 %v325
      %v462 = vunpack.c.l.b16 %v326
      %v463 = vunpack.c.l.b16 %v327
      %v464 = vunpack.c.l.b16 %v328
      %v465 = vunpack.c.l.b16 %v329
      %v466 = vunpack.c.l.b16 %v330
      %v467 = vunpack.c.l.b16 %v331
      %v468 = vunpack.c.l.b16 %v332
      %v469 = vunpack.c.l.b16 %v333
      %v470 = vunpack.c.l.b16 %v334
      %v471 = vunpack.c.l.b16 %v335
      %v472 = vunpack.c.l.b16 %v336
      %v473 = vpack.c.b16 %v438, %v437
      %v474 = vpack.c.b16 %v440, %v439
      %v475 = vpack.c.b16 %v442, %v441
      %v476 = vpack.c.b16 %v444, %v443
      %v477 = vpack.c.b16 %v446, %v445
      %v478 = vpack.c.b16 %v448, %v447
      %v479 = vpack.c.b16 %v450, %v449
      %v480 = vpack.c.b16 %v452, %v451
      %v481 = vpack.c.b16 %v454, %v453
      %v482 = vpack.c.b16 %v456, %v455
      %v483 = vpack.c.b16 %v458, %v457
      %v484 = vpack.c.b16 %v460, %v459
      %v485 = vpack.c.b16 %v462, %v461
      %v486 = vpack.c.b16 %v464, %v463
      %v487 = vpack.c.b16 %v466, %v465
      %v488 = vpack.c.b16 %v468, %v467
      %v489 = vpack.c.b16 %v470, %v469
      %v490 = vpack.c.b16 %v472, %v471
      %vm509 = vcmask 261120
      %v511 = vsel %vm509, %v383, 0
      %v514 = vsel %vm509, %v386, 0
      %v517 = vsel %vm509, %v389, 0
      %v520 = vsel %vm509, %v392, 0
      %522 = vmatpush.bf16.msra.mxu0 %v480
      %523 = vmatpush.bf16.msra.mxu0 %v479
      %524 = vmatpush.bf16.msra.mxu0 %v478
      %525 = vmatpush.bf16.msra.mxu0 %v477
      %526 = vmatpush.bf16.msra.mxu0 %v476
      %527 = vmatpush.bf16.msra.mxu0 %v475
      %528 = vmatpush.bf16.msra.mxu0 %v474
      %529 = vmatpush.bf16.msra.mxu0 %v473
      %530 = vmatmul.bf16.gmra.mxu0 %v381
      %v531 = vpop.f32.mrf.mxu0
      %v532 = vadd.f32 %v339, %v531
      %v533 = vpop.f32.mrf.mxu0
      %v534 = vadd.f32 %v339, %v533
      %535 = vmatmul.bf16.gmra.mxu0 %v384
      %v536 = vpop.f32.mrf.mxu0
      %v537 = vadd.f32 %v339, %v536
      %v538 = vpop.f32.mrf.mxu0
      %v539 = vadd.f32 %v339, %v538
      %540 = vmatmul.bf16.gmra.mxu0 %v387
      %v541 = vpop.f32.mrf.mxu0
      %v542 = vadd.f32 %v339, %v541
      %v543 = vpop.f32.mrf.mxu0
      %v544 = vadd.f32 %v339, %v543
      %545 = vmatmul.bf16.gmra.mxu0 %v390
      %v546 = vpop.f32.mrf.mxu0
      %v547 = vadd.f32 %v339, %v546
      %v548 = vpop.f32.mrf.mxu0
      %v549 = vadd.f32 %v339, %v548
      %550 = vdwg.mxu0
      %551 = vmatpush.bf16.msra.mxu0 %v488
      %552 = vmatpush.bf16.msra.mxu0 %v487
      %553 = vmatpush.bf16.msra.mxu0 %v486
      %554 = vmatpush.bf16.msra.mxu0 %v485
      %555 = vmatpush.bf16.msra.mxu0 %v484
      %556 = vmatpush.bf16.msra.mxu0 %v483
      %557 = vmatpush.bf16.msra.mxu0 %v482
      %558 = vmatpush.bf16.msra.mxu0 %v481
      %559 = vmatmul.bf16.gmra.mxu0 %v382
      %v560 = vpop.f32.mrf.mxu0
      %v561 = vadd.f32 %v532, %v560
      %v562 = vpop.f32.mrf.mxu0
      %v563 = vadd.f32 %v534, %v562
      %564 = vmatmul.bf16.gmra.mxu0 %v385
      %v565 = vpop.f32.mrf.mxu0
      %v566 = vadd.f32 %v537, %v565
      %v567 = vpop.f32.mrf.mxu0
      %v568 = vadd.f32 %v539, %v567
      %569 = vmatmul.bf16.gmra.mxu0 %v388
      %v570 = vpop.f32.mrf.mxu0
      %v571 = vadd.f32 %v542, %v570
      %v572 = vpop.f32.mrf.mxu0
      %v573 = vadd.f32 %v544, %v572
      %574 = vmatmul.bf16.gmra.mxu0 %v391
      %v575 = vpop.f32.mrf.mxu0
      %v576 = vadd.f32 %v547, %v575
      %v577 = vpop.f32.mrf.mxu0
      %v578 = vadd.f32 %v549, %v577
      %579 = vdwg.mxu0
      %580 = vmatpush.bf16.msra.mxu0 0
      %581 = vmatpush.bf16.msra.mxu0 0
      %582 = vmatpush.bf16.msra.mxu0 0
      %583 = vmatpush.bf16.msra.mxu0 0
      %584 = vmatpush.bf16.msra.mxu0 0
      %585 = vmatpush.bf16.msra.mxu0 0
      %586 = vmatpush.bf16.msra.mxu0 %v490
      %587 = vmatpush.bf16.msra.mxu0 %v489
      %588 = vmatmul.bf16.gmra.mxu0 %v511
      %v589 = vpop.f32.mrf.mxu0
      %v590 = vadd.f32 %v561, %v589
      %v591 = vpop.f32.mrf.mxu0
      %v592 = vadd.f32 %v563, %v591
      %593 = vmatmul.bf16.gmra.mxu0 %v514
      %v594 = vpop.f32.mrf.mxu0
      %v595 = vadd.f32 %v566, %v594
      %v596 = vpop.f32.mrf.mxu0
      %v597 = vadd.f32 %v568, %v596
      %598 = vmatmul.bf16.gmra.mxu0 %v517
      %v599 = vpop.f32.mrf.mxu0
      %v600 = vadd.f32 %v571, %v599
      %v601 = vpop.f32.mrf.mxu0
      %v602 = vadd.f32 %v573, %v601
      %603 = vmatmul.bf16.gmra.mxu0 %v520
      %v604 = vpop.f32.mrf.mxu0
      %v605 = vadd.f32 %v576, %v604
      %v606 = vpop.f32.mrf.mxu0
      %v607 = vadd.f32 %v578, %v606
      %608 = vdwg.mxu0
      %v609 = vpack.c.bf16 %v590, %v590
      %v610 = vpack.c.bf16 %v592, %v592
      %v611 = vpack.c.bf16 %v595, %v595
      %v612 = vpack.c.bf16 %v597, %v597
      %v613 = vpack.c.bf16 %v600, %v600
      %v614 = vpack.c.bf16 %v602, %v602
      %v615 = vpack.c.bf16 %v605, %v605
      %v616 = vpack.c.bf16 %v607, %v607
      %617 = vst [vmem:[%s276] sm:$0xf] %v609
      %618 = vst [vmem:[%s276 + $0x4] sm:$0xf] %v610
      %619 = vst [vmem:[%s276 + $0x8] sm:$0xf] %v611
      %620 = vst [vmem:[%s276 + $0xc] sm:$0xf] %v612
      %621 = vst [vmem:[%s276 + $0x10] sm:$0xf] %v613
      %622 = vst [vmem:[%s276 + $0x14] sm:$0xf] %v614
      %623 = vst [vmem:[%s276 + $0x18] sm:$0xf] %v615
      %624 = vst [vmem:[%s276 + $0x1c] sm:$0xf] %v616
      %p625 = scmp.eq.s32.totalorder %s22, 0
      // Predicated region
      $region33: #{zencoder_forward.12} parent=31 // pred_check
        %p626 = pneg %p625
      $region34: #{zencoder_forward.12} parent=31 // pred_check_branch
        %628 = sbr.rel (%p626) target = $region36
      $region35: #{zencoder_forward.12} parent=31 // pred_region
        %629 = vst [vmem:[%s280] sm:$0x1] 0.0
        %630 = vst [vmem:[%s283] sm:$0x1] 0.0
      $region36: #{zencoder_forward.12} parent=31 // pred_fallthru
        _
      %v631 = vld [vmem:[%s280] sm:$0x1]
      %v632 = vadd.f32 %v590, %v592
      %v633 = vadd.f32 %v632, %v595
      %v634 = vadd.f32 %v633, %v597
      %v635 = vadd.f32 %v634, %v600
      %v636 = vadd.f32 %v635, %v602
      %v637 = vadd.f32 %v636, %v605
      %v638 = vadd.f32 %v637, %v607
      %v639 = vrot.slane %v638, 4
      %v640 = vadd.f32 %v638, %v639
      %v641 = vrot.slane %v640, 2
      %v642 = vadd.f32 %v640, %v641
      %v643 = vrot.slane %v642, 1
      %v644 = vadd.f32 %v642, %v643
      %v645 = vadd.f32 %v631, %v644
      %646 = vst [vmem:[%s280] sm:$0x1] %v645
      %v647 = vld [vmem:[%s283] sm:$0x1]
      %v648 = vmul.f32 %v590, %v590
      %v649 = vmul.f32 %v592, %v592
      %v650 = vmul.f32 %v595, %v595
      %v651 = vmul.f32 %v597, %v597
      %v652 = vmul.f32 %v600, %v600
      %v653 = vmul.f32 %v602, %v602
      %v654 = vmul.f32 %v605, %v605
      %v655 = vmul.f32 %v607, %v607
      %v656 = vadd.f32 %v648, %v649
      %v657 = vadd.f32 %v656, %v650
      %v658 = vadd.f32 %v657, %v651
      %v659 = vadd.f32 %v658, %v652
      %v660 = vadd.f32 %v659, %v653
      %v661 = vadd.f32 %v660, %v654
      %v662 = vadd.f32 %v661, %v655
      %v663 = vrot.slane %v662, 4
      %v664 = vadd.f32 %v662, %v663
      %v665 = vrot.slane %v664, 2
      %v666 = vadd.f32 %v664, %v665
      %v667 = vrot.slane %v666, 1
      %v668 = vadd.f32 %v666, %v667
      %v669 = vadd.f32 %v647, %v668
      %670 = vst [vmem:[%s283] sm:$0x1] %v669
      %s671 = smul.u32 8, %s22
      %p672 = scmp.lt.s32.totalorder %s21, 1
      %s673 = scalar_select %p672, %s21, 1
      %p674 = scmp.lt.s32.totalorder %s671, 7
      %s675 = scalar_select %p674, %s671, 7
      %s676 = smul.addr %s673, 8
      %s677 = sadd.s32 %s675, %s676
      %s678 = smul.addr %s677, 4
      %s679 = scalar_lea.vmem %s3, %s678
      %p680 = scmp.lt.s32.totalorder %s21, 1
      %s681 = scalar_select %p680, %s21, 1
      %s682 = scalar_lea.vmem %s4, %s681
      %p683 = scmp.lt.s32.totalorder %s21, 1
      %s684 = scalar_select %p683, %s21, 1
      %s685 = scalar_lea.vmem %s5, %s684
      // Predicated region
      $region37: #{zencoder_forward.12} parent=31 // pred_check
        %p686 = pneg %p119
      $region38: #{zencoder_forward.12} parent=31 // pred_check_branch
        %688 = sbr.rel (%p686) target = $region40
      $region39: #{zencoder_forward.12} parent=31 // pred_region
        %s689 = smul.u32 8, %s22
      $region40: #{zencoder_forward.12} parent=31 // pred_fallthru
        _
      // Predicated region
      $region41: #{zencoder_forward.12} parent=31 // pred_check
        %p690 = pneg %p145
      $region42: #{zencoder_forward.12} parent=31 // pred_check_branch
        %692 = sbr.rel (%p690) target = $region44
      $region43: #{zencoder_forward.12} parent=31 // pred_region
        _
      $region44: #{zencoder_forward.12} parent=31 // pred_fallthru
        _
      // Predicated region
      $region45: #{zencoder_forward.12} parent=31 // pred_check
        %p693 = pneg %p171
      $region46: #{zencoder_forward.12} parent=31 // pred_check_branch
        %695 = sbr.rel (%p693) target = $region48
      $region47: #{zencoder_forward.12} parent=31 // pred_region
        _
      $region48: #{zencoder_forward.12} parent=31 // pred_fallthru
        _
    $region32: #{zencoder_forward.12} parent=5 // pred_fallthru
      _
    %p696 = scmp.le.s32.totalorder 2, %s12
    // Predicated region
    $region49: #{zencoder_forward.12} parent=5 // pred_check
      %p697 = pneg %p696
    $region50: #{zencoder_forward.12} parent=5 // pred_check_branch
      %699 = sbr.rel (%p697) target = $region52
    $region51: #{zencoder_forward.12} parent=5 // pred_region
      %s700 = ssub.s32 %s12, 2
      // Predicated region
      $region53: #{zencoder_forward.12} parent=51 // pred_check
        %p701 = pneg %p125
      $region54: #{zencoder_forward.12} parent=51 // pred_check_branch
        %703 = sbr.rel (%p701) target = $region56
      $region55: #{zencoder_forward.12} parent=51 // pred_region
        %s704 = smul.u32 8, %s24
        %p705 = scmp.lt.s32.totalorder %s23, 1
        %s706 = scalar_select %p705, %s23, 1
        %p707 = scmp.lt.s32.totalorder %s704, 7
        %s708 = scalar_select %p707, %s704, 7
        %s709 = smul.addr %s706, 8
        %s710 = sadd.s32 %s708, %s709
        %s711 = smul.addr %s710, 4
        %s712 = scalar_lea.vmem %s3, %s711
      $region56: #{zencoder_forward.12} parent=51 // pred_fallthru
        _
      // Predicated region
      $region57: #{zencoder_forward.12} parent=51 // pred_check
        %p713 = pneg %p151
      $region58: #{zencoder_forward.12} parent=51 // pred_check_branch
        %715 = sbr.rel (%p713) target = $region60
      $region59: #{zencoder_forward.12} parent=51 // pred_region
        %p716 = scmp.lt.s32.totalorder %s23, 1
        %s717 = scalar_select %p716, %s23, 1
        %s718 = scalar_lea.vmem %s4, %s717
      $region60: #{zencoder_forward.12} parent=51 // pred_fallthru
        _
      // Predicated region
      $region61: #{zencoder_forward.12} parent=51 // pred_check
        %p719 = pneg %p177
      $region62: #{zencoder_forward.12} parent=51 // pred_check_branch
        %721 = sbr.rel (%p719) target = $region64
      $region63: #{zencoder_forward.12} parent=51 // pred_region
        %p722 = scmp.lt.s32.totalorder %s23, 1
        %s723 = scalar_select %p722, %s23, 1
        %s724 = scalar_lea.vmem %s5, %s723
      $region64: #{zencoder_forward.12} parent=51 // pred_fallthru
        _
    $region52: #{zencoder_forward.12} parent=5 // pred_fallthru
      _
  $region6: #{zencoder_forward.12} parent=0 // loop_footer
    %s16 = sadd.s32 1, %s12
  $region7: #{zencoder_forward.12} parent=0 // loop_footer_branch
    %11 = sbr.rel target = $region3
  $region8: #{zencoder_forward.12} parent=0 // loop_exit
    _

// kernel: zencoder_forward.15
$region0: #{zencoder_forward.15}
  #allocation0 [shape = 'u32[]', space=smem, size = 0x4, offset = 0x4, fixed_abs, tag = 'smem constant byte address 0x4 - core index']
  #allocation1 [shape = 'u32[72,128]{1,0:T(1,128)}', space=vmem, size = 0x9000, scoped, tag = 'internal scratch']
  %s0 = inlined_call_operand.vmem [shape: bf16[2,16,128], index: 0, kind: input, shape index: {}]
  %s1 = inlined_call_operand.vmem [shape: f32[2,1,128], index: 1, kind: input, shape index: {}]
  %s2 = inlined_call_operand.vmem [shape: f32[2,1,128], index: 2, kind: input, shape index: {}]
  %s3 = inlined_call_operand.vmem [shape: bf16[2,16,128], index: 3, kind: output, shape index: {}]
  %s4 = sld [smem:[#allocation0]]
  $region45: #{zencoder_forward.15} parent=0
    _
  %s6 = ssub.s32 1, %s4
  %s7 = scalar_select 0, %s6, %s4
  loop: start=0, step=1, limit=4
  $region2: #{zencoder_forward.15} parent=0 // loop_pre_header
    _
  $region3: #{zencoder_forward.15} parent=0 // loop_header
    %s9 = sphi 0, %s13
    %p10 = scmp.ge.s32.totalorder %s9, 4
    %s16 = sphi 0, %s28
    %s17 = sphi 0, %s24
    %s18 = sphi 0, %s16
    %s19 = sphi 0, %s17
    %s20 = sphi 0, %s18
    %s21 = sphi 0, %s19
    %s33 = sphi 0, %s35
    %s36 = sphi 0, %s33
    %s37 = sphi 0, %s36
    %s53 = sphi 0, %s37
    %s59 = sphi 0, %s61
    %s62 = sphi 0, %s59
    %s63 = sphi 0, %s62
    %s79 = sphi 0, %s63
    %s85 = sphi 0, %s87
    %s88 = sphi 0, %s85
    %s89 = sphi 0, %s88
    %s105 = sphi 0, %s89
    %s113 = sphi 0, %s115
    %s116 = sphi 0, %s113
    %s117 = sphi 0, %s116
    %s133 = sphi 0, %s117
  $region4: #{zencoder_forward.15} parent=0 // loop_header_branch
    %12 = sbr.rel (%p10) target = $region8
  $region5: #{zencoder_forward.15} parent=0 // loop_body
    %s14 = ssub.s32 %s9, 1
    %s15 = ssub.s32 %s9, 2
    %s22 = sadd.s32 1, %s17
    %p23 = scmp.ge.s32.totalorder %s22, 1
    %s24 = scalar_select %p23, 0, %s22
    %s25 = sadd.s32 1, %s16
    %s26 = scalar_select %p23, %s25, %s16
    %p27 = scmp.ge.s32.totalorder %s26, 2
    %s28 = scalar_select %p27, 0, %s26
    %s29 = ssub.s32 %s16, %s28
    %s30 = ssub.s32 %s17, %s24
    %s31 = sor.u32 %s29, %s30
    %p32 = scmp.eq.s32.totalorder %s31, 0
    %s34 = sadd.s32 %s33, 1
    %s35 = scalar_select %p32, %s33, %s34
    %p38 = pneg %p32
    %p39 = scmp.eq.s32.totalorder %s9, 1
    %p40 = por %p38, %p39
    %p41 = scmp.ne.s32.totalorder %s33, %s36
    %p42 = scmp.eq.s32.totalorder %s9, 0
    %p43 = por %p41, %p42
    %p44 = scmp.ne.s32.totalorder %s33, %s36
    %p45 = scmp.eq.s32.totalorder %s14, 1
    %p46 = por %p44, %p45
    %p47 = scmp.ne.s32.totalorder %s36, %s37
    %p48 = scmp.eq.s32.totalorder %s14, 0
    %p49 = por %p47, %p48
    %p50 = scmp.ne.s32.totalorder %s36, %s37
    %p51 = scmp.eq.s32.totalorder %s15, 1
    %p52 = por %p50, %p51
    %p54 = scmp.ne.s32.totalorder %s37, %s53
    %p55 = scmp.eq.s32.totalorder %s15, 0
    %p56 = por %p54, %p55
    %s57 = ssub.s32 %s16, %s28
    %p58 = scmp.eq.s32.totalorder %s57, 0
    %s60 = sadd.s32 %s59, 1
    %s61 = scalar_select %p58, %s59, %s60
    %p64 = pneg %p58
    %p65 = scmp.eq.s32.totalorder %s9, 1
    %p66 = por %p64, %p65
    %p67 = scmp.ne.s32.totalorder %s59, %s62
    %p68 = scmp.eq.s32.totalorder %s9, 0
    %p69 = por %p67, %p68
    %p70 = scmp.ne.s32.totalorder %s59, %s62
    %p71 = scmp.eq.s32.totalorder %s14, 1
    %p72 = por %p70, %p71
    %p73 = scmp.ne.s32.totalorder %s62, %s63
    %p74 = scmp.eq.s32.totalorder %s14, 0
    %p75 = por %p73, %p74
    %p76 = scmp.ne.s32.totalorder %s62, %s63
    %p77 = scmp.eq.s32.totalorder %s15, 1
    %p78 = por %p76, %p77
    %p80 = scmp.ne.s32.totalorder %s63, %s79
    %p81 = scmp.eq.s32.totalorder %s15, 0
    %p82 = por %p80, %p81
    %s83 = ssub.s32 %s16, %s28
    %p84 = scmp.eq.s32.totalorder %s83, 0
    %s86 = sadd.s32 %s85, 1
    %s87 = scalar_select %p84, %s85, %s86
    %p90 = pneg %p84
    %p91 = scmp.eq.s32.totalorder %s9, 1
    %p92 = por %p90, %p91
    %p93 = scmp.ne.s32.totalorder %s85, %s88
    %p94 = scmp.eq.s32.totalorder %s9, 0
    %p95 = por %p93, %p94
    %p96 = scmp.ne.s32.totalorder %s85, %s88
    %p97 = scmp.eq.s32.totalorder %s14, 1
    %p98 = por %p96, %p97
    %p99 = scmp.ne.s32.totalorder %s88, %s89
    %p100 = scmp.eq.s32.totalorder %s14, 0
    %p101 = por %p99, %p100
    %p102 = scmp.ne.s32.totalorder %s88, %s89
    %p103 = scmp.eq.s32.totalorder %s15, 1
    %p104 = por %p102, %p103
    %p106 = scmp.ne.s32.totalorder %s89, %s105
    %p107 = scmp.eq.s32.totalorder %s15, 0
    %p108 = por %p106, %p107
    %s109 = ssub.s32 %s16, %s28
    %s110 = ssub.s32 %s17, %s24
    %s111 = sor.u32 %s109, %s110
    %p112 = scmp.eq.s32.totalorder %s111, 0
    %s114 = sadd.s32 %s113, 1
    %s115 = scalar_select %p112, %s113, %s114
    %p118 = pneg %p112
    %p119 = scmp.eq.s32.totalorder %s9, 1
    %p120 = por %p118, %p119
    %p121 = scmp.ne.s32.totalorder %s113, %s116
    %p122 = scmp.eq.s32.totalorder %s9, 0
    %p123 = por %p121, %p122
    %p124 = scmp.ne.s32.totalorder %s113, %s116
    %p125 = scmp.eq.s32.totalorder %s14, 1
    %p126 = por %p124, %p125
    %p127 = scmp.ne.s32.totalorder %s116, %s117
    %p128 = scmp.eq.s32.totalorder %s14, 0
    %p129 = por %p127, %p128
    %p130 = scmp.ne.s32.totalorder %s116, %s117
    %p131 = scmp.eq.s32.totalorder %s15, 1
    %p132 = por %p130, %p131
    %p134 = scmp.ne.s32.totalorder %s117, %s133
    %p135 = scmp.eq.s32.totalorder %s15, 0
    %p136 = por %p134, %p135
    %p137 = scmp.le.s32.totalorder 1, %s9
    %p138 = scmp.lt.s32.totalorder %s9, 3
    %p139 = pnand %p137, %p138
    %p140 = pneg %p139
    // Predicated region
    $region9: #{zencoder_forward.15} parent=5 // pred_check
      _
    $region10: #{zencoder_forward.15} parent=5 // pred_check_branch
      %142 = sbr.rel (%p139) target = $region12
    $region11: #{zencoder_forward.15} parent=5 // pred_region
      %s143 = ssub.s32 %s9, 1
    $region12: #{zencoder_forward.15} parent=5 // pred_fallthru
      _
    %p144 = scmp.lt.s32.totalorder %s9, 2
    // Predicated region
    $region13: #{zencoder_forward.15} parent=5 // pred_check
      %p145 = pneg %p144
    $region14: #{zencoder_forward.15} parent=5 // pred_check_branch
      %147 = sbr.rel (%p145) target = $region16
    $region15: #{zencoder_forward.15} parent=5 // pred_region
      // Predicated region
      $region17: #{zencoder_forward.15} parent=15 // pred_check
        %p148 = pneg %p43
      $region18: #{zencoder_forward.15} parent=15 // pred_check_branch
        %150 = sbr.rel (%p148) target = $region20
      $region19: #{zencoder_forward.15} parent=15 // pred_region
        %s151 = smul.u32 2, %s17
        %p152 = scmp.lt.s32.totalorder %s16, 1
        %s153 = scalar_select %p152, %s16, 1
        %p154 = scmp.lt.s32.totalorder %s151, 1
        %s155 = scalar_select %p154, %s151, 1
        %s156 = smul.addr %s153, 2
        %s157 = sadd.s32 %s155, %s156
        %s158 = smul.addr %s157, 4
        %s159 = scalar_lea.vmem %s0, %s158
        %s160 = smul.u32 2, %s17
      $region20: #{zencoder_forward.15} parent=15 // pred_fallthru
        _
      // Predicated region
      $region21: #{zencoder_forward.15} parent=15 // pred_check
        %p161 = pneg %p69
      $region22: #{zencoder_forward.15} parent=15 // pred_check_branch
        %163 = sbr.rel (%p161) target = $region24
      $region23: #{zencoder_forward.15} parent=15 // pred_region
        %p164 = scmp.lt.s32.totalorder %s16, 1
        %s165 = scalar_select %p164, %s16, 1
        %s166 = scalar_lea.vmem %s1, %s165
      $region24: #{zencoder_forward.15} parent=15 // pred_fallthru
        _
      // Predicated region
      $region25: #{zencoder_forward.15} parent=15 // pred_check
        %p167 = pneg %p95
      $region26: #{zencoder_forward.15} parent=15 // pred_check_branch
        %169 = sbr.rel (%p167) target = $region28
      $region27: #{zencoder_forward.15} parent=15 // pred_region
        %p170 = scmp.lt.s32.totalorder %s16, 1
        %s171 = scalar_select %p170, %s16, 1
        %s172 = scalar_lea.vmem %s2, %s171
      $region28: #{zencoder_forward.15} parent=15 // pred_fallthru
        _
    $region16: #{zencoder_forward.15} parent=5 // pred_fallthru
      _
    %p173 = scmp.le.s32.totalorder 1, %s9
    %p174 = scmp.lt.s32.totalorder %s9, 3
    %p175 = pnand %p173, %p174
    %p176 = pneg %p175
    // Predicated region
    $region29: #{zencoder_forward.15} parent=5 // pred_check
      _
    $region30: #{zencoder_forward.15} parent=5 // pred_check_branch
      %178 = sbr.rel (%p175) target = $region32
    $region31: #{zencoder_forward.15} parent=5 // pred_region
      %s179 = ssub.s32 %s9, 1
      %s180 = smul.u32 2, %s19
      %p181 = scmp.lt.s32.totalorder %s18, 1
      %s182 = scalar_select %p181, %s18, 1
      %p183 = scmp.lt.s32.totalorder %s180, 1
      %s184 = scalar_select %p183, %s180, 1
      %s185 = smul.addr %s182, 2
      %s186 = sadd.s32 %s184, %s185
      %s187 = smul.addr %s186, 4
      %s188 = scalar_lea.vmem %s0, %s187
      %p189 = pneg %p49
      %p190 = pneg %p46
      %p191 = scmp.lt.s32.totalorder %s18, 1
      %s192 = scalar_select %p191, %s18, 1
      %s193 = scalar_lea.vmem %s1, %s192
      %p194 = pneg %p75
      %p195 = pneg %p72
      %p196 = scmp.lt.s32.totalorder %s18, 1
      %s197 = scalar_select %p196, %s18, 1
      %s198 = scalar_lea.vmem %s2, %s197
      %p199 = pneg %p101
      %p200 = pneg %p98
      %p201 = pneg %p129
      %p202 = pneg %p126
      %s203 = smul.u32 2, %s19
      %p204 = scmp.lt.s32.totalorder %s18, 1
      %s205 = scalar_select %p204, %s18, 1
      %p206 = scmp.lt.s32.totalorder %s203, 1
      %s207 = scalar_select %p206, %s203, 1
      %s208 = smul.addr %s205, 2
      %s209 = sadd.s32 %s207, %s208
      %s210 = smul.addr %s209, 4
      %s211 = scalar_lea.vmem %s3, %s210
      %s212 = smul.u32 2, %s19
      %p213 = scmp.lt.s32.totalorder %s18, 1
      %s214 = scalar_select %p213, %s18, 1
      %p215 = scmp.lt.s32.totalorder %s212, 1
      %s216 = scalar_select %p215, %s212, 1
      %s217 = smul.addr %s214, 2
      %s218 = sadd.s32 %s216, %s217
      %s219 = smul.addr %s218, 4
      %s220 = scalar_lea.vmem %s0, %s219
      %s221 = smul.u32 2, %s19
      %p222 = scmp.lt.s32.totalorder %s18, 1
      %s223 = scalar_select %p222, %s18, 1
      %s224 = scalar_lea.vmem %s1, %s223
      %p225 = scmp.lt.s32.totalorder %s18, 1
      %s226 = scalar_select %p225, %s18, 1
      %s227 = scalar_lea.vmem %s2, %s226
      %s228 = smul.u32 2, %s19
      %p229 = scmp.lt.s32.totalorder %s18, 1
      %s230 = scalar_select %p229, %s18, 1
      %p231 = scmp.lt.s32.totalorder %s228, 1
      %s232 = scalar_select %p231, %s228, 1
      %s233 = smul.addr %s230, 2
      %s234 = sadd.s32 %s232, %s233
      %s235 = smul.addr %s234, 4
      %s236 = scalar_lea.vmem %s3, %s235
      %s237 = smul.u32 2, %s19
      %v238 = vld [vmem:[%s220] sm:$0xf]
      %v239 = vld [vmem:[%s220 + $0x4] sm:$0xf]
      %v240 = vunpack.c.l.bf16 %v238
      %v241 = vunpack.c.l.bf16 %v239
      %v242 = vld [vmem:[%s224] sm:$0x1]
      %v243 = vmul.f32 %v242, 0.0625
      %v244 = vld [vmem:[%s227] sm:$0x1]
      %v245 = vmul.f32 %v244, 0.0625
      %v246 = vmul.f32 %v243, %v243
      %v247 = vsub.f32 %v245, %v246
      %v248 = vmax.f32 %v247, 0.0
      %v250 = vperm.slane %v243, 0
      %v252 = vsub.f32 %v240, %v250
      %v253 = vsub.f32 %v241, %v250
      %v254 = vadd.f32 %v248, 1e-05
      %v255 = vrsqrt.pop %v254
      %v256 = vmul.f32 %v255, %v254
      %v257 = vmul.f32 %v256, %v255
      %v258 = vmul.f32 0.5, %v257
      %v259 = vsub.f32 1.5, %v258
      %v260 = vmul.f32 %v255, %v259
      %vm261 = vweird.f32 %v254
      %vm262 = vweird.f32 %v255
      %vm263 = vmor %vm261, %vm262
      %v264 = vsel %vm263, %v255, %v260
      %v266 = vperm.slane %v264, 0
      %v268 = vmul.f32 %v252, %v266
      %v269 = vmul.f32 %v253, %v266
      %vm270 = vcmp.ge.f32.partialorder %v268, 0.0
      %vm271 = vcmp.ge.f32.partialorder %v269, 0.0
      %v272 = vmul.f32 %v268, 0.2
      %v273 = vmul.f32 %v269, 0.2
      %v274 = vsel %vm270, %v268, %v272
      %v275 = vsel %vm271, %v269, %v273
      %v276 = vpack.c.bf16 %v274, %v274
      %v277 = vpack.c.bf16 %v275, %v275
      %278 = vst [vmem:[%s236] sm:$0xf] %v276
      %279 = vst [vmem:[%s236 + $0x4] sm:$0xf] %v277
      %s280 = smul.u32 2, %s19
      %p281 = scmp.lt.s32.totalorder %s18, 1
      %s282 = scalar_select %p281, %s18, 1
      %p283 = scmp.lt.s32.totalorder %s280, 1
      %s284 = scalar_select %p283, %s280, 1
      %s285 = smul.addr %s282, 2
      %s286 = sadd.s32 %s284, %s285
      %s287 = smul.addr %s286, 4
      %s288 = scalar_lea.vmem %s3, %s287
      // Predicated region
      $region33: #{zencoder_forward.15} parent=31 // pred_check
        %p289 = pneg %p126
      $region34: #{zencoder_forward.15} parent=31 // pred_check_branch
        %291 = sbr.rel (%p289) target = $region36
      $region35: #{zencoder_forward.15} parent=31 // pred_region
        %s292 = smul.u32 2, %s19
      $region36: #{zencoder_forward.15} parent=31 // pred_fallthru
        _
    $region32: #{zencoder_forward.15} parent=5 // pred_fallthru
      _
    %p293 = scmp.le.s32.totalorder 2, %s9
    // Predicated region
    $region37: #{zencoder_forward.15} parent=5 // pred_check
      %p294 = pneg %p293
    $region38: #{zencoder_forward.15} parent=5 // pred_check_branch
      %296 = sbr.rel (%p294) target = $region40
    $region39: #{zencoder_forward.15} parent=5 // pred_region
      %s297 = ssub.s32 %s9, 2
      // Predicated region
      $region41: #{zencoder_forward.15} parent=39 // pred_check
        %p298 = pneg %p132
      $region42: #{zencoder_forward.15} parent=39 // pred_check_branch
        %300 = sbr.rel (%p298) target = $region44
      $region43: #{zencoder_forward.15} parent=39 // pred_region
        %s301 = smul.u32 2, %s21
        %p302 = scmp.lt.s32.totalorder %s20, 1
        %s303 = scalar_select %p302, %s20, 1
        %p304 = scmp.lt.s32.totalorder %s301, 1
        %s305 = scalar_select %p304, %s301, 1
        %s306 = smul.addr %s303, 2
        %s307 = sadd.s32 %s305, %s306
        %s308 = smul.addr %s307, 4
        %s309 = scalar_lea.vmem %s3, %s308
      $region44: #{zencoder_forward.15} parent=39 // pred_fallthru
        _
    $region40: #{zencoder_forward.15} parent=5 // pred_fallthru
      _
  $region6: #{zencoder_forward.15} parent=0 // loop_footer
    %s13 = sadd.s32 1, %s9
  $region7: #{zencoder_forward.15} parent=0 // loop_footer_branch
    %8 = sbr.rel target = $region3
  $region8: #{zencoder_forward.15} parent=0 // loop_exit
    _

// kernel: zencoder_forward.14
$region0: #{zencoder_forward.14}
  #allocation0 [shape = 'u32[]', space=smem, size = 0x4, offset = 0x4, fixed_abs, tag = 'smem constant byte address 0x4 - core index']
  #allocation1 [shape = 'u32[72,128]{1,0:T(1,128)}', space=vmem, size = 0x9000, scoped, tag = 'internal scratch']
  %s0 = inlined_call_operand.vmem [shape: bf16[2,16,576], index: 0, kind: input, shape index: {}]
  %s1 = inlined_call_operand.vmem [shape: bf16[576,128], index: 1, kind: input, shape index: {}]
  %s2 = inlined_call_operand.vmem [shape: f32[1,128], index: 2, kind: input, shape index: {}]
  %s3 = inlined_call_operand.vmem [shape: bf16[2,16,128], index: 3, kind: output, shape index: {0}]
  %s4 = inlined_call_operand.vmem [shape: f32[2,1,128], index: 4, kind: output, shape index: {1}]
  %s5 = inlined_call_operand.vmem [shape: f32[2,1,128], index: 5, kind: output, shape index: {2}]
  %6 = xla_tuple %s3, %s4, %s5
  %s7 = sld [smem:[#allocation0]]
  $region65: #{zencoder_forward.14} parent=0
    _
  %s9 = ssub.s32 1, %s7
  %s10 = scalar_select 0, %s9, %s7
  loop: start=0, step=1, limit=4
  $region2: #{zencoder_forward.14} parent=0 // loop_pre_header
    _
  $region3: #{zencoder_forward.14} parent=0 // loop_header
    %s12 = sphi 0, %s16
    %p13 = scmp.ge.s32.totalorder %s12, 4
    %s19 = sphi 0, %s31
    %s20 = sphi 0, %s27
    %s21 = sphi 0, %s19
    %s22 = sphi 0, %s20
    %s23 = sphi 0, %s21
    %s24 = sphi 0, %s22
    %s36 = sphi 0, %s38
    %s39 = sphi 0, %s36
    %s40 = sphi 0, %s39
    %s56 = sphi 0, %s40
    %s60 = sphi 0, %s60
    %s62 = sphi 0, %s60
    %s63 = sphi 0, %s62
    %s77 = sphi 0, %s63
    %s81 = sphi 0, %s81
    %s83 = sphi 0, %s81
    %s84 = sphi 0, %s83
    %s98 = sphi 0, %s84
    %s106 = sphi 0, %s108
    %s109 = sphi 0, %s106
    %s110 = sphi 0, %s109
    %s126 = sphi 0, %s110
    %s132 = sphi 0, %s134
    %s135 = sphi 0, %s132
    %s136 = sphi 0, %s135
    %s152 = sphi 0, %s136
    %s158 = sphi 0, %s160
    %s161 = sphi 0, %s158
    %s162 = sphi 0, %s161
    %s178 = sphi 0, %s162
  $region4: #{zencoder_forward.14} parent=0 // loop_header_branch
    %15 = sbr.rel (%p13) target = $region8
  $region5: #{zencoder_forward.14} parent=0 // loop_body
    %s17 = ssub.s32 %s12, 1
    %s18 = ssub.s32 %s12, 2
    %s25 = sadd.s32 1, %s20
    %p26 = scmp.ge.s32.totalorder %s25, 1
    %s27 = scalar_select %p26, 0, %s25
    %s28 = sadd.s32 1, %s19
    %s29 = scalar_select %p26, %s28, %s19
    %p30 = scmp.ge.s32.totalorder %s29, 2
    %s31 = scalar_select %p30, 0, %s29
    %s32 = ssub.s32 %s19, %s31
    %s33 = ssub.s32 %s20, %s27
    %s34 = sor.u32 %s32, %s33
    %p35 = scmp.eq.s32.totalorder %s34, 0
    %s37 = sadd.s32 %s36, 1
    %s38 = scalar_select %p35, %s36, %s37
    %p41 = pneg %p35
    %p42 = scmp.eq.s32.totalorder %s12, 1
    %p43 = por %p41, %p42
    %p44 = scmp.ne.s32.totalorder %s36, %s39
    %p45 = scmp.eq.s32.totalorder %s12, 0
    %p46 = por %p44, %p45
    %p47 = scmp.ne.s32.totalorder %s36, %s39
    %p48 = scmp.eq.s32.totalorder %s17, 1
    %p49 = por %p47, %p48
    %p50 = scmp.ne.s32.totalorder %s39, %s40
    %p51 = scmp.eq.s32.totalorder %s17, 0
    %p52 = por %p50, %p51
    %p53 = scmp.ne.s32.totalorder %s39, %s40
    %p54 = scmp.eq.s32.totalorder %s18, 1
    %p55 = por %p53, %p54
    %p57 = scmp.ne.s32.totalorder %s40, %s56
    %p58 = scmp.eq.s32.totalorder %s18, 0
    %p59 = por %p57, %p58
    %s61 = sadd.s32 %s60, 1
    %p64 = scmp.eq.s32.totalorder %s12, 1
    %p65 = scmp.ne.s32.totalorder %s60, %s62
    %p66 = scmp.eq.s32.totalorder %s12, 0
    %p67 = por %p65, %p66
    %p68 = scmp.ne.s32.totalorder %s60, %s62
    %p69 = scmp.eq.s32.totalorder %s17, 1
    %p70 = por %p68, %p69
    %p71 = scmp.ne.s32.totalorder %s62, %s63
    %p72 = scmp.eq.s32.totalorder %s17, 0
    %p73 = por %p71, %p72
    %p74 = scmp.ne.s32.totalorder %s62, %s63
    %p75 = scmp.eq.s32.totalorder %s18, 1
    %p76 = por %p74, %p75
    %p78 = scmp.ne.s32.totalorder %s63, %s77
    %p79 = scmp.eq.s32.totalorder %s18, 0
    %p80 = por %p78, %p79
    %s82 = sadd.s32 %s81, 1
    %p85 = scmp.eq.s32.totalorder %s12, 1
    %p86 = scmp.ne.s32.totalorder %s81, %s83
    %p87 = scmp.eq.s32.totalorder %s12, 0
    %p88 = por %p86, %p87
    %p89 = scmp.ne.s32.totalorder %s81, %s83
    %p90 = scmp.eq.s32.totalorder %s17, 1
    %p91 = por %p89, %p90
    %p92 = scmp.ne.s32.totalorder %s83, %s84
    %p93 = scmp.eq.s32.totalorder %s17, 0
    %p94 = por %p92, %p93
    %p95 = scmp.ne.s32.totalorder %s83, %s84
    %p96 = scmp.eq.s32.totalorder %s18, 1
    %p97 = por %p95, %p96
    %p99 = scmp.ne.s32.totalorder %s84, %s98
    %p100 = scmp.eq.s32.totalorder %s18, 0
    %p101 = por %p99, %p100
    %s102 = ssub.s32 %s19, %s31
    %s103 = ssub.s32 %s20, %s27
    %s104 = sor.u32 %s102, %s103
    %p105 = scmp.eq.s32.totalorder %s104, 0
    %s107 = sadd.s32 %s106, 1
    %s108 = scalar_select %p105, %s106, %s107
    %p111 = pneg %p105
    %p112 = scmp.eq.s32.totalorder %s12, 1
    %p113 = por %p111, %p112
    %p114 = scmp.ne.s32.totalorder %s106, %s109
    %p115 = scmp.eq.s32.totalorder %s12, 0
    %p116 = por %p114, %p115
    %p117 = scmp.ne.s32.totalorder %s106, %s109
    %p118 = scmp.eq.s32.totalorder %s17, 1
    %p119 = por %p117, %p118
    %p120 = scmp.ne.s32.totalorder %s109, %s110
    %p121 = scmp.eq.s32.totalorder %s17, 0
    %p122 = por %p120, %p121
    %p123 = scmp.ne.s32.totalorder %s109, %s110
    %p124 = scmp.eq.s32.totalorder %s18, 1
    %p125 = por %p123, %p124
    %p127 = scmp.ne.s32.totalorder %s110, %s126
    %p128 = scmp.eq.s32.totalorder %s18, 0
    %p129 = por %p127, %p128
    %s130 = ssub.s32 %s19, %s31
    %p131 = scmp.eq.s32.totalorder %s130, 0
    %s133 = sadd.s32 %s132, 1
    %s134 = scalar_select %p131, %s132, %s133
    %p137 = pneg %p131
    %p138 = scmp.eq.s32.totalorder %s12, 1
    %p139 = por %p137, %p138
    %p140 = scmp.ne.s32.totalorder %s132, %s135
    %p141 = scmp.eq.s32.totalorder %s12, 0
    %p142 = por %p140, %p141
    %p143 = scmp.ne.s32.totalorder %s132, %s135
    %p144 = scmp.eq.s32.totalorder %s17, 1
    %p145 = por %p143, %p144
    %p146 = scmp.ne.s32.totalorder %s135, %s136
    %p147 = scmp.eq.s32.totalorder %s17, 0
    %p148 = por %p146, %p147
    %p149 = scmp.ne.s32.totalorder %s135, %s136
    %p150 = scmp.eq.s32.totalorder %s18, 1
    %p151 = por %p149, %p150
    %p153 = scmp.ne.s32.totalorder %s136, %s152
    %p154 = scmp.eq.s32.totalorder %s18, 0
    %p155 = por %p153, %p154
    %s156 = ssub.s32 %s19, %s31
    %p157 = scmp.eq.s32.totalorder %s156, 0
    %s159 = sadd.s32 %s158, 1
    %s160 = scalar_select %p157, %s158, %s159
    %p163 = pneg %p157
    %p164 = scmp.eq.s32.totalorder %s12, 1
    %p165 = por %p163, %p164
    %p166 = scmp.ne.s32.totalorder %s158, %s161
    %p167 = scmp.eq.s32.totalorder %s12, 0
    %p168 = por %p166, %p167
    %p169 = scmp.ne.s32.totalorder %s158, %s161
    %p170 = scmp.eq.s32.totalorder %s17, 1
    %p171 = por %p169, %p170
    %p172 = scmp.ne.s32.totalorder %s161, %s162
    %p173 = scmp.eq.s32.totalorder %s17, 0
    %p174 = por %p172, %p173
    %p175 = scmp.ne.s32.totalorder %s161, %s162
    %p176 = scmp.eq.s32.totalorder %s18, 1
    %p177 = por %p175, %p176
    %p179 = scmp.ne.s32.totalorder %s162, %s178
    %p180 = scmp.eq.s32.totalorder %s18, 0
    %p181 = por %p179, %p180
    %p182 = scmp.le.s32.totalorder 1, %s12
    %p183 = scmp.lt.s32.totalorder %s12, 3
    %p184 = pnand %p182, %p183
    %p185 = pneg %p184
    // Predicated region
    $region9: #{zencoder_forward.14} parent=5 // pred_check
      _
    $region10: #{zencoder_forward.14} parent=5 // pred_check_branch
      %187 = sbr.rel (%p184) target = $region12
    $region11: #{zencoder_forward.14} parent=5 // pred_region
      %s188 = ssub.s32 %s12, 1
      // Predicated region
      $region13: #{zencoder_forward.14} parent=11 // pred_check
        %p189 = pneg %p73
      $region14: #{zencoder_forward.14} parent=11 // pred_check_branch
        %191 = sbr.rel (%p189) target = $region16
      $region15: #{zencoder_forward.14} parent=11 // pred_region
        _
      $region16: #{zencoder_forward.14} parent=11 // pred_fallthru
        _
      // Predicated region
      $region17: #{zencoder_forward.14} parent=11 // pred_check
        %p192 = pneg %p94
      $region18: #{zencoder_forward.14} parent=11 // pred_check_branch
        %194 = sbr.rel (%p192) target = $region20
      $region19: #{zencoder_forward.14} parent=11 // pred_region
        _
      $region20: #{zencoder_forward.14} parent=11 // pred_fallthru
        _
    $region12: #{zencoder_forward.14} parent=5 // pred_fallthru
      _
    %p195 = scmp.lt.s32.totalorder %s12, 2
    // Predicated region
    $region21: #{zencoder_forward.14} parent=5 // pred_check
      %p196 = pneg %p195
    $region22: #{zencoder_forward.14} parent=5 // pred_check_branch
      %198 = sbr.rel (%p196) target = $region24
    $region23: #{zencoder_forward.14} parent=5 // pred_region
      // Predicated region
      $region25: #{zencoder_forward.14} parent=23 // pred_check
        %p199 = pneg %p46
      $region26: #{zencoder_forward.14} parent=23 // pred_check_branch
        %201 = sbr.rel (%p199) target = $region28
      $region27: #{zencoder_forward.14} parent=23 // pred_region
        %s202 = smul.u32 2, %s20
        %p203 = scmp.lt.s32.totalorder %s19, 1
        %s204 = scalar_select %p203, %s19, 1
        %p205 = scmp.lt.s32.totalorder %s202, 1
        %s206 = scalar_select %p205, %s202, 1
        %s207 = smul.addr %s206, 5
        %s208 = smul.addr %s204, 10
        %s209 = sadd.s32 %s207, %s208
        %s210 = smul.addr %s209, 4
        %s211 = scalar_lea.vmem %s0, %s210
        %s212 = smul.u32 2, %s20
      $region28: #{zencoder_forward.14} parent=23 // pred_fallthru
        _
    $region24: #{zencoder_forward.14} parent=5 // pred_fallthru
      _
    %p213 = scmp.le.s32.totalorder 1, %s12
    %p214 = scmp.lt.s32.totalorder %s12, 3
    %p215 = pnand %p213, %p214
    %p216 = pneg %p215
    // Predicated region
    $region29: #{zencoder_forward.14} parent=5 // pred_check
      _
    $region30: #{zencoder_forward.14} parent=5 // pred_check_branch
      %218 = sbr.rel (%p215) target = $region32
    $region31: #{zencoder_forward.14} parent=5 // pred_region
      %s219 = ssub.s32 %s12, 1
      %s220 = smul.u32 2, %s22
      %p221 = scmp.lt.s32.totalorder %s21, 1
      %s222 = scalar_select %p221, %s21, 1
      %p223 = scmp.lt.s32.totalorder %s220, 1
      %s224 = scalar_select %p223, %s220, 1
      %s225 = smul.addr %s224, 5
      %s226 = smul.addr %s222, 10
      %s227 = sadd.s32 %s225, %s226
      %s228 = smul.addr %s227, 4
      %s229 = scalar_lea.vmem %s0, %s228
      %p230 = pneg %p52
      %p231 = pneg %p49
      %p232 = pneg %p73
      %p233 = pneg %p70
      %p234 = pneg %p94
      %p235 = pneg %p91
      %p236 = pneg %p122
      %p237 = pneg %p119
      %s238 = smul.u32 2, %s22
      %p239 = scmp.lt.s32.totalorder %s21, 1
      %s240 = scalar_select %p239, %s21, 1
      %p241 = scmp.lt.s32.totalorder %s238, 1
      %s242 = scalar_select %p241, %s238, 1
      %s243 = smul.addr %s240, 2
      %s244 = sadd.s32 %s242, %s243
      %s245 = smul.addr %s244, 4
      %s246 = scalar_lea.vmem %s3, %s245
      %p247 = pneg %p148
      %p248 = pneg %p145
      %p249 = scmp.lt.s32.totalorder %s21, 1
      %s250 = scalar_select %p249, %s21, 1
      %s251 = scalar_lea.vmem %s4, %s250
      %p252 = pneg %p174
      %p253 = pneg %p171
      %p254 = scmp.lt.s32.totalorder %s21, 1
      %s255 = scalar_select %p254, %s21, 1
      %s256 = scalar_lea.vmem %s5, %s255
      %s257 = smul.u32 2, %s22
      %p258 = scmp.lt.s32.totalorder %s21, 1
      %s259 = scalar_select %p258, %s21, 1
      %p260 = scmp.lt.s32.totalorder %s257, 1
      %s261 = scalar_select %p260, %s257, 1
      %s262 = smul.addr %s261, 5
      %s263 = smul.addr %s259, 10
      %s264 = sadd.s32 %s262, %s263
      %s265 = smul.addr %s264, 4
      %s266 = scalar_lea.vmem %s0, %s265
      %s267 = smul.u32 2, %s22
      %s268 = smul.u32 2, %s22
      %p269 = scmp.lt.s32.totalorder %s21, 1
      %s270 = scalar_select %p269, %s21, 1
      %p271 = scmp.lt.s32.totalorder %s268, 1
      %s272 = scalar_select %p271, %s268, 1
      %s273 = smul.addr %s270, 2
      %s274 = sadd.s32 %s272, %s273
      %s275 = smul.addr %s274, 4
      %s276 = scalar_lea.vmem %s3, %s275
      %s277 = smul.u32 2, %s22
      %p278 = scmp.lt.s32.totalorder %s21, 1
      %s279 = scalar_select %p278, %s21, 1
      %s280 = scalar_lea.vmem %s4, %s279
      %p281 = scmp.lt.s32.totalorder %s21, 1
      %s282 = scalar_select %p281, %s21, 1
      %s283 = scalar_lea.vmem %s5, %s282
      %v285 = vld [vmem:[%s266] sm:$0xff]
      %v286 = vld [vmem:[%s266 + $0x8] sm:$0xff]
      %v287 = vld [vmem:[%s266 + $0x10] sm:$0xf]
      %v288 = vld [vmem:[%s266 + $0x14] sm:$0xff]
      %v289 = vld [vmem:[%s266 + $0x1c] sm:$0xff]
      %v290 = vld [vmem:[%s266 + $0x24] sm:$0xf]
      %v291 = vld [vmem:[%s1] sm:$0xf]
      %v292 = vld [vmem:[%s1 + $0x4] sm:$0xf]
      %v293 = vld [vmem:[%s1 + $0x8] sm:$0xf]
      %v294 = vld [vmem:[%s1 + $0xc] sm:$0xf]
      %v295 = vld [vmem:[%s1 + $0x10] sm:$0xf]
      %v296 = vld [vmem:[%s1 + $0x14] sm:$0xf]
      %v297 = vld [vmem:[%s1 + $0x18] sm:$0xf]
      %v298 = vld [vmem:[%s1 + $0x1c] sm:$0xf]
      %v299 = vld [vmem:[%s1 + $0x20] sm:$0xf]
      %v300 = vld [vmem:[%s1 + $0x24] sm:$0xf]
      %v301 = vld [vmem:[%s1 + $0x28] sm:$0xf]
      %v302 = vld [vmem:[%s1 + $0x2c] sm:$0xf]
      %v303 = vld [vmem:[%s1 + $0x30] sm:$0xf]
      %v304 = vld [vmem:[%s1 + $0x34] sm:$0xf]
      %v305 = vld [vmem:[%s1 + $0x38] sm:$0xf]
      %v306 = vld [vmem:[%s1 + $0x3c] sm:$0xf]
      %v307 = vld [vmem:[%s1 + $0x40] sm:$0xf]
      %v308 = vld [vmem:[%s1 + $0x44] sm:$0xf]
      %v309 = vld [vmem:[%s1 + $0x48] sm:$0xf]
      %v310 = vld [vmem:[%s1 + $0x4c] sm:$0xf]
      %v311 = vld [vmem:[%s1 + $0x50] sm:$0xf]
      %v312 = vld [vmem:[%s1 + $0x54] sm:$0xf]
      %v313 = vld [vmem:[%s1 + $0x58] sm:$0xf]
      %v314 = vld [vmem:[%s1 + $0x5c] sm:$0xf]
      %v315 = vld [vmem:[%s1 + $0x60] sm:$0xf]
      %v316 = vld [vmem:[%s1 + $0x64] sm:$0xf]
      %v317 = vld [vmem:[%s1 + $0x68] sm:$0xf]
      %v318 = vld [vmem:[%s1 + $0x6c] sm:$0xf]
      %v319 = vld [vmem:[%s1 + $0x70] sm:$0xf]
      %v320 = vld [vmem:[%s1 + $0x74] sm:$0xf]
      %v321 = vld [vmem:[%s1 + $0x78] sm:$0xf]
      %v322 = vld [vmem:[%s1 + $0x7c] sm:$0xf]
      %v323 = vld [vmem:[%s1 + $0x80] sm:$0xf]
      %v324 = vld [vmem:[%s1 + $0x84] sm:$0xf]
      %v325 = vld [vmem:[%s1 + $0x88] sm:$0xf]
      %v326 = vld [vmem:[%s1 + $0x8c] sm:$0xf]
      %v327 = vld [vmem:[%s1 + $0x90] sm:$0xf]
      %v328 = vld [vmem:[%s1 + $0x94] sm:$0xf]
      %v329 = vld [vmem:[%s1 + $0x98] sm:$0xf]
      %v330 = vld [vmem:[%s1 + $0x9c] sm:$0xf]
      %v331 = vld [vmem:[%s1 + $0xa0] sm:$0xf]
      %v332 = vld [vmem:[%s1 + $0xa4] sm:$0xf]
      %v333 = vld [vmem:[%s1 + $0xa8] sm:$0xf]
      %v334 = vld [vmem:[%s1 + $0xac] sm:$0xf]
      %v335 = vld [vmem:[%s1 + $0xb0] sm:$0xf]
      %v336 = vld [vmem:[%s1 + $0xb4] sm:$0xf]
      %v337 = vld [vmem:[%s1 + $0xb8] sm:$0xf]
      %v338 = vld [vmem:[%s1 + $0xbc] sm:$0xf]
      %v339 = vld [vmem:[%s1 + $0xc0] sm:$0xf]
      %v340 = vld [vmem:[%s1 + $0xc4] sm:$0xf]
      %v341 = vld [vmem:[%s1 + $0xc8] sm:$0xf]
      %v342 = vld [vmem:[%s1 + $0xcc] sm:$0xf]
      %v343 = vld [vmem:[%s1 + $0xd0] sm:$0xf]
      %v344 = vld [vmem:[%s1 + $0xd4] sm:$0xf]
      %v345 = vld [vmem:[%s1 + $0xd8] sm:$0xf]
      %v346 = vld [vmem:[%s1 + $0xdc] sm:$0xf]
      %v347 = vld [vmem:[%s1 + $0xe0] sm:$0xf]
      %v348 = vld [vmem:[%s1 + $0xe4] sm:$0xf]
      %v349 = vld [vmem:[%s1 + $0xe8] sm:$0xf]
      %v350 = vld [vmem:[%s1 + $0xec] sm:$0xf]
      %v351 = vld [vmem:[%s1 + $0xf0] sm:$0xf]
      %v352 = vld [vmem:[%s1 + $0xf4] sm:$0xf]
      %v353 = vld [vmem:[%s1 + $0xf8] sm:$0xf]
      %v354 = vld [vmem:[%s1 + $0xfc] sm:$0xf]
      %v355 = vld [vmem:[%s1 + $0x100] sm:$0xf]
      %v356 = vld [vmem:[%s1 + $0x104] sm:$0xf]
      %v357 = vld [vmem:[%s1 + $0x108] sm:$0xf]
      %v358 = vld [vmem:[%s1 + $0x10c] sm:$0xf]
      %v359 = vld [vmem:[%s1 + $0x110] sm:$0xf]
      %v360 = vld [vmem:[%s1 + $0x114] sm:$0xf]
      %v361 = vld [vmem:[%s1 + $0x118] sm:$0xf]
      %v362 = vld [vmem:[%s1 + $0x11c] sm:$0xf]
      %v363 = vld [vmem:[%s2] sm:$0x1]
      %v365 = vperm.slane %v363, 0
      %v373 = vunpack.c.l.b16 %v285
      %v374 = vunpack.c.h.b16 %v285
      %v375 = vunpack.c.l.b16 %v286
      %v376 = vunpack.c.h.b16 %v286
      %v377 = vunpack.c.l.b16 %v287
      %v378 = vunpack.c.l.b16 %v288
      %v379 = vunpack.c.h.b16 %v288
      %v380 = vunpack.c.l.b16 %v289
      %v381 = vunpack.c.h.b16 %v289
      %v382 = vunpack.c.l.b16 %v290
      %v383 = vpack.c.b16 %v378, %v373
      %v384 = vpack.c.b16 %v379, %v374
      %v385 = vpack.c.b16 %v380, %v375
      %v386 = vpack.c.b16 %v381, %v376
      %v387 = vpack.c.b16 %v382, %v377
      %v464 = vunpack.c.l.b16 %v291
      %v465 = vunpack.c.l.b16 %v292
      %v466 = vunpack.c.l.b16 %v293
      %v467 = vunpack.c.l.b16 %v294
      %v468 = vunpack.c.l.b16 %v295
      %v469 = vunpack.c.l.b16 %v296
      %v470 = vunpack.c.l.b16 %v297
      %v471 = vunpack.c.l.b16 %v298
      %v472 = vunpack.c.l.b16 %v299
      %v473 = vunpack.c.l.b16 %v300
      %v474 = vunpack.c.l.b16 %v301
      %v475 = vunpack.c.l.b16 %v302
      %v476 = vunpack.c.l.b16 %v303
      %v477 = vunpack.c.l.b16 %v304
      %v478 = vunpack.c.l.b16 %v305
      %v479 = vunpack.c.l.b16 %v306
      %v480 = vunpack.c.l.b16 %v307
      %v481 = vunpack.c.l.b16 %v308
      %v482 = vunpack.c.l.b16 %v309
      %v483 = vunpack.c.l.b16 %v310
      %v484 = vunpack.c.l.b16 %v311
      %v485 = vunpack.c.l.b16 %v312
      %v486 = vunpack.c.l.b16 %v313
      %v487 = vunpack.c.l.b16 %v314
      %v488 = vunpack.c.l.b16 %v315
      %v489 = vunpack.c.l.b16 %v316
      %v490 = vunpack.c.l.b16 %v317
      %v491 = vunpack.c.l.b16 %v318
      %v492 = vunpack.c.l.b16 %v319
      %v493 = vunpack.c.l.b16 %v320
      %v494 = vunpack.c.l.b16 %v321
      %v495 = vunpack.c.l.b16 %v322
      %v496 = vunpack.c.l.b16 %v323
      %v497 = vunpack.c.l.b16 %v324
      %v498 = vunpack.c.l.b16 %v325
      %v499 = vunpack.c.l.b16 %v326
      %v500 = vunpack.c.l.b16 %v327
      %v501 = vunpack.c.l.b16 %v328
      %v502 = vunpack.c.l.b16 %v329
      %v503 = vunpack.c.l.b16 %v330
      %v504 = vunpack.c.l.b16 %v331
      %v505 = vunpack.c.l.b16 %v332
      %v506 = vunpack.c.l.b16 %v333
      %v507 = vunpack.c.l.b16 %v334
      %v508 = vunpack.c.l.b16 %v335
      %v509 = vunpack.c.l.b16 %v336
      %v510 = vunpack.c.l.b16 %v337
      %v511 = vunpack.c.l.b16 %v338
      %v512 = vunpack.c.l.b16 %v339
      %v513 = vunpack.c.l.b16 %v340
      %v514 = vunpack.c.l.b16 %v341
      %v515 = vunpack.c.l.b16 %v342
      %v516 = vunpack.c.l.b16 %v343
      %v517 = vunpack.c.l.b16 %v344
      %v518 = vunpack.c.l.b16 %v345
      %v519 = vunpack.c.l.b16 %v346
      %v520 = vunpack.c.l.b16 %v347
      %v521 = vunpack.c.l.b16 %v348
      %v522 = vunpack.c.l.b16 %v349
      %v523 = vunpack.c.l.b16 %v350
      %v524 = vunpack.c.l.b16 %v351
      %v525 = vunpack.c.l.b16 %v352
      %v526 = vunpack.c.l.b16 %v353
      %v527 = vunpack.c.l.b16 %v354
      %v528 = vunpack.c.l.b16 %v355
      %v529 = vunpack.c.l.b16 %v356
      %v530 = vunpack.c.l.b16 %v357
      %v531 = vunpack.c.l.b16 %v358
      %v532 = vunpack.c.l.b16 %v359
      %v533 = vunpack.c.l.b16 %v360
      %v534 = vunpack.c.l.b16 %v361
      %v535 = vunpack.c.l.b16 %v362
      %v536 = vpack.c.b16 %v465, %v464
      %v537 = vpack.c.b16 %v467, %v466
      %v538 = vpack.c.b16 %v469, %v468
      %v539 = vpack.c.b16 %v471, %v470
      %v540 = vpack.c.b16 %v473, %v472
      %v541 = vpack.c.b16 %v475, %v474
      %v542 = vpack.c.b16 %v477, %v476
      %v543 = vpack.c.b16 %v479, %v478
      %v544 = vpack.c.b16 %v481, %v480
      %v545 = vpack.c.b16 %v483, %v482
      %v546 = vpack.c.b16 %v485, %v484
      %v547 = vpack.c.b16 %v487, %v486
      %v548 = vpack.c.b16 %v489, %v488
      %v549 = vpack.c.b16 %v491, %v490
      %v550 = vpack.c.b16 %v493, %v492
      %v551 = vpack.c.b16 %v495, %v494
      %v552 = vpack.c.b16 %v497, %v496
      %v553 = vpack.c.b16 %v499, %v498
      %v554 = vpack.c.b16 %v501, %v500
      %v555 = vpack.c.b16 %v503, %v502
      %v556 = vpack.c.b16 %v505, %v504
      %v557 = vpack.c.b16 %v507, %v506
      %v558 = vpack.c.b16 %v509, %v508
      %v559 = vpack.c.b16 %v511, %v510
      %v560 = vpack.c.b16 %v513, %v512
      %v561 = vpack.c.b16 %v515, %v514
      %v562 = vpack.c.b16 %v517, %v516
      %v563 = vpack.c.b16 %v519, %v518
      %v564 = vpack.c.b16 %v521, %v520
      %v565 = vpack.c.b16 %v523, %v522
      %v566 = vpack.c.b16 %v525, %v524
      %v567 = vpack.c.b16 %v527, %v526
      %v568 = vpack.c.b16 %v529, %v528
      %v569 = vpack.c.b16 %v531, %v530
      %v570 = vpack.c.b16 %v533, %v532
      %v571 = vpack.c.b16 %v535, %v534
      %vm608 = vcmask 523264
      %v610 = vsel %vm608, %v387, 0
      %612 = vmatpush.bf16.msra.mxu0 %v543
      %613 = vmatpush.bf16.msra.mxu0 %v542
      %614 = vmatpush.bf16.msra.mxu0 %v541
      %615 = vmatpush.bf16.msra.mxu0 %v540
      %616 = vmatpush.bf16.msra.mxu0 %v539
      %617 = vmatpush.bf16.msra.mxu0 %v538
      %618 = vmatpush.bf16.msra.mxu0 %v537
      %619 = vmatpush.bf16.msra.mxu0 %v536
      %620 = vmatmul.bf16.gmra.mxu0 %v383
      %v621 = vpop.f32.mrf.mxu0
      %v622 = vadd.f32 %v365, %v621
      %v623 = vpop.f32.mrf.mxu0
      %v624 = vadd.f32 %v365, %v623
      %625 = vdwg.mxu0
      %626 = vmatpush.bf16.msra.mxu0 %v551
      %627 = vmatpush.bf16.msra.mxu0 %v550
      %628 = vmatpush.bf16.msra.mxu0 %v549
      %629 = vmatpush.bf16.msra.mxu0 %v548
      %630 = vmatpush.bf16.msra.mxu0 %v547
      %631 = vmatpush.bf16.msra.mxu0 %v546
      %632 = vmatpush.bf16.msra.mxu0 %v545
      %633 = vmatpush.bf16.msra.mxu0 %v544
      %634 = vmatmul.bf16.gmra.mxu0 %v384
      %v635 = vpop.f32.mrf.mxu0
      %v636 = vadd.f32 %v622, %v635
      %v637 = vpop.f32.mrf.mxu0
      %v638 = vadd.f32 %v624, %v637
      %639 = vdwg.mxu0
      %640 = vmatpush.bf16.msra.mxu0 %v559
      %641 = vmatpush.bf16.msra.mxu0 %v558
      %642 = vmatpush.bf16.msra.mxu0 %v557
      %643 = vmatpush.bf16.msra.mxu0 %v556
      %644 = vmatpush.bf16.msra.mxu0 %v555
      %645 = vmatpush.bf16.msra.mxu0 %v554
      %646 = vmatpush.bf16.msra.mxu0 %v553
      %647 = vmatpush.bf16.msra.mxu0 %v552
      %648 = vmatmul.bf16.gmra.mxu0 %v385
      %v649 = vpop.f32.mrf.mxu0
      %v650 = vadd.f32 %v636, %v649
      %v651 = vpop.f32.mrf.mxu0
      %v652 = vadd.f32 %v638, %v651
      %653 = vdwg.mxu0
      %654 = vmatpush.bf16.msra.mxu0 %v567
      %655 = vmatpush.bf16.msra.mxu0 %v566
      %656 = vmatpush.bf16.msra.mxu0 %v565
      %657 = vmatpush.bf16.msra.mxu0 %v564
      %658 = vmatpush.bf16.msra.mxu0 %v563
      %659 = vmatpush.bf16.msra.mxu0 %v562
      %660 = vmatpush.bf16.msra.mxu0 %v561
      %661 = vmatpush.bf16.msra.mxu0 %v560
      %662 = vmatmul.bf16.gmra.mxu0 %v386
      %v663 = vpop.f32.mrf.mxu0
      %v664 = vadd.f32 %v650, %v663
      %v665 = vpop.f32.mrf.mxu0
      %v666 = vadd.f32 %v652, %v665
      %667 = vdwg.mxu0
      %668 = vmatpush.bf16.msra.mxu0 0
      %669 = vmatpush.bf16.msra.mxu0 0
      %670 = vmatpush.bf16.msra.mxu0 0
      %671 = vmatpush.bf16.msra.mxu0 0
      %672 = vmatpush.bf16.msra.mxu0 %v571
      %673 = vmatpush.bf16.msra.mxu0 %v570
      %674 = vmatpush.bf16.msra.mxu0 %v569
      %675 = vmatpush.bf16.msra.mxu0 %v568
      %676 = vmatmul.bf16.gmra.mxu0 %v610
      %v677 = vpop.f32.mrf.mxu0
      %v678 = vadd.f32 %v664, %v677
      %v679 = vpop.f32.mrf.mxu0
      %v680 = vadd.f32 %v666, %v679
      %681 = vdwg.mxu0
      %v682 = vpack.c.bf16 %v678, %v678
      %v683 = vpack.c.bf16 %v680, %v680
      %684 = vst [vmem:[%s276] sm:$0xf] %v682
      %685 = vst [vmem:[%s276 + $0x4] sm:$0xf] %v683
      %p686 = scmp.eq.s32.totalorder %s22, 0
      // Predicated region
      $region33: #{zencoder_forward.14} parent=31 // pred_check
        %p687 = pneg %p686
      $region34: #{zencoder_forward.14} parent=31 // pred_check_branch
        %689 = sbr.rel (%p687) target = $region36
      $region35: #{zencoder_forward.14} parent=31 // pred_region
        %690 = vst [vmem:[%s280] sm:$0x1] 0.0
        %691 = vst [vmem:[%s283] sm:$0x1] 0.0
      $region36: #{zencoder_forward.14} parent=31 // pred_fallthru
        _
      %v692 = vld [vmem:[%s280] sm:$0x1]
      %v693 = vadd.f32 %v678, %v680
      %v694 = vrot.slane %v693, 4
      %v695 = vadd.f32 %v693, %v694
      %v696 = vrot.slane %v695, 2
      %v697 = vadd.f32 %v695, %v696
      %v698 = vrot.slane %v697, 1
      %v699 = vadd.f32 %v697, %v698
      %v700 = vadd.f32 %v692, %v699
      %701 = vst [vmem:[%s280] sm:$0x1] %v700
      %v702 = vld [vmem:[%s283] sm:$0x1]
      %v703 = vmul.f32 %v678, %v678
      %v704 = vmul.f32 %v680, %v680
      %v705 = vadd.f32 %v703, %v704
      %v706 = vrot.slane %v705, 4
      %v707 = vadd.f32 %v705, %v706
      %v708 = vrot.slane %v707, 2
      %v709 = vadd.f32 %v707, %v708
      %v710 = vrot.slane %v709, 1
      %v711 = vadd.f32 %v709, %v710
      %v712 = vadd.f32 %v702, %v711
      %713 = vst [vmem:[%s283] sm:$0x1] %v712
      %s714 = smul.u32 2, %s22
      %p715 = scmp.lt.s32.totalorder %s21, 1
      %s716 = scalar_select %p715, %s21, 1
      %p717 = scmp.lt.s32.totalorder %s714, 1
      %s718 = scalar_select %p717, %s714, 1
      %s719 = smul.addr %s716, 2
      %s720 = sadd.s32 %s718, %s719
      %s721 = smul.addr %s720, 4
      %s722 = scalar_lea.vmem %s3, %s721
      %p723 = scmp.lt.s32.totalorder %s21, 1
      %s724 = scalar_select %p723, %s21, 1
      %s725 = scalar_lea.vmem %s4, %s724
      %p726 = scmp.lt.s32.totalorder %s21, 1
      %s727 = scalar_select %p726, %s21, 1
      %s728 = scalar_lea.vmem %s5, %s727
      // Predicated region
      $region37: #{zencoder_forward.14} parent=31 // pred_check
        %p729 = pneg %p119
      $region38: #{zencoder_forward.14} parent=31 // pred_check_branch
        %731 = sbr.rel (%p729) target = $region40
      $region39: #{zencoder_forward.14} parent=31 // pred_region
        %s732 = smul.u32 2, %s22
      $region40: #{zencoder_forward.14} parent=31 // pred_fallthru
        _
      // Predicated region
      $region41: #{zencoder_forward.14} parent=31 // pred_check
        %p733 = pneg %p145
      $region42: #{zencoder_forward.14} parent=31 // pred_check_branch
        %735 = sbr.rel (%p733) target = $region44
      $region43: #{zencoder_forward.14} parent=31 // pred_region
        _
      $region44: #{zencoder_forward.14} parent=31 // pred_fallthru
        _
      // Predicated region
      $region45: #{zencoder_forward.14} parent=31 // pred_check
        %p736 = pneg %p171
      $region46: #{zencoder_forward.14} parent=31 // pred_check_branch
        %738 = sbr.rel (%p736) target = $region48
      $region47: #{zencoder_forward.14} parent=31 // pred_region
        _
      $region48: #{zencoder_forward.14} parent=31 // pred_fallthru
        _
    $region32: #{zencoder_forward.14} parent=5 // pred_fallthru
      _
    %p739 = scmp.le.s32.totalorder 2, %s12
    // Predicated region
    $region49: #{zencoder_forward.14} parent=5 // pred_check
      %p740 = pneg %p739
    $region50: #{zencoder_forward.14} parent=5 // pred_check_branch
      %742 = sbr.rel (%p740) target = $region52
    $region51: #{zencoder_forward.14} parent=5 // pred_region
      %s743 = ssub.s32 %s12, 2
      // Predicated region
      $region53: #{zencoder_forward.14} parent=51 // pred_check
        %p744 = pneg %p125
      $region54: #{zencoder_forward.14} parent=51 // pred_check_branch
        %746 = sbr.rel (%p744) target = $region56
      $region55: #{zencoder_forward.14} parent=51 // pred_region
        %s747 = smul.u32 2, %s24
        %p748 = scmp.lt.s32.totalorder %s23, 1
        %s749 = scalar_select %p748, %s23, 1
        %p750 = scmp.lt.s32.totalorder %s747, 1
        %s751 = scalar_select %p750, %s747, 1
        %s752 = smul.addr %s749, 2
        %s753 = sadd.s32 %s751, %s752
        %s754 = smul.addr %s753, 4
        %s755 = scalar_lea.vmem %s3, %s754
      $region56: #{zencoder_forward.14} parent=51 // pred_fallthru
        _
      // Predicated region
      $region57: #{zencoder_forward.14} parent=51 // pred_check
        %p756 = pneg %p151
      $region58: #{zencoder_forward.14} parent=51 // pred_check_branch
        %758 = sbr.rel (%p756) target = $region60
      $region59: #{zencoder_forward.14} parent=51 // pred_region
        %p759 = scmp.lt.s32.totalorder %s23, 1
        %s760 = scalar_select %p759, %s23, 1
        %s761 = scalar_lea.vmem %s4, %s760
      $region60: #{zencoder_forward.14} parent=51 // pred_fallthru
        _
      // Predicated region
      $region61: #{zencoder_forward.14} parent=51 // pred_check
        %p762 = pneg %p177
      $region62: #{zencoder_forward.14} parent=51 // pred_check_branch
        %764 = sbr.rel (%p762) target = $region64
      $region63: #{zencoder_forward.14} parent=51 // pred_region
        %p765 = scmp.lt.s32.totalorder %s23, 1
        %s766 = scalar_select %p765, %s23, 1
        %s767 = scalar_lea.vmem %s5, %s766
      $region64: #{zencoder_forward.14} parent=51 // pred_fallthru
        _
    $region52: #{zencoder_forward.14} parent=5 // pred_fallthru
      _
  $region6: #{zencoder_forward.14} parent=0 // loop_footer
    %s16 = sadd.s32 1, %s12
  $region7: #{zencoder_forward.14} parent=0 // loop_footer_branch
    %11 = sbr.rel target = $region3
  $region8: #{zencoder_forward.14} parent=0 // loop_exit
    _

// kernel: zencoder_forward.17
$region0: #{zencoder_forward.17}
  #allocation0 [shape = 'u32[]', space=smem, size = 0x4, offset = 0x4, fixed_abs, tag = 'smem constant byte address 0x4 - core index']
  #allocation1 [shape = 'u32[72,128]{1,0:T(1,128)}', space=vmem, size = 0x9000, scoped, tag = 'internal scratch']
  %s0 = inlined_call_operand.vmem [shape: bf16[2,16,1024], index: 0, kind: input, shape index: {}]
  %s1 = inlined_call_operand.vmem [shape: f32[2,1,1024], index: 1, kind: input, shape index: {}]
  %s2 = inlined_call_operand.vmem [shape: f32[2,1,1024], index: 2, kind: input, shape index: {}]
  %s3 = inlined_call_operand.vmem [shape: bf16[2,16,1024], index: 3, kind: output, shape index: {}]
  %s4 = sld [smem:[#allocation0]]
  $region45: #{zencoder_forward.17} parent=0
    _
  %s6 = ssub.s32 1, %s4
  %s7 = scalar_select 0, %s6, %s4
  loop: start=0, step=1, limit=4
  $region2: #{zencoder_forward.17} parent=0 // loop_pre_header
    _
  $region3: #{zencoder_forward.17} parent=0 // loop_header
    %s9 = sphi 0, %s13
    %p10 = scmp.ge.s32.totalorder %s9, 4
    %s16 = sphi 0, %s28
    %s17 = sphi 0, %s24
    %s18 = sphi 0, %s16
    %s19 = sphi 0, %s17
    %s20 = sphi 0, %s18
    %s21 = sphi 0, %s19
    %s33 = sphi 0, %s35
    %s36 = sphi 0, %s33
    %s37 = sphi 0, %s36
    %s53 = sphi 0, %s37
    %s59 = sphi 0, %s61
    %s62 = sphi 0, %s59
    %s63 = sphi 0, %s62
    %s79 = sphi 0, %s63
    %s85 = sphi 0, %s87
    %s88 = sphi 0, %s85
    %s89 = sphi 0, %s88
    %s105 = sphi 0, %s89
    %s113 = sphi 0, %s115
    %s116 = sphi 0, %s113
    %s117 = sphi 0, %s116
    %s133 = sphi 0, %s117
  $region4: #{zencoder_forward.17} parent=0 // loop_header_branch
    %12 = sbr.rel (%p10) target = $region8
  $region5: #{zencoder_forward.17} parent=0 // loop_body
    %s14 = ssub.s32 %s9, 1
    %s15 = ssub.s32 %s9, 2
    %s22 = sadd.s32 1, %s17
    %p23 = scmp.ge.s32.totalorder %s22, 1
    %s24 = scalar_select %p23, 0, %s22
    %s25 = sadd.s32 1, %s16
    %s26 = scalar_select %p23, %s25, %s16
    %p27 = scmp.ge.s32.totalorder %s26, 2
    %s28 = scalar_select %p27, 0, %s26
    %s29 = ssub.s32 %s16, %s28
    %s30 = ssub.s32 %s17, %s24
    %s31 = sor.u32 %s29, %s30
    %p32 = scmp.eq.s32.totalorder %s31, 0
    %s34 = sadd.s32 %s33, 1
    %s35 = scalar_select %p32, %s33, %s34
    %p38 = pneg %p32
    %p39 = scmp.eq.s32.totalorder %s9, 1
    %p40 = por %p38, %p39
    %p41 = scmp.ne.s32.totalorder %s33, %s36
    %p42 = scmp.eq.s32.totalorder %s9, 0
    %p43 = por %p41, %p42
    %p44 = scmp.ne.s32.totalorder %s33, %s36
    %p45 = scmp.eq.s32.totalorder %s14, 1
    %p46 = por %p44, %p45
    %p47 = scmp.ne.s32.totalorder %s36, %s37
    %p48 = scmp.eq.s32.totalorder %s14, 0
    %p49 = por %p47, %p48
    %p50 = scmp.ne.s32.totalorder %s36, %s37
    %p51 = scmp.eq.s32.totalorder %s15, 1
    %p52 = por %p50, %p51
    %p54 = scmp.ne.s32.totalorder %s37, %s53
    %p55 = scmp.eq.s32.totalorder %s15, 0
    %p56 = por %p54, %p55
    %s57 = ssub.s32 %s16, %s28
    %p58 = scmp.eq.s32.totalorder %s57, 0
    %s60 = sadd.s32 %s59, 1
    %s61 = scalar_select %p58, %s59, %s60
    %p64 = pneg %p58
    %p65 = scmp.eq.s32.totalorder %s9, 1
    %p66 = por %p64, %p65
    %p67 = scmp.ne.s32.totalorder %s59, %s62
    %p68 = scmp.eq.s32.totalorder %s9, 0
    %p69 = por %p67, %p68
    %p70 = scmp.ne.s32.totalorder %s59, %s62
    %p71 = scmp.eq.s32.totalorder %s14, 1
    %p72 = por %p70, %p71
    %p73 = scmp.ne.s32.totalorder %s62, %s63
    %p74 = scmp.eq.s32.totalorder %s14, 0
    %p75 = por %p73, %p74
    %p76 = scmp.ne.s32.totalorder %s62, %s63
    %p77 = scmp.eq.s32.totalorder %s15, 1
    %p78 = por %p76, %p77
    %p80 = scmp.ne.s32.totalorder %s63, %s79
    %p81 = scmp.eq.s32.totalorder %s15, 0
    %p82 = por %p80, %p81
    %s83 = ssub.s32 %s16, %s28
    %p84 = scmp.eq.s32.totalorder %s83, 0
    %s86 = sadd.s32 %s85, 1
    %s87 = scalar_select %p84, %s85, %s86
    %p90 = pneg %p84
    %p91 = scmp.eq.s32.totalorder %s9, 1
    %p92 = por %p90, %p91
    %p93 = scmp.ne.s32.totalorder %s85, %s88
    %p94 = scmp.eq.s32.totalorder %s9, 0
    %p95 = por %p93, %p94
    %p96 = scmp.ne.s32.totalorder %s85, %s88
    %p97 = scmp.eq.s32.totalorder %s14, 1
    %p98 = por %p96, %p97
    %p99 = scmp.ne.s32.totalorder %s88, %s89
    %p100 = scmp.eq.s32.totalorder %s14, 0
    %p101 = por %p99, %p100
    %p102 = scmp.ne.s32.totalorder %s88, %s89
    %p103 = scmp.eq.s32.totalorder %s15, 1
    %p104 = por %p102, %p103
    %p106 = scmp.ne.s32.totalorder %s89, %s105
    %p107 = scmp.eq.s32.totalorder %s15, 0
    %p108 = por %p106, %p107
    %s109 = ssub.s32 %s16, %s28
    %s110 = ssub.s32 %s17, %s24
    %s111 = sor.u32 %s109, %s110
    %p112 = scmp.eq.s32.totalorder %s111, 0
    %s114 = sadd.s32 %s113, 1
    %s115 = scalar_select %p112, %s113, %s114
    %p118 = pneg %p112
    %p119 = scmp.eq.s32.totalorder %s9, 1
    %p120 = por %p118, %p119
    %p121 = scmp.ne.s32.totalorder %s113, %s116
    %p122 = scmp.eq.s32.totalorder %s9, 0
    %p123 = por %p121, %p122
    %p124 = scmp.ne.s32.totalorder %s113, %s116
    %p125 = scmp.eq.s32.totalorder %s14, 1
    %p126 = por %p124, %p125
    %p127 = scmp.ne.s32.totalorder %s116, %s117
    %p128 = scmp.eq.s32.totalorder %s14, 0
    %p129 = por %p127, %p128
    %p130 = scmp.ne.s32.totalorder %s116, %s117
    %p131 = scmp.eq.s32.totalorder %s15, 1
    %p132 = por %p130, %p131
    %p134 = scmp.ne.s32.totalorder %s117, %s133
    %p135 = scmp.eq.s32.totalorder %s15, 0
    %p136 = por %p134, %p135
    %p137 = scmp.le.s32.totalorder 1, %s9
    %p138 = scmp.lt.s32.totalorder %s9, 3
    %p139 = pnand %p137, %p138
    %p140 = pneg %p139
    // Predicated region
    $region9: #{zencoder_forward.17} parent=5 // pred_check
      _
    $region10: #{zencoder_forward.17} parent=5 // pred_check_branch
      %142 = sbr.rel (%p139) target = $region12
    $region11: #{zencoder_forward.17} parent=5 // pred_region
      %s143 = ssub.s32 %s9, 1
    $region12: #{zencoder_forward.17} parent=5 // pred_fallthru
      _
    %p144 = scmp.lt.s32.totalorder %s9, 2
    // Predicated region
    $region13: #{zencoder_forward.17} parent=5 // pred_check
      %p145 = pneg %p144
    $region14: #{zencoder_forward.17} parent=5 // pred_check_branch
      %147 = sbr.rel (%p145) target = $region16
    $region15: #{zencoder_forward.17} parent=5 // pred_region
      // Predicated region
      $region17: #{zencoder_forward.17} parent=15 // pred_check
        %p148 = pneg %p43
      $region18: #{zencoder_forward.17} parent=15 // pred_check_branch
        %150 = sbr.rel (%p148) target = $region20
      $region19: #{zencoder_forward.17} parent=15 // pred_region
        %s151 = smul.u32 2, %s17
        %p152 = scmp.lt.s32.totalorder %s16, 1
        %s153 = scalar_select %p152, %s16, 1
        %p154 = scmp.lt.s32.totalorder %s151, 1
        %s155 = scalar_select %p154, %s151, 1
        %s156 = smul.addr %s155, 8
        %s157 = smul.addr %s153, 16
        %s158 = sadd.s32 %s156, %s157
        %s159 = smul.addr %s158, 4
        %s160 = scalar_lea.vmem %s0, %s159
        %s161 = smul.u32 2, %s17
      $region20: #{zencoder_forward.17} parent=15 // pred_fallthru
        _
      // Predicated region
      $region21: #{zencoder_forward.17} parent=15 // pred_check
        %p162 = pneg %p69
      $region22: #{zencoder_forward.17} parent=15 // pred_check_branch
        %164 = sbr.rel (%p162) target = $region24
      $region23: #{zencoder_forward.17} parent=15 // pred_region
        %p165 = scmp.lt.s32.totalorder %s16, 1
        %s166 = scalar_select %p165, %s16, 1
        %s167 = smul.addr %s166, 8
        %s168 = scalar_lea.vmem %s1, %s167
      $region24: #{zencoder_forward.17} parent=15 // pred_fallthru
        _
      // Predicated region
      $region25: #{zencoder_forward.17} parent=15 // pred_check
        %p169 = pneg %p95
      $region26: #{zencoder_forward.17} parent=15 // pred_check_branch
        %171 = sbr.rel (%p169) target = $region28
      $region27: #{zencoder_forward.17} parent=15 // pred_region
        %p172 = scmp.lt.s32.totalorder %s16, 1
        %s173 = scalar_select %p172, %s16, 1
        %s174 = smul.addr %s173, 8
        %s175 = scalar_lea.vmem %s2, %s174
      $region28: #{zencoder_forward.17} parent=15 // pred_fallthru
        _
    $region16: #{zencoder_forward.17} parent=5 // pred_fallthru
      _
    %p176 = scmp.le.s32.totalorder 1, %s9
    %p177 = scmp.lt.s32.totalorder %s9, 3
    %p178 = pnand %p176, %p177
    %p179 = pneg %p178
    // Predicated region
    $region29: #{zencoder_forward.17} parent=5 // pred_check
      _
    $region30: #{zencoder_forward.17} parent=5 // pred_check_branch
      %181 = sbr.rel (%p178) target = $region32
    $region31: #{zencoder_forward.17} parent=5 // pred_region
      %s182 = ssub.s32 %s9, 1
      %s183 = smul.u32 2, %s19
      %p184 = scmp.lt.s32.totalorder %s18, 1
      %s185 = scalar_select %p184, %s18, 1
      %p186 = scmp.lt.s32.totalorder %s183, 1
      %s187 = scalar_select %p186, %s183, 1
      %s188 = smul.addr %s187, 8
      %s189 = smul.addr %s185, 16
      %s190 = sadd.s32 %s188, %s189
      %s191 = smul.addr %s190, 4
      %s192 = scalar_lea.vmem %s0, %s191
      %p193 = pneg %p49
      %p194 = pneg %p46
      %p195 = scmp.lt.s32.totalorder %s18, 1
      %s196 = scalar_select %p195, %s18, 1
      %s197 = smul.addr %s196, 8
      %s198 = scalar_lea.vmem %s1, %s197
      %p199 = pneg %p75
      %p200 = pneg %p72
      %p201 = scmp.lt.s32.totalorder %s18, 1
      %s202 = scalar_select %p201, %s18, 1
      %s203 = smul.addr %s202, 8
      %s204 = scalar_lea.vmem %s2, %s203
      %p205 = pneg %p101
      %p206 = pneg %p98
      %p207 = pneg %p129
      %p208 = pneg %p126
      %s209 = smul.u32 2, %s19
      %p210 = scmp.lt.s32.totalorder %s18, 1
      %s211 = scalar_select %p210, %s18, 1
      %p212 = scmp.lt.s32.totalorder %s209, 1
      %s213 = scalar_select %p212, %s209, 1
      %s214 = smul.addr %s213, 8
      %s215 = smul.addr %s211, 16
      %s216 = sadd.s32 %s214, %s215
      %s217 = smul.addr %s216, 4
      %s218 = scalar_lea.vmem %s3, %s217
      %s219 = smul.u32 2, %s19
      %p220 = scmp.lt.s32.totalorder %s18, 1
      %s221 = scalar_select %p220, %s18, 1
      %p222 = scmp.lt.s32.totalorder %s219, 1
      %s223 = scalar_select %p222, %s219, 1
      %s224 = smul.addr %s223, 8
      %s225 = smul.addr %s221, 16
      %s226 = sadd.s32 %s224, %s225
      %s227 = smul.addr %s226, 4
      %s228 = scalar_lea.vmem %s0, %s227
      %s229 = smul.u32 2, %s19
      %p230 = scmp.lt.s32.totalorder %s18, 1
      %s231 = scalar_select %p230, %s18, 1
      %s232 = smul.addr %s231, 8
      %s233 = scalar_lea.vmem %s1, %s232
      %p234 = scmp.lt.s32.totalorder %s18, 1
      %s235 = scalar_select %p234, %s18, 1
      %s236 = smul.addr %s235, 8
      %s237 = scalar_lea.vmem %s2, %s236
      %s238 = smul.u32 2, %s19
      %p239 = scmp.lt.s32.totalorder %s18, 1
      %s240 = scalar_select %p239, %s18, 1
      %p241 = scmp.lt.s32.totalorder %s238, 1
      %s242 = scalar_select %p241, %s238, 1
      %s243 = smul.addr %s242, 8
      %s244 = smul.addr %s240, 16
      %s245 = sadd.s32 %s243, %s244
      %s246 = smul.addr %s245, 4
      %s247 = scalar_lea.vmem %s3, %s246
      %s248 = smul.u32 2, %s19
      %v249 = vld [vmem:[%s228] sm:$0xff]
      %v250 = vld [vmem:[%s228 + $0x8] sm:$0xff]
      %v251 = vld [vmem:[%s228 + $0x10] sm:$0xff]
      %v252 = vld [vmem:[%s228 + $0x18] sm:$0xff]
      %v253 = vld [vmem:[%s228 + $0x20] sm:$0xff]
      %v254 = vld [vmem:[%s228 + $0x28] sm:$0xff]
      %v255 = vld [vmem:[%s228 + $0x30] sm:$0xff]
      %v256 = vld [vmem:[%s228 + $0x38] sm:$0xff]
      %v257 = vunpack.c.l.bf16 %v249
      %v258 = vunpack.c.h.bf16 %v249
      %v259 = vunpack.c.l.bf16 %v250
      %v260 = vunpack.c.h.bf16 %v250
      %v261 = vunpack.c.l.bf16 %v251
      %v262 = vunpack.c.h.bf16 %v251
      %v263 = vunpack.c.l.bf16 %v252
      %v264 = vunpack.c.h.bf16 %v252
      %v265 = vunpack.c.l.bf16 %v253
      %v266 = vunpack.c.h.bf16 %v253
      %v267 = vunpack.c.l.bf16 %v254
      %v268 = vunpack.c.h.bf16 %v254
      %v269 = vunpack.c.l.bf16 %v255
      %v270 = vunpack.c.h.bf16 %v255
      %v271 = vunpack.c.l.bf16 %v256
      %v272 = vunpack.c.h.bf16 %v256
      %v273 = vld [vmem:[%s233] sm:$0xff]
      %v274 = vmul.f32 %v273, 0.015625
      %v275 = vld [vmem:[%s237] sm:$0xff]
      %v276 = vmul.f32 %v275, 0.015625
      %v277 = vmul.f32 %v274, %v274
      %v278 = vsub.f32 %v276, %v277
      %v279 = vmax.f32 %v278, 0.0
      %v281 = vperm.slane %v274, 0
      %v282 = vperm.slane %v274, 1
      %v283 = vperm.slane %v274, 2
      %v284 = vperm.slane %v274, 3
      %v285 = vperm.slane %v274, 4
      %v286 = vperm.slane %v274, 5
      %v287 = vperm.slane %v274, 6
      %v288 = vperm.slane %v274, 7
      %v297 = vsub.f32 %v257, %v281
      %v298 = vsub.f32 %v258, %v282
      %v299 = vsub.f32 %v259, %v283
      %v300 = vsub.f32 %v260, %v284
      %v301 = vsub.f32 %v261, %v285
      %v302 = vsub.f32 %v262, %v286
      %v303 = vsub.f32 %v263, %v287
      %v304 = vsub.f32 %v264, %v288
      %v305 = vsub.f32 %v265, %v281
      %v306 = vsub.f32 %v266, %v282
      %v307 = vsub.f32 %v267, %v283
      %v308 = vsub.f32 %v268, %v284
      %v309 = vsub.f32 %v269, %v285
      %v310 = vsub.f32 %v270, %v286
      %v311 = vsub.f32 %v271, %v287
      %v312 = vsub.f32 %v272, %v288
      %v313 = vadd.f32 %v279, 1e-05
      %v314 = vrsqrt.pop %v313
      %v315 = vmul.f32 %v314, %v313
      %v316 = vmul.f32 %v315, %v314
      %v317 = vmul.f32 0.5, %v316
      %v318 = vsub.f32 1.5, %v317
      %v319 = vmul.f32 %v314, %v318
      %vm320 = vweird.f32 %v313
      %vm321 = vweird.f32 %v314
      %vm322 = vmor %vm320, %vm321
      %v323 = vsel %vm322, %v314, %v319
      %v325 = vperm.slane %v323, 0
      %v326 = vperm.slane %v323, 1
      %v327 = vperm.slane %v323, 2
      %v328 = vperm.slane %v323, 3
      %v329 = vperm.slane %v323, 4
      %v330 = vperm.slane %v323, 5
      %v331 = vperm.slane %v323, 6
      %v332 = vperm.slane %v323, 7
      %v341 = vmul.f32 %v297, %v325
      %v342 = vmul.f32 %v298, %v326
      %v343 = vmul.f32 %v299, %v327
      %v344 = vmul.f32 %v300, %v328
      %v345 = vmul.f32 %v301, %v329
      %v346 = vmul.f32 %v302, %v330
      %v347 = vmul.f32 %v303, %v331
      %v348 = vmul.f32 %v304, %v332
      %v349 = vmul.f32 %v305, %v325
      %v350 = vmul.f32 %v306, %v326
      %v351 = vmul.f32 %v307, %v327
      %v352 = vmul.f32 %v308, %v328
      %v353 = vmul.f32 %v309, %v329
      %v354 = vmul.f32 %v310, %v330
      %v355 = vmul.f32 %v311, %v331
      %v356 = vmul.f32 %v312, %v332
      %vm357 = vcmp.ge.f32.partialorder %v341, 0.0
      %vm358 = vcmp.ge.f32.partialorder %v342, 0.0
      %vm359 = vcmp.ge.f32.partialorder %v343, 0.0
      %vm360 = vcmp.ge.f32.partialorder %v344, 0.0
      %vm361 = vcmp.ge.f32.partialorder %v345, 0.0
      %vm362 = vcmp.ge.f32.partialorder %v346, 0.0
      %vm363 = vcmp.ge.f32.partialorder %v347, 0.0
      %vm364 = vcmp.ge.f32.partialorder %v348, 0.0
      %vm365 = vcmp.ge.f32.partialorder %v349, 0.0
      %vm366 = vcmp.ge.f32.partialorder %v350, 0.0
      %vm367 = vcmp.ge.f32.partialorder %v351, 0.0
      %vm368 = vcmp.ge.f32.partialorder %v352, 0.0
      %vm369 = vcmp.ge.f32.partialorder %v353, 0.0
      %vm370 = vcmp.ge.f32.partialorder %v354, 0.0
      %vm371 = vcmp.ge.f32.partialorder %v355, 0.0
      %vm372 = vcmp.ge.f32.partialorder %v356, 0.0
      %v373 = vmul.f32 %v341, 0.2
      %v374 = vmul.f32 %v342, 0.2
      %v375 = vmul.f32 %v343, 0.2
      %v376 = vmul.f32 %v344, 0.2
      %v377 = vmul.f32 %v345, 0.2
      %v378 = vmul.f32 %v346, 0.2
      %v379 = vmul.f32 %v347, 0.2
      %v380 = vmul.f32 %v348, 0.2
      %v381 = vmul.f32 %v349, 0.2
      %v382 = vmul.f32 %v350, 0.2
      %v383 = vmul.f32 %v351, 0.2
      %v384 = vmul.f32 %v352, 0.2
      %v385 = vmul.f32 %v353, 0.2
      %v386 = vmul.f32 %v354, 0.2
      %v387 = vmul.f32 %v355, 0.2
      %v388 = vmul.f32 %v356, 0.2
      %v389 = vsel %vm357, %v341, %v373
      %v390 = vsel %vm358, %v342, %v374
      %v391 = vsel %vm359, %v343, %v375
      %v392 = vsel %vm360, %v344, %v376
      %v393 = vsel %vm361, %v345, %v377
      %v394 = vsel %vm362, %v346, %v378
      %v395 = vsel %vm363, %v347, %v379
      %v396 = vsel %vm364, %v348, %v380
      %v397 = vsel %vm365, %v349, %v381
      %v398 = vsel %vm366, %v350, %v382
      %v399 = vsel %vm367, %v351, %v383
      %v400 = vsel %vm368, %v352, %v384
      %v401 = vsel %vm369, %v353, %v385
      %v402 = vsel %vm370, %v354, %v386
      %v403 = vsel %vm371, %v355, %v387
      %v404 = vsel %vm372, %v356, %v388
      %v405 = vpack.c.bf16 %v390, %v389
      %v406 = vpack.c.bf16 %v392, %v391
      %v407 = vpack.c.bf16 %v394, %v393
      %v408 = vpack.c.bf16 %v396, %v395
      %v409 = vpack.c.bf16 %v398, %v397
      %v410 = vpack.c.bf16 %v400, %v399
      %v411 = vpack.c.bf16 %v402, %v401
      %v412 = vpack.c.bf16 %v404, %v403
      %413 = vst [vmem:[%s247] sm:$0xff] %v405
      %414 = vst [vmem:[%s247 + $0x8] sm:$0xff] %v406
      %415 = vst [vmem:[%s247 + $0x10] sm:$0xff] %v407
      %416 = vst [vmem:[%s247 + $0x18] sm:$0xff] %v408
      %417 = vst [vmem:[%s247 + $0x20] sm:$0xff] %v409
      %418 = vst [vmem:[%s247 + $0x28] sm:$0xff] %v410
      %419 = vst [vmem:[%s247 + $0x30] sm:$0xff] %v411
      %420 = vst [vmem:[%s247 + $0x38] sm:$0xff] %v412
      %s421 = smul.u32 2, %s19
      %p422 = scmp.lt.s32.totalorder %s18, 1
      %s423 = scalar_select %p422, %s18, 1
      %p424 = scmp.lt.s32.totalorder %s421, 1
      %s425 = scalar_select %p424, %s421, 1
      %s426 = smul.addr %s425, 8
      %s427 = smul.addr %s423, 16
      %s428 = sadd.s32 %s426, %s427
      %s429 = smul.addr %s428, 4
      %s430 = scalar_lea.vmem %s3, %s429
      // Predicated region
      $region33: #{zencoder_forward.17} parent=31 // pred_check
        %p431 = pneg %p126
      $region34: #{zencoder_forward.17} parent=31 // pred_check_branch
        %433 = sbr.rel (%p431) target = $region36
      $region35: #{zencoder_forward.17} parent=31 // pred_region
        %s434 = smul.u32 2, %s19
      $region36: #{zencoder_forward.17} parent=31 // pred_fallthru
        _
    $region32: #{zencoder_forward.17} parent=5 // pred_fallthru
      _
    %p435 = scmp.le.s32.totalorder 2, %s9
    // Predicated region
    $region37: #{zencoder_forward.17} parent=5 // pred_check
      %p436 = pneg %p435
    $region38: #{zencoder_forward.17} parent=5 // pred_check_branch
      %438 = sbr.rel (%p436) target = $region40
    $region39: #{zencoder_forward.17} parent=5 // pred_region
      %s439 = ssub.s32 %s9, 2
      // Predicated region
      $region41: #{zencoder_forward.17} parent=39 // pred_check
        %p440 = pneg %p132
      $region42: #{zencoder_forward.17} parent=39 // pred_check_branch
        %442 = sbr.rel (%p440) target = $region44
      $region43: #{zencoder_forward.17} parent=39 // pred_region
        %s443 = smul.u32 2, %s21
        %p444 = scmp.lt.s32.totalorder %s20, 1
        %s445 = scalar_select %p444, %s20, 1
        %p446 = scmp.lt.s32.totalorder %s443, 1
        %s447 = scalar_select %p446, %s443, 1
        %s448 = smul.addr %s447, 8
        %s449 = smul.addr %s445, 16
        %s450 = sadd.s32 %s448, %s449
        %s451 = smul.addr %s450, 4
        %s452 = scalar_lea.vmem %s3, %s451
      $region44: #{zencoder_forward.17} parent=39 // pred_fallthru
        _
    $region40: #{zencoder_forward.17} parent=5 // pred_fallthru
      _
  $region6: #{zencoder_forward.17} parent=0 // loop_footer
    %s13 = sadd.s32 1, %s9
  $region7: #{zencoder_forward.17} parent=0 // loop_footer_branch
    %8 = sbr.rel target = $region3
  $region8: #{zencoder_forward.17} parent=0 // loop_exit
    _

// kernel: zencoder_forward.16
$region0: #{zencoder_forward.16}
  #allocation0 [shape = 'u32[]', space=smem, size = 0x4, offset = 0x4, fixed_abs, tag = 'smem constant byte address 0x4 - core index']
  #allocation1 [shape = 'u32[72,128]{1,0:T(1,128)}', space=vmem, size = 0x9000, scoped, tag = 'internal scratch']
  %s0 = inlined_call_operand.vmem [shape: bf16[2,16,512], index: 0, kind: input, shape index: {}]
  %s1 = inlined_call_operand.vmem [shape: bf16[512,1024], index: 1, kind: input, shape index: {}]
  %s2 = inlined_call_operand.vmem [shape: f32[1,1024], index: 2, kind: input, shape index: {}]
  %s3 = inlined_call_operand.vmem [shape: bf16[2,16,1024], index: 3, kind: output, shape index: {0}]
  %s4 = inlined_call_operand.vmem [shape: f32[2,1,1024], index: 4, kind: output, shape index: {1}]
  %s5 = inlined_call_operand.vmem [shape: f32[2,1,1024], index: 5, kind: output, shape index: {2}]
  %6 = xla_tuple %s3, %s4, %s5
  %s7 = sld [smem:[#allocation0]]
  $region65: #{zencoder_forward.16} parent=0
    _
  %s9 = ssub.s32 1, %s7
  %s10 = scalar_select 0, %s9, %s7
  loop: start=0, step=1, limit=4
  $region2: #{zencoder_forward.16} parent=0 // loop_pre_header
    _
  $region3: #{zencoder_forward.16} parent=0 // loop_header
    %s12 = sphi 0, %s16
    %p13 = scmp.ge.s32.totalorder %s12, 4
    %s19 = sphi 0, %s31
    %s20 = sphi 0, %s27
    %s21 = sphi 0, %s19
    %s22 = sphi 0, %s20
    %s23 = sphi 0, %s21
    %s24 = sphi 0, %s22
    %s36 = sphi 0, %s38
    %s39 = sphi 0, %s36
    %s40 = sphi 0, %s39
    %s56 = sphi 0, %s40
    %s60 = sphi 0, %s60
    %s62 = sphi 0, %s60
    %s63 = sphi 0, %s62
    %s77 = sphi 0, %s63
    %s81 = sphi 0, %s81
    %s83 = sphi 0, %s81
    %s84 = sphi 0, %s83
    %s98 = sphi 0, %s84
    %s106 = sphi 0, %s108
    %s109 = sphi 0, %s106
    %s110 = sphi 0, %s109
    %s126 = sphi 0, %s110
    %s132 = sphi 0, %s134
    %s135 = sphi 0, %s132
    %s136 = sphi 0, %s135
    %s152 = sphi 0, %s136
    %s158 = sphi 0, %s160
    %s161 = sphi 0, %s158
    %s162 = sphi 0, %s161
    %s178 = sphi 0, %s162
  $region4: #{zencoder_forward.16} parent=0 // loop_header_branch
    %15 = sbr.rel (%p13) target = $region8
  $region5: #{zencoder_forward.16} parent=0 // loop_body
    %s17 = ssub.s32 %s12, 1
    %s18 = ssub.s32 %s12, 2
    %s25 = sadd.s32 1, %s20
    %p26 = scmp.ge.s32.totalorder %s25, 1
    %s27 = scalar_select %p26, 0, %s25
    %s28 = sadd.s32 1, %s19
    %s29 = scalar_select %p26, %s28, %s19
    %p30 = scmp.ge.s32.totalorder %s29, 2
    %s31 = scalar_select %p30, 0, %s29
    %s32 = ssub.s32 %s19, %s31
    %s33 = ssub.s32 %s20, %s27
    %s34 = sor.u32 %s32, %s33
    %p35 = scmp.eq.s32.totalorder %s34, 0
    %s37 = sadd.s32 %s36, 1
    %s38 = scalar_select %p35, %s36, %s37
    %p41 = pneg %p35
    %p42 = scmp.eq.s32.totalorder %s12, 1
    %p43 = por %p41, %p42
    %p44 = scmp.ne.s32.totalorder %s36, %s39
    %p45 = scmp.eq.s32.totalorder %s12, 0
    %p46 = por %p44, %p45
    %p47 = scmp.ne.s32.totalorder %s36, %s39
    %p48 = scmp.eq.s32.totalorder %s17, 1
    %p49 = por %p47, %p48
    %p50 = scmp.ne.s32.totalorder %s39, %s40
    %p51 = scmp.eq.s32.totalorder %s17, 0
    %p52 = por %p50, %p51
    %p53 = scmp.ne.s32.totalorder %s39, %s40
    %p54 = scmp.eq.s32.totalorder %s18, 1
    %p55 = por %p53, %p54
    %p57 = scmp.ne.s32.totalorder %s40, %s56
    %p58 = scmp.eq.s32.totalorder %s18, 0
    %p59 = por %p57, %p58
    %s61 = sadd.s32 %s60, 1
    %p64 = scmp.eq.s32.totalorder %s12, 1
    %p65 = scmp.ne.s32.totalorder %s60, %s62
    %p66 = scmp.eq.s32.totalorder %s12, 0
    %p67 = por %p65, %p66
    %p68 = scmp.ne.s32.totalorder %s60, %s62
    %p69 = scmp.eq.s32.totalorder %s17, 1
    %p70 = por %p68, %p69
    %p71 = scmp.ne.s32.totalorder %s62, %s63
    %p72 = scmp.eq.s32.totalorder %s17, 0
    %p73 = por %p71, %p72
    %p74 = scmp.ne.s32.totalorder %s62, %s63
    %p75 = scmp.eq.s32.totalorder %s18, 1
    %p76 = por %p74, %p75
    %p78 = scmp.ne.s32.totalorder %s63, %s77
    %p79 = scmp.eq.s32.totalorder %s18, 0
    %p80 = por %p78, %p79
    %s82 = sadd.s32 %s81, 1
    %p85 = scmp.eq.s32.totalorder %s12, 1
    %p86 = scmp.ne.s32.totalorder %s81, %s83
    %p87 = scmp.eq.s32.totalorder %s12, 0
    %p88 = por %p86, %p87
    %p89 = scmp.ne.s32.totalorder %s81, %s83
    %p90 = scmp.eq.s32.totalorder %s17, 1
    %p91 = por %p89, %p90
    %p92 = scmp.ne.s32.totalorder %s83, %s84
    %p93 = scmp.eq.s32.totalorder %s17, 0
    %p94 = por %p92, %p93
    %p95 = scmp.ne.s32.totalorder %s83, %s84
    %p96 = scmp.eq.s32.totalorder %s18, 1
    %p97 = por %p95, %p96
    %p99 = scmp.ne.s32.totalorder %s84, %s98
    %p100 = scmp.eq.s32.totalorder %s18, 0
    %p101 = por %p99, %p100
    %s102 = ssub.s32 %s19, %s31
    %s103 = ssub.s32 %s20, %s27
    %s104 = sor.u32 %s102, %s103
    %p105 = scmp.eq.s32.totalorder %s104, 0
    %s107 = sadd.s32 %s106, 1
    %s108 = scalar_select %p105, %s106, %s107
    %p111 = pneg %p105
    %p112 = scmp.eq.s32.totalorder %s12, 1
    %p113 = por %p111, %p112
    %p114 = scmp.ne.s32.totalorder %s106, %s109
    %p115 = scmp.eq.s32.totalorder %s12, 0
    %p116 = por %p114, %p115
    %p117 = scmp.ne.s32.totalorder %s106, %s109
    %p118 = scmp.eq.s32.totalorder %s17, 1
    %p119 = por %p117, %p118
    %p120 = scmp.ne.s32.totalorder %s109, %s110
    %p121 = scmp.eq.s32.totalorder %s17, 0
    %p122 = por %p120, %p121
    %p123 = scmp.ne.s32.totalorder %s109, %s110
    %p124 = scmp.eq.s32.totalorder %s18, 1
    %p125 = por %p123, %p124
    %p127 = scmp.ne.s32.totalorder %s110, %s126
    %p128 = scmp.eq.s32.totalorder %s18, 0
    %p129 = por %p127, %p128
    %s130 = ssub.s32 %s19, %s31
    %p131 = scmp.eq.s32.totalorder %s130, 0
    %s133 = sadd.s32 %s132, 1
    %s134 = scalar_select %p131, %s132, %s133
    %p137 = pneg %p131
    %p138 = scmp.eq.s32.totalorder %s12, 1
    %p139 = por %p137, %p138
    %p140 = scmp.ne.s32.totalorder %s132, %s135
    %p141 = scmp.eq.s32.totalorder %s12, 0
    %p142 = por %p140, %p141
    %p143 = scmp.ne.s32.totalorder %s132, %s135
    %p144 = scmp.eq.s32.totalorder %s17, 1
    %p145 = por %p143, %p144
    %p146 = scmp.ne.s32.totalorder %s135, %s136
    %p147 = scmp.eq.s32.totalorder %s17, 0
    %p148 = por %p146, %p147
    %p149 = scmp.ne.s32.totalorder %s135, %s136
    %p150 = scmp.eq.s32.totalorder %s18, 1
    %p151 = por %p149, %p150
    %p153 = scmp.ne.s32.totalorder %s136, %s152
    %p154 = scmp.eq.s32.totalorder %s18, 0
    %p155 = por %p153, %p154
    %s156 = ssub.s32 %s19, %s31
    %p157 = scmp.eq.s32.totalorder %s156, 0
    %s159 = sadd.s32 %s158, 1
    %s160 = scalar_select %p157, %s158, %s159
    %p163 = pneg %p157
    %p164 = scmp.eq.s32.totalorder %s12, 1
    %p165 = por %p163, %p164
    %p166 = scmp.ne.s32.totalorder %s158, %s161
    %p167 = scmp.eq.s32.totalorder %s12, 0
    %p168 = por %p166, %p167
    %p169 = scmp.ne.s32.totalorder %s158, %s161
    %p170 = scmp.eq.s32.totalorder %s17, 1
    %p171 = por %p169, %p170
    %p172 = scmp.ne.s32.totalorder %s161, %s162
    %p173 = scmp.eq.s32.totalorder %s17, 0
    %p174 = por %p172, %p173
    %p175 = scmp.ne.s32.totalorder %s161, %s162
    %p176 = scmp.eq.s32.totalorder %s18, 1
    %p177 = por %p175, %p176
    %p179 = scmp.ne.s32.totalorder %s162, %s178
    %p180 = scmp.eq.s32.totalorder %s18, 0
    %p181 = por %p179, %p180
    %p182 = scmp.le.s32.totalorder 1, %s12
    %p183 = scmp.lt.s32.totalorder %s12, 3
    %p184 = pnand %p182, %p183
    %p185 = pneg %p184
    // Predicated region
    $region9: #{zencoder_forward.16} parent=5 // pred_check
      _
    $region10: #{zencoder_forward.16} parent=5 // pred_check_branch
      %187 = sbr.rel (%p184) target = $region12
    $region11: #{zencoder_forward.16} parent=5 // pred_region
      %s188 = ssub.s32 %s12, 1
      // Predicated region
      $region13: #{zencoder_forward.16} parent=11 // pred_check
        %p189 = pneg %p73
      $region14: #{zencoder_forward.16} parent=11 // pred_check_branch
        %191 = sbr.rel (%p189) target = $region16
      $region15: #{zencoder_forward.16} parent=11 // pred_region
        _
      $region16: #{zencoder_forward.16} parent=11 // pred_fallthru
        _
      // Predicated region
      $region17: #{zencoder_forward.16} parent=11 // pred_check
        %p192 = pneg %p94
      $region18: #{zencoder_forward.16} parent=11 // pred_check_branch
        %194 = sbr.rel (%p192) target = $region20
      $region19: #{zencoder_forward.16} parent=11 // pred_region
        _
      $region20: #{zencoder_forward.16} parent=11 // pred_fallthru
        _
    $region12: #{zencoder_forward.16} parent=5 // pred_fallthru
      _
    %p195 = scmp.lt.s32.totalorder %s12, 2
    // Predicated region
    $region21: #{zencoder_forward.16} parent=5 // pred_check
      %p196 = pneg %p195
    $region22: #{zencoder_forward.16} parent=5 // pred_check_branch
      %198 = sbr.rel (%p196) target = $region24
    $region23: #{zencoder_forward.16} parent=5 // pred_region
      // Predicated region
      $region25: #{zencoder_forward.16} parent=23 // pred_check
        %p199 = pneg %p46
      $region26: #{zencoder_forward.16} parent=23 // pred_check_branch
        %201 = sbr.rel (%p199) target = $region28
      $region27: #{zencoder_forward.16} parent=23 // pred_region
        %s202 = smul.u32 2, %s20
        %p203 = scmp.lt.s32.totalorder %s19, 1
        %s204 = scalar_select %p203, %s19, 1
        %p205 = scmp.lt.s32.totalorder %s202, 1
        %s206 = scalar_select %p205, %s202, 1
        %s207 = smul.addr %s206, 4
        %s208 = smul.addr %s204, 8
        %s209 = sadd.s32 %s207, %s208
        %s210 = smul.addr %s209, 4
        %s211 = scalar_lea.vmem %s0, %s210
        %s212 = smul.u32 2, %s20
      $region28: #{zencoder_forward.16} parent=23 // pred_fallthru
        _
    $region24: #{zencoder_forward.16} parent=5 // pred_fallthru
      _
    %p213 = scmp.le.s32.totalorder 1, %s12
    %p214 = scmp.lt.s32.totalorder %s12, 3
    %p215 = pnand %p213, %p214
    %p216 = pneg %p215
    // Predicated region
    $region29: #{zencoder_forward.16} parent=5 // pred_check
      _
    $region30: #{zencoder_forward.16} parent=5 // pred_check_branch
      %218 = sbr.rel (%p215) target = $region32
    $region31: #{zencoder_forward.16} parent=5 // pred_region
      %s219 = ssub.s32 %s12, 1
      %s220 = smul.u32 2, %s22
      %p221 = scmp.lt.s32.totalorder %s21, 1
      %s222 = scalar_select %p221, %s21, 1
      %p223 = scmp.lt.s32.totalorder %s220, 1
      %s224 = scalar_select %p223, %s220, 1
      %s225 = smul.addr %s224, 4
      %s226 = smul.addr %s222, 8
      %s227 = sadd.s32 %s225, %s226
      %s228 = smul.addr %s227, 4
      %s229 = scalar_lea.vmem %s0, %s228
      %p230 = pneg %p52
      %p231 = pneg %p49
      %p232 = pneg %p73
      %p233 = pneg %p70
      %p234 = pneg %p94
      %p235 = pneg %p91
      %p236 = pneg %p122
      %p237 = pneg %p119
      %s238 = smul.u32 2, %s22
      %p239 = scmp.lt.s32.totalorder %s21, 1
      %s240 = scalar_select %p239, %s21, 1
      %p241 = scmp.lt.s32.totalorder %s238, 1
      %s242 = scalar_select %p241, %s238, 1
      %s243 = smul.addr %s242, 8
      %s244 = smul.addr %s240, 16
      %s245 = sadd.s32 %s243, %s244
      %s246 = smul.addr %s245, 4
      %s247 = scalar_lea.vmem %s3, %s246
      %p248 = pneg %p148
      %p249 = pneg %p145
      %p250 = scmp.lt.s32.totalorder %s21, 1
      %s251 = scalar_select %p250, %s21, 1
      %s252 = smul.addr %s251, 8
      %s253 = scalar_lea.vmem %s4, %s252
      %p254 = pneg %p174
      %p255 = pneg %p171
      %p256 = scmp.lt.s32.totalorder %s21, 1
      %s257 = scalar_select %p256, %s21, 1
      %s258 = smul.addr %s257, 8
      %s259 = scalar_lea.vmem %s5, %s258
      %s260 = smul.u32 2, %s22
      %p261 = scmp.lt.s32.totalorder %s21, 1
      %s262 = scalar_select %p261, %s21, 1
      %p263 = scmp.lt.s32.totalorder %s260, 1
      %s264 = scalar_select %p263, %s260, 1
      %s265 = smul.addr %s264, 4
      %s266 = smul.addr %s262, 8
      %s267 = sadd.s32 %s265, %s266
      %s268 = smul.addr %s267, 4
      %s269 = scalar_lea.vmem %s0, %s268
      %s270 = smul.u32 2, %s22
      %s271 = smul.u32 2, %s22
      %p272 = scmp.lt.s32.totalorder %s21, 1
      %s273 = scalar_select %p272, %s21, 1
      %p274 = scmp.lt.s32.totalorder %s271, 1
      %s275 = scalar_select %p274, %s271, 1
      %s276 = smul.addr %s275, 8
      %s277 = smul.addr %s273, 16
      %s278 = sadd.s32 %s276, %s277
      %s279 = smul.addr %s278, 4
      %s280 = scalar_lea.vmem %s3, %s279
      %s281 = smul.u32 2, %s22
      %p282 = scmp.lt.s32.totalorder %s21, 1
      %s283 = scalar_select %p282, %s21, 1
      %s284 = smul.addr %s283, 8
      %s285 = scalar_lea.vmem %s4, %s284
      %p286 = scmp.lt.s32.totalorder %s21, 1
      %s287 = scalar_select %p286, %s21, 1
      %s288 = smul.addr %s287, 8
      %s289 = scalar_lea.vmem %s5, %s288
      %v290 = vld [vmem:[%s269] sm:$0xff]
      %v291 = vld [vmem:[%s269 + $0x8] sm:$0xff]
      %v292 = vld [vmem:[%s269 + $0x10] sm:$0xff]
      %v293 = vld [vmem:[%s269 + $0x18] sm:$0xff]
      %v294 = vld [vmem:[%s1] sm:$0xff]
      %v295 = vld [vmem:[%s1 + $0x8] sm:$0xff]
      %v296 = vld [vmem:[%s1 + $0x10] sm:$0xff]
      %v297 = vld [vmem:[%s1 + $0x18] sm:$0xff]
      %v298 = vld [vmem:[%s1 + $0x20] sm:$0xff]
      %v299 = vld [vmem:[%s1 + $0x28] sm:$0xff]
      %v300 = vld [vmem:[%s1 + $0x30] sm:$0xff]
      %v301 = vld [vmem:[%s1 + $0x38] sm:$0xff]
      %v302 = vld [vmem:[%s1 + $0x40] sm:$0xff]
      %v303 = vld [vmem:[%s1 + $0x48] sm:$0xff]
      %v304 = vld [vmem:[%s1 + $0x50] sm:$0xff]
      %v305 = vld [vmem:[%s1 + $0x58] sm:$0xff]
      %v306 = vld [vmem:[%s1 + $0x60] sm:$0xff]
      %v307 = vld [vmem:[%s1 + $0x68] sm:$0xff]
      %v308 = vld [vmem:[%s1 + $0x70] sm:$0xff]
      %v309 = vld [vmem:[%s1 + $0x78] sm:$0xff]
      %v310 = vld [vmem:[%s1 + $0x80] sm:$0xff]
      %v311 = vld [vmem:[%s1 + $0x88] sm:$0xff]
      %v312 = vld [vmem:[%s1 + $0x90] sm:$0xff]
      %v313 = vld [vmem:[%s1 + $0x98] sm:$0xff]
      %v314 = vld [vmem:[%s1 + $0xa0] sm:$0xff]
      %v315 = vld [vmem:[%s1 + $0xa8] sm:$0xff]
      %v316 = vld [vmem:[%s1 + $0xb0] sm:$0xff]
      %v317 = vld [vmem:[%s1 + $0xb8] sm:$0xff]
      %v318 = vld [vmem:[%s1 + $0xc0] sm:$0xff]
      %v319 = vld [vmem:[%s1 + $0xc8] sm:$0xff]
      %v320 = vld [vmem:[%s1 + $0xd0] sm:$0xff]
      %v321 = vld [vmem:[%s1 + $0xd8] sm:$0xff]
      %v322 = vld [vmem:[%s1 + $0xe0] sm:$0xff]
      %v323 = vld [vmem:[%s1 + $0xe8] sm:$0xff]
      %v324 = vld [vmem:[%s1 + $0xf0] sm:$0xff]
      %v325 = vld [vmem:[%s1 + $0xf8] sm:$0xff]
      %v326 = vld [vmem:[%s1 + $0x100] sm:$0xff]
      %v327 = vld [vmem:[%s1 + $0x108] sm:$0xff]
      %v328 = vld [vmem:[%s1 + $0x110] sm:$0xff]
      %v329 = vld [vmem:[%s1 + $0x118] sm:$0xff]
      %v330 = vld [vmem:[%s1 + $0x120] sm:$0xff]
      %v331 = vld [vmem:[%s1 + $0x128] sm:$0xff]
      %v332 = vld [vmem:[%s1 + $0x130] sm:$0xff]
      %v333 = vld [vmem:[%s1 + $0x138] sm:$0xff]
      %v334 = vld [vmem:[%s1 + $0x140] sm:$0xff]
      %v335 = vld [vmem:[%s1 + $0x148] sm:$0xff]
      %v336 = vld [vmem:[%s1 + $0x150] sm:$0xff]
      %v337 = vld [vmem:[%s1 + $0x158] sm:$0xff]
      %v338 = vld [vmem:[%s1 + $0x160] sm:$0xff]
      %v339 = vld [vmem:[%s1 + $0x168] sm:$0xff]
      %v340 = vld [vmem:[%s1 + $0x170] sm:$0xff]
      %v341 = vld [vmem:[%s1 + $0x178] sm:$0xff]
      %v342 = vld [vmem:[%s1 + $0x180] sm:$0xff]
      %v343 = vld [vmem:[%s1 + $0x188] sm:$0xff]
      %v344 = vld [vmem:[%s1 + $0x190] sm:$0xff]
      %v345 = vld [vmem:[%s1 + $0x198] sm:$0xff]
      %v346 = vld [vmem:[%s1 + $0x1a0] sm:$0xff]
      %v347 = vld [vmem:[%s1 + $0x1a8] sm:$0xff]
      %v348 = vld [vmem:[%s1 + $0x1b0] sm:$0xff]
      %v349 = vld [vmem:[%s1 + $0x1b8] sm:$0xff]
      %v350 = vld [vmem:[%s1 + $0x1c0] sm:$0xff]
      %v351 = vld [vmem:[%s1 + $0x1c8] sm:$0xff]
      %v352 = vld [vmem:[%s1 + $0x1d0] sm:$0xff]
      %v353 = vld [vmem:[%s1 + $0x1d8] sm:$0xff]
      %v354 = vld [vmem:[%s1 + $0x1e0] sm:$0xff]
      %v355 = vld [vmem:[%s1 + $0x1e8] sm:$0xff]
      %v356 = vld [vmem:[%s1 + $0x1f0] sm:$0xff]
      %v357 = vld [vmem:[%s1 + $0x1f8] sm:$0xff]
      %v358 = vld [vmem:[%s1 + $0x200] sm:$0xff]
      %v359 = vld [vmem:[%s1 + $0x208] sm:$0xff]
      %v360 = vld [vmem:[%s1 + $0x210] sm:$0xff]
      %v361 = vld [vmem:[%s1 + $0x218] sm:$0xff]
      %v362 = vld [vmem:[%s1 + $0x220] sm:$0xff]
      %v363 = vld [vmem:[%s1 + $0x228] sm:$0xff]
      %v364 = vld [vmem:[%s1 + $0x230] sm:$0xff]
      %v365 = vld [vmem:[%s1 + $0x238] sm:$0xff]
      %v366 = vld [vmem:[%s1 + $0x240] sm:$0xff]
      %v367 = vld [vmem:[%s1 + $0x248] sm:$0xff]
      %v368 = vld [vmem:[%s1 + $0x250] sm:$0xff]
      %v369 = vld [vmem:[%s1 + $0x258] sm:$0xff]
      %v370 = vld [vmem:[%s1 + $0x260] sm:$0xff]
      %v371 = vld [vmem:[%s1 + $0x268] sm:$0xff]
      %v372 = vld [vmem:[%s1 + $0x270] sm:$0xff]
      %v373 = vld [vmem:[%s1 + $0x278] sm:$0xff]
      %v374 = vld [vmem:[%s1 + $0x280] sm:$0xff]
      %v375 = vld [vmem:[%s1 + $0x288] sm:$0xff]
      %v376 = vld [vmem:[%s1 + $0x290] sm:$0xff]
      %v377 = vld [vmem:[%s1 + $0x298] sm:$0xff]
      %v378 = vld [vmem:[%s1 + $0x2a0] sm:$0xff]
      %v379 = vld [vmem:[%s1 + $0x2a8] sm:$0xff]
      %v380 = vld [vmem:[%s1 + $0x2b0] sm:$0xff]
      %v381 = vld [vmem:[%s1 + $0x2b8] sm:$0xff]
      %v382 = vld [vmem:[%s1 + $0x2c0] sm:$0xff]
      %v383 = vld [vmem:[%s1 + $0x2c8] sm:$0xff]
      %v384 = vld [vmem:[%s1 + $0x2d0] sm:$0xff]
      %v385 = vld [vmem:[%s1 + $0x2d8] sm:$0xff]
      %v386 = vld [vmem:[%s1 + $0x2e0] sm:$0xff]
      %v387 = vld [vmem:[%s1 + $0x2e8] sm:$0xff]
      %v388 = vld [vmem:[%s1 + $0x2f0] sm:$0xff]
      %v389 = vld [vmem:[%s1 + $0x2f8] sm:$0xff]
      %v390 = vld [vmem:[%s1 + $0x300] sm:$0xff]
      %v391 = vld [vmem:[%s1 + $0x308] sm:$0xff]
      %v392 = vld [vmem:[%s1 + $0x310] sm:$0xff]
      %v393 = vld [vmem:[%s1 + $0x318] sm:$0xff]
      %v394 = vld [vmem:[%s1 + $0x320] sm:$0xff]
      %v395 = vld [vmem:[%s1 + $0x328] sm:$0xff]
      %v396 = vld [vmem:[%s1 + $0x330] sm:$0xff]
      %v397 = vld [vmem:[%s1 + $0x338] sm:$0xff]
      %v398 = vld [vmem:[%s1 + $0x340] sm:$0xff]
      %v399 = vld [vmem:[%s1 + $0x348] sm:$0xff]
      %v400 = vld [vmem:[%s1 + $0x350] sm:$0xff]
      %v401 = vld [vmem:[%s1 + $0x358] sm:$0xff]
      %v402 = vld [vmem:[%s1 + $0x360] sm:$0xff]
      %v403 = vld [vmem:[%s1 + $0x368] sm:$0xff]
      %v404 = vld [vmem:[%s1 + $0x370] sm:$0xff]
      %v405 = vld [vmem:[%s1 + $0x378] sm:$0xff]
      %v406 = vld [vmem:[%s1 + $0x380] sm:$0xff]
      %v407 = vld [vmem:[%s1 + $0x388] sm:$0xff]
      %v408 = vld [vmem:[%s1 + $0x390] sm:$0xff]
      %v409 = vld [vmem:[%s1 + $0x398] sm:$0xff]
      %v410 = vld [vmem:[%s1 + $0x3a0] sm:$0xff]
      %v411 = vld [vmem:[%s1 + $0x3a8] sm:$0xff]
      %v412 = vld [vmem:[%s1 + $0x3b0] sm:$0xff]
      %v413 = vld [vmem:[%s1 + $0x3b8] sm:$0xff]
      %v414 = vld [vmem:[%s1 + $0x3c0] sm:$0xff]
      %v415 = vld [vmem:[%s1 + $0x3c8] sm:$0xff]
      %v416 = vld [vmem:[%s1 + $0x3d0] sm:$0xff]
      %v417 = vld [vmem:[%s1 + $0x3d8] sm:$0xff]
      %v418 = vld [vmem:[%s1 + $0x3e0] sm:$0xff]
      %v419 = vld [vmem:[%s1 + $0x3e8] sm:$0xff]
      %v420 = vld [vmem:[%s1 + $0x3f0] sm:$0xff]
      %v421 = vld [vmem:[%s1 + $0x3f8] sm:$0xff]
      %v422 = vld [vmem:[%s1 + $0x400] sm:$0xff]
      %v423 = vld [vmem:[%s1 + $0x408] sm:$0xff]
      %v424 = vld [vmem:[%s1 + $0x410] sm:$0xff]
      %v425 = vld [vmem:[%s1 + $0x418] sm:$0xff]
      %v426 = vld [vmem:[%s1 + $0x420] sm:$0xff]
      %v427 = vld [vmem:[%s1 + $0x428] sm:$0xff]
      %v428 = vld [vmem:[%s1 + $0x430] sm:$0xff]
      %v429 = vld [vmem:[%s1 + $0x438] sm:$0xff]
      %v430 = vld [vmem:[%s1 + $0x440] sm:$0xff]
      %v431 = vld [vmem:[%s1 + $0x448] sm:$0xff]
      %v432 = vld [vmem:[%s1 + $0x450] sm:$0xff]
      %v433 = vld [vmem:[%s1 + $0x458] sm:$0xff]
      %v434 = vld [vmem:[%s1 + $0x460] sm:$0xff]
      %v435 = vld [vmem:[%s1 + $0x468] sm:$0xff]
      %v436 = vld [vmem:[%s1 + $0x470] sm:$0xff]
      %v437 = vld [vmem:[%s1 + $0x478] sm:$0xff]
      %v438 = vld [vmem:[%s1 + $0x480] sm:$0xff]
      %v439 = vld [vmem:[%s1 + $0x488] sm:$0xff]
      %v440 = vld [vmem:[%s1 + $0x490] sm:$0xff]
      %v441 = vld [vmem:[%s1 + $0x498] sm:$0xff]
      %v442 = vld [vmem:[%s1 + $0x4a0] sm:$0xff]
      %v443 = vld [vmem:[%s1 + $0x4a8] sm:$0xff]
      %v444 = vld [vmem:[%s1 + $0x4b0] sm:$0xff]
      %v445 = vld [vmem:[%s1 + $0x4b8] sm:$0xff]
      %v446 = vld [vmem:[%s1 + $0x4c0] sm:$0xff]
      %v447 = vld [vmem:[%s1 + $0x4c8] sm:$0xff]
      %v448 = vld [vmem:[%s1 + $0x4d0] sm:$0xff]
      %v449 = vld [vmem:[%s1 + $0x4d8] sm:$0xff]
      %v450 = vld [vmem:[%s1 + $0x4e0] sm:$0xff]
      %v451 = vld [vmem:[%s1 + $0x4e8] sm:$0xff]
      %v452 = vld [vmem:[%s1 + $0x4f0] sm:$0xff]
      %v453 = vld [vmem:[%s1 + $0x4f8] sm:$0xff]
      %v454 = vld [vmem:[%s1 + $0x500] sm:$0xff]
      %v455 = vld [vmem:[%s1 + $0x508] sm:$0xff]
      %v456 = vld [vmem:[%s1 + $0x510] sm:$0xff]
      %v457 = vld [vmem:[%s1 + $0x518] sm:$0xff]
      %v458 = vld [vmem:[%s1 + $0x520] sm:$0xff]
      %v459 = vld [vmem:[%s1 + $0x528] sm:$0xff]
      %v460 = vld [vmem:[%s1 + $0x530] sm:$0xff]
      %v461 = vld [vmem:[%s1 + $0x538] sm:$0xff]
      %v462 = vld [vmem:[%s1 + $0x540] sm:$0xff]
      %v463 = vld [vmem:[%s1 + $0x548] sm:$0xff]
      %v464 = vld [vmem:[%s1 + $0x550] sm:$0xff]
      %v465 = vld [vmem:[%s1 + $0x558] sm:$0xff]
      %v466 = vld [vmem:[%s1 + $0x560] sm:$0xff]
      %v467 = vld [vmem:[%s1 + $0x568] sm:$0xff]
      %v468 = vld [vmem:[%s1 + $0x570] sm:$0xff]
      %v469 = vld [vmem:[%s1 + $0x578] sm:$0xff]
      %v470 = vld [vmem:[%s1 + $0x580] sm:$0xff]
      %v471 = vld [vmem:[%s1 + $0x588] sm:$0xff]
      %v472 = vld [vmem:[%s1 + $0x590] sm:$0xff]
      %v473 = vld [vmem:[%s1 + $0x598] sm:$0xff]
      %v474 = vld [vmem:[%s1 + $0x5a0] sm:$0xff]
      %v475 = vld [vmem:[%s1 + $0x5a8] sm:$0xff]
      %v476 = vld [vmem:[%s1 + $0x5b0] sm:$0xff]
      %v477 = vld [vmem:[%s1 + $0x5b8] sm:$0xff]
      %v478 = vld [vmem:[%s1 + $0x5c0] sm:$0xff]
      %v479 = vld [vmem:[%s1 + $0x5c8] sm:$0xff]
      %v480 = vld [vmem:[%s1 + $0x5d0] sm:$0xff]
      %v481 = vld [vmem:[%s1 + $0x5d8] sm:$0xff]
      %v482 = vld [vmem:[%s1 + $0x5e0] sm:$0xff]
      %v483 = vld [vmem:[%s1 + $0x5e8] sm:$0xff]
      %v484 = vld [vmem:[%s1 + $0x5f0] sm:$0xff]
      %v485 = vld [vmem:[%s1 + $0x5f8] sm:$0xff]
      %v486 = vld [vmem:[%s1 + $0x600] sm:$0xff]
      %v487 = vld [vmem:[%s1 + $0x608] sm:$0xff]
      %v488 = vld [vmem:[%s1 + $0x610] sm:$0xff]
      %v489 = vld [vmem:[%s1 + $0x618] sm:$0xff]
      %v490 = vld [vmem:[%s1 + $0x620] sm:$0xff]
      %v491 = vld [vmem:[%s1 + $0x628] sm:$0xff]
      %v492 = vld [vmem:[%s1 + $0x630] sm:$0xff]
      %v493 = vld [vmem:[%s1 + $0x638] sm:$0xff]
      %v494 = vld [vmem:[%s1 + $0x640] sm:$0xff]
      %v495 = vld [vmem:[%s1 + $0x648] sm:$0xff]
      %v496 = vld [vmem:[%s1 + $0x650] sm:$0xff]
      %v497 = vld [vmem:[%s1 + $0x658] sm:$0xff]
      %v498 = vld [vmem:[%s1 + $0x660] sm:$0xff]
      %v499 = vld [vmem:[%s1 + $0x668] sm:$0xff]
      %v500 = vld [vmem:[%s1 + $0x670] sm:$0xff]
      %v501 = vld [vmem:[%s1 + $0x678] sm:$0xff]
      %v502 = vld [vmem:[%s1 + $0x680] sm:$0xff]
      %v503 = vld [vmem:[%s1 + $0x688] sm:$0xff]
      %v504 = vld [vmem:[%s1 + $0x690] sm:$0xff]
      %v505 = vld [vmem:[%s1 + $0x698] sm:$0xff]
      %v506 = vld [vmem:[%s1 + $0x6a0] sm:$0xff]
      %v507 = vld [vmem:[%s1 + $0x6a8] sm:$0xff]
      %v508 = vld [vmem:[%s1 + $0x6b0] sm:$0xff]
      %v509 = vld [vmem:[%s1 + $0x6b8] sm:$0xff]
      %v510 = vld [vmem:[%s1 + $0x6c0] sm:$0xff]
      %v511 = vld [vmem:[%s1 + $0x6c8] sm:$0xff]
      %v512 = vld [vmem:[%s1 + $0x6d0] sm:$0xff]
      %v513 = vld [vmem:[%s1 + $0x6d8] sm:$0xff]
      %v514 = vld [vmem:[%s1 + $0x6e0] sm:$0xff]
      %v515 = vld [vmem:[%s1 + $0x6e8] sm:$0xff]
      %v516 = vld [vmem:[%s1 + $0x6f0] sm:$0xff]
      %v517 = vld [vmem:[%s1 + $0x6f8] sm:$0xff]
      %v518 = vld [vmem:[%s1 + $0x700] sm:$0xff]
      %v519 = vld [vmem:[%s1 + $0x708] sm:$0xff]
      %v520 = vld [vmem:[%s1 + $0x710] sm:$0xff]
      %v521 = vld [vmem:[%s1 + $0x718] sm:$0xff]
      %v522 = vld [vmem:[%s1 + $0x720] sm:$0xff]
      %v523 = vld [vmem:[%s1 + $0x728] sm:$0xff]
      %v524 = vld [vmem:[%s1 + $0x730] sm:$0xff]
      %v525 = vld [vmem:[%s1 + $0x738] sm:$0xff]
      %v526 = vld [vmem:[%s1 + $0x740] sm:$0xff]
      %v527 = vld [vmem:[%s1 + $0x748] sm:$0xff]
      %v528 = vld [vmem:[%s1 + $0x750] sm:$0xff]
      %v529 = vld [vmem:[%s1 + $0x758] sm:$0xff]
      %v530 = vld [vmem:[%s1 + $0x760] sm:$0xff]
      %v531 = vld [vmem:[%s1 + $0x768] sm:$0xff]
      %v532 = vld [vmem:[%s1 + $0x770] sm:$0xff]
      %v533 = vld [vmem:[%s1 + $0x778] sm:$0xff]
      %v534 = vld [vmem:[%s1 + $0x780] sm:$0xff]
      %v535 = vld [vmem:[%s1 + $0x788] sm:$0xff]
      %v536 = vld [vmem:[%s1 + $0x790] sm:$0xff]
      %v537 = vld [vmem:[%s1 + $0x798] sm:$0xff]
      %v538 = vld [vmem:[%s1 + $0x7a0] sm:$0xff]
      %v539 = vld [vmem:[%s1 + $0x7a8] sm:$0xff]
      %v540 = vld [vmem:[%s1 + $0x7b0] sm:$0xff]
      %v541 = vld [vmem:[%s1 + $0x7b8] sm:$0xff]
      %v542 = vld [vmem:[%s1 + $0x7c0] sm:$0xff]
      %v543 = vld [vmem:[%s1 + $0x7c8] sm:$0xff]
      %v544 = vld [vmem:[%s1 + $0x7d0] sm:$0xff]
      %v545 = vld [vmem:[%s1 + $0x7d8] sm:$0xff]
      %v546 = vld [vmem:[%s1 + $0x7e0] sm:$0xff]
      %v547 = vld [vmem:[%s1 + $0x7e8] sm:$0xff]
      %v548 = vld [vmem:[%s1 + $0x7f0] sm:$0xff]
      %v549 = vld [vmem:[%s1 + $0x7f8] sm:$0xff]
      %v550 = vld [vmem:[%s2] sm:$0xff]
      %v552 = vperm.slane %v550, 0
      %v553 = vperm.slane %v550, 1
      %v554 = vperm.slane %v550, 2
      %v555 = vperm.slane %v550, 3
      %v556 = vperm.slane %v550, 4
      %v557 = vperm.slane %v550, 5
      %v558 = vperm.slane %v550, 6
      %v559 = vperm.slane %v550, 7
      %v572 = vunpack.c.l.b16 %v290
      %v573 = vunpack.c.h.b16 %v290
      %v574 = vunpack.c.l.b16 %v291
      %v575 = vunpack.c.h.b16 %v291
      %v576 = vunpack.c.l.b16 %v292
      %v577 = vunpack.c.h.b16 %v292
      %v578 = vunpack.c.l.b16 %v293
      %v579 = vunpack.c.h.b16 %v293
      %v580 = vpack.c.b16 %v576, %v572
      %v581 = vpack.c.b16 %v577, %v573
      %v582 = vpack.c.b16 %v578, %v574
      %v583 = vpack.c.b16 %v579, %v575
      %v844 = vunpack.c.l.b16 %v294
      %v845 = vunpack.c.h.b16 %v294
      %v846 = vunpack.c.l.b16 %v295
      %v847 = vunpack.c.h.b16 %v295
      %v848 = vunpack.c.l.b16 %v296
      %v849 = vunpack.c.h.b16 %v296
      %v850 = vunpack.c.l.b16 %v297
      %v851 = vunpack.c.h.b16 %v297
      %v852 = vunpack.c.l.b16 %v298
      %v853 = vunpack.c.h.b16 %v298
      %v854 = vunpack.c.l.b16 %v299
      %v855 = vunpack.c.h.b16 %v299
      %v856 = vunpack.c.l.b16 %v300
      %v857 = vunpack.c.h.b16 %v300
      %v858 = vunpack.c.l.b16 %v301
      %v859 = vunpack.c.h.b16 %v301
      %v860 = vunpack.c.l.b16 %v302
      %v861 = vunpack.c.h.b16 %v302
      %v862 = vunpack.c.l.b16 %v303
      %v863 = vunpack.c.h.b16 %v303
      %v864 = vunpack.c.l.b16 %v304
      %v865 = vunpack.c.h.b16 %v304
      %v866 = vunpack.c.l.b16 %v305
      %v867 = vunpack.c.h.b16 %v305
      %v868 = vunpack.c.l.b16 %v306
      %v869 = vunpack.c.h.b16 %v306
      %v870 = vunpack.c.l.b16 %v307
      %v871 = vunpack.c.h.b16 %v307
      %v872 = vunpack.c.l.b16 %v308
      %v873 = vunpack.c.h.b16 %v308
      %v874 = vunpack.c.l.b16 %v309
      %v875 = vunpack.c.h.b16 %v309
      %v876 = vunpack.c.l.b16 %v310
      %v877 = vunpack.c.h.b16 %v310
      %v878 = vunpack.c.l.b16 %v311
      %v879 = vunpack.c.h.b16 %v311
      %v880 = vunpack.c.l.b16 %v312
      %v881 = vunpack.c.h.b16 %v312
      %v882 = vunpack.c.l.b16 %v313
      %v883 = vunpack.c.h.b16 %v313
      %v884 = vunpack.c.l.b16 %v314
      %v885 = vunpack.c.h.b16 %v314
      %v886 = vunpack.c.l.b16 %v315
      %v887 = vunpack.c.h.b16 %v315
      %v888 = vunpack.c.l.b16 %v316
      %v889 = vunpack.c.h.b16 %v316
      %v890 = vunpack.c.l.b16 %v317
      %v891 = vunpack.c.h.b16 %v317
      %v892 = vunpack.c.l.b16 %v318
      %v893 = vunpack.c.h.b16 %v318
      %v894 = vunpack.c.l.b16 %v319
      %v895 = vunpack.c.h.b16 %v319
      %v896 = vunpack.c.l.b16 %v320
      %v897 = vunpack.c.h.b16 %v320
      %v898 = vunpack.c.l.b16 %v321
      %v899 = vunpack.c.h.b16 %v321
      %v900 = vunpack.c.l.b16 %v322
      %v901 = vunpack.c.h.b16 %v322
      %v902 = vunpack.c.l.b16 %v323
      %v903 = vunpack.c.h.b16 %v323
      %v904 = vunpack.c.l.b16 %v324
      %v905 = vunpack.c.h.b16 %v324
      %v906 = vunpack.c.l.b16 %v325
      %v907 = vunpack.c.h.b16 %v325
      %v908 = vunpack.c.l.b16 %v326
      %v909 = vunpack.c.h.b16 %v326
      %v910 = vunpack.c.l.b16 %v327
      %v911 = vunpack.c.h.b16 %v327
      %v912 = vunpack.c.l.b16 %v328
      %v913 = vunpack.c.h.b16 %v328
      %v914 = vunpack.c.l.b16 %v329
      %v915 = vunpack.c.h.b16 %v329
      %v916 = vunpack.c.l.b16 %v330
      %v917 = vunpack.c.h.b16 %v330
      %v918 = vunpack.c.l.b16 %v331
      %v919 = vunpack.c.h.b16 %v331
      %v920 = vunpack.c.l.b16 %v332
      %v921 = vunpack.c.h.b16 %v332
      %v922 = vunpack.c.l.b16 %v333
      %v923 = vunpack.c.h.b16 %v333
      %v924 = vunpack.c.l.b16 %v334
      %v925 = vunpack.c.h.b16 %v334
      %v926 = vunpack.c.l.b16 %v335
      %v927 = vunpack.c.h.b16 %v335
      %v928 = vunpack.c.l.b16 %v336
      %v929 = vunpack.c.h.b16 %v336
      %v930 = vunpack.c.l.b16 %v337
      %v931 = vunpack.c.h.b16 %v337
      %v932 = vunpack.c.l.b16 %v338
      %v933 = vunpack.c.h.b16 %v338
      %v934 = vunpack.c.l.b16 %v339
      %v935 = vunpack.c.h.b16 %v339
      %v936 = vunpack.c.l.b16 %v340
      %v937 = vunpack.c.h.b16 %v340
      %v938 = vunpack.c.l.b16 %v341
      %v939 = vunpack.c.h.b16 %v341
      %v940 = vunpack.c.l.b16 %v342
      %v941 = vunpack.c.h.b16 %v342
      %v942 = vunpack.c.l.b16 %v343
      %v943 = vunpack.c.h.b16 %v343
      %v944 = vunpack.c.l.b16 %v344
      %v945 = vunpack.c.h.b16 %v344
      %v946 = vunpack.c.l.b16 %v345
      %v947 = vunpack.c.h.b16 %v345
      %v948 = vunpack.c.l.b16 %v346
      %v949 = vunpack.c.h.b16 %v346
      %v950 = vunpack.c.l.b16 %v347
      %v951 = vunpack.c.h.b16 %v347
      %v952 = vunpack.c.l.b16 %v348
      %v953 = vunpack.c.h.b16 %v348
      %v954 = vunpack.c.l.b16 %v349
      %v955 = vunpack.c.h.b16 %v349
      %v956 = vunpack.c.l.b16 %v350
      %v957 = vunpack.c.h.b16 %v350
      %v958 = vunpack.c.l.b16 %v351
      %v959 = vunpack.c.h.b16 %v351
      %v960 = vunpack.c.l.b16 %v352
      %v961 = vunpack.c.h.b16 %v352
      %v962 = vunpack.c.l.b16 %v353
      %v963 = vunpack.c.h.b16 %v353
      %v964 = vunpack.c.l.b16 %v354
      %v965 = vunpack.c.h.b16 %v354
      %v966 = vunpack.c.l.b16 %v355
      %v967 = vunpack.c.h.b16 %v355
      %v968 = vunpack.c.l.b16 %v356
      %v969 = vunpack.c.h.b16 %v356
      %v970 = vunpack.c.l.b16 %v357
      %v971 = vunpack.c.h.b16 %v357
      %v972 = vunpack.c.l.b16 %v358
      %v973 = vunpack.c.h.b16 %v358
      %v974 = vunpack.c.l.b16 %v359
      %v975 = vunpack.c.h.b16 %v359
      %v976 = vunpack.c.l.b16 %v360
      %v977 = vunpack.c.h.b16 %v360
      %v978 = vunpack.c.l.b16 %v361
      %v979 = vunpack.c.h.b16 %v361
      %v980 = vunpack.c.l.b16 %v362
      %v981 = vunpack.c.h.b16 %v362
      %v982 = vunpack.c.l.b16 %v363
      %v983 = vunpack.c.h.b16 %v363
      %v984 = vunpack.c.l.b16 %v364
      %v985 = vunpack.c.h.b16 %v364
      %v986 = vunpack.c.l.b16 %v365
      %v987 = vunpack.c.h.b16 %v365
      %v988 = vunpack.c.l.b16 %v366
      %v989 = vunpack.c.h.b16 %v366
      %v990 = vunpack.c.l.b16 %v367
      %v991 = vunpack.c.h.b16 %v367
      %v992 = vunpack.c.l.b16 %v368
      %v993 = vunpack.c.h.b16 %v368
      %v994 = vunpack.c.l.b16 %v369
      %v995 = vunpack.c.h.b16 %v369
      %v996 = vunpack.c.l.b16 %v370
      %v997 = vunpack.c.h.b16 %v370
      %v998 = vunpack.c.l.b16 %v371
      %v999 = vunpack.c.h.b16 %v371
      %v1000 = vunpack.c.l.b16 %v372
      %v1001 = vunpack.c.h.b16 %v372
      %v1002 = vunpack.c.l.b16 %v373
      %v1003 = vunpack.c.h.b16 %v373
      %v1004 = vunpack.c.l.b16 %v374
      %v1005 = vunpack.c.h.b16 %v374
      %v1006 = vunpack.c.l.b16 %v375
      %v1007 = vunpack.c.h.b16 %v375
      %v1008 = vunpack.c.l.b16 %v376
      %v1009 = vunpack.c.h.b16 %v376
      %v1010 = vunpack.c.l.b16 %v377
      %v1011 = vunpack.c.h.b16 %v377
      %v1012 = vunpack.c.l.b16 %v378
      %v1013 = vunpack.c.h.b16 %v378
      %v1014 = vunpack.c.l.b16 %v379
      %v1015 = vunpack.c.h.b16 %v379
      %v1016 = vunpack.c.l.b16 %v380
      %v1017 = vunpack.c.h.b16 %v380
      %v1018 = vunpack.c.l.b16 %v381
      %v1019 = vunpack.c.h.b16 %v381
      %v1020 = vunpack.c.l.b16 %v382
      %v1021 = vunpack.c.h.b16 %v382
      %v1022 = vunpack.c.l.b16 %v383
      %v1023 = vunpack.c.h.b16 %v383
      %v1024 = vunpack.c.l.b16 %v384
      %v1025 = vunpack.c.h.b16 %v384
      %v1026 = vunpack.c.l.b16 %v385
      %v1027 = vunpack.c.h.b16 %v385
      %v1028 = vunpack.c.l.b16 %v386
      %v1029 = vunpack.c.h.b16 %v386
      %v1030 = vunpack.c.l.b16 %v387
      %v1031 = vunpack.c.h.b16 %v387
      %v1032 = vunpack.c.l.b16 %v388
      %v1033 = vunpack.c.h.b16 %v388
      %v1034 = vunpack.c.l.b16 %v389
      %v1035 = vunpack.c.h.b16 %v389
      %v1036 = vunpack.c.l.b16 %v390
      %v1037 = vunpack.c.h.b16 %v390
      %v1038 = vunpack.c.l.b16 %v391
      %v1039 = vunpack.c.h.b16 %v391
      %v1040 = vunpack.c.l.b16 %v392
      %v1041 = vunpack.c.h.b16 %v392
      %v1042 = vunpack.c.l.b16 %v393
      %v1043 = vunpack.c.h.b16 %v393
      %v1044 = vunpack.c.l.b16 %v394
      %v1045 = vunpack.c.h.b16 %v394
      %v1046 = vunpack.c.l.b16 %v395
      %v1047 = vunpack.c.h.b16 %v395
      %v1048 = vunpack.c.l.b16 %v396
      %v1049 = vunpack.c.h.b16 %v396
      %v1050 = vunpack.c.l.b16 %v397
      %v1051 = vunpack.c.h.b16 %v397
      %v1052 = vunpack.c.l.b16 %v398
      %v1053 = vunpack.c.h.b16 %v398
      %v1054 = vunpack.c.l.b16 %v399
      %v1055 = vunpack.c.h.b16 %v399
      %v1056 = vunpack.c.l.b16 %v400
      %v1057 = vunpack.c.h.b16 %v400
      %v1058 = vunpack.c.l.b16 %v401
      %v1059 = vunpack.c.h.b16 %v401
      %v1060 = vunpack.c.l.b16 %v402
      %v1061 = vunpack.c.h.b16 %v402
      %v1062 = vunpack.c.l.b16 %v403
      %v1063 = vunpack.c.h.b16 %v403
      %v1064 = vunpack.c.l.b16 %v404
      %v1065 = vunpack.c.h.b16 %v404
      %v1066 = vunpack.c.l.b16 %v405
      %v1067 = vunpack.c.h.b16 %v405
      %v1068 = vunpack.c.l.b16 %v406
      %v1069 = vunpack.c.h.b16 %v406
      %v1070 = vunpack.c.l.b16 %v407
      %v1071 = vunpack.c.h.b16 %v407
      %v1072 = vunpack.c.l.b16 %v408
      %v1073 = vunpack.c.h.b16 %v408
      %v1074 = vunpack.c.l.b16 %v409
      %v1075 = vunpack.c.h.b16 %v409
      %v1076 = vunpack.c.l.b16 %v410
      %v1077 = vunpack.c.h.b16 %v410
      %v1078 = vunpack.c.l.b16 %v411
      %v1079 = vunpack.c.h.b16 %v411
      %v1080 = vunpack.c.l.b16 %v412
      %v1081 = vunpack.c.h.b16 %v412
      %v1082 = vunpack.c.l.b16 %v413
      %v1083 = vunpack.c.h.b16 %v413
      %v1084 = vunpack.c.l.b16 %v414
      %v1085 = vunpack.c.h.b16 %v414
      %v1086 = vunpack.c.l.b16 %v415
      %v1087 = vunpack.c.h.b16 %v415
      %v1088 = vunpack.c.l.b16 %v416
      %v1089 = vunpack.c.h.b16 %v416
      %v1090 = vunpack.c.l.b16 %v417
      %v1091 = vunpack.c.h.b16 %v417
      %v1092 = vunpack.c.l.b16 %v418
      %v1093 = vunpack.c.h.b16 %v418
      %v1094 = vunpack.c.l.b16 %v419
      %v1095 = vunpack.c.h.b16 %v419
      %v1096 = vunpack.c.l.b16 %v420
      %v1097 = vunpack.c.h.b16 %v420
      %v1098 = vunpack.c.l.b16 %v421
      %v1099 = vunpack.c.h.b16 %v421
      %v1100 = vunpack.c.l.b16 %v422
      %v1101 = vunpack.c.h.b16 %v422
      %v1102 = vunpack.c.l.b16 %v423
      %v1103 = vunpack.c.h.b16 %v423
      %v1104 = vunpack.c.l.b16 %v424
      %v1105 = vunpack.c.h.b16 %v424
      %v1106 = vunpack.c.l.b16 %v425
      %v1107 = vunpack.c.h.b16 %v425
      %v1108 = vunpack.c.l.b16 %v426
      %v1109 = vunpack.c.h.b16 %v426
      %v1110 = vunpack.c.l.b16 %v427
      %v1111 = vunpack.c.h.b16 %v427
      %v1112 = vunpack.c.l.b16 %v428
      %v1113 = vunpack.c.h.b16 %v428
      %v1114 = vunpack.c.l.b16 %v429
      %v1115 = vunpack.c.h.b16 %v429
      %v1116 = vunpack.c.l.b16 %v430
      %v1117 = vunpack.c.h.b16 %v430
      %v1118 = vunpack.c.l.b16 %v431
      %v1119 = vunpack.c.h.b16 %v431
      %v1120 = vunpack.c.l.b16 %v432
      %v1121 = vunpack.c.h.b16 %v432
      %v1122 = vunpack.c.l.b16 %v433
      %v1123 = vunpack.c.h.b16 %v433
      %v1124 = vunpack.c.l.b16 %v434
      %v1125 = vunpack.c.h.b16 %v434
      %v1126 = vunpack.c.l.b16 %v435
      %v1127 = vunpack.c.h.b16 %v435
      %v1128 = vunpack.c.l.b16 %v436
      %v1129 = vunpack.c.h.b16 %v436
      %v1130 = vunpack.c.l.b16 %v437
      %v1131 = vunpack.c.h.b16 %v437
      %v1132 = vunpack.c.l.b16 %v438
      %v1133 = vunpack.c.h.b16 %v438
      %v1134 = vunpack.c.l.b16 %v439
      %v1135 = vunpack.c.h.b16 %v439
      %v1136 = vunpack.c.l.b16 %v440
      %v1137 = vunpack.c.h.b16 %v440
      %v1138 = vunpack.c.l.b16 %v441
      %v1139 = vunpack.c.h.b16 %v441
      %v1140 = vunpack.c.l.b16 %v442
      %v1141 = vunpack.c.h.b16 %v442
      %v1142 = vunpack.c.l.b16 %v443
      %v1143 = vunpack.c.h.b16 %v443
      %v1144 = vunpack.c.l.b16 %v444
      %v1145 = vunpack.c.h.b16 %v444
      %v1146 = vunpack.c.l.b16 %v445
      %v1147 = vunpack.c.h.b16 %v445
      %v1148 = vunpack.c.l.b16 %v446
      %v1149 = vunpack.c.h.b16 %v446
      %v1150 = vunpack.c.l.b16 %v447
      %v1151 = vunpack.c.h.b16 %v447
      %v1152 = vunpack.c.l.b16 %v448
      %v1153 = vunpack.c.h.b16 %v448
      %v1154 = vunpack.c.l.b16 %v449
      %v1155 = vunpack.c.h.b16 %v449
      %v1156 = vunpack.c.l.b16 %v450
      %v1157 = vunpack.c.h.b16 %v450
      %v1158 = vunpack.c.l.b16 %v451
      %v1159 = vunpack.c.h.b16 %v451
      %v1160 = vunpack.c.l.b16 %v452
      %v1161 = vunpack.c.h.b16 %v452
      %v1162 = vunpack.c.l.b16 %v453
      %v1163 = vunpack.c.h.b16 %v453
      %v1164 = vunpack.c.l.b16 %v454
      %v1165 = vunpack.c.h.b16 %v454
      %v1166 = vunpack.c.l.b16 %v455
      %v1167 = vunpack.c.h.b16 %v455
      %v1168 = vunpack.c.l.b16 %v456
      %v1169 = vunpack.c.h.b16 %v456
      %v1170 = vunpack.c.l.b16 %v457
      %v1171 = vunpack.c.h.b16 %v457
      %v1172 = vunpack.c.l.b16 %v458
      %v1173 = vunpack.c.h.b16 %v458
      %v1174 = vunpack.c.l.b16 %v459
      %v1175 = vunpack.c.h.b16 %v459
      %v1176 = vunpack.c.l.b16 %v460
      %v1177 = vunpack.c.h.b16 %v460
      %v1178 = vunpack.c.l.b16 %v461
      %v1179 = vunpack.c.h.b16 %v461
      %v1180 = vunpack.c.l.b16 %v462
      %v1181 = vunpack.c.h.b16 %v462
      %v1182 = vunpack.c.l.b16 %v463
      %v1183 = vunpack.c.h.b16 %v463
      %v1184 = vunpack.c.l.b16 %v464
      %v1185 = vunpack.c.h.b16 %v464
      %v1186 = vunpack.c.l.b16 %v465
      %v1187 = vunpack.c.h.b16 %v465
      %v1188 = vunpack.c.l.b16 %v466
      %v1189 = vunpack.c.h.b16 %v466
      %v1190 = vunpack.c.l.b16 %v467
      %v1191 = vunpack.c.h.b16 %v467
      %v1192 = vunpack.c.l.b16 %v468
      %v1193 = vunpack.c.h.b16 %v468
      %v1194 = vunpack.c.l.b16 %v469
      %v1195 = vunpack.c.h.b16 %v469
      %v1196 = vunpack.c.l.b16 %v470
      %v1197 = vunpack.c.h.b16 %v470
      %v1198 = vunpack.c.l.b16 %v471
      %v1199 = vunpack.c.h.b16 %v471
      %v1200 = vunpack.c.l.b16 %v472
      %v1201 = vunpack.c.h.b16 %v472
      %v1202 = vunpack.c.l.b16 %v473
      %v1203 = vunpack.c.h.b16 %v473
      %v1204 = vunpack.c.l.b16 %v474
      %v1205 = vunpack.c.h.b16 %v474
      %v1206 = vunpack.c.l.b16 %v475
      %v1207 = vunpack.c.h.b16 %v475
      %v1208 = vunpack.c.l.b16 %v476
      %v1209 = vunpack.c.h.b16 %v476
      %v1210 = vunpack.c.l.b16 %v477
      %v1211 = vunpack.c.h.b16 %v477
      %v1212 = vunpack.c.l.b16 %v478
      %v1213 = vunpack.c.h.b16 %v478
      %v1214 = vunpack.c.l.b16 %v479
      %v1215 = vunpack.c.h.b16 %v479
      %v1216 = vunpack.c.l.b16 %v480
      %v1217 = vunpack.c.h.b16 %v480
      %v1218 = vunpack.c.l.b16 %v481
      %v1219 = vunpack.c.h.b16 %v481
      %v1220 = vunpack.c.l.b16 %v482
      %v1221 = vunpack.c.h.b16 %v482
      %v1222 = vunpack.c.l.b16 %v483
      %v1223 = vunpack.c.h.b16 %v483
      %v1224 = vunpack.c.l.b16 %v484
      %v1225 = vunpack.c.h.b16 %v484
      %v1226 = vunpack.c.l.b16 %v485
      %v1227 = vunpack.c.h.b16 %v485
      %v1228 = vunpack.c.l.b16 %v486
      %v1229 = vunpack.c.h.b16 %v486
      %v1230 = vunpack.c.l.b16 %v487
      %v1231 = vunpack.c.h.b16 %v487
      %v1232 = vunpack.c.l.b16 %v488
      %v1233 = vunpack.c.h.b16 %v488
      %v1234 = vunpack.c.l.b16 %v489
      %v1235 = vunpack.c.h.b16 %v489
      %v1236 = vunpack.c.l.b16 %v490
      %v1237 = vunpack.c.h.b16 %v490
      %v1238 = vunpack.c.l.b16 %v491
      %v1239 = vunpack.c.h.b16 %v491
      %v1240 = vunpack.c.l.b16 %v492
      %v1241 = vunpack.c.h.b16 %v492
      %v1242 = vunpack.c.l.b16 %v493
      %v1243 = vunpack.c.h.b16 %v493
      %v1244 = vunpack.c.l.b16 %v494
      %v1245 = vunpack.c.h.b16 %v494
      %v1246 = vunpack.c.l.b16 %v495
      %v1247 = vunpack.c.h.b16 %v495
      %v1248 = vunpack.c.l.b16 %v496
      %v1249 = vunpack.c.h.b16 %v496
      %v1250 = vunpack.c.l.b16 %v497
      %v1251 = vunpack.c.h.b16 %v497
      %v1252 = vunpack.c.l.b16 %v498
      %v1253 = vunpack.c.h.b16 %v498
      %v1254 = vunpack.c.l.b16 %v499
      %v1255 = vunpack.c.h.b16 %v499
      %v1256 = vunpack.c.l.b16 %v500
      %v1257 = vunpack.c.h.b16 %v500
      %v1258 = vunpack.c.l.b16 %v501
      %v1259 = vunpack.c.h.b16 %v501
      %v1260 = vunpack.c.l.b16 %v502
      %v1261 = vunpack.c.h.b16 %v502
      %v1262 = vunpack.c.l.b16 %v503
      %v1263 = vunpack.c.h.b16 %v503
      %v1264 = vunpack.c.l.b16 %v504
      %v1265 = vunpack.c.h.b16 %v504
      %v1266 = vunpack.c.l.b16 %v505
      %v1267 = vunpack.c.h.b16 %v505
      %v1268 = vunpack.c.l.b16 %v506
      %v1269 = vunpack.c.h.b16 %v506
      %v1270 = vunpack.c.l.b16 %v507
      %v1271 = vunpack.c.h.b16 %v507
      %v1272 = vunpack.c.l.b16 %v508
      %v1273 = vunpack.c.h.b16 %v508
      %v1274 = vunpack.c.l.b16 %v509
      %v1275 = vunpack.c.h.b16 %v509
      %v1276 = vunpack.c.l.b16 %v510
      %v1277 = vunpack.c.h.b16 %v510
      %v1278 = vunpack.c.l.b16 %v511
      %v1279 = vunpack.c.h.b16 %v511
      %v1280 = vunpack.c.l.b16 %v512
      %v1281 = vunpack.c.h.b16 %v512
      %v1282 = vunpack.c.l.b16 %v513
      %v1283 = vunpack.c.h.b16 %v513
      %v1284 = vunpack.c.l.b16 %v514
      %v1285 = vunpack.c.h.b16 %v514
      %v1286 = vunpack.c.l.b16 %v515
      %v1287 = vunpack.c.h.b16 %v515
      %v1288 = vunpack.c.l.b16 %v516
      %v1289 = vunpack.c.h.b16 %v516
      %v1290 = vunpack.c.l.b16 %v517
      %v1291 = vunpack.c.h.b16 %v517
      %v1292 = vunpack.c.l.b16 %v518
      %v1293 = vunpack.c.h.b16 %v518
      %v1294 = vunpack.c.l.b16 %v519
      %v1295 = vunpack.c.h.b16 %v519
      %v1296 = vunpack.c.l.b16 %v520
      %v1297 = vunpack.c.h.b16 %v520
      %v1298 = vunpack.c.l.b16 %v521
      %v1299 = vunpack.c.h.b16 %v521
      %v1300 = vunpack.c.l.b16 %v522
      %v1301 = vunpack.c.h.b16 %v522
      %v1302 = vunpack.c.l.b16 %v523
      %v1303 = vunpack.c.h.b16 %v523
      %v1304 = vunpack.c.l.b16 %v524
      %v1305 = vunpack.c.h.b16 %v524
      %v1306 = vunpack.c.l.b16 %v525
      %v1307 = vunpack.c.h.b16 %v525
      %v1308 = vunpack.c.l.b16 %v526
      %v1309 = vunpack.c.h.b16 %v526
      %v1310 = vunpack.c.l.b16 %v527
      %v1311 = vunpack.c.h.b16 %v527
      %v1312 = vunpack.c.l.b16 %v528
      %v1313 = vunpack.c.h.b16 %v528
      %v1314 = vunpack.c.l.b16 %v529
      %v1315 = vunpack.c.h.b16 %v529
      %v1316 = vunpack.c.l.b16 %v530
      %v1317 = vunpack.c.h.b16 %v530
      %v1318 = vunpack.c.l.b16 %v531
      %v1319 = vunpack.c.h.b16 %v531
      %v1320 = vunpack.c.l.b16 %v532
      %v1321 = vunpack.c.h.b16 %v532
      %v1322 = vunpack.c.l.b16 %v533
      %v1323 = vunpack.c.h.b16 %v533
      %v1324 = vunpack.c.l.b16 %v534
      %v1325 = vunpack.c.h.b16 %v534
      %v1326 = vunpack.c.l.b16 %v535
      %v1327 = vunpack.c.h.b16 %v535
      %v1328 = vunpack.c.l.b16 %v536
      %v1329 = vunpack.c.h.b16 %v536
      %v1330 = vunpack.c.l.b16 %v537
      %v1331 = vunpack.c.h.b16 %v537
      %v1332 = vunpack.c.l.b16 %v538
      %v1333 = vunpack.c.h.b16 %v538
      %v1334 = vunpack.c.l.b16 %v539
      %v1335 = vunpack.c.h.b16 %v539
      %v1336 = vunpack.c.l.b16 %v540
      %v1337 = vunpack.c.h.b16 %v540
      %v1338 = vunpack.c.l.b16 %v541
      %v1339 = vunpack.c.h.b16 %v541
      %v1340 = vunpack.c.l.b16 %v542
      %v1341 = vunpack.c.h.b16 %v542
      %v1342 = vunpack.c.l.b16 %v543
      %v1343 = vunpack.c.h.b16 %v543
      %v1344 = vunpack.c.l.b16 %v544
      %v1345 = vunpack.c.h.b16 %v544
      %v1346 = vunpack.c.l.b16 %v545
      %v1347 = vunpack.c.h.b16 %v545
      %v1348 = vunpack.c.l.b16 %v546
      %v1349 = vunpack.c.h.b16 %v546
      %v1350 = vunpack.c.l.b16 %v547
      %v1351 = vunpack.c.h.b16 %v547
      %v1352 = vunpack.c.l.b16 %v548
      %v1353 = vunpack.c.h.b16 %v548
      %v1354 = vunpack.c.l.b16 %v549
      %v1355 = vunpack.c.h.b16 %v549
      %v1356 = vpack.c.b16 %v852, %v844
      %v1357 = vpack.c.b16 %v853, %v845
      %v1358 = vpack.c.b16 %v854, %v846
      %v1359 = vpack.c.b16 %v855, %v847
      %v1360 = vpack.c.b16 %v856, %v848
      %v1361 = vpack.c.b16 %v857, %v849
      %v1362 = vpack.c.b16 %v858, %v850
      %v1363 = vpack.c.b16 %v859, %v851
      %v1364 = vpack.c.b16 %v868, %v860
      %v1365 = vpack.c.b16 %v869, %v861
      %v1366 = vpack.c.b16 %v870, %v862
      %v1367 = vpack.c.b16 %v871, %v863
      %v1368 = vpack.c.b16 %v872, %v864
      %v1369 = vpack.c.b16 %v873, %v865
      %v1370 = vpack.c.b16 %v874, %v866
      %v1371 = vpack.c.b16 %v875, %v867
      %v1372 = vpack.c.b16 %v884, %v876
      %v1373 = vpack.c.b16 %v885, %v877
      %v1374 = vpack.c.b16 %v886, %v878
      %v1375 = vpack.c.b16 %v887, %v879
      %v1376 = vpack.c.b16 %v888, %v880
      %v1377 = vpack.c.b16 %v889, %v881
      %v1378 = vpack.c.b16 %v890, %v882
      %v1379 = vpack.c.b16 %v891, %v883
      %v1380 = vpack.c.b16 %v900, %v892
      %v1381 = vpack.c.b16 %v901, %v893
      %v1382 = vpack.c.b16 %v902, %v894
      %v1383 = vpack.c.b16 %v903, %v895
      %v1384 = vpack.c.b16 %v904, %v896
      %v1385 = vpack.c.b16 %v905, %v897
      %v1386 = vpack.c.b16 %v906, %v898
      %v1387 = vpack.c.b16 %v907, %v899
      %v1388 = vpack.c.b16 %v916, %v908
      %v1389 = vpack.c.b16 %v917, %v909
      %v1390 = vpack.c.b16 %v918, %v910
      %v1391 = vpack.c.b16 %v919, %v911
      %v1392 = vpack.c.b16 %v920, %v912
      %v1393 = vpack.c.b16 %v921, %v913
      %v1394 = vpack.c.b16 %v922, %v914
      %v1395 = vpack.c.b16 %v923, %v915
      %v1396 = vpack.c.b16 %v932, %v924
      %v1397 = vpack.c.b16 %v933, %v925
      %v1398 = vpack.c.b16 %v934, %v926
      %v1399 = vpack.c.b16 %v935, %v927
      %v1400 = vpack.c.b16 %v936, %v928
      %v1401 = vpack.c.b16 %v937, %v929
      %v1402 = vpack.c.b16 %v938, %v930
      %v1403 = vpack.c.b16 %v939, %v931
      %v1404 = vpack.c.b16 %v948, %v940
      %v1405 = vpack.c.b16 %v949, %v941
      %v1406 = vpack.c.b16 %v950, %v942
      %v1407 = vpack.c.b16 %v951, %v943
      %v1408 = vpack.c.b16 %v952, %v944
      %v1409 = vpack.c.b16 %v953, %v945
      %v1410 = vpack.c.b16 %v954, %v946
      %v1411 = vpack.c.b16 %v955, %v947
      %v1412 = vpack.c.b16 %v964, %v956
      %v1413 = vpack.c.b16 %v965, %v957
      %v1414 = vpack.c.b16 %v966, %v958
      %v1415 = vpack.c.b16 %v967, %v959
      %v1416 = vpack.c.b16 %v968, %v960
      %v1417 = vpack.c.b16 %v969, %v961
      %v1418 = vpack.c.b16 %v970, %v962
      %v1419 = vpack.c.b16 %v971, %v963
      %v1420 = vpack.c.b16 %v980, %v972
      %v1421 = vpack.c.b16 %v981, %v973
      %v1422 = vpack.c.b16 %v982, %v974
      %v1423 = vpack.c.b16 %v983, %v975
      %v1424 = vpack.c.b16 %v984, %v976
      %v1425 = vpack.c.b16 %v985, %v977
      %v1426 = vpack.c.b16 %v986, %v978
      %v1427 = vpack.c.b16 %v987, %v979
      %v1428 = vpack.c.b16 %v996, %v988
      %v1429 = vpack.c.b16 %v997, %v989
      %v1430 = vpack.c.b16 %v998, %v990
      %v1431 = vpack.c.b16 %v999, %v991
      %v1432 = vpack.c.b16 %v1000, %v992
      %v1433 = vpack.c.b16 %v1001, %v993
      %v1434 = vpack.c.b16 %v1002, %v994
      %v1435 = vpack.c.b16 %v1003, %v995
      %v1436 = vpack.c.b16 %v1012, %v1004
      %v1437 = vpack.c.b16 %v1013, %v1005
      %v1438 = vpack.c.b16 %v1014, %v1006
      %v1439 = vpack.c.b16 %v1015, %v1007
      %v1440 = vpack.c.b16 %v1016, %v1008
      %v1441 = vpack.c.b16 %v1017, %v1009
      %v1442 = vpack.c.b16 %v1018, %v1010
      %v1443 = vpack.c.b16 %v1019, %v1011
      %v1444 = vpack.c.b16 %v1028, %v1020
      %v1445 = vpack.c.b16 %v1029, %v1021
      %v1446 = vpack.c.b16 %v1030, %v1022
      %v1447 = vpack.c.b16 %v1031, %v1023
      %v1448 = vpack.c.b16 %v1032, %v1024
      %v1449 = vpack.c.b16 %v1033, %v1025
      %v1450 = vpack.c.b16 %v1034, %v1026
      %v1451 = vpack.c.b16 %v1035, %v1027
      %v1452 = vpack.c.b16 %v1044, %v1036
      %v1453 = vpack.c.b16 %v1045, %v1037
      %v1454 = vpack.c.b16 %v1046, %v1038
      %v1455 = vpack.c.b16 %v1047, %v1039
      %v1456 = vpack.c.b16 %v1048, %v1040
      %v1457 = vpack.c.b16 %v1049, %v1041
      %v1458 = vpack.c.b16 %v1050, %v1042
      %v1459 = vpack.c.b16 %v1051, %v1043
      %v1460 = vpack.c.b16 %v1060, %v1052
      %v1461 = vpack.c.b16 %v1061, %v1053
      %v1462 = vpack.c.b16 %v1062, %v1054
      %v1463 = vpack.c.b16 %v1063, %v1055
      %v1464 = vpack.c.b16 %v1064, %v1056
      %v1465 = vpack.c.b16 %v1065, %v1057
      %v1466 = vpack.c.b16 %v1066, %v1058
      %v1467 = vpack.c.b16 %v1067, %v1059
      %v1468 = vpack.c.b16 %v1076, %v1068
      %v1469 = vpack.c.b16 %v1077, %v1069
      %v1470 = vpack.c.b16 %v1078, %v1070
      %v1471 = vpack.c.b16 %v1079, %v1071
      %v1472 = vpack.c.b16 %v1080, %v1072
      %v1473 = vpack.c.b16 %v1081, %v1073
      %v1474 = vpack.c.b16 %v1082, %v1074
      %v1475 = vpack.c.b16 %v1083, %v1075
      %v1476 = vpack.c.b16 %v1092, %v1084
      %v1477 = vpack.c.b16 %v1093, %v1085
      %v1478 = vpack.c.b16 %v1094, %v1086
      %v1479 = vpack.c.b16 %v1095, %v1087
      %v1480 = vpack.c.b16 %v1096, %v1088
      %v1481 = vpack.c.b16 %v1097, %v1089
      %v1482 = vpack.c.b16 %v1098, %v1090
      %v1483 = vpack.c.b16 %v1099, %v1091
      %v1484 = vpack.c.b16 %v1108, %v1100
      %v1485 = vpack.c.b16 %v1109, %v1101
      %v1486 = vpack.c.b16 %v1110, %v1102
      %v1487 = vpack.c.b16 %v1111, %v1103
      %v1488 = vpack.c.b16 %v1112, %v1104
      %v1489 = vpack.c.b16 %v1113, %v1105
      %v1490 = vpack.c.b16 %v1114, %v1106
      %v1491 = vpack.c.b16 %v1115, %v1107
      %v1492 = vpack.c.b16 %v1124, %v1116
      %v1493 = vpack.c.b16 %v1125, %v1117
      %v1494 = vpack.c.b16 %v1126, %v1118
      %v1495 = vpack.c.b16 %v1127, %v1119
      %v1496 = vpack.c.b16 %v1128, %v1120
      %v1497 = vpack.c.b16 %v1129, %v1121
      %v1498 = vpack.c.b16 %v1130, %v1122
      %v1499 = vpack.c.b16 %v1131, %v1123
      %v1500 = vpack.c.b16 %v1140, %v1132
      %v1501 = vpack.c.b16 %v1141, %v1133
      %v1502 = vpack.c.b16 %v1142, %v1134
      %v1503 = vpack.c.b16 %v1143, %v1135
      %v1504 = vpack.c.b16 %v1144, %v1136
      %v1505 = vpack.c.b16 %v1145, %v1137
      %v1506 = vpack.c.b16 %v1146, %v1138
      %v1507 = vpack.c.b16 %v1147, %v1139
      %v1508 = vpack.c.b16 %v1156, %v1148
      %v1509 = vpack.c.b16 %v1157, %v1149
      %v1510 = vpack.c.b16 %v1158, %v1150
      %v1511 = vpack.c.b16 %v1159, %v1151
      %v1512 = vpack.c.b16 %v1160, %v1152
      %v1513 = vpack.c.b16 %v1161, %v1153
      %v1514 = vpack.c.b16 %v1162, %v1154
      %v1515 = vpack.c.b16 %v1163, %v1155
      %v1516 = vpack.c.b16 %v1172, %v1164
      %v1517 = vpack.c.b16 %v1173, %v1165
      %v1518 = vpack.c.b16 %v1174, %v1166
      %v1519 = vpack.c.b16 %v1175, %v1167
      %v1520 = vpack.c.b16 %v1176, %v1168
      %v1521 = vpack.c.b16 %v1177, %v1169
      %v1522 = vpack.c.b16 %v1178, %v1170
      %v1523 = vpack.c.b16 %v1179, %v1171
      %v1524 = vpack.c.b16 %v1188, %v1180
      %v1525 = vpack.c.b16 %v1189, %v1181
      %v1526 = vpack.c.b16 %v1190, %v1182
      %v1527 = vpack.c.b16 %v1191, %v1183
      %v1528 = vpack.c.b16 %v1192, %v1184
      %v1529 = vpack.c.b16 %v1193, %v1185
      %v1530 = vpack.c.b16 %v1194, %v1186
      %v1531 = vpack.c.b16 %v1195, %v1187
      %v1532 = vpack.c.b16 %v1204, %v1196
      %v1533 = vpack.c.b16 %v1205, %v1197
      %v1534 = vpack.c.b16 %v1206, %v1198
      %v1535 = vpack.c.b16 %v1207, %v1199
      %v1536 = vpack.c.b16 %v1208, %v1200
      %v1537 = vpack.c.b16 %v1209, %v1201
      %v1538 = vpack.c.b16 %v1210, %v1202
      %v1539 = vpack.c.b16 %v1211, %v1203
      %v1540 = vpack.c.b16 %v1220, %v1212
      %v1541 = vpack.c.b16 %v1221, %v1213
      %v1542 = vpack.c.b16 %v1222, %v1214
      %v1543 = vpack.c.b16 %v1223, %v1215
      %v1544 = vpack.c.b16 %v1224, %v1216
      %v1545 = vpack.c.b16 %v1225, %v1217
      %v1546 = vpack.c.b16 %v1226, %v1218
      %v1547 = vpack.c.b16 %v1227, %v1219
      %v1548 = vpack.c.b16 %v1236, %v1228
      %v1549 = vpack.c.b16 %v1237, %v1229
      %v1550 = vpack.c.b16 %v1238, %v1230
      %v1551 = vpack.c.b16 %v1239, %v1231
      %v1552 = vpack.c.b16 %v1240, %v1232
      %v1553 = vpack.c.b16 %v1241, %v1233
      %v1554 = vpack.c.b16 %v1242, %v1234
      %v1555 = vpack.c.b16 %v1243, %v1235
      %v1556 = vpack.c.b16 %v1252, %v1244
      %v1557 = vpack.c.b16 %v1253, %v1245
      %v1558 = vpack.c.b16 %v1254, %v1246
      %v1559 = vpack.c.b16 %v1255, %v1247
      %v1560 = vpack.c.b16 %v1256, %v1248
      %v1561 = vpack.c.b16 %v1257, %v1249
      %v1562 = vpack.c.b16 %v1258, %v1250
      %v1563 = vpack.c.b16 %v1259, %v1251
      %v1564 = vpack.c.b16 %v1268, %v1260
      %v1565 = vpack.c.b16 %v1269, %v1261
      %v1566 = vpack.c.b16 %v1270, %v1262
      %v1567 = vpack.c.b16 %v1271, %v1263
      %v1568 = vpack.c.b16 %v1272, %v1264
      %v1569 = vpack.c.b16 %v1273, %v1265
      %v1570 = vpack.c.b16 %v1274, %v1266
      %v1571 = vpack.c.b16 %v1275, %v1267
      %v1572 = vpack.c.b16 %v1284, %v1276
      %v1573 = vpack.c.b16 %v1285, %v1277
      %v1574 = vpack.c.b16 %v1286, %v1278
      %v1575 = vpack.c.b16 %v1287, %v1279
      %v1576 = vpack.c.b16 %v1288, %v1280
      %v1577 = vpack.c.b16 %v1289, %v1281
      %v1578 = vpack.c.b16 %v1290, %v1282
      %v1579 = vpack.c.b16 %v1291, %v1283
      %v1580 = vpack.c.b16 %v1300, %v1292
      %v1581 = vpack.c.b16 %v1301, %v1293
      %v1582 = vpack.c.b16 %v1302, %v1294
      %v1583 = vpack.c.b16 %v1303, %v1295
      %v1584 = vpack.c.b16 %v1304, %v1296
      %v1585 = vpack.c.b16 %v1305, %v1297
      %v1586 = vpack.c.b16 %v1306, %v1298
      %v1587 = vpack.c.b16 %v1307, %v1299
      %v1588 = vpack.c.b16 %v1316, %v1308
      %v1589 = vpack.c.b16 %v1317, %v1309
      %v1590 = vpack.c.b16 %v1318, %v1310
      %v1591 = vpack.c.b16 %v1319, %v1311
      %v1592 = vpack.c.b16 %v1320, %v1312
      %v1593 = vpack.c.b16 %v1321, %v1313
      %v1594 = vpack.c.b16 %v1322, %v1314
      %v1595 = vpack.c.b16 %v1323, %v1315
      %v1596 = vpack.c.b16 %v1332, %v1324
      %v1597 = vpack.c.b16 %v1333, %v1325
      %v1598 = vpack.c.b16 %v1334, %v1326
      %v1599 = vpack.c.b16 %v1335, %v1327
      %v1600 = vpack.c.b16 %v1336, %v1328
      %v1601 = vpack.c.b16 %v1337, %v1329
      %v1602 = vpack.c.b16 %v1338, %v1330
      %v1603 = vpack.c.b16 %v1339, %v1331
      %v1604 = vpack.c.b16 %v1348, %v1340
      %v1605 = vpack.c.b16 %v1349, %v1341
      %v1606 = vpack.c.b16 %v1350, %v1342
      %v1607 = vpack.c.b16 %v1351, %v1343
      %v1608 = vpack.c.b16 %v1352, %v1344
      %v1609 = vpack.c.b16 %v1353, %v1345
      %v1610 = vpack.c.b16 %v1354, %v1346
      %v1611 = vpack.c.b16 %v1355, %v1347
      %1868 = vmatpush.bf16.msra.mxu0 %v1412
      %1869 = vmatpush.bf16.msra.mxu0 %v1404
      %1870 = vmatpush.bf16.msra.mxu0 %v1396
      %1871 = vmatpush.bf16.msra.mxu0 %v1388
      %1872 = vmatpush.bf16.msra.mxu0 %v1380
      %1873 = vmatpush.bf16.msra.mxu0 %v1372
      %1874 = vmatpush.bf16.msra.mxu0 %v1364
      %1875 = vmatpush.bf16.msra.mxu0 %v1356
      %1876 = vmatmul.bf16.gmra.mxu0 %v580
      %v1877 = vpop.f32.mrf.mxu0
      %v1878 = vadd.f32 %v552, %v1877
      %v1879 = vpop.f32.mrf.mxu0
      %v1880 = vadd.f32 %v552, %v1879
      %1881 = vdwg.mxu0
      %1882 = vmatpush.bf16.msra.mxu0 %v1476
      %1883 = vmatpush.bf16.msra.mxu0 %v1468
      %1884 = vmatpush.bf16.msra.mxu0 %v1460
      %1885 = vmatpush.bf16.msra.mxu0 %v1452
      %1886 = vmatpush.bf16.msra.mxu0 %v1444
      %1887 = vmatpush.bf16.msra.mxu0 %v1436
      %1888 = vmatpush.bf16.msra.mxu0 %v1428
      %1889 = vmatpush.bf16.msra.mxu0 %v1420
      %1890 = vmatmul.bf16.gmra.mxu0 %v581
      %v1891 = vpop.f32.mrf.mxu0
      %v1892 = vadd.f32 %v1878, %v1891
      %v1893 = vpop.f32.mrf.mxu0
      %v1894 = vadd.f32 %v1880, %v1893
      %1895 = vdwg.mxu0
      %1896 = vmatpush.bf16.msra.mxu0 %v1540
      %1897 = vmatpush.bf16.msra.mxu0 %v1532
      %1898 = vmatpush.bf16.msra.mxu0 %v1524
      %1899 = vmatpush.bf16.msra.mxu0 %v1516
      %1900 = vmatpush.bf16.msra.mxu0 %v1508
      %1901 = vmatpush.bf16.msra.mxu0 %v1500
      %1902 = vmatpush.bf16.msra.mxu0 %v1492
      %1903 = vmatpush.bf16.msra.mxu0 %v1484
      %1904 = vmatmul.bf16.gmra.mxu0 %v582
      %v1905 = vpop.f32.mrf.mxu0
      %v1906 = vadd.f32 %v1892, %v1905
      %v1907 = vpop.f32.mrf.mxu0
      %v1908 = vadd.f32 %v1894, %v1907
      %1909 = vdwg.mxu0
      %1910 = vmatpush.bf16.msra.mxu0 %v1604
      %1911 = vmatpush.bf16.msra.mxu0 %v1596
      %1912 = vmatpush.bf16.msra.mxu0 %v1588
      %1913 = vmatpush.bf16.msra.mxu0 %v1580
      %1914 = vmatpush.bf16.msra.mxu0 %v1572
      %1915 = vmatpush.bf16.msra.mxu0 %v1564
      %1916 = vmatpush.bf16.msra.mxu0 %v1556
      %1917 = vmatpush.bf16.msra.mxu0 %v1548
      %1918 = vmatmul.bf16.gmra.mxu0 %v583
      %v1919 = vpop.f32.mrf.mxu0
      %v1920 = vadd.f32 %v1906, %v1919
      %v1921 = vpop.f32.mrf.mxu0
      %v1922 = vadd.f32 %v1908, %v1921
      %1923 = vdwg.mxu0
      %1924 = vmatpush.bf16.msra.mxu0 %v1413
      %1925 = vmatpush.bf16.msra.mxu0 %v1405
      %1926 = vmatpush.bf16.msra.mxu0 %v1397
      %1927 = vmatpush.bf16.msra.mxu0 %v1389
      %1928 = vmatpush.bf16.msra.mxu0 %v1381
      %1929 = vmatpush.bf16.msra.mxu0 %v1373
      %1930 = vmatpush.bf16.msra.mxu0 %v1365
      %1931 = vmatpush.bf16.msra.mxu0 %v1357
      %1932 = vmatmul.bf16.gmra.mxu0 %v580
      %v1933 = vpop.f32.mrf.mxu0
      %v1934 = vadd.f32 %v553, %v1933
      %v1935 = vpop.f32.mrf.mxu0
      %v1936 = vadd.f32 %v553, %v1935
      %1937 = vdwg.mxu0
      %1938 = vmatpush.bf16.msra.mxu0 %v1477
      %1939 = vmatpush.bf16.msra.mxu0 %v1469
      %1940 = vmatpush.bf16.msra.mxu0 %v1461
      %1941 = vmatpush.bf16.msra.mxu0 %v1453
      %1942 = vmatpush.bf16.msra.mxu0 %v1445
      %1943 = vmatpush.bf16.msra.mxu0 %v1437
      %1944 = vmatpush.bf16.msra.mxu0 %v1429
      %1945 = vmatpush.bf16.msra.mxu0 %v1421
      %1946 = vmatmul.bf16.gmra.mxu0 %v581
      %v1947 = vpop.f32.mrf.mxu0
      %v1948 = vadd.f32 %v1934, %v1947
      %v1949 = vpop.f32.mrf.mxu0
      %v1950 = vadd.f32 %v1936, %v1949
      %1951 = vdwg.mxu0
      %1952 = vmatpush.bf16.msra.mxu0 %v1541
      %1953 = vmatpush.bf16.msra.mxu0 %v1533
      %1954 = vmatpush.bf16.msra.mxu0 %v1525
      %1955 = vmatpush.bf16.msra.mxu0 %v1517
      %1956 = vmatpush.bf16.msra.mxu0 %v1509
      %1957 = vmatpush.bf16.msra.mxu0 %v1501
      %1958 = vmatpush.bf16.msra.mxu0 %v1493
      %1959 = vmatpush.bf16.msra.mxu0 %v1485
      %1960 = vmatmul.bf16.gmra.mxu0 %v582
      %v1961 = vpop.f32.mrf.mxu0
      %v1962 = vadd.f32 %v1948, %v1961
      %v1963 = vpop.f32.mrf.mxu0
      %v1964 = vadd.f32 %v1950, %v1963
      %1965 = vdwg.mxu0
      %1966 = vmatpush.bf16.msra.mxu0 %v1605
      %1967 = vmatpush.bf16.msra.mxu0 %v1597
      %1968 = vmatpush.bf16.msra.mxu0 %v1589
      %1969 = vmatpush.bf16.msra.mxu0 %v1581
      %1970 = vmatpush.bf16.msra.mxu0 %v1573
      %1971 = vmatpush.bf16.msra.mxu0 %v1565
      %1972 = vmatpush.bf16.msra.mxu0 %v1557
      %1973 = vmatpush.bf16.msra.mxu0 %v1549
      %1974 = vmatmul.bf16.gmra.mxu0 %v583
      %v1975 = vpop.f32.mrf.mxu0
      %v1976 = vadd.f32 %v1962, %v1975
      %v1977 = vpop.f32.mrf.mxu0
      %v1978 = vadd.f32 %v1964, %v1977
      %1979 = vdwg.mxu0
      %1980 = vmatpush.bf16.msra.mxu0 %v1414
      %1981 = vmatpush.bf16.msra.mxu0 %v1406
      %1982 = vmatpush.bf16.msra.mxu0 %v1398
      %1983 = vmatpush.bf16.msra.mxu0 %v1390
      %1984 = vmatpush.bf16.msra.mxu0 %v1382
      %1985 = vmatpush.bf16.msra.mxu0 %v1374
      %1986 = vmatpush.bf16.msra.mxu0 %v1366
      %1987 = vmatpush.bf16.msra.mxu0 %v1358
      %1988 = vmatmul.bf16.gmra.mxu0 %v580
      %v1989 = vpop.f32.mrf.mxu0
      %v1990 = vadd.f32 %v554, %v1989
      %v1991 = vpop.f32.mrf.mxu0
      %v1992 = vadd.f32 %v554, %v1991
      %1993 = vdwg.mxu0
      %1994 = vmatpush.bf16.msra.mxu0 %v1478
      %1995 = vmatpush.bf16.msra.mxu0 %v1470
      %1996 = vmatpush.bf16.msra.mxu0 %v1462
      %1997 = vmatpush.bf16.msra.mxu0 %v1454
      %1998 = vmatpush.bf16.msra.mxu0 %v1446
      %1999 = vmatpush.bf16.msra.mxu0 %v1438
      %2000 = vmatpush.bf16.msra.mxu0 %v1430
      %2001 = vmatpush.bf16.msra.mxu0 %v1422
      %2002 = vmatmul.bf16.gmra.mxu0 %v581
      %v2003 = vpop.f32.mrf.mxu0
      %v2004 = vadd.f32 %v1990, %v2003
      %v2005 = vpop.f32.mrf.mxu0
      %v2006 = vadd.f32 %v1992, %v2005
      %2007 = vdwg.mxu0
      %2008 = vmatpush.bf16.msra.mxu0 %v1542
      %2009 = vmatpush.bf16.msra.mxu0 %v1534
      %2010 = vmatpush.bf16.msra.mxu0 %v1526
      %2011 = vmatpush.bf16.msra.mxu0 %v1518
      %2012 = vmatpush.bf16.msra.mxu0 %v1510
      %2013 = vmatpush.bf16.msra.mxu0 %v1502
      %2014 = vmatpush.bf16.msra.mxu0 %v1494
      %2015 = vmatpush.bf16.msra.mxu0 %v1486
      %2016 = vmatmul.bf16.gmra.mxu0 %v582
      %v2017 = vpop.f32.mrf.mxu0
      %v2018 = vadd.f32 %v2004, %v2017
      %v2019 = vpop.f32.mrf.mxu0
      %v2020 = vadd.f32 %v2006, %v2019
      %2021 = vdwg.mxu0
      %2022 = vmatpush.bf16.msra.mxu0 %v1606
      %2023 = vmatpush.bf16.msra.mxu0 %v1598
      %2024 = vmatpush.bf16.msra.mxu0 %v1590
      %2025 = vmatpush.bf16.msra.mxu0 %v1582
      %2026 = vmatpush.bf16.msra.mxu0 %v1574
      %2027 = vmatpush.bf16.msra.mxu0 %v1566
      %2028 = vmatpush.bf16.msra.mxu0 %v1558
      %2029 = vmatpush.bf16.msra.mxu0 %v1550
      %2030 = vmatmul.bf16.gmra.mxu0 %v583
      %v2031 = vpop.f32.mrf.mxu0
      %v2032 = vadd.f32 %v2018, %v2031
      %v2033 = vpop.f32.mrf.mxu0
      %v2034 = vadd.f32 %v2020, %v2033
      %2035 = vdwg.mxu0
      %2036 = vmatpush.bf16.msra.mxu0 %v1415
      %2037 = vmatpush.bf16.msra.mxu0 %v1407
      %2038 = vmatpush.bf16.msra.mxu0 %v1399
      %2039 = vmatpush.bf16.msra.mxu0 %v1391
      %2040 = vmatpush.bf16.msra.mxu0 %v1383
      %2041 = vmatpush.bf16.msra.mxu0 %v1375
      %2042 = vmatpush.bf16.msra.mxu0 %v1367
      %2043 = vmatpush.bf16.msra.mxu0 %v1359
      %2044 = vmatmul.bf16.gmra.mxu0 %v580
      %v2045 = vpop.f32.mrf.mxu0
      %v2046 = vadd.f32 %v555, %v2045
      %v2047 = vpop.f32.mrf.mxu0
      %v2048 = vadd.f32 %v555, %v2047
      %2049 = vdwg.mxu0
      %2050 = vmatpush.bf16.msra.mxu0 %v1479
      %2051 = vmatpush.bf16.msra.mxu0 %v1471
      %2052 = vmatpush.bf16.msra.mxu0 %v1463
      %2053 = vmatpush.bf16.msra.mxu0 %v1455
      %2054 = vmatpush.bf16.msra.mxu0 %v1447
      %2055 = vmatpush.bf16.msra.mxu0 %v1439
      %2056 = vmatpush.bf16.msra.mxu0 %v1431
      %2057 = vmatpush.bf16.msra.mxu0 %v1423
      %2058 = vmatmul.bf16.gmra.mxu0 %v581
      %v2059 = vpop.f32.mrf.mxu0
      %v2060 = vadd.f32 %v2046, %v2059
      %v2061 = vpop.f32.mrf.mxu0
      %v2062 = vadd.f32 %v2048, %v2061
      %2063 = vdwg.mxu0
      %2064 = vmatpush.bf16.msra.mxu0 %v1543
      %2065 = vmatpush.bf16.msra.mxu0 %v1535
      %2066 = vmatpush.bf16.msra.mxu0 %v1527
      %2067 = vmatpush.bf16.msra.mxu0 %v1519
      %2068 = vmatpush.bf16.msra.mxu0 %v1511
      %2069 = vmatpush.bf16.msra.mxu0 %v1503
      %2070 = vmatpush.bf16.msra.mxu0 %v1495
      %2071 = vmatpush.bf16.msra.mxu0 %v1487
      %2072 = vmatmul.bf16.gmra.mxu0 %v582
      %v2073 = vpop.f32.mrf.mxu0
      %v2074 = vadd.f32 %v2060, %v2073
      %v2075 = vpop.f32.mrf.mxu0
      %v2076 = vadd.f32 %v2062, %v2075
      %2077 = vdwg.mxu0
      %2078 = vmatpush.bf16.msra.mxu0 %v1607
      %2079 = vmatpush.bf16.msra.mxu0 %v1599
      %2080 = vmatpush.bf16.msra.mxu0 %v1591
      %2081 = vmatpush.bf16.msra.mxu0 %v1583
      %2082 = vmatpush.bf16.msra.mxu0 %v1575
      %2083 = vmatpush.bf16.msra.mxu0 %v1567
      %2084 = vmatpush.bf16.msra.mxu0 %v1559
      %2085 = vmatpush.bf16.msra.mxu0 %v1551
      %2086 = vmatmul.bf16.gmra.mxu0 %v583
      %v2087 = vpop.f32.mrf.mxu0
      %v2088 = vadd.f32 %v2074, %v2087
      %v2089 = vpop.f32.mrf.mxu0
      %v2090 = vadd.f32 %v2076, %v2089
      %2091 = vdwg.mxu0
      %2092 = vmatpush.bf16.msra.mxu0 %v1416
      %2093 = vmatpush.bf16.msra.mxu0 %v1408
      %2094 = vmatpush.bf16.msra.mxu0 %v1400
      %2095 = vmatpush.bf16.msra.mxu0 %v1392
      %2096 = vmatpush.bf16.msra.mxu0 %v1384
      %2097 = vmatpush.bf16.msra.mxu0 %v1376
      %2098 = vmatpush.bf16.msra.mxu0 %v1368
      %2099 = vmatpush.bf16.msra.mxu0 %v1360
      %2100 = vmatmul.bf16.gmra.mxu0 %v580
      %v2101 = vpop.f32.mrf.mxu0
      %v2102 = vadd.f32 %v556, %v2101
      %v2103 = vpop.f32.mrf.mxu0
      %v2104 = vadd.f32 %v556, %v2103
      %2105 = vdwg.mxu0
      %2106 = vmatpush.bf16.msra.mxu0 %v1480
      %2107 = vmatpush.bf16.msra.mxu0 %v1472
      %2108 = vmatpush.bf16.msra.mxu0 %v1464
      %2109 = vmatpush.bf16.msra.mxu0 %v1456
      %2110 = vmatpush.bf16.msra.mxu0 %v1448
      %2111 = vmatpush.bf16.msra.mxu0 %v1440
      %2112 = vmatpush.bf16.msra.mxu0 %v1432
      %2113 = vmatpush.bf16.msra.mxu0 %v1424
      %2114 = vmatmul.bf16.gmra.mxu0 %v581
      %v2115 = vpop.f32.mrf.mxu0
      %v2116 = vadd.f32 %v2102, %v2115
      %v2117 = vpop.f32.mrf.mxu0
      %v2118 = vadd.f32 %v2104, %v2117
      %2119 = vdwg.mxu0
      %2120 = vmatpush.bf16.msra.mxu0 %v1544
      %2121 = vmatpush.bf16.msra.mxu0 %v1536
      %2122 = vmatpush.bf16.msra.mxu0 %v1528
      %2123 = vmatpush.bf16.msra.mxu0 %v1520
      %2124 = vmatpush.bf16.msra.mxu0 %v1512
      %2125 = vmatpush.bf16.msra.mxu0 %v1504
      %2126 = vmatpush.bf16.msra.mxu0 %v1496
      %2127 = vmatpush.bf16.msra.mxu0 %v1488
      %2128 = vmatmul.bf16.gmra.mxu0 %v582
      %v2129 = vpop.f32.mrf.mxu0
      %v2130 = vadd.f32 %v2116, %v2129
      %v2131 = vpop.f32.mrf.mxu0
      %v2132 = vadd.f32 %v2118, %v2131
      %2133 = vdwg.mxu0
      %2134 = vmatpush.bf16.msra.mxu0 %v1608
      %2135 = vmatpush.bf16.msra.mxu0 %v1600
      %2136 = vmatpush.bf16.msra.mxu0 %v1592
      %2137 = vmatpush.bf16.msra.mxu0 %v1584
      %2138 = vmatpush.bf16.msra.mxu0 %v1576
      %2139 = vmatpush.bf16.msra.mxu0 %v1568
      %2140 = vmatpush.bf16.msra.mxu0 %v1560
      %2141 = vmatpush.bf16.msra.mxu0 %v1552
      %2142 = vmatmul.bf16.gmra.mxu0 %v583
      %v2143 = vpop.f32.mrf.mxu0
      %v2144 = vadd.f32 %v2130, %v2143
      %v2145 = vpop.f32.mrf.mxu0
      %v2146 = vadd.f32 %v2132, %v2145
      %2147 = vdwg.mxu0
      %2148 = vmatpush.bf16.msra.mxu0 %v1417
      %2149 = vmatpush.bf16.msra.mxu0 %v1409
      %2150 = vmatpush.bf16.msra.mxu0 %v1401
      %2151 = vmatpush.bf16.msra.mxu0 %v1393
      %2152 = vmatpush.bf16.msra.mxu0 %v1385
      %2153 = vmatpush.bf16.msra.mxu0 %v1377
      %2154 = vmatpush.bf16.msra.mxu0 %v1369
      %2155 = vmatpush.bf16.msra.mxu0 %v1361
      %2156 = vmatmul.bf16.gmra.mxu0 %v580
      %v2157 = vpop.f32.mrf.mxu0
      %v2158 = vadd.f32 %v557, %v2157
      %v2159 = vpop.f32.mrf.mxu0
      %v2160 = vadd.f32 %v557, %v2159
      %2161 = vdwg.mxu0
      %2162 = vmatpush.bf16.msra.mxu0 %v1481
      %2163 = vmatpush.bf16.msra.mxu0 %v1473
      %2164 = vmatpush.bf16.msra.mxu0 %v1465
      %2165 = vmatpush.bf16.msra.mxu0 %v1457
      %2166 = vmatpush.bf16.msra.mxu0 %v1449
      %2167 = vmatpush.bf16.msra.mxu0 %v1441
      %2168 = vmatpush.bf16.msra.mxu0 %v1433
      %2169 = vmatpush.bf16.msra.mxu0 %v1425
      %2170 = vmatmul.bf16.gmra.mxu0 %v581
      %v2171 = vpop.f32.mrf.mxu0
      %v2172 = vadd.f32 %v2158, %v2171
      %v2173 = vpop.f32.mrf.mxu0
      %v2174 = vadd.f32 %v2160, %v2173
      %2175 = vdwg.mxu0
      %2176 = vmatpush.bf16.msra.mxu0 %v1545
      %2177 = vmatpush.bf16.msra.mxu0 %v1537
      %2178 = vmatpush.bf16.msra.mxu0 %v1529
      %2179 = vmatpush.bf16.msra.mxu0 %v1521
      %2180 = vmatpush.bf16.msra.mxu0 %v1513
      %2181 = vmatpush.bf16.msra.mxu0 %v1505
      %2182 = vmatpush.bf16.msra.mxu0 %v1497
      %2183 = vmatpush.bf16.msra.mxu0 %v1489
      %2184 = vmatmul.bf16.gmra.mxu0 %v582
      %v2185 = vpop.f32.mrf.mxu0
      %v2186 = vadd.f32 %v2172, %v2185
      %v2187 = vpop.f32.mrf.mxu0
      %v2188 = vadd.f32 %v2174, %v2187
      %2189 = vdwg.mxu0
      %2190 = vmatpush.bf16.msra.mxu0 %v1609
      %2191 = vmatpush.bf16.msra.mxu0 %v1601
      %2192 = vmatpush.bf16.msra.mxu0 %v1593
      %2193 = vmatpush.bf16.msra.mxu0 %v1585
      %2194 = vmatpush.bf16.msra.mxu0 %v1577
      %2195 = vmatpush.bf16.msra.mxu0 %v1569
      %2196 = vmatpush.bf16.msra.mxu0 %v1561
      %2197 = vmatpush.bf16.msra.mxu0 %v1553
      %2198 = vmatmul.bf16.gmra.mxu0 %v583
      %v2199 = vpop.f32.mrf.mxu0
      %v2200 = vadd.f32 %v2186, %v2199
      %v2201 = vpop.f32.mrf.mxu0
      %v2202 = vadd.f32 %v2188, %v2201
      %2203 = vdwg.mxu0
      %2204 = vmatpush.bf16.msra.mxu0 %v1418
      %2205 = vmatpush.bf16.msra.mxu0 %v1410
      %2206 = vmatpush.bf16.msra.mxu0 %v1402
      %2207 = vmatpush.bf16.msra.mxu0 %v1394
      %2208 = vmatpush.bf16.msra.mxu0 %v1386
      %2209 = vmatpush.bf16.msra.mxu0 %v1378
      %2210 = vmatpush.bf16.msra.mxu0 %v1370
      %2211 = vmatpush.bf16.msra.mxu0 %v1362
      %2212 = vmatmul.bf16.gmra.mxu0 %v580
      %v2213 = vpop.f32.mrf.mxu0
      %v2214 = vadd.f32 %v558, %v2213
      %v2215 = vpop.f32.mrf.mxu0
      %v2216 = vadd.f32 %v558, %v2215
      %2217 = vdwg.mxu0
      %2218 = vmatpush.bf16.msra.mxu0 %v1482
      %2219 = vmatpush.bf16.msra.mxu0 %v1474
      %2220 = vmatpush.bf16.msra.mxu0 %v1466
      %2221 = vmatpush.bf16.msra.mxu0 %v1458
      %2222 = vmatpush.bf16.msra.mxu0 %v1450
      %2223 = vmatpush.bf16.msra.mxu0 %v1442
      %2224 = vmatpush.bf16.msra.mxu0 %v1434
      %2225 = vmatpush.bf16.msra.mxu0 %v1426
      %2226 = vmatmul.bf16.gmra.mxu0 %v581
      %v2227 = vpop.f32.mrf.mxu0
      %v2228 = vadd.f32 %v2214, %v2227
      %v2229 = vpop.f32.mrf.mxu0
      %v2230 = vadd.f32 %v2216, %v2229
      %2231 = vdwg.mxu0
      %2232 = vmatpush.bf16.msra.mxu0 %v1546
      %2233 = vmatpush.bf16.msra.mxu0 %v1538
      %2234 = vmatpush.bf16.msra.mxu0 %v1530
      %2235 = vmatpush.bf16.msra.mxu0 %v1522
      %2236 = vmatpush.bf16.msra.mxu0 %v1514
      %2237 = vmatpush.bf16.msra.mxu0 %v1506
      %2238 = vmatpush.bf16.msra.mxu0 %v1498
      %2239 = vmatpush.bf16.msra.mxu0 %v1490
      %2240 = vmatmul.bf16.gmra.mxu0 %v582
      %v2241 = vpop.f32.mrf.mxu0
      %v2242 = vadd.f32 %v2228, %v2241
      %v2243 = vpop.f32.mrf.mxu0
      %v2244 = vadd.f32 %v2230, %v2243
      %2245 = vdwg.mxu0
      %2246 = vmatpush.bf16.msra.mxu0 %v1610
      %2247 = vmatpush.bf16.msra.mxu0 %v1602
      %2248 = vmatpush.bf16.msra.mxu0 %v1594
      %2249 = vmatpush.bf16.msra.mxu0 %v1586
      %2250 = vmatpush.bf16.msra.mxu0 %v1578
      %2251 = vmatpush.bf16.msra.mxu0 %v1570
      %2252 = vmatpush.bf16.msra.mxu0 %v1562
      %2253 = vmatpush.bf16.msra.mxu0 %v1554
      %2254 = vmatmul.bf16.gmra.mxu0 %v583
      %v2255 = vpop.f32.mrf.mxu0
      %v2256 = vadd.f32 %v2242, %v2255
      %v2257 = vpop.f32.mrf.mxu0
      %v2258 = vadd.f32 %v2244, %v2257
      %2259 = vdwg.mxu0
      %2260 = vmatpush.bf16.msra.mxu0 %v1419
      %2261 = vmatpush.bf16.msra.mxu0 %v1411
      %2262 = vmatpush.bf16.msra.mxu0 %v1403
      %2263 = vmatpush.bf16.msra.mxu0 %v1395
      %2264 = vmatpush.bf16.msra.mxu0 %v1387
      %2265 = vmatpush.bf16.msra.mxu0 %v1379
      %2266 = vmatpush.bf16.msra.mxu0 %v1371
      %2267 = vmatpush.bf16.msra.mxu0 %v1363
      %2268 = vmatmul.bf16.gmra.mxu0 %v580
      %v2269 = vpop.f32.mrf.mxu0
      %v2270 = vadd.f32 %v559, %v2269
      %v2271 = vpop.f32.mrf.mxu0
      %v2272 = vadd.f32 %v559, %v2271
      %2273 = vdwg.mxu0
      %2274 = vmatpush.bf16.msra.mxu0 %v1483
      %2275 = vmatpush.bf16.msra.mxu0 %v1475
      %2276 = vmatpush.bf16.msra.mxu0 %v1467
      %2277 = vmatpush.bf16.msra.mxu0 %v1459
      %2278 = vmatpush.bf16.msra.mxu0 %v1451
      %2279 = vmatpush.bf16.msra.mxu0 %v1443
      %2280 = vmatpush.bf16.msra.mxu0 %v1435
      %2281 = vmatpush.bf16.msra.mxu0 %v1427
      %2282 = vmatmul.bf16.gmra.mxu0 %v581
      %v2283 = vpop.f32.mrf.mxu0
      %v2284 = vadd.f32 %v2270, %v2283
      %v2285 = vpop.f32.mrf.mxu0
      %v2286 = vadd.f32 %v2272, %v2285
      %2287 = vdwg.mxu0
      %2288 = vmatpush.bf16.msra.mxu0 %v1547
      %2289 = vmatpush.bf16.msra.mxu0 %v1539
      %2290 = vmatpush.bf16.msra.mxu0 %v1531
      %2291 = vmatpush.bf16.msra.mxu0 %v1523
      %2292 = vmatpush.bf16.msra.mxu0 %v1515
      %2293 = vmatpush.bf16.msra.mxu0 %v1507
      %2294 = vmatpush.bf16.msra.mxu0 %v1499
      %2295 = vmatpush.bf16.msra.mxu0 %v1491
      %2296 = vmatmul.bf16.gmra.mxu0 %v582
      %v2297 = vpop.f32.mrf.mxu0
      %v2298 = vadd.f32 %v2284, %v2297
      %v2299 = vpop.f32.mrf.mxu0
      %v2300 = vadd.f32 %v2286, %v2299
      %2301 = vdwg.mxu0
      %2302 = vmatpush.bf16.msra.mxu0 %v1611
      %2303 = vmatpush.bf16.msra.mxu0 %v1603
      %2304 = vmatpush.bf16.msra.mxu0 %v1595
      %2305 = vmatpush.bf16.msra.mxu0 %v1587
      %2306 = vmatpush.bf16.msra.mxu0 %v1579
      %2307 = vmatpush.bf16.msra.mxu0 %v1571
      %2308 = vmatpush.bf16.msra.mxu0 %v1563
      %2309 = vmatpush.bf16.msra.mxu0 %v1555
      %2310 = vmatmul.bf16.gmra.mxu0 %v583
      %v2311 = vpop.f32.mrf.mxu0
      %v2312 = vadd.f32 %v2298, %v2311
      %v2313 = vpop.f32.mrf.mxu0
      %v2314 = vadd.f32 %v2300, %v2313
      %2315 = vdwg.mxu0
      %v2316 = vpack.c.bf16 %v1976, %v1920
      %v2317 = vpack.c.bf16 %v2088, %v2032
      %v2318 = vpack.c.bf16 %v2200, %v2144
      %v2319 = vpack.c.bf16 %v2312, %v2256
      %v2320 = vpack.c.bf16 %v1978, %v1922
      %v2321 = vpack.c.bf16 %v2090, %v2034
      %v2322 = vpack.c.bf16 %v2202, %v2146
      %v2323 = vpack.c.bf16 %v2314, %v2258
      %2324 = vst [vmem:[%s280] sm:$0xff] %v2316
      %2325 = vst [vmem:[%s280 + $0x8] sm:$0xff] %v2317
      %2326 = vst [vmem:[%s280 + $0x10] sm:$0xff] %v2318
      %2327 = vst [vmem:[%s280 + $0x18] sm:$0xff] %v2319
      %2328 = vst [vmem:[%s280 + $0x20] sm:$0xff] %v2320
      %2329 = vst [vmem:[%s280 + $0x28] sm:$0xff] %v2321
      %2330 = vst [vmem:[%s280 + $0x30] sm:$0xff] %v2322
      %2331 = vst [vmem:[%s280 + $0x38] sm:$0xff] %v2323
      %p2332 = scmp.eq.s32.totalorder %s22, 0
      // Predicated region
      $region33: #{zencoder_forward.16} parent=31 // pred_check
        %p2333 = pneg %p2332
      $region34: #{zencoder_forward.16} parent=31 // pred_check_branch
        %2335 = sbr.rel (%p2333) target = $region36
      $region35: #{zencoder_forward.16} parent=31 // pred_region
        %2336 = vst [vmem:[%s285] sm:$0xff] 0.0
        %2337 = vst [vmem:[%s289] sm:$0xff] 0.0
      $region36: #{zencoder_forward.16} parent=31 // pred_fallthru
        _
      %v2338 = vld [vmem:[%s285] sm:$0xff]
      %v2339 = vadd.f32 %v1920, %v1922
      %v2340 = vrot.slane %v2339, 4
      %v2341 = vadd.f32 %v2339, %v2340
      %v2342 = vrot.slane %v2341, 2
      %v2343 = vadd.f32 %v2341, %v2342
      %v2344 = vrot.slane %v2343, 1
      %v2345 = vadd.f32 %v2343, %v2344
      %v2346 = vadd.f32 %v1976, %v1978
      %v2347 = vrot.slane %v2346, 4
      %v2348 = vadd.f32 %v2346, %v2347
      %v2349 = vrot.slane %v2348, 2
      %v2350 = vadd.f32 %v2348, %v2349
      %v2351 = vrot.slane %v2350, 1
      %v2352 = vadd.f32 %v2350, %v2351
      %v2353 = vadd.f32 %v2032, %v2034
      %v2354 = vrot.slane %v2353, 4
      %v2355 = vadd.f32 %v2353, %v2354
      %v2356 = vrot.slane %v2355, 2
      %v2357 = vadd.f32 %v2355, %v2356
      %v2358 = vrot.slane %v2357, 1
      %v2359 = vadd.f32 %v2357, %v2358
      %v2360 = vadd.f32 %v2088, %v2090
      %v2361 = vrot.slane %v2360, 4
      %v2362 = vadd.f32 %v2360, %v2361
      %v2363 = vrot.slane %v2362, 2
      %v2364 = vadd.f32 %v2362, %v2363
      %v2365 = vrot.slane %v2364, 1
      %v2366 = vadd.f32 %v2364, %v2365
      %v2367 = vadd.f32 %v2144, %v2146
      %v2368 = vrot.slane %v2367, 4
      %v2369 = vadd.f32 %v2367, %v2368
      %v2370 = vrot.slane %v2369, 2
      %v2371 = vadd.f32 %v2369, %v2370
      %v2372 = vrot.slane %v2371, 1
      %v2373 = vadd.f32 %v2371, %v2372
      %v2374 = vadd.f32 %v2200, %v2202
      %v2375 = vrot.slane %v2374, 4
      %v2376 = vadd.f32 %v2374, %v2375
      %v2377 = vrot.slane %v2376, 2
      %v2378 = vadd.f32 %v2376, %v2377
      %v2379 = vrot.slane %v2378, 1
      %v2380 = vadd.f32 %v2378, %v2379
      %v2381 = vadd.f32 %v2256, %v2258
      %v2382 = vrot.slane %v2381, 4
      %v2383 = vadd.f32 %v2381, %v2382
      %v2384 = vrot.slane %v2383, 2
      %v2385 = vadd.f32 %v2383, %v2384
      %v2386 = vrot.slane %v2385, 1
      %v2387 = vadd.f32 %v2385, %v2386
      %v2388 = vadd.f32 %v2312, %v2314
      %v2389 = vrot.slane %v2388, 4
      %v2390 = vadd.f32 %v2388, %v2389
      %v2391 = vrot.slane %v2390, 2
      %v2392 = vadd.f32 %v2390, %v2391
      %v2393 = vrot.slane %v2392, 1
      %v2394 = vadd.f32 %v2392, %v2393
      %v2403 = vrot.slane %v2352, 7
      %v2404 = vrot.slane %v2359, 6
      %v2405 = vrot.slane %v2366, 5
      %v2406 = vrot.slane %v2373, 4
      %v2407 = vrot.slane %v2380, 3
      %v2408 = vrot.slane %v2387, 2
      %v2409 = vrot.slane %v2394, 1
      %vm2410 = vcmask 1040384
      %v2411 = vsel %vm2410, %v2345, %v2403
      %vm2412 = vcmask 1042434
      %v2413 = vsel %vm2412, %v2404, %v2405
      %vm2414 = vcmask 1041408
      %v2415 = vsel %vm2414, %v2411, %v2413
      %vm2416 = vcmask 1044484
      %v2417 = vsel %vm2416, %v2406, %v2407
      %vm2418 = vcmask 1046534
      %v2419 = vsel %vm2418, %v2408, %v2409
      %vm2420 = vcmask 1045508
      %v2421 = vsel %vm2420, %v2417, %v2419
      %vm2422 = vcmask 1043456
      %v2423 = vsel %vm2422, %v2415, %v2421
      %v2425 = vadd.f32 %v2338, %v2423
      %2426 = vst [vmem:[%s285] sm:$0xff] %v2425
      %v2427 = vld [vmem:[%s289] sm:$0xff]
      %v2428 = vmul.f32 %v1920, %v1920
      %v2429 = vmul.f32 %v1976, %v1976
      %v2430 = vmul.f32 %v2032, %v2032
      %v2431 = vmul.f32 %v2088, %v2088
      %v2432 = vmul.f32 %v2144, %v2144
      %v2433 = vmul.f32 %v2200, %v2200
      %v2434 = vmul.f32 %v2256, %v2256
      %v2435 = vmul.f32 %v2312, %v2312
      %v2436 = vmul.f32 %v1922, %v1922
      %v2437 = vmul.f32 %v1978, %v1978
      %v2438 = vmul.f32 %v2034, %v2034
      %v2439 = vmul.f32 %v2090, %v2090
      %v2440 = vmul.f32 %v2146, %v2146
      %v2441 = vmul.f32 %v2202, %v2202
      %v2442 = vmul.f32 %v2258, %v2258
      %v2443 = vmul.f32 %v2314, %v2314
      %v2444 = vadd.f32 %v2428, %v2436
      %v2445 = vrot.slane %v2444, 4
      %v2446 = vadd.f32 %v2444, %v2445
      %v2447 = vrot.slane %v2446, 2
      %v2448 = vadd.f32 %v2446, %v2447
      %v2449 = vrot.slane %v2448, 1
      %v2450 = vadd.f32 %v2448, %v2449
      %v2451 = vadd.f32 %v2429, %v2437
      %v2452 = vrot.slane %v2451, 4
      %v2453 = vadd.f32 %v2451, %v2452
      %v2454 = vrot.slane %v2453, 2
      %v2455 = vadd.f32 %v2453, %v2454
      %v2456 = vrot.slane %v2455, 1
      %v2457 = vadd.f32 %v2455, %v2456
      %v2458 = vadd.f32 %v2430, %v2438
      %v2459 = vrot.slane %v2458, 4
      %v2460 = vadd.f32 %v2458, %v2459
      %v2461 = vrot.slane %v2460, 2
      %v2462 = vadd.f32 %v2460, %v2461
      %v2463 = vrot.slane %v2462, 1
      %v2464 = vadd.f32 %v2462, %v2463
      %v2465 = vadd.f32 %v2431, %v2439
      %v2466 = vrot.slane %v2465, 4
      %v2467 = vadd.f32 %v2465, %v2466
      %v2468 = vrot.slane %v2467, 2
      %v2469 = vadd.f32 %v2467, %v2468
      %v2470 = vrot.slane %v2469, 1
      %v2471 = vadd.f32 %v2469, %v2470
      %v2472 = vadd.f32 %v2432, %v2440
      %v2473 = vrot.slane %v2472, 4
      %v2474 = vadd.f32 %v2472, %v2473
      %v2475 = vrot.slane %v2474, 2
      %v2476 = vadd.f32 %v2474, %v2475
      %v2477 = vrot.slane %v2476, 1
      %v2478 = vadd.f32 %v2476, %v2477
      %v2479 = vadd.f32 %v2433, %v2441
      %v2480 = vrot.slane %v2479, 4
      %v2481 = vadd.f32 %v2479, %v2480
      %v2482 = vrot.slane %v2481, 2
      %v2483 = vadd.f32 %v2481, %v2482
      %v2484 = vrot.slane %v2483, 1
      %v2485 = vadd.f32 %v2483, %v2484
      %v2486 = vadd.f32 %v2434, %v2442
      %v2487 = vrot.slane %v2486, 4
      %v2488 = vadd.f32 %v2486, %v2487
      %v2489 = vrot.slane %v2488, 2
      %v2490 = vadd.f32 %v2488, %v2489
      %v2491 = vrot.slane %v2490, 1
      %v2492 = vadd.f32 %v2490, %v2491
      %v2493 = vadd.f32 %v2435, %v2443
      %v2494 = vrot.slane %v2493, 4
      %v2495 = vadd.f32 %v2493, %v2494
      %v2496 = vrot.slane %v2495, 2
      %v2497 = vadd.f32 %v2495, %v2496
      %v2498 = vrot.slane %v2497, 1
      %v2499 = vadd.f32 %v2497, %v2498
      %v2508 = vrot.slane %v2457, 7
      %v2509 = vrot.slane %v2464, 6
      %v2510 = vrot.slane %v2471, 5
      %v2511 = vrot.slane %v2478, 4
      %v2512 = vrot.slane %v2485, 3
      %v2513 = vrot.slane %v2492, 2
      %v2514 = vrot.slane %v2499, 1
      %v2515 = vsel %vm2410, %v2450, %v2508
      %v2516 = vsel %vm2412, %v2509, %v2510
      %v2517 = vsel %vm2414, %v2515, %v2516
      %v2518 = vsel %vm2416, %v2511, %v2512
      %v2519 = vsel %vm2418, %v2513, %v2514
      %v2520 = vsel %vm2420, %v2518, %v2519
      %v2521 = vsel %vm2422, %v2517, %v2520
      %v2523 = vadd.f32 %v2427, %v2521
      %2524 = vst [vmem:[%s289] sm:$0xff] %v2523
      %s2525 = smul.u32 2, %s22
      %p2526 = scmp.lt.s32.totalorder %s21, 1
      %s2527 = scalar_select %p2526, %s21, 1
      %p2528 = scmp.lt.s32.totalorder %s2525, 1
      %s2529 = scalar_select %p2528, %s2525, 1
      %s2530 = smul.addr %s2529, 8
      %s2531 = smul.addr %s2527, 16
      %s2532 = sadd.s32 %s2530, %s2531
      %s2533 = smul.addr %s2532, 4
      %s2534 = scalar_lea.vmem %s3, %s2533
      %p2535 = scmp.lt.s32.totalorder %s21, 1
      %s2536 = scalar_select %p2535, %s21, 1
      %s2537 = smul.addr %s2536, 8
      %s2538 = scalar_lea.vmem %s4, %s2537
      %p2539 = scmp.lt.s32.totalorder %s21, 1
      %s2540 = scalar_select %p2539, %s21, 1
      %s2541 = smul.addr %s2540, 8
      %s2542 = scalar_lea.vmem %s5, %s2541
      // Predicated region
      $region37: #{zencoder_forward.16} parent=31 // pred_check
        %p2543 = pneg %p119
      $region38: #{zencoder_forward.16} parent=31 // pred_check_branch
        %2545 = sbr.rel (%p2543) target = $region40
      $region39: #{zencoder_forward.16} parent=31 // pred_region
        %s2546 = smul.u32 2, %s22
      $region40: #{zencoder_forward.16} parent=31 // pred_fallthru
        _
      // Predicated region
      $region41: #{zencoder_forward.16} parent=31 // pred_check
        %p2547 = pneg %p145
      $region42: #{zencoder_forward.16} parent=31 // pred_check_branch
        %2549 = sbr.rel (%p2547) target = $region44
      $region43: #{zencoder_forward.16} parent=31 // pred_region
        _
      $region44: #{zencoder_forward.16} parent=31 // pred_fallthru
        _
      // Predicated region
      $region45: #{zencoder_forward.16} parent=31 // pred_check
        %p2550 = pneg %p171
      $region46: #{zencoder_forward.16} parent=31 // pred_check_branch
        %2552 = sbr.rel (%p2550) target = $region48
      $region47: #{zencoder_forward.16} parent=31 // pred_region
        _
      $region48: #{zencoder_forward.16} parent=31 // pred_fallthru
        _
    $region32: #{zencoder_forward.16} parent=5 // pred_fallthru
      _
    %p2553 = scmp.le.s32.totalorder 2, %s12
    // Predicated region
    $region49: #{zencoder_forward.16} parent=5 // pred_check
      %p2554 = pneg %p2553
    $region50: #{zencoder_forward.16} parent=5 // pred_check_branch
      %2556 = sbr.rel (%p2554) target = $region52
    $region51: #{zencoder_forward.16} parent=5 // pred_region
      %s2557 = ssub.s32 %s12, 2
      // Predicated region
      $region53: #{zencoder_forward.16} parent=51 // pred_check
        %p2558 = pneg %p125
      $region54: #{zencoder_forward.16} parent=51 // pred_check_branch
        %2560 = sbr.rel (%p2558) target = $region56
      $region55: #{zencoder_forward.16} parent=51 // pred_region
        %s2561 = smul.u32 2, %s24
        %p2562 = scmp.lt.s32.totalorder %s23, 1
        %s2563 = scalar_select %p2562, %s23, 1
        %p2564 = scmp.lt.s32.totalorder %s2561, 1
        %s2565 = scalar_select %p2564, %s2561, 1
        %s2566 = smul.addr %s2565, 8
        %s2567 = smul.addr %s2563, 16
        %s2568 = sadd.s32 %s2566, %s2567
        %s2569 = smul.addr %s2568, 4
        %s2570 = scalar_lea.vmem %s3, %s2569
      $region56: #{zencoder_forward.16} parent=51 // pred_fallthru
        _
      // Predicated region
      $region57: #{zencoder_forward.16} parent=51 // pred_check
        %p2571 = pneg %p151
      $region58: #{zencoder_forward.16} parent=51 // pred_check_branch
        %2573 = sbr.rel (%p2571) target = $region60
      $region59: #{zencoder_forward.16} parent=51 // pred_region
        %p2574 = scmp.lt.s32.totalorder %s23, 1
        %s2575 = scalar_select %p2574, %s23, 1
        %s2576 = smul.addr %s2575, 8
        %s2577 = scalar_lea.vmem %s4, %s2576
      $region60: #{zencoder_forward.16} parent=51 // pred_fallthru
        _
      // Predicated region
      $region61: #{zencoder_forward.16} parent=51 // pred_check
        %p2578 = pneg %p177
      $region62: #{zencoder_forward.16} parent=51 // pred_check_branch
        %2580 = sbr.rel (%p2578) target = $region64
      $region63: #{zencoder_forward.16} parent=51 // pred_region
        %p2581 = scmp.lt.s32.totalorder %s23, 1
        %s2582 = scalar_select %p2581, %s23, 1
        %s2583 = smul.addr %s2582, 8
        %s2584 = scalar_lea.vmem %s5, %s2583
      $region64: #{zencoder_forward.16} parent=51 // pred_fallthru
        _
    $region52: #{zencoder_forward.16} parent=5 // pred_fallthru
      _
  $region6: #{zencoder_forward.16} parent=0 // loop_footer
    %s16 = sadd.s32 1, %s12
  $region7: #{zencoder_forward.16} parent=0 // loop_footer_branch
    %11 = sbr.rel target = $region3
  $region8: #{zencoder_forward.16} parent=0 // loop_exit
    _

// kernel: zencoder_forward.19
$region0: #{zencoder_forward.19}
  #allocation0 [shape = 'u32[]', space=smem, size = 0x4, offset = 0x4, fixed_abs, tag = 'smem constant byte address 0x4 - core index']
  #allocation1 [shape = 'u32[72,128]{1,0:T(1,128)}', space=vmem, size = 0x9000, scoped, tag = 'internal scratch']
  %s0 = inlined_call_operand.vmem [shape: f32[2,64,128], index: 0, kind: input, shape index: {}]
  %s1 = inlined_call_operand.vmem [shape: f32[2,64,8], index: 1, kind: input, shape index: {}]
  %s2 = inlined_call_operand.hbm [shape: f32[2,8,128], index: 2, kind: output, shape index: {}]
  %s3 = sld [smem:[#allocation0]]
  $region41: #{zencoder_forward.19} parent=0
    _
  %s5 = ssub.s32 1, %s3
  %s6 = scalar_select 0, %s5, %s3
  $region1: #{zencoder_forward.19} parent=0
    #allocation2 [shape = 'u8[8192]{0}', space=vmem, size = 0x2000, scoped, tag = 'output window, operand 0']
    #allocation3 [shape = 's32[2]{0}', space=sflag, size = 0x8, scoped, tag = 'scoped memory for zencoder_forward.19']
    %7 = vsyncpa [#allocation3], 0
    %s8 = scalar_lea.sflag [#allocation3], 1
    %9 = vsyncpa %s8, 0
    loop: start=0, step=1, limit=4
    $region2: #{zencoder_forward.19} parent=1 // loop_pre_header
      _
    $region3: #{zencoder_forward.19} parent=1 // loop_header
      %s11 = sphi 0, %s15
      %p12 = scmp.ge.s32.totalorder %s11, 4
      %s21 = sphi 0, %s23
      %s24 = sphi 0, %s21
      %s25 = sphi 0, %s24
      %s41 = sphi 0, %s25
      %s47 = sphi 0, %s49
      %s50 = sphi 0, %s47
      %s51 = sphi 0, %s50
      %s67 = sphi 0, %s51
      %s73 = sphi 0, %s75
      %s76 = sphi 0, %s73
      %s77 = sphi 0, %s76
      %s93 = sphi 0, %s77
    $region4: #{zencoder_forward.19} parent=1 // loop_header_branch
      %14 = sbr.rel (%p12) target = $region8
    $region5: #{zencoder_forward.19} parent=1 // loop_body
      %s16 = ssub.s32 %s11, 1
      %s17 = ssub.s32 %s11, 2
      %s18 = sadd.s32 %s11, 1
      %s19 = ssub.s32 %s11, %s18
      %p20 = scmp.eq.s32.totalorder %s19, 0
      %s22 = sadd.s32 %s21, 1
      %s23 = scalar_select %p20, %s21, %s22
      %p26 = pneg %p20
      %p27 = scmp.eq.s32.totalorder %s11, 1
      %p28 = por %p26, %p27
      %p29 = scmp.ne.s32.totalorder %s21, %s24
      %p30 = scmp.eq.s32.totalorder %s11, 0
      %p31 = por %p29, %p30
      %p32 = scmp.ne.s32.totalorder %s21, %s24
      %p33 = scmp.eq.s32.totalorder %s16, 1
      %p34 = por %p32, %p33
      %p35 = scmp.ne.s32.totalorder %s24, %s25
      %p36 = scmp.eq.s32.totalorder %s16, 0
      %p37 = por %p35, %p36
      %p38 = scmp.ne.s32.totalorder %s24, %s25
      %p39 = scmp.eq.s32.totalorder %s17, 1
      %p40 = por %p38, %p39
      %p42 = scmp.ne.s32.totalorder %s25, %s41
      %p43 = scmp.eq.s32.totalorder %s17, 0
      %p44 = por %p42, %p43
      %s45 = ssub.s32 %s11, %s18
      %p46 = scmp.eq.s32.totalorder %s45, 0
      %s48 = sadd.s32 %s47, 1
      %s49 = scalar_select %p46, %s47, %s48
      %p52 = pneg %p46
      %p53 = scmp.eq.s32.totalorder %s11, 1
      %p54 = por %p52, %p53
      %p55 = scmp.ne.s32.totalorder %s47, %s50
      %p56 = scmp.eq.s32.totalorder %s11, 0
      %p57 = por %p55, %p56
      %p58 = scmp.ne.s32.totalorder %s47, %s50
      %p59 = scmp.eq.s32.totalorder %s16, 1
      %p60 = por %p58, %p59
      %p61 = scmp.ne.s32.totalorder %s50, %s51
      %p62 = scmp.eq.s32.totalorder %s16, 0
      %p63 = por %p61, %p62
      %p64 = scmp.ne.s32.totalorder %s50, %s51
      %p65 = scmp.eq.s32.totalorder %s17, 1
      %p66 = por %p64, %p65
      %p68 = scmp.ne.s32.totalorder %s51, %s67
      %p69 = scmp.eq.s32.totalorder %s17, 0
      %p70 = por %p68, %p69
      %s71 = ssub.s32 %s11, %s18
      %p72 = scmp.eq.s32.totalorder %s71, 0
      %s74 = sadd.s32 %s73, 1
      %s75 = scalar_select %p72, %s73, %s74
      %p78 = pneg %p72
      %p79 = scmp.eq.s32.totalorder %s11, 1
      %p80 = por %p78, %p79
      %p81 = scmp.ne.s32.totalorder %s73, %s76
      %p82 = scmp.eq.s32.totalorder %s11, 0
      %p83 = por %p81, %p82
      %p84 = scmp.ne.s32.totalorder %s73, %s76
      %p85 = scmp.eq.s32.totalorder %s16, 1
      %p86 = por %p84, %p85
      %p87 = scmp.ne.s32.totalorder %s76, %s77
      %p88 = scmp.eq.s32.totalorder %s16, 0
      %p89 = por %p87, %p88
      %p90 = scmp.ne.s32.totalorder %s76, %s77
      %p91 = scmp.eq.s32.totalorder %s17, 1
      %p92 = por %p90, %p91
      %p94 = scmp.ne.s32.totalorder %s77, %s93
      %p95 = scmp.eq.s32.totalorder %s17, 0
      %p96 = por %p94, %p95
      %p97 = scmp.le.s32.totalorder 1, %s11
      %p98 = scmp.lt.s32.totalorder %s11, 3
      %p99 = pnand %p97, %p98
      %p100 = pneg %p99
      // Predicated region
      $region9: #{zencoder_forward.19} parent=5 // pred_check
        _
      $region10: #{zencoder_forward.19} parent=5 // pred_check_branch
        %102 = sbr.rel (%p99) target = $region12
      $region11: #{zencoder_forward.19} parent=5 // pred_region
        %s103 = ssub.s32 %s11, 1
      $region12: #{zencoder_forward.19} parent=5 // pred_fallthru
        _
      %p104 = scmp.lt.s32.totalorder %s11, 2
      // Predicated region
      $region13: #{zencoder_forward.19} parent=5 // pred_check
        %p105 = pneg %p104
      $region14: #{zencoder_forward.19} parent=5 // pred_check_branch
        %107 = sbr.rel (%p105) target = $region16
      $region15: #{zencoder_forward.19} parent=5 // pred_region
        // Predicated region
        $region17: #{zencoder_forward.19} parent=15 // pred_check
          %p108 = pneg %p31
        $region18: #{zencoder_forward.19} parent=15 // pred_check_branch
          %110 = sbr.rel (%p108) target = $region20
        $region19: #{zencoder_forward.19} parent=15 // pred_region
          %p111 = scmp.lt.s32.totalorder %s11, 1
          %s112 = scalar_select %p111, %s11, 1
          %s113 = smul.addr %s112, 8
          %s114 = smul.addr %s113, 8
          %s115 = scalar_lea.vmem %s0, %s114
        $region20: #{zencoder_forward.19} parent=15 // pred_fallthru
          _
        // Predicated region
        $region21: #{zencoder_forward.19} parent=15 // pred_check
          %p116 = pneg %p57
        $region22: #{zencoder_forward.19} parent=15 // pred_check_branch
          %118 = sbr.rel (%p116) target = $region24
        $region23: #{zencoder_forward.19} parent=15 // pred_region
          %p119 = scmp.lt.s32.totalorder %s11, 1
          %s120 = scalar_select %p119, %s11, 1
          %s121 = smul.addr %s120, 8
          %s122 = smul.addr %s121, 8
          %s123 = scalar_lea.vmem %s1, %s122
        $region24: #{zencoder_forward.19} parent=15 // pred_fallthru
          _
      $region16: #{zencoder_forward.19} parent=5 // pred_fallthru
        _
      %p124 = scmp.le.s32.totalorder 1, %s11
      %p125 = scmp.lt.s32.totalorder %s11, 3
      %p126 = pnand %p124, %p125
      %p127 = pneg %p126
      // Predicated region
      $region25: #{zencoder_forward.19} parent=5 // pred_check
        _
      $region26: #{zencoder_forward.19} parent=5 // pred_check_branch
        %129 = sbr.rel (%p126) target = $region28
      $region27: #{zencoder_forward.19} parent=5 // pred_region
        %s130 = ssub.s32 %s11, 1
        %p131 = scmp.lt.s32.totalorder %s16, 1
        %s132 = scalar_select %p131, %s16, 1
        %s133 = smul.addr %s132, 8
        %s134 = smul.addr %s133, 8
        %s135 = scalar_lea.vmem %s0, %s134
        %p136 = pneg %p37
        %p137 = pneg %p34
        %p138 = scmp.lt.s32.totalorder %s16, 1
        %s139 = scalar_select %p138, %s16, 1
        %s140 = smul.addr %s139, 8
        %s141 = smul.addr %s140, 8
        %s142 = scalar_lea.vmem %s1, %s141
        %p143 = pneg %p63
        %p144 = pneg %p60
        %p145 = pneg %p89
        %p146 = pneg %p86
        %s147 = sand.u32 %s76, 1
        %s148 = scalar_lea.sflag [#allocation3], %s147
        %s149 = sand.u32 %s76, 1
        %s150 = smul.addr %s149, 8
        %s151 = scalar_lea.vmem [#allocation2], %s150
        %p152 = scmp.lt.s32.totalorder %s16, 1
        %s153 = scalar_select %p152, %s16, 1
        %s154 = smul.addr %s153, 8
        %s155 = smul.addr %s154, 8
        %s156 = scalar_lea.vmem %s0, %s155
        %p157 = scmp.lt.s32.totalorder %s16, 1
        %s158 = scalar_select %p157, %s16, 1
        %s159 = smul.addr %s158, 8
        %s160 = smul.addr %s159, 8
        %s161 = scalar_lea.vmem %s1, %s160
        %v162 = vld [vmem:[%s156] sm:$0xff]
        %v163 = vld [vmem:[%s156 + $0x8] sm:$0xff]
        %v164 = vld [vmem:[%s156 + $0x10] sm:$0xff]
        %v165 = vld [vmem:[%s156 + $0x18] sm:$0xff]
        %v166 = vld [vmem:[%s156 + $0x20] sm:$0xff]
        %v167 = vld [vmem:[%s156 + $0x28] sm:$0xff]
        %v168 = vld [vmem:[%s156 + $0x30] sm:$0xff]
        %v169 = vld [vmem:[%s156 + $0x38] sm:$0xff]
        %v170 = vld [vmem:[%s161] sm:$0xff]
        %v171 = vld [vmem:[%s161 + $0x8] sm:$0xff]
        %v172 = vld [vmem:[%s161 + $0x10] sm:$0xff]
        %v173 = vld [vmem:[%s161 + $0x18] sm:$0xff]
        %v174 = vld [vmem:[%s161 + $0x20] sm:$0xff]
        %v175 = vld [vmem:[%s161 + $0x28] sm:$0xff]
        %v176 = vld [vmem:[%s161 + $0x30] sm:$0xff]
        %v177 = vld [vmem:[%s161 + $0x38] sm:$0xff]
        %178 = vxpose.xlu0.b32.start [1/16] %v170, 128
        %179 = vxpose.xlu0.b32.cont [2/16] %v171, 128
        %180 = vxpose.xlu0.b32.cont [3/16] %v172, 128
        %181 = vxpose.xlu0.b32.cont [4/16] %v173, 128
        %182 = vxpose.xlu0.b32.cont [5/16] %v174, 128
        %183 = vxpose.xlu0.b32.cont [6/16] %v175, 128
        %184 = vxpose.xlu0.b32.cont [7/16] %v176, 128
        %185 = vxpose.xlu0.b32.cont [8/16] %v177, 128
        %186 = vxpose.xlu0.b32.cont [9/16] 0.0, 128
        %187 = vxpose.xlu0.b32.cont [10/16] 0.0, 128
        %188 = vxpose.xlu0.b32.cont [11/16] 0.0, 128
        %189 = vxpose.xlu0.b32.cont [12/16] 0.0, 128
        %190 = vxpose.xlu0.b32.cont [13/16] 0.0, 128
        %191 = vxpose.xlu0.b32.cont [14/16] 0.0, 128
        %192 = vxpose.xlu0.b32.cont [15/16] 0.0, 128
        %193 = vxpose.xlu0.b32.end [16/16] 0.0, 128
        %v194 = vpop.trf.xlu0
        %v195 = vpop.trf.xlu0
        %v196 = vpop.trf.xlu0
        %v197 = vpop.trf.xlu0
        %v198 = vpop.trf.xlu0
        %v199 = vpop.trf.xlu0
        %v200 = vpop.trf.xlu0
        %v201 = vpop.trf.xlu0
        %v202 = vpop.trf.xlu0
        %v203 = vpop.trf.xlu0
        %v204 = vpop.trf.xlu0
        %v205 = vpop.trf.xlu0
        %v206 = vpop.trf.xlu0
        %v207 = vpop.trf.xlu0
        %v208 = vpop.trf.xlu0
        %v209 = vpop.trf.xlu0
        %vm210 = vcmask 523264
        %v212 = vsel %vm210, %v194, 0
        %214 = vmatpush.msra.mxu0 0.0
        %215 = vmatpush.msra.mxu0 0.0
        %216 = vmatpush.msra.mxu0 0.0
        %217 = vmatpush.msra.mxu0 0.0
        %218 = vmatpush.msra.mxu0 0.0
        %219 = vmatpush.msra.mxu0 0.0
        %220 = vmatpush.msra.mxu0 0.0
        %221 = vmatpush.msra.mxu0 0.0
        %222 = vmatpush.msra.mxu0 %v169
        %223 = vmatpush.msra.mxu0 %v168
        %224 = vmatpush.msra.mxu0 %v167
        %225 = vmatpush.msra.mxu0 %v166
        %226 = vmatpush.msra.mxu0 %v165
        %227 = vmatpush.msra.mxu0 %v164
        %228 = vmatpush.msra.mxu0 %v163
        %229 = vmatpush.msra.mxu0 %v162
        %230 = vmatmul.f32.gmra.mxu0 %v212
        %v231 = vpop.f32.mrf.mxu0
        %v232 = vadd.f32 0.0, %v231
        %233 = vdwg.mxu0
        %vm234 = vcmask 64512
        %v235 = vsel %vm234, %v170, 0.0
        %v236 = vsel %vm234, %v171, 0.0
        %v237 = vadd.f32 %v235, %v236
        %v238 = vsel %vm234, %v172, 0.0
        %v239 = vadd.f32 %v237, %v238
        %v240 = vsel %vm234, %v173, 0.0
        %v241 = vadd.f32 %v239, %v240
        %v242 = vsel %vm234, %v174, 0.0
        %v243 = vadd.f32 %v241, %v242
        %v244 = vsel %vm234, %v175, 0.0
        %v245 = vadd.f32 %v243, %v244
        %v246 = vsel %vm234, %v176, 0.0
        %v247 = vadd.f32 %v245, %v246
        %v248 = vsel %vm234, %v177, 0.0
        %v249 = vadd.f32 %v247, %v248
        %v250 = vrot.slane %v249, 4
        %v251 = vadd.f32 %v249, %v250
        %v252 = vrot.slane %v251, 2
        %v253 = vadd.f32 %v251, %v252
        %v254 = vrot.slane %v253, 1
        %v255 = vadd.f32 %v253, %v254
        %v256 = vlaneseq
        %v257 = vshrl.u32 %v256, 7
        %259 = vset.pattern.permute.xlu0 %v257
        %260 = vperm.xlu0 %259, %v255
        %v261 = vpop.permute.xlu0 %260
        %v262 = vmax.f32 %v261, 1.0
        %v263 = vrcp.pop %v262
        %v264 = vmul.f32 %v262, %v263
        %v265 = vsub.f32 1.0, %v264
        %v266 = vmul.f32 %v263, %v265
        %v267 = vadd.f32 %v263, %v266
        %vm268 = vweird.f32 %v262
        %vm269 = vweird.f32 %v263
        %vm270 = vmor %vm268, %vm269
        %v271 = vsel %vm270, %v263, %v267
        %v272 = vand.u32 2147483647, %v262
        %vm273 = vcmp.eq.f32.partialorder %v272, 8.507059e+37
        %v274 = vand.u32 %v262, 2147483648
        %v275 = vor.u32 1.1754944e-38, %v274
        %v276 = vsel %vm273, %v275, %v271
        %v277 = vmul.f32 %v232, %v276
        %vm278 = vcmp.gt.f32.partialorder %v261, 0.0
        %v279 = vsel %vm278, 1, 0
        %vm280 = vcmp.eq.s32.totalorder %v279, 1
        %v281 = vsel %vm280, %v277, 0.0
        %282 = vst [vmem:[%s151] sm:$0xff] %v281
        %s283 = sand.u32 %s76, 1
        %s284 = scalar_lea.sflag [#allocation3], %s283
        %s285 = sand.u32 %s76, 1
        %s286 = smul.addr %s285, 8
        %s287 = scalar_lea.vmem [#allocation2], %s286
        // Predicated region
        $region29: #{zencoder_forward.19} parent=27 // pred_check
          %p288 = pneg %p86
        $region30: #{zencoder_forward.19} parent=27 // pred_check_branch
          %290 = sbr.rel (%p288) target = $region32
        $region31: #{zencoder_forward.19} parent=27 // pred_region
          %292 = vsyncadd %s284, 0
          %s293 = smul.addr %s16, 8
          %s294 = scalar_lea.hbm %s2, %s293
          %s296 = sshll.u32 %s287, 4
          %s297 = int_to_ptr.vmem [resolvable:$true] %s296
          %s298 = sshll.u32 %s294, 4
          %s299 = int_to_ptr.hbm [resolvable:$true] %s298
          %301 = dma.vmem_to_hbm [thread:$0]  %s297, 128, %s299, %s284
        $region32: #{zencoder_forward.19} parent=27 // pred_fallthru
          _
      $region28: #{zencoder_forward.19} parent=5 // pred_fallthru
        _
      %p302 = scmp.le.s32.totalorder 2, %s11
      // Predicated region
      $region33: #{zencoder_forward.19} parent=5 // pred_check
        %p303 = pneg %p302
      $region34: #{zencoder_forward.19} parent=5 // pred_check_branch
        %305 = sbr.rel (%p303) target = $region36
      $region35: #{zencoder_forward.19} parent=5 // pred_region
        %s306 = ssub.s32 %s11, 2
        // Predicated region
        $region37: #{zencoder_forward.19} parent=35 // pred_check
          %p307 = pneg %p92
        $region38: #{zencoder_forward.19} parent=35 // pred_check_branch
          %309 = sbr.rel (%p307) target = $region40
        $region39: #{zencoder_forward.19} parent=35 // pred_region
          %s310 = sand.u32 %s77, 1
          %s311 = scalar_lea.sflag [#allocation3], %s310
          %s312 = sand.u32 %s77, 1
          %s313 = smul.addr %s312, 8
          %s314 = scalar_lea.vmem [#allocation2], %s313
          %316 = dma.done %s311, 128
        $region40: #{zencoder_forward.19} parent=35 // pred_fallthru
          _
      $region36: #{zencoder_forward.19} parent=5 // pred_fallthru
        _
    $region6: #{zencoder_forward.19} parent=1 // loop_footer
      %s15 = sadd.s32 1, %s11
    $region7: #{zencoder_forward.19} parent=1 // loop_footer_branch
      %10 = sbr.rel target = $region3
    $region8: #{zencoder_forward.19} parent=1 // loop_exit
      _
    %317 = vsyncpa [#allocation3], 1
    %s318 = scalar_lea.sflag [#allocation3], 1
    %319 = vsyncpa %s318, 1

// kernel: zencoder_forward.18
$region0: #{zencoder_forward.18}
  #allocation0 [shape = 'u32[]', space=smem, size = 0x4, offset = 0x4, fixed_abs, tag = 'smem constant byte address 0x4 - core index']
  #allocation1 [shape = 'u32[72,128]{1,0:T(1,128)}', space=vmem, size = 0x9000, scoped, tag = 'internal scratch']
  %s0 = inlined_call_operand.vmem [shape: bf16[2,64,2304], index: 0, kind: input, shape index: {}]
  %s1 = inlined_call_operand.vmem [shape: bf16[2304,128], index: 1, kind: input, shape index: {}]
  %s2 = inlined_call_operand.vmem [shape: f32[1,128], index: 2, kind: input, shape index: {}]
  %s3 = inlined_call_operand.vmem [shape: f32[2,64,128], index: 3, kind: output, shape index: {}]
  %s4 = sld [smem:[#allocation0]]
  $region45: #{zencoder_forward.18} parent=0
    _
  %s6 = ssub.s32 1, %s4
  %s7 = scalar_select 0, %s6, %s4
  loop: start=0, step=1, limit=4
  $region2: #{zencoder_forward.18} parent=0 // loop_pre_header
    _
  $region3: #{zencoder_forward.18} parent=0 // loop_header
    %s9 = sphi 0, %s13
    %p10 = scmp.ge.s32.totalorder %s9, 4
    %s16 = sphi 0, %s28
    %s17 = sphi 0, %s24
    %s18 = sphi 0, %s16
    %s19 = sphi 0, %s17
    %s20 = sphi 0, %s18
    %s21 = sphi 0, %s19
    %s33 = sphi 0, %s35
    %s36 = sphi 0, %s33
    %s37 = sphi 0, %s36
    %s53 = sphi 0, %s37
    %s57 = sphi 0, %s57
    %s59 = sphi 0, %s57
    %s60 = sphi 0, %s59
    %s74 = sphi 0, %s60
    %s78 = sphi 0, %s78
    %s80 = sphi 0, %s78
    %s81 = sphi 0, %s80
    %s95 = sphi 0, %s81
    %s103 = sphi 0, %s105
    %s106 = sphi 0, %s103
    %s107 = sphi 0, %s106
    %s123 = sphi 0, %s107
  $region4: #{zencoder_forward.18} parent=0 // loop_header_branch
    %12 = sbr.rel (%p10) target = $region8
  $region5: #{zencoder_forward.18} parent=0 // loop_body
    %s14 = ssub.s32 %s9, 1
    %s15 = ssub.s32 %s9, 2
    %s22 = sadd.s32 1, %s17
    %p23 = scmp.ge.s32.totalorder %s22, 1
    %s24 = scalar_select %p23, 0, %s22
    %s25 = sadd.s32 1, %s16
    %s26 = scalar_select %p23, %s25, %s16
    %p27 = scmp.ge.s32.totalorder %s26, 2
    %s28 = scalar_select %p27, 0, %s26
    %s29 = ssub.s32 %s16, %s28
    %s30 = ssub.s32 %s17, %s24
    %s31 = sor.u32 %s29, %s30
    %p32 = scmp.eq.s32.totalorder %s31, 0
    %s34 = sadd.s32 %s33, 1
    %s35 = scalar_select %p32, %s33, %s34
    %p38 = pneg %p32
    %p39 = scmp.eq.s32.totalorder %s9, 1
    %p40 = por %p38, %p39
    %p41 = scmp.ne.s32.totalorder %s33, %s36
    %p42 = scmp.eq.s32.totalorder %s9, 0
    %p43 = por %p41, %p42
    %p44 = scmp.ne.s32.totalorder %s33, %s36
    %p45 = scmp.eq.s32.totalorder %s14, 1
    %p46 = por %p44, %p45
    %p47 = scmp.ne.s32.totalorder %s36, %s37
    %p48 = scmp.eq.s32.totalorder %s14, 0
    %p49 = por %p47, %p48
    %p50 = scmp.ne.s32.totalorder %s36, %s37
    %p51 = scmp.eq.s32.totalorder %s15, 1
    %p52 = por %p50, %p51
    %p54 = scmp.ne.s32.totalorder %s37, %s53
    %p55 = scmp.eq.s32.totalorder %s15, 0
    %p56 = por %p54, %p55
    %s58 = sadd.s32 %s57, 1
    %p61 = scmp.eq.s32.totalorder %s9, 1
    %p62 = scmp.ne.s32.totalorder %s57, %s59
    %p63 = scmp.eq.s32.totalorder %s9, 0
    %p64 = por %p62, %p63
    %p65 = scmp.ne.s32.totalorder %s57, %s59
    %p66 = scmp.eq.s32.totalorder %s14, 1
    %p67 = por %p65, %p66
    %p68 = scmp.ne.s32.totalorder %s59, %s60
    %p69 = scmp.eq.s32.totalorder %s14, 0
    %p70 = por %p68, %p69
    %p71 = scmp.ne.s32.totalorder %s59, %s60
    %p72 = scmp.eq.s32.totalorder %s15, 1
    %p73 = por %p71, %p72
    %p75 = scmp.ne.s32.totalorder %s60, %s74
    %p76 = scmp.eq.s32.totalorder %s15, 0
    %p77 = por %p75, %p76
    %s79 = sadd.s32 %s78, 1
    %p82 = scmp.eq.s32.totalorder %s9, 1
    %p83 = scmp.ne.s32.totalorder %s78, %s80
    %p84 = scmp.eq.s32.totalorder %s9, 0
    %p85 = por %p83, %p84
    %p86 = scmp.ne.s32.totalorder %s78, %s80
    %p87 = scmp.eq.s32.totalorder %s14, 1
    %p88 = por %p86, %p87
    %p89 = scmp.ne.s32.totalorder %s80, %s81
    %p90 = scmp.eq.s32.totalorder %s14, 0
    %p91 = por %p89, %p90
    %p92 = scmp.ne.s32.totalorder %s80, %s81
    %p93 = scmp.eq.s32.totalorder %s15, 1
    %p94 = por %p92, %p93
    %p96 = scmp.ne.s32.totalorder %s81, %s95
    %p97 = scmp.eq.s32.totalorder %s15, 0
    %p98 = por %p96, %p97
    %s99 = ssub.s32 %s16, %s28
    %s100 = ssub.s32 %s17, %s24
    %s101 = sor.u32 %s99, %s100
    %p102 = scmp.eq.s32.totalorder %s101, 0
    %s104 = sadd.s32 %s103, 1
    %s105 = scalar_select %p102, %s103, %s104
    %p108 = pneg %p102
    %p109 = scmp.eq.s32.totalorder %s9, 1
    %p110 = por %p108, %p109
    %p111 = scmp.ne.s32.totalorder %s103, %s106
    %p112 = scmp.eq.s32.totalorder %s9, 0
    %p113 = por %p111, %p112
    %p114 = scmp.ne.s32.totalorder %s103, %s106
    %p115 = scmp.eq.s32.totalorder %s14, 1
    %p116 = por %p114, %p115
    %p117 = scmp.ne.s32.totalorder %s106, %s107
    %p118 = scmp.eq.s32.totalorder %s14, 0
    %p119 = por %p117, %p118
    %p120 = scmp.ne.s32.totalorder %s106, %s107
    %p121 = scmp.eq.s32.totalorder %s15, 1
    %p122 = por %p120, %p121
    %p124 = scmp.ne.s32.totalorder %s107, %s123
    %p125 = scmp.eq.s32.totalorder %s15, 0
    %p126 = por %p124, %p125
    %p127 = scmp.le.s32.totalorder 1, %s9
    %p128 = scmp.lt.s32.totalorder %s9, 3
    %p129 = pnand %p127, %p128
    %p130 = pneg %p129
    // Predicated region
    $region9: #{zencoder_forward.18} parent=5 // pred_check
      _
    $region10: #{zencoder_forward.18} parent=5 // pred_check_branch
      %132 = sbr.rel (%p129) target = $region12
    $region11: #{zencoder_forward.18} parent=5 // pred_region
      %s133 = ssub.s32 %s9, 1
      // Predicated region
      $region13: #{zencoder_forward.18} parent=11 // pred_check
        %p134 = pneg %p70
      $region14: #{zencoder_forward.18} parent=11 // pred_check_branch
        %136 = sbr.rel (%p134) target = $region16
      $region15: #{zencoder_forward.18} parent=11 // pred_region
        _
      $region16: #{zencoder_forward.18} parent=11 // pred_fallthru
        _
      // Predicated region
      $region17: #{zencoder_forward.18} parent=11 // pred_check
        %p137 = pneg %p91
      $region18: #{zencoder_forward.18} parent=11 // pred_check_branch
        %139 = sbr.rel (%p137) target = $region20
      $region19: #{zencoder_forward.18} parent=11 // pred_region
        _
      $region20: #{zencoder_forward.18} parent=11 // pred_fallthru
        _
    $region12: #{zencoder_forward.18} parent=5 // pred_fallthru
      _
    %p140 = scmp.lt.s32.totalorder %s9, 2
    // Predicated region
    $region21: #{zencoder_forward.18} parent=5 // pred_check
      %p141 = pneg %p140
    $region22: #{zencoder_forward.18} parent=5 // pred_check_branch
      %143 = sbr.rel (%p141) target = $region24
    $region23: #{zencoder_forward.18} parent=5 // pred_region
      // Predicated region
      $region25: #{zencoder_forward.18} parent=23 // pred_check
        %p144 = pneg %p43
      $region26: #{zencoder_forward.18} parent=23 // pred_check_branch
        %146 = sbr.rel (%p144) target = $region28
      $region27: #{zencoder_forward.18} parent=23 // pred_region
        %s147 = smul.u32 8, %s17
        %p148 = scmp.lt.s32.totalorder %s16, 1
        %s149 = scalar_select %p148, %s16, 1
        %p150 = scmp.lt.s32.totalorder %s147, 7
        %s151 = scalar_select %p150, %s147, 7
        %s152 = smul.addr %s151, 18
        %s153 = smul.addr %s149, 144
        %s154 = sadd.s32 %s152, %s153
        %s155 = smul.addr %s154, 4
        %s156 = scalar_lea.vmem %s0, %s155
        %s157 = smul.u32 8, %s17
      $region28: #{zencoder_forward.18} parent=23 // pred_fallthru
        _
    $region24: #{zencoder_forward.18} parent=5 // pred_fallthru
      _
    %p158 = scmp.le.s32.totalorder 1, %s9
    %p159 = scmp.lt.s32.totalorder %s9, 3
    %p160 = pnand %p158, %p159
    %p161 = pneg %p160
    // Predicated region
    $region29: #{zencoder_forward.18} parent=5 // pred_check
      _
    $region30: #{zencoder_forward.18} parent=5 // pred_check_branch
      %163 = sbr.rel (%p160) target = $region32
    $region31: #{zencoder_forward.18} parent=5 // pred_region
      %s164 = ssub.s32 %s9, 1
      %s165 = smul.u32 8, %s19
      %p166 = scmp.lt.s32.totalorder %s18, 1
      %s167 = scalar_select %p166, %s18, 1
      %p168 = scmp.lt.s32.totalorder %s165, 7
      %s169 = scalar_select %p168, %s165, 7
      %s170 = smul.addr %s169, 18
      %s171 = smul.addr %s167, 144
      %s172 = sadd.s32 %s170, %s171
      %s173 = smul.addr %s172, 4
      %s174 = scalar_lea.vmem %s0, %s173
      %p175 = pneg %p49
      %p176 = pneg %p46
      %p177 = pneg %p70
      %p178 = pneg %p67
      %p179 = pneg %p91
      %p180 = pneg %p88
      %p181 = pneg %p119
      %p182 = pneg %p116
      %s183 = smul.u32 8, %s19
      %p184 = scmp.lt.s32.totalorder %s18, 1
      %s185 = scalar_select %p184, %s18, 1
      %p186 = scmp.lt.s32.totalorder %s183, 7
      %s187 = scalar_select %p186, %s183, 7
      %s188 = smul.addr %s185, 8
      %s189 = sadd.s32 %s187, %s188
      %s190 = smul.addr %s189, 8
      %s191 = scalar_lea.vmem %s3, %s190
      %s192 = smul.u32 8, %s19
      %p193 = scmp.lt.s32.totalorder %s18, 1
      %s194 = scalar_select %p193, %s18, 1
      %p195 = scmp.lt.s32.totalorder %s192, 7
      %s196 = scalar_select %p195, %s192, 7
      %s197 = smul.addr %s196, 18
      %s198 = smul.addr %s194, 144
      %s199 = sadd.s32 %s197, %s198
      %s200 = smul.addr %s199, 4
      %s201 = scalar_lea.vmem %s0, %s200
      %s202 = smul.u32 8, %s19
      %s203 = smul.u32 8, %s19
      %p204 = scmp.lt.s32.totalorder %s18, 1
      %s205 = scalar_select %p204, %s18, 1
      %p206 = scmp.lt.s32.totalorder %s203, 7
      %s207 = scalar_select %p206, %s203, 7
      %s208 = smul.addr %s205, 8
      %s209 = sadd.s32 %s207, %s208
      %s210 = smul.addr %s209, 8
      %s211 = scalar_lea.vmem %s3, %s210
      %s212 = smul.u32 8, %s19
      %v213 = vld [vmem:[%s201] sm:$0xff]
      %v214 = vld [vmem:[%s201 + $0x8] sm:$0xff]
      %v215 = vld [vmem:[%s201 + $0x10] sm:$0xff]
      %v216 = vld [vmem:[%s201 + $0x18] sm:$0xff]
      %v217 = vld [vmem:[%s201 + $0x20] sm:$0xff]
      %v218 = vld [vmem:[%s201 + $0x28] sm:$0xff]
      %v219 = vld [vmem:[%s201 + $0x30] sm:$0xff]
      %v220 = vld [vmem:[%s201 + $0x38] sm:$0xff]
      %v221 = vld [vmem:[%s201 + $0x40] sm:$0xff]
      %v222 = vld [vmem:[%s201 + $0x48] sm:$0xff]
      %v223 = vld [vmem:[%s201 + $0x50] sm:$0xff]
      %v224 = vld [vmem:[%s201 + $0x58] sm:$0xff]
      %v225 = vld [vmem:[%s201 + $0x60] sm:$0xff]
      %v226 = vld [vmem:[%s201 + $0x68] sm:$0xff]
      %v227 = vld [vmem:[%s201 + $0x70] sm:$0xff]
      %v228 = vld [vmem:[%s201 + $0x78] sm:$0xff]
      %v229 = vld [vmem:[%s201 + $0x80] sm:$0xff]
      %v230 = vld [vmem:[%s201 + $0x88] sm:$0xff]
      %v231 = vld [vmem:[%s201 + $0x90] sm:$0xff]
      %v232 = vld [vmem:[%s201 + $0x98] sm:$0xff]
      %v233 = vld [vmem:[%s201 + $0xa0] sm:$0xff]
      %v234 = vld [vmem:[%s201 + $0xa8] sm:$0xff]
      %v235 = vld [vmem:[%s201 + $0xb0] sm:$0xff]
      %v236 = vld [vmem:[%s201 + $0xb8] sm:$0xff]
      %v237 = vld [vmem:[%s201 + $0xc0] sm:$0xff]
      %v238 = vld [vmem:[%s201 + $0xc8] sm:$0xff]
      %v239 = vld [vmem:[%s201 + $0xd0] sm:$0xff]
      %v240 = vld [vmem:[%s201 + $0xd8] sm:$0xff]
      %v241 = vld [vmem:[%s201 + $0xe0] sm:$0xff]
      %v242 = vld [vmem:[%s201 + $0xe8] sm:$0xff]
      %v243 = vld [vmem:[%s201 + $0xf0] sm:$0xff]
      %v244 = vld [vmem:[%s201 + $0xf8] sm:$0xff]
      %v245 = vld [vmem:[%s201 + $0x100] sm:$0xff]
      %v246 = vld [vmem:[%s201 + $0x108] sm:$0xff]
      %v247 = vld [vmem:[%s201 + $0x110] sm:$0xff]
      %v248 = vld [vmem:[%s201 + $0x118] sm:$0xff]
      %v249 = vld [vmem:[%s201 + $0x120] sm:$0xff]
      %v250 = vld [vmem:[%s201 + $0x128] sm:$0xff]
      %v251 = vld [vmem:[%s201 + $0x130] sm:$0xff]
      %v252 = vld [vmem:[%s201 + $0x138] sm:$0xff]
      %v253 = vld [vmem:[%s201 + $0x140] sm:$0xff]
      %v254 = vld [vmem:[%s201 + $0x148] sm:$0xff]
      %v255 = vld [vmem:[%s201 + $0x150] sm:$0xff]
      %v256 = vld [vmem:[%s201 + $0x158] sm:$0xff]
      %v257 = vld [vmem:[%s201 + $0x160] sm:$0xff]
      %v258 = vld [vmem:[%s201 + $0x168] sm:$0xff]
      %v259 = vld [vmem:[%s201 + $0x170] sm:$0xff]
      %v260 = vld [vmem:[%s201 + $0x178] sm:$0xff]
      %v261 = vld [vmem:[%s201 + $0x180] sm:$0xff]
      %v262 = vld [vmem:[%s201 + $0x188] sm:$0xff]
      %v263 = vld [vmem:[%s201 + $0x190] sm:$0xff]
      %v264 = vld [vmem:[%s201 + $0x198] sm:$0xff]
      %v265 = vld [vmem:[%s201 + $0x1a0] sm:$0xff]
      %v266 = vld [vmem:[%s201 + $0x1a8] sm:$0xff]
      %v267 = vld [vmem:[%s201 + $0x1b0] sm:$0xff]
      %v268 = vld [vmem:[%s201 + $0x1b8] sm:$0xff]
      %v269 = vld [vmem:[%s201 + $0x1c0] sm:$0xff]
      %v270 = vld [vmem:[%s201 + $0x1c8] sm:$0xff]
      %v271 = vld [vmem:[%s201 + $0x1d0] sm:$0xff]
      %v272 = vld [vmem:[%s201 + $0x1d8] sm:$0xff]
      %v273 = vld [vmem:[%s201 + $0x1e0] sm:$0xff]
      %v274 = vld [vmem:[%s201 + $0x1e8] sm:$0xff]
      %v275 = vld [vmem:[%s201 + $0x1f0] sm:$0xff]
      %v276 = vld [vmem:[%s201 + $0x1f8] sm:$0xff]
      %v277 = vld [vmem:[%s201 + $0x200] sm:$0xff]
      %v278 = vld [vmem:[%s201 + $0x208] sm:$0xff]
      %v279 = vld [vmem:[%s201 + $0x210] sm:$0xff]
      %v280 = vld [vmem:[%s201 + $0x218] sm:$0xff]
      %v281 = vld [vmem:[%s201 + $0x220] sm:$0xff]
      %v282 = vld [vmem:[%s201 + $0x228] sm:$0xff]
      %v283 = vld [vmem:[%s201 + $0x230] sm:$0xff]
      %v284 = vld [vmem:[%s201 + $0x238] sm:$0xff]
      %v285 = vld [vmem:[%s1] sm:$0xf]
      %v286 = vld [vmem:[%s1 + $0x4] sm:$0xf]
      %v287 = vld [vmem:[%s1 + $0x8] sm:$0xf]
      %v288 = vld [vmem:[%s1 + $0xc] sm:$0xf]
      %v289 = vld [vmem:[%s1 + $0x10] sm:$0xf]
      %v290 = vld [vmem:[%s1 + $0x14] sm:$0xf]
      %v291 = vld [vmem:[%s1 + $0x18] sm:$0xf]
      %v292 = vld [vmem:[%s1 + $0x1c] sm:$0xf]
      %v293 = vld [vmem:[%s1 + $0x20] sm:$0xf]
      %v294 = vld [vmem:[%s1 + $0x24] sm:$0xf]
      %v295 = vld [vmem:[%s1 + $0x28] sm:$0xf]
      %v296 = vld [vmem:[%s1 + $0x2c] sm:$0xf]
      %v297 = vld [vmem:[%s1 + $0x30] sm:$0xf]
      %v298 = vld [vmem:[%s1 + $0x34] sm:$0xf]
      %v299 = vld [vmem:[%s1 + $0x38] sm:$0xf]
      %v300 = vld [vmem:[%s1 + $0x3c] sm:$0xf]
      %v301 = vld [vmem:[%s1 + $0x40] sm:$0xf]
      %v302 = vld [vmem:[%s1 + $0x44] sm:$0xf]
      %v303 = vld [vmem:[%s1 + $0x48] sm:$0xf]
      %v304 = vld [vmem:[%s1 + $0x4c] sm:$0xf]
      %v305 = vld [vmem:[%s1 + $0x50] sm:$0xf]
      %v306 = vld [vmem:[%s1 + $0x54] sm:$0xf]
      %v307 = vld [vmem:[%s1 + $0x58] sm:$0xf]
      %v308 = vld [vmem:[%s1 + $0x5c] sm:$0xf]
      %v309 = vld [vmem:[%s1 + $0x60] sm:$0xf]
      %v310 = vld [vmem:[%s1 + $0x64] sm:$0xf]
      %v311 = vld [vmem:[%s1 + $0x68] sm:$0xf]
      %v312 = vld [vmem:[%s1 + $0x6c] sm:$0xf]
      %v313 = vld [vmem:[%s1 + $0x70] sm:$0xf]
      %v314 = vld [vmem:[%s1 + $0x74] sm:$0xf]
      %v315 = vld [vmem:[%s1 + $0x78] sm:$0xf]
      %v316 = vld [vmem:[%s1 + $0x7c] sm:$0xf]
      %v317 = vld [vmem:[%s1 + $0x80] sm:$0xf]
      %v318 = vld [vmem:[%s1 + $0x84] sm:$0xf]
      %v319 = vld [vmem:[%s1 + $0x88] sm:$0xf]
      %v320 = vld [vmem:[%s1 + $0x8c] sm:$0xf]
      %v321 = vld [vmem:[%s1 + $0x90] sm:$0xf]
      %v322 = vld [vmem:[%s1 + $0x94] sm:$0xf]
      %v323 = vld [vmem:[%s1 + $0x98] sm:$0xf]
      %v324 = vld [vmem:[%s1 + $0x9c] sm:$0xf]
      %v325 = vld [vmem:[%s1 + $0xa0] sm:$0xf]
      %v326 = vld [vmem:[%s1 + $0xa4] sm:$0xf]
      %v327 = vld [vmem:[%s1 + $0xa8] sm:$0xf]
      %v328 = vld [vmem:[%s1 + $0xac] sm:$0xf]
      %v329 = vld [vmem:[%s1 + $0xb0] sm:$0xf]
      %v330 = vld [vmem:[%s1 + $0xb4] sm:$0xf]
      %v331 = vld [vmem:[%s1 + $0xb8] sm:$0xf]
      %v332 = vld [vmem:[%s1 + $0xbc] sm:$0xf]
      %v333 = vld [vmem:[%s1 + $0xc0] sm:$0xf]
      %v334 = vld [vmem:[%s1 + $0xc4] sm:$0xf]
      %v335 = vld [vmem:[%s1 + $0xc8] sm:$0xf]
      %v336 = vld [vmem:[%s1 + $0xcc] sm:$0xf]
      %v337 = vld [vmem:[%s1 + $0xd0] sm:$0xf]
      %v338 = vld [vmem:[%s1 + $0xd4] sm:$0xf]
      %v339 = vld [vmem:[%s1 + $0xd8] sm:$0xf]
      %v340 = vld [vmem:[%s1 + $0xdc] sm:$0xf]
      %v341 = vld [vmem:[%s1 + $0xe0] sm:$0xf]
      %v342 = vld [vmem:[%s1 + $0xe4] sm:$0xf]
      %v343 = vld [vmem:[%s1 + $0xe8] sm:$0xf]
      %v344 = vld [vmem:[%s1 + $0xec] sm:$0xf]
      %v345 = vld [vmem:[%s1 + $0xf0] sm:$0xf]
      %v346 = vld [vmem:[%s1 + $0xf4] sm:$0xf]
      %v347 = vld [vmem:[%s1 + $0xf8] sm:$0xf]
      %v348 = vld [vmem:[%s1 + $0xfc] sm:$0xf]
      %v349 = vld [vmem:[%s1 + $0x100] sm:$0xf]
      %v350 = vld [vmem:[%s1 + $0x104] sm:$0xf]
      %v351 = vld [vmem:[%s1 + $0x108] sm:$0xf]
      %v352 = vld [vmem:[%s1 + $0x10c] sm:$0xf]
      %v353 = vld [vmem:[%s1 + $0x110] sm:$0xf]
      %v354 = vld [vmem:[%s1 + $0x114] sm:$0xf]
      %v355 = vld [vmem:[%s1 + $0x118] sm:$0xf]
      %v356 = vld [vmem:[%s1 + $0x11c] sm:$0xf]
      %v357 = vld [vmem:[%s1 + $0x120] sm:$0xf]
      %v358 = vld [vmem:[%s1 + $0x124] sm:$0xf]
      %v359 = vld [vmem:[%s1 + $0x128] sm:$0xf]
      %v360 = vld [vmem:[%s1 + $0x12c] sm:$0xf]
      %v361 = vld [vmem:[%s1 + $0x130] sm:$0xf]
      %v362 = vld [vmem:[%s1 + $0x134] sm:$0xf]
      %v363 = vld [vmem:[%s1 + $0x138] sm:$0xf]
      %v364 = vld [vmem:[%s1 + $0x13c] sm:$0xf]
      %v365 = vld [vmem:[%s1 + $0x140] sm:$0xf]
      %v366 = vld [vmem:[%s1 + $0x144] sm:$0xf]
      %v367 = vld [vmem:[%s1 + $0x148] sm:$0xf]
      %v368 = vld [vmem:[%s1 + $0x14c] sm:$0xf]
      %v369 = vld [vmem:[%s1 + $0x150] sm:$0xf]
      %v370 = vld [vmem:[%s1 + $0x154] sm:$0xf]
      %v371 = vld [vmem:[%s1 + $0x158] sm:$0xf]
      %v372 = vld [vmem:[%s1 + $0x15c] sm:$0xf]
      %v373 = vld [vmem:[%s1 + $0x160] sm:$0xf]
      %v374 = vld [vmem:[%s1 + $0x164] sm:$0xf]
      %v375 = vld [vmem:[%s1 + $0x168] sm:$0xf]
      %v376 = vld [vmem:[%s1 + $0x16c] sm:$0xf]
      %v377 = vld [vmem:[%s1 + $0x170] sm:$0xf]
      %v378 = vld [vmem:[%s1 + $0x174] sm:$0xf]
      %v379 = vld [vmem:[%s1 + $0x178] sm:$0xf]
      %v380 = vld [vmem:[%s1 + $0x17c] sm:$0xf]
      %v381 = vld [vmem:[%s1 + $0x180] sm:$0xf]
      %v382 = vld [vmem:[%s1 + $0x184] sm:$0xf]
      %v383 = vld [vmem:[%s1 + $0x188] sm:$0xf]
      %v384 = vld [vmem:[%s1 + $0x18c] sm:$0xf]
      %v385 = vld [vmem:[%s1 + $0x190] sm:$0xf]
      %v386 = vld [vmem:[%s1 + $0x194] sm:$0xf]
      %v387 = vld [vmem:[%s1 + $0x198] sm:$0xf]
      %v388 = vld [vmem:[%s1 + $0x19c] sm:$0xf]
      %v389 = vld [vmem:[%s1 + $0x1a0] sm:$0xf]
      %v390 = vld [vmem:[%s1 + $0x1a4] sm:$0xf]
      %v391 = vld [vmem:[%s1 + $0x1a8] sm:$0xf]
      %v392 = vld [vmem:[%s1 + $0x1ac] sm:$0xf]
      %v393 = vld [vmem:[%s1 + $0x1b0] sm:$0xf]
      %v394 = vld [vmem:[%s1 + $0x1b4] sm:$0xf]
      %v395 = vld [vmem:[%s1 + $0x1b8] sm:$0xf]
      %v396 = vld [vmem:[%s1 + $0x1bc] sm:$0xf]
      %v397 = vld [vmem:[%s1 + $0x1c0] sm:$0xf]
      %v398 = vld [vmem:[%s1 + $0x1c4] sm:$0xf]
      %v399 = vld [vmem:[%s1 + $0x1c8] sm:$0xf]
      %v400 = vld [vmem:[%s1 + $0x1cc] sm:$0xf]
      %v401 = vld [vmem:[%s1 + $0x1d0] sm:$0xf]
      %v402 = vld [vmem:[%s1 + $0x1d4] sm:$0xf]
      %v403 = vld [vmem:[%s1 + $0x1d8] sm:$0xf]
      %v404 = vld [vmem:[%s1 + $0x1dc] sm:$0xf]
      %v405 = vld [vmem:[%s1 + $0x1e0] sm:$0xf]
      %v406 = vld [vmem:[%s1 + $0x1e4] sm:$0xf]
      %v407 = vld [vmem:[%s1 + $0x1e8] sm:$0xf]
      %v408 = vld [vmem:[%s1 + $0x1ec] sm:$0xf]
      %v409 = vld [vmem:[%s1 + $0x1f0] sm:$0xf]
      %v410 = vld [vmem:[%s1 + $0x1f4] sm:$0xf]
      %v411 = vld [vmem:[%s1 + $0x1f8] sm:$0xf]
      %v412 = vld [vmem:[%s1 + $0x1fc] sm:$0xf]
      %v413 = vld [vmem:[%s1 + $0x200] sm:$0xf]
      %v414 = vld [vmem:[%s1 + $0x204] sm:$0xf]
      %v415 = vld [vmem:[%s1 + $0x208] sm:$0xf]
      %v416 = vld [vmem:[%s1 + $0x20c] sm:$0xf]
      %v417 = vld [vmem:[%s1 + $0x210] sm:$0xf]
      %v418 = vld [vmem:[%s1 + $0x214] sm:$0xf]
      %v419 = vld [vmem:[%s1 + $0x218] sm:$0xf]
      %v420 = vld [vmem:[%s1 + $0x21c] sm:$0xf]
      %v421 = vld [vmem:[%s1 + $0x220] sm:$0xf]
      %v422 = vld [vmem:[%s1 + $0x224] sm:$0xf]
      %v423 = vld [vmem:[%s1 + $0x228] sm:$0xf]
      %v424 = vld [vmem:[%s1 + $0x22c] sm:$0xf]
      %v425 = vld [vmem:[%s1 + $0x230] sm:$0xf]
      %v426 = vld [vmem:[%s1 + $0x234] sm:$0xf]
      %v427 = vld [vmem:[%s1 + $0x238] sm:$0xf]
      %v428 = vld [vmem:[%s1 + $0x23c] sm:$0xf]
      %v429 = vld [vmem:[%s1 + $0x240] sm:$0xf]
      %v430 = vld [vmem:[%s1 + $0x244] sm:$0xf]
      %v431 = vld [vmem:[%s1 + $0x248] sm:$0xf]
      %v432 = vld [vmem:[%s1 + $0x24c] sm:$0xf]
      %v433 = vld [vmem:[%s1 + $0x250] sm:$0xf]
      %v434 = vld [vmem:[%s1 + $0x254] sm:$0xf]
      %v435 = vld [vmem:[%s1 + $0x258] sm:$0xf]
      %v436 = vld [vmem:[%s1 + $0x25c] sm:$0xf]
      %v437 = vld [vmem:[%s1 + $0x260] sm:$0xf]
      %v438 = vld [vmem:[%s1 + $0x264] sm:$0xf]
      %v439 = vld [vmem:[%s1 + $0x268] sm:$0xf]
      %v440 = vld [vmem:[%s1 + $0x26c] sm:$0xf]
      %v441 = vld [vmem:[%s1 + $0x270] sm:$0xf]
      %v442 = vld [vmem:[%s1 + $0x274] sm:$0xf]
      %v443 = vld [vmem:[%s1 + $0x278] sm:$0xf]
      %v444 = vld [vmem:[%s1 + $0x27c] sm:$0xf]
      %v445 = vld [vmem:[%s1 + $0x280] sm:$0xf]
      %v446 = vld [vmem:[%s1 + $0x284] sm:$0xf]
      %v447 = vld [vmem:[%s1 + $0x288] sm:$0xf]
      %v448 = vld [vmem:[%s1 + $0x28c] sm:$0xf]
      %v449 = vld [vmem:[%s1 + $0x290] sm:$0xf]
      %v450 = vld [vmem:[%s1 + $0x294] sm:$0xf]
      %v451 = vld [vmem:[%s1 + $0x298] sm:$0xf]
      %v452 = vld [vmem:[%s1 + $0x29c] sm:$0xf]
      %v453 = vld [vmem:[%s1 + $0x2a0] sm:$0xf]
      %v454 = vld [vmem:[%s1 + $0x2a4] sm:$0xf]
      %v455 = vld [vmem:[%s1 + $0x2a8] sm:$0xf]
      %v456 = vld [vmem:[%s1 + $0x2ac] sm:$0xf]
      %v457 = vld [vmem:[%s1 + $0x2b0] sm:$0xf]
      %v458 = vld [vmem:[%s1 + $0x2b4] sm:$0xf]
      %v459 = vld [vmem:[%s1 + $0x2b8] sm:$0xf]
      %v460 = vld [vmem:[%s1 + $0x2bc] sm:$0xf]
      %v461 = vld [vmem:[%s1 + $0x2c0] sm:$0xf]
      %v462 = vld [vmem:[%s1 + $0x2c4] sm:$0xf]
      %v463 = vld [vmem:[%s1 + $0x2c8] sm:$0xf]
      %v464 = vld [vmem:[%s1 + $0x2cc] sm:$0xf]
      %v465 = vld [vmem:[%s1 + $0x2d0] sm:$0xf]
      %v466 = vld [vmem:[%s1 + $0x2d4] sm:$0xf]
      %v467 = vld [vmem:[%s1 + $0x2d8] sm:$0xf]
      %v468 = vld [vmem:[%s1 + $0x2dc] sm:$0xf]
      %v469 = vld [vmem:[%s1 + $0x2e0] sm:$0xf]
      %v470 = vld [vmem:[%s1 + $0x2e4] sm:$0xf]
      %v471 = vld [vmem:[%s1 + $0x2e8] sm:$0xf]
      %v472 = vld [vmem:[%s1 + $0x2ec] sm:$0xf]
      %v473 = vld [vmem:[%s1 + $0x2f0] sm:$0xf]
      %v474 = vld [vmem:[%s1 + $0x2f4] sm:$0xf]
      %v475 = vld [vmem:[%s1 + $0x2f8] sm:$0xf]
      %v476 = vld [vmem:[%s1 + $0x2fc] sm:$0xf]
      %v477 = vld [vmem:[%s1 + $0x300] sm:$0xf]
      %v478 = vld [vmem:[%s1 + $0x304] sm:$0xf]
      %v479 = vld [vmem:[%s1 + $0x308] sm:$0xf]
      %v480 = vld [vmem:[%s1 + $0x30c] sm:$0xf]
      %v481 = vld [vmem:[%s1 + $0x310] sm:$0xf]
      %v482 = vld [vmem:[%s1 + $0x314] sm:$0xf]
      %v483 = vld [vmem:[%s1 + $0x318] sm:$0xf]
      %v484 = vld [vmem:[%s1 + $0x31c] sm:$0xf]
      %v485 = vld [vmem:[%s1 + $0x320] sm:$0xf]
      %v486 = vld [vmem:[%s1 + $0x324] sm:$0xf]
      %v487 = vld [vmem:[%s1 + $0x328] sm:$0xf]
      %v488 = vld [vmem:[%s1 + $0x32c] sm:$0xf]
      %v489 = vld [vmem:[%s1 + $0x330] sm:$0xf]
      %v490 = vld [vmem:[%s1 + $0x334] sm:$0xf]
      %v491 = vld [vmem:[%s1 + $0x338] sm:$0xf]
      %v492 = vld [vmem:[%s1 + $0x33c] sm:$0xf]
      %v493 = vld [vmem:[%s1 + $0x340] sm:$0xf]
      %v494 = vld [vmem:[%s1 + $0x344] sm:$0xf]
      %v495 = vld [vmem:[%s1 + $0x348] sm:$0xf]
      %v496 = vld [vmem:[%s1 + $0x34c] sm:$0xf]
      %v497 = vld [vmem:[%s1 + $0x350] sm:$0xf]
      %v498 = vld [vmem:[%s1 + $0x354] sm:$0xf]
      %v499 = vld [vmem:[%s1 + $0x358] sm:$0xf]
      %v500 = vld [vmem:[%s1 + $0x35c] sm:$0xf]
      %v501 = vld [vmem:[%s1 + $0x360] sm:$0xf]
      %v502 = vld [vmem:[%s1 + $0x364] sm:$0xf]
      %v503 = vld [vmem:[%s1 + $0x368] sm:$0xf]
      %v504 = vld [vmem:[%s1 + $0x36c] sm:$0xf]
      %v505 = vld [vmem:[%s1 + $0x370] sm:$0xf]
      %v506 = vld [vmem:[%s1 + $0x374] sm:$0xf]
      %v507 = vld [vmem:[%s1 + $0x378] sm:$0xf]
      %v508 = vld [vmem:[%s1 + $0x37c] sm:$0xf]
      %v509 = vld [vmem:[%s1 + $0x380] sm:$0xf]
      %v510 = vld [vmem:[%s1 + $0x384] sm:$0xf]
      %v511 = vld [vmem:[%s1 + $0x388] sm:$0xf]
      %v512 = vld [vmem:[%s1 + $0x38c] sm:$0xf]
      %v513 = vld [vmem:[%s1 + $0x390] sm:$0xf]
      %v514 = vld [vmem:[%s1 + $0x394] sm:$0xf]
      %v515 = vld [vmem:[%s1 + $0x398] sm:$0xf]
      %v516 = vld [vmem:[%s1 + $0x39c] sm:$0xf]
      %v517 = vld [vmem:[%s1 + $0x3a0] sm:$0xf]
      %v518 = vld [vmem:[%s1 + $0x3a4] sm:$0xf]
      %v519 = vld [vmem:[%s1 + $0x3a8] sm:$0xf]
      %v520 = vld [vmem:[%s1 + $0x3ac] sm:$0xf]
      %v521 = vld [vmem:[%s1 + $0x3b0] sm:$0xf]
      %v522 = vld [vmem:[%s1 + $0x3b4] sm:$0xf]
      %v523 = vld [vmem:[%s1 + $0x3b8] sm:$0xf]
      %v524 = vld [vmem:[%s1 + $0x3bc] sm:$0xf]
      %v525 = vld [vmem:[%s1 + $0x3c0] sm:$0xf]
      %v526 = vld [vmem:[%s1 + $0x3c4] sm:$0xf]
      %v527 = vld [vmem:[%s1 + $0x3c8] sm:$0xf]
      %v528 = vld [vmem:[%s1 + $0x3cc] sm:$0xf]
      %v529 = vld [vmem:[%s1 + $0x3d0] sm:$0xf]
      %v530 = vld [vmem:[%s1 + $0x3d4] sm:$0xf]
      %v531 = vld [vmem:[%s1 + $0x3d8] sm:$0xf]
      %v532 = vld [vmem:[%s1 + $0x3dc] sm:$0xf]
      %v533 = vld [vmem:[%s1 + $0x3e0] sm:$0xf]
      %v534 = vld [vmem:[%s1 + $0x3e4] sm:$0xf]
      %v535 = vld [vmem:[%s1 + $0x3e8] sm:$0xf]
      %v536 = vld [vmem:[%s1 + $0x3ec] sm:$0xf]
      %v537 = vld [vmem:[%s1 + $0x3f0] sm:$0xf]
      %v538 = vld [vmem:[%s1 + $0x3f4] sm:$0xf]
      %v539 = vld [vmem:[%s1 + $0x3f8] sm:$0xf]
      %v540 = vld [vmem:[%s1 + $0x3fc] sm:$0xf]
      %v541 = vld [vmem:[%s1 + $0x400] sm:$0xf]
      %v542 = vld [vmem:[%s1 + $0x404] sm:$0xf]
      %v543 = vld [vmem:[%s1 + $0x408] sm:$0xf]
      %v544 = vld [vmem:[%s1 + $0x40c] sm:$0xf]
      %v545 = vld [vmem:[%s1 + $0x410] sm:$0xf]
      %v546 = vld [vmem:[%s1 + $0x414] sm:$0xf]
      %v547 = vld [vmem:[%s1 + $0x418] sm:$0xf]
      %v548 = vld [vmem:[%s1 + $0x41c] sm:$0xf]
      %v549 = vld [vmem:[%s1 + $0x420] sm:$0xf]
      %v550 = vld [vmem:[%s1 + $0x424] sm:$0xf]
      %v551 = vld [vmem:[%s1 + $0x428] sm:$0xf]
      %v552 = vld [vmem:[%s1 + $0x42c] sm:$0xf]
      %v553 = vld [vmem:[%s1 + $0x430] sm:$0xf]
      %v554 = vld [vmem:[%s1 + $0x434] sm:$0xf]
      %v555 = vld [vmem:[%s1 + $0x438] sm:$0xf]
      %v556 = vld [vmem:[%s1 + $0x43c] sm:$0xf]
      %v557 = vld [vmem:[%s1 + $0x440] sm:$0xf]
      %v558 = vld [vmem:[%s1 + $0x444] sm:$0xf]
      %v559 = vld [vmem:[%s1 + $0x448] sm:$0xf]
      %v560 = vld [vmem:[%s1 + $0x44c] sm:$0xf]
      %v561 = vld [vmem:[%s1 + $0x450] sm:$0xf]
      %v562 = vld [vmem:[%s1 + $0x454] sm:$0xf]
      %v563 = vld [vmem:[%s1 + $0x458] sm:$0xf]
      %v564 = vld [vmem:[%s1 + $0x45c] sm:$0xf]
      %v565 = vld [vmem:[%s1 + $0x460] sm:$0xf]
      %v566 = vld [vmem:[%s1 + $0x464] sm:$0xf]
      %v567 = vld [vmem:[%s1 + $0x468] sm:$0xf]
      %v568 = vld [vmem:[%s1 + $0x46c] sm:$0xf]
      %v569 = vld [vmem:[%s1 + $0x470] sm:$0xf]
      %v570 = vld [vmem:[%s1 + $0x474] sm:$0xf]
      %v571 = vld [vmem:[%s1 + $0x478] sm:$0xf]
      %v572 = vld [vmem:[%s1 + $0x47c] sm:$0xf]
      %v573 = vld [vmem:[%s2] sm:$0x1]
      %v575 = vperm.slane %v573, 0
      %v649 = vunpack.c.l.b16 %v213
      %v650 = vunpack.c.h.b16 %v213
      %v651 = vunpack.c.l.b16 %v214
      %v652 = vunpack.c.h.b16 %v214
      %v653 = vunpack.c.l.b16 %v215
      %v654 = vunpack.c.h.b16 %v215
      %v655 = vunpack.c.l.b16 %v216
      %v656 = vunpack.c.h.b16 %v216
      %v657 = vunpack.c.l.b16 %v217
      %v658 = vunpack.c.h.b16 %v217
      %v659 = vunpack.c.l.b16 %v218
      %v660 = vunpack.c.h.b16 %v218
      %v661 = vunpack.c.l.b16 %v219
      %v662 = vunpack.c.h.b16 %v219
      %v663 = vunpack.c.l.b16 %v220
      %v664 = vunpack.c.h.b16 %v220
      %v665 = vunpack.c.l.b16 %v221
      %v666 = vunpack.c.h.b16 %v221
      %v667 = vunpack.c.l.b16 %v222
      %v668 = vunpack.c.h.b16 %v222
      %v669 = vunpack.c.l.b16 %v223
      %v670 = vunpack.c.h.b16 %v223
      %v671 = vunpack.c.l.b16 %v224
      %v672 = vunpack.c.h.b16 %v224
      %v673 = vunpack.c.l.b16 %v225
      %v674 = vunpack.c.h.b16 %v225
      %v675 = vunpack.c.l.b16 %v226
      %v676 = vunpack.c.h.b16 %v226
      %v677 = vunpack.c.l.b16 %v227
      %v678 = vunpack.c.h.b16 %v227
      %v679 = vunpack.c.l.b16 %v228
      %v680 = vunpack.c.h.b16 %v228
      %v681 = vunpack.c.l.b16 %v229
      %v682 = vunpack.c.h.b16 %v229
      %v683 = vunpack.c.l.b16 %v230
      %v684 = vunpack.c.h.b16 %v230
      %v685 = vunpack.c.l.b16 %v231
      %v686 = vunpack.c.h.b16 %v231
      %v687 = vunpack.c.l.b16 %v232
      %v688 = vunpack.c.h.b16 %v232
      %v689 = vunpack.c.l.b16 %v233
      %v690 = vunpack.c.h.b16 %v233
      %v691 = vunpack.c.l.b16 %v234
      %v692 = vunpack.c.h.b16 %v234
      %v693 = vunpack.c.l.b16 %v235
      %v694 = vunpack.c.h.b16 %v235
      %v695 = vunpack.c.l.b16 %v236
      %v696 = vunpack.c.h.b16 %v236
      %v697 = vunpack.c.l.b16 %v237
      %v698 = vunpack.c.h.b16 %v237
      %v699 = vunpack.c.l.b16 %v238
      %v700 = vunpack.c.h.b16 %v238
      %v701 = vunpack.c.l.b16 %v239
      %v702 = vunpack.c.h.b16 %v239
      %v703 = vunpack.c.l.b16 %v240
      %v704 = vunpack.c.h.b16 %v240
      %v705 = vunpack.c.l.b16 %v241
      %v706 = vunpack.c.h.b16 %v241
      %v707 = vunpack.c.l.b16 %v242
      %v708 = vunpack.c.h.b16 %v242
      %v709 = vunpack.c.l.b16 %v243
      %v710 = vunpack.c.h.b16 %v243
      %v711 = vunpack.c.l.b16 %v244
      %v712 = vunpack.c.h.b16 %v244
      %v713 = vunpack.c.l.b16 %v245
      %v714 = vunpack.c.h.b16 %v245
      %v715 = vunpack.c.l.b16 %v246
      %v716 = vunpack.c.h.b16 %v246
      %v717 = vunpack.c.l.b16 %v247
      %v718 = vunpack.c.h.b16 %v247
      %v719 = vunpack.c.l.b16 %v248
      %v720 = vunpack.c.h.b16 %v248
      %v721 = vunpack.c.l.b16 %v249
      %v722 = vunpack.c.h.b16 %v249
      %v723 = vunpack.c.l.b16 %v250
      %v724 = vunpack.c.h.b16 %v250
      %v725 = vunpack.c.l.b16 %v251
      %v726 = vunpack.c.h.b16 %v251
      %v727 = vunpack.c.l.b16 %v252
      %v728 = vunpack.c.h.b16 %v252
      %v729 = vunpack.c.l.b16 %v253
      %v730 = vunpack.c.h.b16 %v253
      %v731 = vunpack.c.l.b16 %v254
      %v732 = vunpack.c.h.b16 %v254
      %v733 = vunpack.c.l.b16 %v255
      %v734 = vunpack.c.h.b16 %v255
      %v735 = vunpack.c.l.b16 %v256
      %v736 = vunpack.c.h.b16 %v256
      %v737 = vunpack.c.l.b16 %v257
      %v738 = vunpack.c.h.b16 %v257
      %v739 = vunpack.c.l.b16 %v258
      %v740 = vunpack.c.h.b16 %v258
      %v741 = vunpack.c.l.b16 %v259
      %v742 = vunpack.c.h.b16 %v259
      %v743 = vunpack.c.l.b16 %v260
      %v744 = vunpack.c.h.b16 %v260
      %v745 = vunpack.c.l.b16 %v261
      %v746 = vunpack.c.h.b16 %v261
      %v747 = vunpack.c.l.b16 %v262
      %v748 = vunpack.c.h.b16 %v262
      %v749 = vunpack.c.l.b16 %v263
      %v750 = vunpack.c.h.b16 %v263
      %v751 = vunpack.c.l.b16 %v264
      %v752 = vunpack.c.h.b16 %v264
      %v753 = vunpack.c.l.b16 %v265
      %v754 = vunpack.c.h.b16 %v265
      %v755 = vunpack.c.l.b16 %v266
      %v756 = vunpack.c.h.b16 %v266
      %v757 = vunpack.c.l.b16 %v267
      %v758 = vunpack.c.h.b16 %v267
      %v759 = vunpack.c.l.b16 %v268
      %v760 = vunpack.c.h.b16 %v268
      %v761 = vunpack.c.l.b16 %v269
      %v762 = vunpack.c.h.b16 %v269
      %v763 = vunpack.c.l.b16 %v270
      %v764 = vunpack.c.h.b16 %v270
      %v765 = vunpack.c.l.b16 %v271
      %v766 = vunpack.c.h.b16 %v271
      %v767 = vunpack.c.l.b16 %v272
      %v768 = vunpack.c.h.b16 %v272
      %v769 = vunpack.c.l.b16 %v273
      %v770 = vunpack.c.h.b16 %v273
      %v771 = vunpack.c.l.b16 %v274
      %v772 = vunpack.c.h.b16 %v274
      %v773 = vunpack.c.l.b16 %v275
      %v774 = vunpack.c.h.b16 %v275
      %v775 = vunpack.c.l.b16 %v276
      %v776 = vunpack.c.h.b16 %v276
      %v777 = vunpack.c.l.b16 %v277
      %v778 = vunpack.c.h.b16 %v277
      %v779 = vunpack.c.l.b16 %v278
      %v780 = vunpack.c.h.b16 %v278
      %v781 = vunpack.c.l.b16 %v279
      %v782 = vunpack.c.h.b16 %v279
      %v783 = vunpack.c.l.b16 %v280
      %v784 = vunpack.c.h.b16 %v280
      %v785 = vunpack.c.l.b16 %v281
      %v786 = vunpack.c.h.b16 %v281
      %v787 = vunpack.c.l.b16 %v282
      %v788 = vunpack.c.h.b16 %v282
      %v789 = vunpack.c.l.b16 %v283
      %v790 = vunpack.c.h.b16 %v283
      %v791 = vunpack.c.l.b16 %v284
      %v792 = vunpack.c.h.b16 %v284
      %v793 = vpack.c.b16 %v667, %v649
      %v794 = vpack.c.b16 %v668, %v650
      %v795 = vpack.c.b16 %v669, %v651
      %v796 = vpack.c.b16 %v670, %v652
      %v797 = vpack.c.b16 %v671, %v653
      %v798 = vpack.c.b16 %v672, %v654
      %v799 = vpack.c.b16 %v673, %v655
      %v800 = vpack.c.b16 %v674, %v656
      %v801 = vpack.c.b16 %v675, %v657
      %v802 = vpack.c.b16 %v676, %v658
      %v803 = vpack.c.b16 %v677, %v659
      %v804 = vpack.c.b16 %v678, %v660
      %v805 = vpack.c.b16 %v679, %v661
      %v806 = vpack.c.b16 %v680, %v662
      %v807 = vpack.c.b16 %v681, %v663
      %v808 = vpack.c.b16 %v682, %v664
      %v809 = vpack.c.b16 %v683, %v665
      %v810 = vpack.c.b16 %v684, %v666
      %v811 = vpack.c.b16 %v703, %v685
      %v812 = vpack.c.b16 %v704, %v686
      %v813 = vpack.c.b16 %v705, %v687
      %v814 = vpack.c.b16 %v706, %v688
      %v815 = vpack.c.b16 %v707, %v689
      %v816 = vpack.c.b16 %v708, %v690
      %v817 = vpack.c.b16 %v709, %v691
      %v818 = vpack.c.b16 %v710, %v692
      %v819 = vpack.c.b16 %v711, %v693
      %v820 = vpack.c.b16 %v712, %v694
      %v821 = vpack.c.b16 %v713, %v695
      %v822 = vpack.c.b16 %v714, %v696
      %v823 = vpack.c.b16 %v715, %v697
      %v824 = vpack.c.b16 %v716, %v698
      %v825 = vpack.c.b16 %v717, %v699
      %v826 = vpack.c.b16 %v718, %v700
      %v827 = vpack.c.b16 %v719, %v701
      %v828 = vpack.c.b16 %v720, %v702
      %v829 = vpack.c.b16 %v739, %v721
      %v830 = vpack.c.b16 %v740, %v722
      %v831 = vpack.c.b16 %v741, %v723
      %v832 = vpack.c.b16 %v742, %v724
      %v833 = vpack.c.b16 %v743, %v725
      %v834 = vpack.c.b16 %v744, %v726
      %v835 = vpack.c.b16 %v745, %v727
      %v836 = vpack.c.b16 %v746, %v728
      %v837 = vpack.c.b16 %v747, %v729
      %v838 = vpack.c.b16 %v748, %v730
      %v839 = vpack.c.b16 %v749, %v731
      %v840 = vpack.c.b16 %v750, %v732
      %v841 = vpack.c.b16 %v751, %v733
      %v842 = vpack.c.b16 %v752, %v734
      %v843 = vpack.c.b16 %v753, %v735
      %v844 = vpack.c.b16 %v754, %v736
      %v845 = vpack.c.b16 %v755, %v737
      %v846 = vpack.c.b16 %v756, %v738
      %v847 = vpack.c.b16 %v775, %v757
      %v848 = vpack.c.b16 %v776, %v758
      %v849 = vpack.c.b16 %v777, %v759
      %v850 = vpack.c.b16 %v778, %v760
      %v851 = vpack.c.b16 %v779, %v761
      %v852 = vpack.c.b16 %v780, %v762
      %v853 = vpack.c.b16 %v781, %v763
      %v854 = vpack.c.b16 %v782, %v764
      %v855 = vpack.c.b16 %v783, %v765
      %v856 = vpack.c.b16 %v784, %v766
      %v857 = vpack.c.b16 %v785, %v767
      %v858 = vpack.c.b16 %v786, %v768
      %v859 = vpack.c.b16 %v787, %v769
      %v860 = vpack.c.b16 %v788, %v770
      %v861 = vpack.c.b16 %v789, %v771
      %v862 = vpack.c.b16 %v790, %v772
      %v863 = vpack.c.b16 %v791, %v773
      %v864 = vpack.c.b16 %v792, %v774
      %v1225 = vunpack.c.l.b16 %v285
      %v1226 = vunpack.c.l.b16 %v286
      %v1227 = vunpack.c.l.b16 %v287
      %v1228 = vunpack.c.l.b16 %v288
      %v1229 = vunpack.c.l.b16 %v289
      %v1230 = vunpack.c.l.b16 %v290
      %v1231 = vunpack.c.l.b16 %v291
      %v1232 = vunpack.c.l.b16 %v292
      %v1233 = vunpack.c.l.b16 %v293
      %v1234 = vunpack.c.l.b16 %v294
      %v1235 = vunpack.c.l.b16 %v295
      %v1236 = vunpack.c.l.b16 %v296
      %v1237 = vunpack.c.l.b16 %v297
      %v1238 = vunpack.c.l.b16 %v298
      %v1239 = vunpack.c.l.b16 %v299
      %v1240 = vunpack.c.l.b16 %v300
      %v1241 = vunpack.c.l.b16 %v301
      %v1242 = vunpack.c.l.b16 %v302
      %v1243 = vunpack.c.l.b16 %v303
      %v1244 = vunpack.c.l.b16 %v304
      %v1245 = vunpack.c.l.b16 %v305
      %v1246 = vunpack.c.l.b16 %v306
      %v1247 = vunpack.c.l.b16 %v307
      %v1248 = vunpack.c.l.b16 %v308
      %v1249 = vunpack.c.l.b16 %v309
      %v1250 = vunpack.c.l.b16 %v310
      %v1251 = vunpack.c.l.b16 %v311
      %v1252 = vunpack.c.l.b16 %v312
      %v1253 = vunpack.c.l.b16 %v313
      %v1254 = vunpack.c.l.b16 %v314
      %v1255 = vunpack.c.l.b16 %v315
      %v1256 = vunpack.c.l.b16 %v316
      %v1257 = vunpack.c.l.b16 %v317
      %v1258 = vunpack.c.l.b16 %v318
      %v1259 = vunpack.c.l.b16 %v319
      %v1260 = vunpack.c.l.b16 %v320
      %v1261 = vunpack.c.l.b16 %v321
      %v1262 = vunpack.c.l.b16 %v322
      %v1263 = vunpack.c.l.b16 %v323
      %v1264 = vunpack.c.l.b16 %v324
      %v1265 = vunpack.c.l.b16 %v325
      %v1266 = vunpack.c.l.b16 %v326
      %v1267 = vunpack.c.l.b16 %v327
      %v1268 = vunpack.c.l.b16 %v328
      %v1269 = vunpack.c.l.b16 %v329
      %v1270 = vunpack.c.l.b16 %v330
      %v1271 = vunpack.c.l.b16 %v331
      %v1272 = vunpack.c.l.b16 %v332
      %v1273 = vunpack.c.l.b16 %v333
      %v1274 = vunpack.c.l.b16 %v334
      %v1275 = vunpack.c.l.b16 %v335
      %v1276 = vunpack.c.l.b16 %v336
      %v1277 = vunpack.c.l.b16 %v337
      %v1278 = vunpack.c.l.b16 %v338
      %v1279 = vunpack.c.l.b16 %v339
      %v1280 = vunpack.c.l.b16 %v340
      %v1281 = vunpack.c.l.b16 %v341
      %v1282 = vunpack.c.l.b16 %v342
      %v1283 = vunpack.c.l.b16 %v343
      %v1284 = vunpack.c.l.b16 %v344
      %v1285 = vunpack.c.l.b16 %v345
      %v1286 = vunpack.c.l.b16 %v346
      %v1287 = vunpack.c.l.b16 %v347
      %v1288 = vunpack.c.l.b16 %v348
      %v1289 = vunpack.c.l.b16 %v349
      %v1290 = vunpack.c.l.b16 %v350
      %v1291 = vunpack.c.l.b16 %v351
      %v1292 = vunpack.c.l.b16 %v352
      %v1293 = vunpack.c.l.b16 %v353
      %v1294 = vunpack.c.l.b16 %v354
      %v1295 = vunpack.c.l.b16 %v355
      %v1296 = vunpack.c.l.b16 %v356
      %v1297 = vunpack.c.l.b16 %v357
      %v1298 = vunpack.c.l.b16 %v358
      %v1299 = vunpack.c.l.b16 %v359
      %v1300 = vunpack.c.l.b16 %v360
      %v1301 = vunpack.c.l.b16 %v361
      %v1302 = vunpack.c.l.b16 %v362
      %v1303 = vunpack.c.l.b16 %v363
      %v1304 = vunpack.c.l.b16 %v364
      %v1305 = vunpack.c.l.b16 %v365
      %v1306 = vunpack.c.l.b16 %v366
      %v1307 = vunpack.c.l.b16 %v367
      %v1308 = vunpack.c.l.b16 %v368
      %v1309 = vunpack.c.l.b16 %v369
      %v1310 = vunpack.c.l.b16 %v370
      %v1311 = vunpack.c.l.b16 %v371
      %v1312 = vunpack.c.l.b16 %v372
      %v1313 = vunpack.c.l.b16 %v373
      %v1314 = vunpack.c.l.b16 %v374
      %v1315 = vunpack.c.l.b16 %v375
      %v1316 = vunpack.c.l.b16 %v376
      %v1317 = vunpack.c.l.b16 %v377
      %v1318 = vunpack.c.l.b16 %v378
      %v1319 = vunpack.c.l.b16 %v379
      %v1320 = vunpack.c.l.b16 %v380
      %v1321 = vunpack.c.l.b16 %v381
      %v1322 = vunpack.c.l.b16 %v382
      %v1323 = vunpack.c.l.b16 %v383
      %v1324 = vunpack.c.l.b16 %v384
      %v1325 = vunpack.c.l.b16 %v385
      %v1326 = vunpack.c.l.b16 %v386
      %v1327 = vunpack.c.l.b16 %v387
      %v1328 = vunpack.c.l.b16 %v388
      %v1329 = vunpack.c.l.b16 %v389
      %v1330 = vunpack.c.l.b16 %v390
      %v1331 = vunpack.c.l.b16 %v391
      %v1332 = vunpack.c.l.b16 %v392
      %v1333 = vunpack.c.l.b16 %v393
      %v1334 = vunpack.c.l.b16 %v394
      %v1335 = vunpack.c.l.b16 %v395
      %v1336 = vunpack.c.l.b16 %v396
      %v1337 = vunpack.c.l.b16 %v397
      %v1338 = vunpack.c.l.b16 %v398
      %v1339 = vunpack.c.l.b16 %v399
      %v1340 = vunpack.c.l.b16 %v400
      %v1341 = vunpack.c.l.b16 %v401
      %v1342 = vunpack.c.l.b16 %v402
      %v1343 = vunpack.c.l.b16 %v403
      %v1344 = vunpack.c.l.b16 %v404
      %v1345 = vunpack.c.l.b16 %v405
      %v1346 = vunpack.c.l.b16 %v406
      %v1347 = vunpack.c.l.b16 %v407
      %v1348 = vunpack.c.l.b16 %v408
      %v1349 = vunpack.c.l.b16 %v409
      %v1350 = vunpack.c.l.b16 %v410
      %v1351 = vunpack.c.l.b16 %v411
      %v1352 = vunpack.c.l.b16 %v412
      %v1353 = vunpack.c.l.b16 %v413
      %v1354 = vunpack.c.l.b16 %v414
      %v1355 = vunpack.c.l.b16 %v415
      %v1356 = vunpack.c.l.b16 %v416
      %v1357 = vunpack.c.l.b16 %v417
      %v1358 = vunpack.c.l.b16 %v418
      %v1359 = vunpack.c.l.b16 %v419
      %v1360 = vunpack.c.l.b16 %v420
      %v1361 = vunpack.c.l.b16 %v421
      %v1362 = vunpack.c.l.b16 %v422
      %v1363 = vunpack.c.l.b16 %v423
      %v1364 = vunpack.c.l.b16 %v424
      %v1365 = vunpack.c.l.b16 %v425
      %v1366 = vunpack.c.l.b16 %v426
      %v1367 = vunpack.c.l.b16 %v427
      %v1368 = vunpack.c.l.b16 %v428
      %v1369 = vunpack.c.l.b16 %v429
      %v1370 = vunpack.c.l.b16 %v430
      %v1371 = vunpack.c.l.b16 %v431
      %v1372 = vunpack.c.l.b16 %v432
      %v1373 = vunpack.c.l.b16 %v433
      %v1374 = vunpack.c.l.b16 %v434
      %v1375 = vunpack.c.l.b16 %v435
      %v1376 = vunpack.c.l.b16 %v436
      %v1377 = vunpack.c.l.b16 %v437
      %v1378 = vunpack.c.l.b16 %v438
      %v1379 = vunpack.c.l.b16 %v439
      %v1380 = vunpack.c.l.b16 %v440
      %v1381 = vunpack.c.l.b16 %v441
      %v1382 = vunpack.c.l.b16 %v442
      %v1383 = vunpack.c.l.b16 %v443
      %v1384 = vunpack.c.l.b16 %v444
      %v1385 = vunpack.c.l.b16 %v445
      %v1386 = vunpack.c.l.b16 %v446
      %v1387 = vunpack.c.l.b16 %v447
      %v1388 = vunpack.c.l.b16 %v448
      %v1389 = vunpack.c.l.b16 %v449
      %v1390 = vunpack.c.l.b16 %v450
      %v1391 = vunpack.c.l.b16 %v451
      %v1392 = vunpack.c.l.b16 %v452
      %v1393 = vunpack.c.l.b16 %v453
      %v1394 = vunpack.c.l.b16 %v454
      %v1395 = vunpack.c.l.b16 %v455
      %v1396 = vunpack.c.l.b16 %v456
      %v1397 = vunpack.c.l.b16 %v457
      %v1398 = vunpack.c.l.b16 %v458
      %v1399 = vunpack.c.l.b16 %v459
      %v1400 = vunpack.c.l.b16 %v460
      %v1401 = vunpack.c.l.b16 %v461
      %v1402 = vunpack.c.l.b16 %v462
      %v1403 = vunpack.c.l.b16 %v463
      %v1404 = vunpack.c.l.b16 %v464
      %v1405 = vunpack.c.l.b16 %v465
      %v1406 = vunpack.c.l.b16 %v466
      %v1407 = vunpack.c.l.b16 %v467
      %v1408 = vunpack.c.l.b16 %v468
      %v1409 = vunpack.c.l.b16 %v469
      %v1410 = vunpack.c.l.b16 %v470
      %v1411 = vunpack.c.l.b16 %v471
      %v1412 = vunpack.c.l.b16 %v472
      %v1413 = vunpack.c.l.b16 %v473
      %v1414 = vunpack.c.l.b16 %v474
      %v1415 = vunpack.c.l.b16 %v475
      %v1416 = vunpack.c.l.b16 %v476
      %v1417 = vunpack.c.l.b16 %v477
      %v1418 = vunpack.c.l.b16 %v478
      %v1419 = vunpack.c.l.b16 %v479
      %v1420 = vunpack.c.l.b16 %v480
      %v1421 = vunpack.c.l.b16 %v481
      %v1422 = vunpack.c.l.b16 %v482
      %v1423 = vunpack.c.l.b16 %v483
      %v1424 = vunpack.c.l.b16 %v484
      %v1425 = vunpack.c.l.b16 %v485
      %v1426 = vunpack.c.l.b16 %v486
      %v1427 = vunpack.c.l.b16 %v487
      %v1428 = vunpack.c.l.b16 %v488
      %v1429 = vunpack.c.l.b16 %v489
      %v1430 = vunpack.c.l.b16 %v490
      %v1431 = vunpack.c.l.b16 %v491
      %v1432 = vunpack.c.l.b16 %v492
      %v1433 = vunpack.c.l.b16 %v493
      %v1434 = vunpack.c.l.b16 %v494
      %v1435 = vunpack.c.l.b16 %v495
      %v1436 = vunpack.c.l.b16 %v496
      %v1437 = vunpack.c.l.b16 %v497
      %v1438 = vunpack.c.l.b16 %v498
      %v1439 = vunpack.c.l.b16 %v499
      %v1440 = vunpack.c.l.b16 %v500
      %v1441 = vunpack.c.l.b16 %v501
      %v1442 = vunpack.c.l.b16 %v502
      %v1443 = vunpack.c.l.b16 %v503
      %v1444 = vunpack.c.l.b16 %v504
      %v1445 = vunpack.c.l.b16 %v505
      %v1446 = vunpack.c.l.b16 %v506
      %v1447 = vunpack.c.l.b16 %v507
      %v1448 = vunpack.c.l.b16 %v508
      %v1449 = vunpack.c.l.b16 %v509
      %v1450 = vunpack.c.l.b16 %v510
      %v1451 = vunpack.c.l.b16 %v511
      %v1452 = vunpack.c.l.b16 %v512
      %v1453 = vunpack.c.l.b16 %v513
      %v1454 = vunpack.c.l.b16 %v514
      %v1455 = vunpack.c.l.b16 %v515
      %v1456 = vunpack.c.l.b16 %v516
      %v1457 = vunpack.c.l.b16 %v517
      %v1458 = vunpack.c.l.b16 %v518
      %v1459 = vunpack.c.l.b16 %v519
      %v1460 = vunpack.c.l.b16 %v520
      %v1461 = vunpack.c.l.b16 %v521
      %v1462 = vunpack.c.l.b16 %v522
      %v1463 = vunpack.c.l.b16 %v523
      %v1464 = vunpack.c.l.b16 %v524
      %v1465 = vunpack.c.l.b16 %v525
      %v1466 = vunpack.c.l.b16 %v526
      %v1467 = vunpack.c.l.b16 %v527
      %v1468 = vunpack.c.l.b16 %v528
      %v1469 = vunpack.c.l.b16 %v529
      %v1470 = vunpack.c.l.b16 %v530
      %v1471 = vunpack.c.l.b16 %v531
      %v1472 = vunpack.c.l.b16 %v532
      %v1473 = vunpack.c.l.b16 %v533
      %v1474 = vunpack.c.l.b16 %v534
      %v1475 = vunpack.c.l.b16 %v535
      %v1476 = vunpack.c.l.b16 %v536
      %v1477 = vunpack.c.l.b16 %v537
      %v1478 = vunpack.c.l.b16 %v538
      %v1479 = vunpack.c.l.b16 %v539
      %v1480 = vunpack.c.l.b16 %v540
      %v1481 = vunpack.c.l.b16 %v541
      %v1482 = vunpack.c.l.b16 %v542
      %v1483 = vunpack.c.l.b16 %v543
      %v1484 = vunpack.c.l.b16 %v544
      %v1485 = vunpack.c.l.b16 %v545
      %v1486 = vunpack.c.l.b16 %v546
      %v1487 = vunpack.c.l.b16 %v547
      %v1488 = vunpack.c.l.b16 %v548
      %v1489 = vunpack.c.l.b16 %v549
      %v1490 = vunpack.c.l.b16 %v550
      %v1491 = vunpack.c.l.b16 %v551
      %v1492 = vunpack.c.l.b16 %v552
      %v1493 = vunpack.c.l.b16 %v553
      %v1494 = vunpack.c.l.b16 %v554
      %v1495 = vunpack.c.l.b16 %v555
      %v1496 = vunpack.c.l.b16 %v556
      %v1497 = vunpack.c.l.b16 %v557
      %v1498 = vunpack.c.l.b16 %v558
      %v1499 = vunpack.c.l.b16 %v559
      %v1500 = vunpack.c.l.b16 %v560
      %v1501 = vunpack.c.l.b16 %v561
      %v1502 = vunpack.c.l.b16 %v562
      %v1503 = vunpack.c.l.b16 %v563
      %v1504 = vunpack.c.l.b16 %v564
      %v1505 = vunpack.c.l.b16 %v565
      %v1506 = vunpack.c.l.b16 %v566
      %v1507 = vunpack.c.l.b16 %v567
      %v1508 = vunpack.c.l.b16 %v568
      %v1509 = vunpack.c.l.b16 %v569
      %v1510 = vunpack.c.l.b16 %v570
      %v1511 = vunpack.c.l.b16 %v571
      %v1512 = vunpack.c.l.b16 %v572
      %v1513 = vpack.c.b16 %v1226, %v1225
      %v1514 = vpack.c.b16 %v1228, %v1227
      %v1515 = vpack.c.b16 %v1230, %v1229
      %v1516 = vpack.c.b16 %v1232, %v1231
      %v1517 = vpack.c.b16 %v1234, %v1233
      %v1518 = vpack.c.b16 %v1236, %v1235
      %v1519 = vpack.c.b16 %v1238, %v1237
      %v1520 = vpack.c.b16 %v1240, %v1239
      %v1521 = vpack.c.b16 %v1242, %v1241
      %v1522 = vpack.c.b16 %v1244, %v1243
      %v1523 = vpack.c.b16 %v1246, %v1245
      %v1524 = vpack.c.b16 %v1248, %v1247
      %v1525 = vpack.c.b16 %v1250, %v1249
      %v1526 = vpack.c.b16 %v1252, %v1251
      %v1527 = vpack.c.b16 %v1254, %v1253
      %v1528 = vpack.c.b16 %v1256, %v1255
      %v1529 = vpack.c.b16 %v1258, %v1257
      %v1530 = vpack.c.b16 %v1260, %v1259
      %v1531 = vpack.c.b16 %v1262, %v1261
      %v1532 = vpack.c.b16 %v1264, %v1263
      %v1533 = vpack.c.b16 %v1266, %v1265
      %v1534 = vpack.c.b16 %v1268, %v1267
      %v1535 = vpack.c.b16 %v1270, %v1269
      %v1536 = vpack.c.b16 %v1272, %v1271
      %v1537 = vpack.c.b16 %v1274, %v1273
      %v1538 = vpack.c.b16 %v1276, %v1275
      %v1539 = vpack.c.b16 %v1278, %v1277
      %v1540 = vpack.c.b16 %v1280, %v1279
      %v1541 = vpack.c.b16 %v1282, %v1281
      %v1542 = vpack.c.b16 %v1284, %v1283
      %v1543 = vpack.c.b16 %v1286, %v1285
      %v1544 = vpack.c.b16 %v1288, %v1287
      %v1545 = vpack.c.b16 %v1290, %v1289
      %v1546 = vpack.c.b16 %v1292, %v1291
      %v1547 = vpack.c.b16 %v1294, %v1293
      %v1548 = vpack.c.b16 %v1296, %v1295
      %v1549 = vpack.c.b16 %v1298, %v1297
      %v1550 = vpack.c.b16 %v1300, %v1299
      %v1551 = vpack.c.b16 %v1302, %v1301
      %v1552 = vpack.c.b16 %v1304, %v1303
      %v1553 = vpack.c.b16 %v1306, %v1305
      %v1554 = vpack.c.b16 %v1308, %v1307
      %v1555 = vpack.c.b16 %v1310, %v1309
      %v1556 = vpack.c.b16 %v1312, %v1311
      %v1557 = vpack.c.b16 %v1314, %v1313
      %v1558 = vpack.c.b16 %v1316, %v1315
      %v1559 = vpack.c.b16 %v1318, %v1317
      %v1560 = vpack.c.b16 %v1320, %v1319
      %v1561 = vpack.c.b16 %v1322, %v1321
      %v1562 = vpack.c.b16 %v1324, %v1323
      %v1563 = vpack.c.b16 %v1326, %v1325
      %v1564 = vpack.c.b16 %v1328, %v1327
      %v1565 = vpack.c.b16 %v1330, %v1329
      %v1566 = vpack.c.b16 %v1332, %v1331
      %v1567 = vpack.c.b16 %v1334, %v1333
      %v1568 = vpack.c.b16 %v1336, %v1335
      %v1569 = vpack.c.b16 %v1338, %v1337
      %v1570 = vpack.c.b16 %v1340, %v1339
      %v1571 = vpack.c.b16 %v1342, %v1341
      %v1572 = vpack.c.b16 %v1344, %v1343
      %v1573 = vpack.c.b16 %v1346, %v1345
      %v1574 = vpack.c.b16 %v1348, %v1347
      %v1575 = vpack.c.b16 %v1350, %v1349
      %v1576 = vpack.c.b16 %v1352, %v1351
      %v1577 = vpack.c.b16 %v1354, %v1353
      %v1578 = vpack.c.b16 %v1356, %v1355
      %v1579 = vpack.c.b16 %v1358, %v1357
      %v1580 = vpack.c.b16 %v1360, %v1359
      %v1581 = vpack.c.b16 %v1362, %v1361
      %v1582 = vpack.c.b16 %v1364, %v1363
      %v1583 = vpack.c.b16 %v1366, %v1365
      %v1584 = vpack.c.b16 %v1368, %v1367
      %v1585 = vpack.c.b16 %v1370, %v1369
      %v1586 = vpack.c.b16 %v1372, %v1371
      %v1587 = vpack.c.b16 %v1374, %v1373
      %v1588 = vpack.c.b16 %v1376, %v1375
      %v1589 = vpack.c.b16 %v1378, %v1377
      %v1590 = vpack.c.b16 %v1380, %v1379
      %v1591 = vpack.c.b16 %v1382, %v1381
      %v1592 = vpack.c.b16 %v1384, %v1383
      %v1593 = vpack.c.b16 %v1386, %v1385
      %v1594 = vpack.c.b16 %v1388, %v1387
      %v1595 = vpack.c.b16 %v1390, %v1389
      %v1596 = vpack.c.b16 %v1392, %v1391
      %v1597 = vpack.c.b16 %v1394, %v1393
      %v1598 = vpack.c.b16 %v1396, %v1395
      %v1599 = vpack.c.b16 %v1398, %v1397
      %v1600 = vpack.c.b16 %v1400, %v1399
      %v1601 = vpack.c.b16 %v1402, %v1401
      %v1602 = vpack.c.b16 %v1404, %v1403
      %v1603 = vpack.c.b16 %v1406, %v1405
      %v1604 = vpack.c.b16 %v1408, %v1407
      %v1605 = vpack.c.b16 %v1410, %v1409
      %v1606 = vpack.c.b16 %v1412, %v1411
      %v1607 = vpack.c.b16 %v1414, %v1413
      %v1608 = vpack.c.b16 %v1416, %v1415
      %v1609 = vpack.c.b16 %v1418, %v1417
      %v1610 = vpack.c.b16 %v1420, %v1419
      %v1611 = vpack.c.b16 %v1422, %v1421
      %v1612 = vpack.c.b16 %v1424, %v1423
      %v1613 = vpack.c.b16 %v1426, %v1425
      %v1614 = vpack.c.b16 %v1428, %v1427
      %v1615 = vpack.c.b16 %v1430, %v1429
      %v1616 = vpack.c.b16 %v1432, %v1431
      %v1617 = vpack.c.b16 %v1434, %v1433
      %v1618 = vpack.c.b16 %v1436, %v1435
      %v1619 = vpack.c.b16 %v1438, %v1437
      %v1620 = vpack.c.b16 %v1440, %v1439
      %v1621 = vpack.c.b16 %v1442, %v1441
      %v1622 = vpack.c.b16 %v1444, %v1443
      %v1623 = vpack.c.b16 %v1446, %v1445
      %v1624 = vpack.c.b16 %v1448, %v1447
      %v1625 = vpack.c.b16 %v1450, %v1449
      %v1626 = vpack.c.b16 %v1452, %v1451
      %v1627 = vpack.c.b16 %v1454, %v1453
      %v1628 = vpack.c.b16 %v1456, %v1455
      %v1629 = vpack.c.b16 %v1458, %v1457
      %v1630 = vpack.c.b16 %v1460, %v1459
      %v1631 = vpack.c.b16 %v1462, %v1461
      %v1632 = vpack.c.b16 %v1464, %v1463
      %v1633 = vpack.c.b16 %v1466, %v1465
      %v1634 = vpack.c.b16 %v1468, %v1467
      %v1635 = vpack.c.b16 %v1470, %v1469
      %v1636 = vpack.c.b16 %v1472, %v1471
      %v1637 = vpack.c.b16 %v1474, %v1473
      %v1638 = vpack.c.b16 %v1476, %v1475
      %v1639 = vpack.c.b16 %v1478, %v1477
      %v1640 = vpack.c.b16 %v1480, %v1479
      %v1641 = vpack.c.b16 %v1482, %v1481
      %v1642 = vpack.c.b16 %v1484, %v1483
      %v1643 = vpack.c.b16 %v1486, %v1485
      %v1644 = vpack.c.b16 %v1488, %v1487
      %v1645 = vpack.c.b16 %v1490, %v1489
      %v1646 = vpack.c.b16 %v1492, %v1491
      %v1647 = vpack.c.b16 %v1494, %v1493
      %v1648 = vpack.c.b16 %v1496, %v1495
      %v1649 = vpack.c.b16 %v1498, %v1497
      %v1650 = vpack.c.b16 %v1500, %v1499
      %v1651 = vpack.c.b16 %v1502, %v1501
      %v1652 = vpack.c.b16 %v1504, %v1503
      %v1653 = vpack.c.b16 %v1506, %v1505
      %v1654 = vpack.c.b16 %v1508, %v1507
      %v1655 = vpack.c.b16 %v1510, %v1509
      %v1656 = vpack.c.b16 %v1512, %v1511
      %1801 = vmatpush.bf16.msra.mxu0 %v1520
      %1802 = vmatpush.bf16.msra.mxu0 %v1519
      %1803 = vmatpush.bf16.msra.mxu0 %v1518
      %1804 = vmatpush.bf16.msra.mxu0 %v1517
      %1805 = vmatpush.bf16.msra.mxu0 %v1516
      %1806 = vmatpush.bf16.msra.mxu0 %v1515
      %1807 = vmatpush.bf16.msra.mxu0 %v1514
      %1808 = vmatpush.bf16.msra.mxu0 %v1513
      %1809 = vmatmul.bf16.gmra.mxu0 %v793
      %v1810 = vpop.f32.mrf.mxu0
      %v1811 = vadd.f32 %v575, %v1810
      %v1812 = vpop.f32.mrf.mxu0
      %v1813 = vadd.f32 %v575, %v1812
      %1814 = vmatmul.bf16.gmra.mxu0 %v811
      %v1815 = vpop.f32.mrf.mxu0
      %v1816 = vadd.f32 %v575, %v1815
      %v1817 = vpop.f32.mrf.mxu0
      %v1818 = vadd.f32 %v575, %v1817
      %1819 = vmatmul.bf16.gmra.mxu0 %v829
      %v1820 = vpop.f32.mrf.mxu0
      %v1821 = vadd.f32 %v575, %v1820
      %v1822 = vpop.f32.mrf.mxu0
      %v1823 = vadd.f32 %v575, %v1822
      %1824 = vmatmul.bf16.gmra.mxu0 %v847
      %v1825 = vpop.f32.mrf.mxu0
      %v1826 = vadd.f32 %v575, %v1825
      %v1827 = vpop.f32.mrf.mxu0
      %v1828 = vadd.f32 %v575, %v1827
      %1829 = vdwg.mxu0
      %1830 = vmatpush.bf16.msra.mxu0 %v1528
      %1831 = vmatpush.bf16.msra.mxu0 %v1527
      %1832 = vmatpush.bf16.msra.mxu0 %v1526
      %1833 = vmatpush.bf16.msra.mxu0 %v1525
      %1834 = vmatpush.bf16.msra.mxu0 %v1524
      %1835 = vmatpush.bf16.msra.mxu0 %v1523
      %1836 = vmatpush.bf16.msra.mxu0 %v1522
      %1837 = vmatpush.bf16.msra.mxu0 %v1521
      %1838 = vmatmul.bf16.gmra.mxu0 %v794
      %v1839 = vpop.f32.mrf.mxu0
      %v1840 = vadd.f32 %v1811, %v1839
      %v1841 = vpop.f32.mrf.mxu0
      %v1842 = vadd.f32 %v1813, %v1841
      %1843 = vmatmul.bf16.gmra.mxu0 %v812
      %v1844 = vpop.f32.mrf.mxu0
      %v1845 = vadd.f32 %v1816, %v1844
      %v1846 = vpop.f32.mrf.mxu0
      %v1847 = vadd.f32 %v1818, %v1846
      %1848 = vmatmul.bf16.gmra.mxu0 %v830
      %v1849 = vpop.f32.mrf.mxu0
      %v1850 = vadd.f32 %v1821, %v1849
      %v1851 = vpop.f32.mrf.mxu0
      %v1852 = vadd.f32 %v1823, %v1851
      %1853 = vmatmul.bf16.gmra.mxu0 %v848
      %v1854 = vpop.f32.mrf.mxu0
      %v1855 = vadd.f32 %v1826, %v1854
      %v1856 = vpop.f32.mrf.mxu0
      %v1857 = vadd.f32 %v1828, %v1856
      %1858 = vdwg.mxu0
      %1859 = vmatpush.bf16.msra.mxu0 %v1536
      %1860 = vmatpush.bf16.msra.mxu0 %v1535
      %1861 = vmatpush.bf16.msra.mxu0 %v1534
      %1862 = vmatpush.bf16.msra.mxu0 %v1533
      %1863 = vmatpush.bf16.msra.mxu0 %v1532
      %1864 = vmatpush.bf16.msra.mxu0 %v1531
      %1865 = vmatpush.bf16.msra.mxu0 %v1530
      %1866 = vmatpush.bf16.msra.mxu0 %v1529
      %1867 = vmatmul.bf16.gmra.mxu0 %v795
      %v1868 = vpop.f32.mrf.mxu0
      %v1869 = vadd.f32 %v1840, %v1868
      %v1870 = vpop.f32.mrf.mxu0
      %v1871 = vadd.f32 %v1842, %v1870
      %1872 = vmatmul.bf16.gmra.mxu0 %v813
      %v1873 = vpop.f32.mrf.mxu0
      %v1874 = vadd.f32 %v1845, %v1873
      %v1875 = vpop.f32.mrf.mxu0
      %v1876 = vadd.f32 %v1847, %v1875
      %1877 = vmatmul.bf16.gmra.mxu0 %v831
      %v1878 = vpop.f32.mrf.mxu0
      %v1879 = vadd.f32 %v1850, %v1878
      %v1880 = vpop.f32.mrf.mxu0
      %v1881 = vadd.f32 %v1852, %v1880
      %1882 = vmatmul.bf16.gmra.mxu0 %v849
      %v1883 = vpop.f32.mrf.mxu0
      %v1884 = vadd.f32 %v1855, %v1883
      %v1885 = vpop.f32.mrf.mxu0
      %v1886 = vadd.f32 %v1857, %v1885
      %1887 = vdwg.mxu0
      %1888 = vmatpush.bf16.msra.mxu0 %v1544
      %1889 = vmatpush.bf16.msra.mxu0 %v1543
      %1890 = vmatpush.bf16.msra.mxu0 %v1542
      %1891 = vmatpush.bf16.msra.mxu0 %v1541
      %1892 = vmatpush.bf16.msra.mxu0 %v1540
      %1893 = vmatpush.bf16.msra.mxu0 %v1539
      %1894 = vmatpush.bf16.msra.mxu0 %v1538
      %1895 = vmatpush.bf16.msra.mxu0 %v1537
      %1896 = vmatmul.bf16.gmra.mxu0 %v796
      %v1897 = vpop.f32.mrf.mxu0
      %v1898 = vadd.f32 %v1869, %v1897
      %v1899 = vpop.f32.mrf.mxu0
      %v1900 = vadd.f32 %v1871, %v1899
      %1901 = vmatmul.bf16.gmra.mxu0 %v814
      %v1902 = vpop.f32.mrf.mxu0
      %v1903 = vadd.f32 %v1874, %v1902
      %v1904 = vpop.f32.mrf.mxu0
      %v1905 = vadd.f32 %v1876, %v1904
      %1906 = vmatmul.bf16.gmra.mxu0 %v832
      %v1907 = vpop.f32.mrf.mxu0
      %v1908 = vadd.f32 %v1879, %v1907
      %v1909 = vpop.f32.mrf.mxu0
      %v1910 = vadd.f32 %v1881, %v1909
      %1911 = vmatmul.bf16.gmra.mxu0 %v850
      %v1912 = vpop.f32.mrf.mxu0
      %v1913 = vadd.f32 %v1884, %v1912
      %v1914 = vpop.f32.mrf.mxu0
      %v1915 = vadd.f32 %v1886, %v1914
      %1916 = vdwg.mxu0
      %1917 = vmatpush.bf16.msra.mxu0 %v1552
      %1918 = vmatpush.bf16.msra.mxu0 %v1551
      %1919 = vmatpush.bf16.msra.mxu0 %v1550
      %1920 = vmatpush.bf16.msra.mxu0 %v1549
      %1921 = vmatpush.bf16.msra.mxu0 %v1548
      %1922 = vmatpush.bf16.msra.mxu0 %v1547
      %1923 = vmatpush.bf16.msra.mxu0 %v1546
      %1924 = vmatpush.bf16.msra.mxu0 %v1545
      %1925 = vmatmul.bf16.gmra.mxu0 %v797
      %v1926 = vpop.f32.mrf.mxu0
      %v1927 = vadd.f32 %v1898, %v1926
      %v1928 = vpop.f32.mrf.mxu0
      %v1929 = vadd.f32 %v1900, %v1928
      %1930 = vmatmul.bf16.gmra.mxu0 %v815
      %v1931 = vpop.f32.mrf.mxu0
      %v1932 = vadd.f32 %v1903, %v1931
      %v1933 = vpop.f32.mrf.mxu0
      %v1934 = vadd.f32 %v1905, %v1933
      %1935 = vmatmul.bf16.gmra.mxu0 %v833
      %v1936 = vpop.f32.mrf.mxu0
      %v1937 = vadd.f32 %v1908, %v1936
      %v1938 = vpop.f32.mrf.mxu0
      %v1939 = vadd.f32 %v1910, %v1938
      %1940 = vmatmul.bf16.gmra.mxu0 %v851
      %v1941 = vpop.f32.mrf.mxu0
      %v1942 = vadd.f32 %v1913, %v1941
      %v1943 = vpop.f32.mrf.mxu0
      %v1944 = vadd.f32 %v1915, %v1943
      %1945 = vdwg.mxu0
      %1946 = vmatpush.bf16.msra.mxu0 %v1560
      %1947 = vmatpush.bf16.msra.mxu0 %v1559
      %1948 = vmatpush.bf16.msra.mxu0 %v1558
      %1949 = vmatpush.bf16.msra.mxu0 %v1557
      %1950 = vmatpush.bf16.msra.mxu0 %v1556
      %1951 = vmatpush.bf16.msra.mxu0 %v1555
      %1952 = vmatpush.bf16.msra.mxu0 %v1554
      %1953 = vmatpush.bf16.msra.mxu0 %v1553
      %1954 = vmatmul.bf16.gmra.mxu0 %v798
      %v1955 = vpop.f32.mrf.mxu0
      %v1956 = vadd.f32 %v1927, %v1955
      %v1957 = vpop.f32.mrf.mxu0
      %v1958 = vadd.f32 %v1929, %v1957
      %1959 = vmatmul.bf16.gmra.mxu0 %v816
      %v1960 = vpop.f32.mrf.mxu0
      %v1961 = vadd.f32 %v1932, %v1960
      %v1962 = vpop.f32.mrf.mxu0
      %v1963 = vadd.f32 %v1934, %v1962
      %1964 = vmatmul.bf16.gmra.mxu0 %v834
      %v1965 = vpop.f32.mrf.mxu0
      %v1966 = vadd.f32 %v1937, %v1965
      %v1967 = vpop.f32.mrf.mxu0
      %v1968 = vadd.f32 %v1939, %v1967
      %1969 = vmatmul.bf16.gmra.mxu0 %v852
      %v1970 = vpop.f32.mrf.mxu0
      %v1971 = vadd.f32 %v1942, %v1970
      %v1972 = vpop.f32.mrf.mxu0
      %v1973 = vadd.f32 %v1944, %v1972
      %1974 = vdwg.mxu0
      %1975 = vmatpush.bf16.msra.mxu0 %v1568
      %1976 = vmatpush.bf16.msra.mxu0 %v1567
      %1977 = vmatpush.bf16.msra.mxu0 %v1566
      %1978 = vmatpush.bf16.msra.mxu0 %v1565
      %1979 = vmatpush.bf16.msra.mxu0 %v1564
      %1980 = vmatpush.bf16.msra.mxu0 %v1563
      %1981 = vmatpush.bf16.msra.mxu0 %v1562
      %1982 = vmatpush.bf16.msra.mxu0 %v1561
      %1983 = vmatmul.bf16.gmra.mxu0 %v799
      %v1984 = vpop.f32.mrf.mxu0
      %v1985 = vadd.f32 %v1956, %v1984
      %v1986 = vpop.f32.mrf.mxu0
      %v1987 = vadd.f32 %v1958, %v1986
      %1988 = vmatmul.bf16.gmra.mxu0 %v817
      %v1989 = vpop.f32.mrf.mxu0
      %v1990 = vadd.f32 %v1961, %v1989
      %v1991 = vpop.f32.mrf.mxu0
      %v1992 = vadd.f32 %v1963, %v1991
      %1993 = vmatmul.bf16.gmra.mxu0 %v835
      %v1994 = vpop.f32.mrf.mxu0
      %v1995 = vadd.f32 %v1966, %v1994
      %v1996 = vpop.f32.mrf.mxu0
      %v1997 = vadd.f32 %v1968, %v1996
      %1998 = vmatmul.bf16.gmra.mxu0 %v853
      %v1999 = vpop.f32.mrf.mxu0
      %v2000 = vadd.f32 %v1971, %v1999
      %v2001 = vpop.f32.mrf.mxu0
      %v2002 = vadd.f32 %v1973, %v2001
      %2003 = vdwg.mxu0
      %2004 = vmatpush.bf16.msra.mxu0 %v1576
      %2005 = vmatpush.bf16.msra.mxu0 %v1575
      %2006 = vmatpush.bf16.msra.mxu0 %v1574
      %2007 = vmatpush.bf16.msra.mxu0 %v1573
      %2008 = vmatpush.bf16.msra.mxu0 %v1572
      %2009 = vmatpush.bf16.msra.mxu0 %v1571
      %2010 = vmatpush.bf16.msra.mxu0 %v1570
      %2011 = vmatpush.bf16.msra.mxu0 %v1569
      %2012 = vmatmul.bf16.gmra.mxu0 %v800
      %v2013 = vpop.f32.mrf.mxu0
      %v2014 = vadd.f32 %v1985, %v2013
      %v2015 = vpop.f32.mrf.mxu0
      %v2016 = vadd.f32 %v1987, %v2015
      %2017 = vmatmul.bf16.gmra.mxu0 %v818
      %v2018 = vpop.f32.mrf.mxu0
      %v2019 = vadd.f32 %v1990, %v2018
      %v2020 = vpop.f32.mrf.mxu0
      %v2021 = vadd.f32 %v1992, %v2020
      %2022 = vmatmul.bf16.gmra.mxu0 %v836
      %v2023 = vpop.f32.mrf.mxu0
      %v2024 = vadd.f32 %v1995, %v2023
      %v2025 = vpop.f32.mrf.mxu0
      %v2026 = vadd.f32 %v1997, %v2025
      %2027 = vmatmul.bf16.gmra.mxu0 %v854
      %v2028 = vpop.f32.mrf.mxu0
      %v2029 = vadd.f32 %v2000, %v2028
      %v2030 = vpop.f32.mrf.mxu0
      %v2031 = vadd.f32 %v2002, %v2030
      %2032 = vdwg.mxu0
      %2033 = vmatpush.bf16.msra.mxu0 %v1584
      %2034 = vmatpush.bf16.msra.mxu0 %v1583
      %2035 = vmatpush.bf16.msra.mxu0 %v1582
      %2036 = vmatpush.bf16.msra.mxu0 %v1581
      %2037 = vmatpush.bf16.msra.mxu0 %v1580
      %2038 = vmatpush.bf16.msra.mxu0 %v1579
      %2039 = vmatpush.bf16.msra.mxu0 %v1578
      %2040 = vmatpush.bf16.msra.mxu0 %v1577
      %2041 = vmatmul.bf16.gmra.mxu0 %v801
      %v2042 = vpop.f32.mrf.mxu0
      %v2043 = vadd.f32 %v2014, %v2042
      %v2044 = vpop.f32.mrf.mxu0
      %v2045 = vadd.f32 %v2016, %v2044
      %2046 = vmatmul.bf16.gmra.mxu0 %v819
      %v2047 = vpop.f32.mrf.mxu0
      %v2048 = vadd.f32 %v2019, %v2047
      %v2049 = vpop.f32.mrf.mxu0
      %v2050 = vadd.f32 %v2021, %v2049
      %2051 = vmatmul.bf16.gmra.mxu0 %v837
      %v2052 = vpop.f32.mrf.mxu0
      %v2053 = vadd.f32 %v2024, %v2052
      %v2054 = vpop.f32.mrf.mxu0
      %v2055 = vadd.f32 %v2026, %v2054
      %2056 = vmatmul.bf16.gmra.mxu0 %v855
      %v2057 = vpop.f32.mrf.mxu0
      %v2058 = vadd.f32 %v2029, %v2057
      %v2059 = vpop.f32.mrf.mxu0
      %v2060 = vadd.f32 %v2031, %v2059
      %2061 = vdwg.mxu0
      %2062 = vmatpush.bf16.msra.mxu0 %v1592
      %2063 = vmatpush.bf16.msra.mxu0 %v1591
      %2064 = vmatpush.bf16.msra.mxu0 %v1590
      %2065 = vmatpush.bf16.msra.mxu0 %v1589
      %2066 = vmatpush.bf16.msra.mxu0 %v1588
      %2067 = vmatpush.bf16.msra.mxu0 %v1587
      %2068 = vmatpush.bf16.msra.mxu0 %v1586
      %2069 = vmatpush.bf16.msra.mxu0 %v1585
      %2070 = vmatmul.bf16.gmra.mxu0 %v802
      %v2071 = vpop.f32.mrf.mxu0
      %v2072 = vadd.f32 %v2043, %v2071
      %v2073 = vpop.f32.mrf.mxu0
      %v2074 = vadd.f32 %v2045, %v2073
      %2075 = vmatmul.bf16.gmra.mxu0 %v820
      %v2076 = vpop.f32.mrf.mxu0
      %v2077 = vadd.f32 %v2048, %v2076
      %v2078 = vpop.f32.mrf.mxu0
      %v2079 = vadd.f32 %v2050, %v2078
      %2080 = vmatmul.bf16.gmra.mxu0 %v838
      %v2081 = vpop.f32.mrf.mxu0
      %v2082 = vadd.f32 %v2053, %v2081
      %v2083 = vpop.f32.mrf.mxu0
      %v2084 = vadd.f32 %v2055, %v2083
      %2085 = vmatmul.bf16.gmra.mxu0 %v856
      %v2086 = vpop.f32.mrf.mxu0
      %v2087 = vadd.f32 %v2058, %v2086
      %v2088 = vpop.f32.mrf.mxu0
      %v2089 = vadd.f32 %v2060, %v2088
      %2090 = vdwg.mxu0
      %2091 = vmatpush.bf16.msra.mxu0 %v1600
      %2092 = vmatpush.bf16.msra.mxu0 %v1599
      %2093 = vmatpush.bf16.msra.mxu0 %v1598
      %2094 = vmatpush.bf16.msra.mxu0 %v1597
      %2095 = vmatpush.bf16.msra.mxu0 %v1596
      %2096 = vmatpush.bf16.msra.mxu0 %v1595
      %2097 = vmatpush.bf16.msra.mxu0 %v1594
      %2098 = vmatpush.bf16.msra.mxu0 %v1593
      %2099 = vmatmul.bf16.gmra.mxu0 %v803
      %v2100 = vpop.f32.mrf.mxu0
      %v2101 = vadd.f32 %v2072, %v2100
      %v2102 = vpop.f32.mrf.mxu0
      %v2103 = vadd.f32 %v2074, %v2102
      %2104 = vmatmul.bf16.gmra.mxu0 %v821
      %v2105 = vpop.f32.mrf.mxu0
      %v2106 = vadd.f32 %v2077, %v2105
      %v2107 = vpop.f32.mrf.mxu0
      %v2108 = vadd.f32 %v2079, %v2107
      %2109 = vmatmul.bf16.gmra.mxu0 %v839
      %v2110 = vpop.f32.mrf.mxu0
      %v2111 = vadd.f32 %v2082, %v2110
      %v2112 = vpop.f32.mrf.mxu0
      %v2113 = vadd.f32 %v2084, %v2112
      %2114 = vmatmul.bf16.gmra.mxu0 %v857
      %v2115 = vpop.f32.mrf.mxu0
      %v2116 = vadd.f32 %v2087, %v2115
      %v2117 = vpop.f32.mrf.mxu0
      %v2118 = vadd.f32 %v2089, %v2117
      %2119 = vdwg.mxu0
      %2120 = vmatpush.bf16.msra.mxu0 %v1608
      %2121 = vmatpush.bf16.msra.mxu0 %v1607
      %2122 = vmatpush.bf16.msra.mxu0 %v1606
      %2123 = vmatpush.bf16.msra.mxu0 %v1605
      %2124 = vmatpush.bf16.msra.mxu0 %v1604
      %2125 = vmatpush.bf16.msra.mxu0 %v1603
      %2126 = vmatpush.bf16.msra.mxu0 %v1602
      %2127 = vmatpush.bf16.msra.mxu0 %v1601
      %2128 = vmatmul.bf16.gmra.mxu0 %v804
      %v2129 = vpop.f32.mrf.mxu0
      %v2130 = vadd.f32 %v2101, %v2129
      %v2131 = vpop.f32.mrf.mxu0
      %v2132 = vadd.f32 %v2103, %v2131
      %2133 = vmatmul.bf16.gmra.mxu0 %v822
      %v2134 = vpop.f32.mrf.mxu0
      %v2135 = vadd.f32 %v2106, %v2134
      %v2136 = vpop.f32.mrf.mxu0
      %v2137 = vadd.f32 %v2108, %v2136
      %2138 = vmatmul.bf16.gmra.mxu0 %v840
      %v2139 = vpop.f32.mrf.mxu0
      %v2140 = vadd.f32 %v2111, %v2139
      %v2141 = vpop.f32.mrf.mxu0
      %v2142 = vadd.f32 %v2113, %v2141
      %2143 = vmatmul.bf16.gmra.mxu0 %v858
      %v2144 = vpop.f32.mrf.mxu0
      %v2145 = vadd.f32 %v2116, %v2144
      %v2146 = vpop.f32.mrf.mxu0
      %v2147 = vadd.f32 %v2118, %v2146
      %2148 = vdwg.mxu0
      %2149 = vmatpush.bf16.msra.mxu0 %v1616
      %2150 = vmatpush.bf16.msra.mxu0 %v1615
      %2151 = vmatpush.bf16.msra.mxu0 %v1614
      %2152 = vmatpush.bf16.msra.mxu0 %v1613
      %2153 = vmatpush.bf16.msra.mxu0 %v1612
      %2154 = vmatpush.bf16.msra.mxu0 %v1611
      %2155 = vmatpush.bf16.msra.mxu0 %v1610
      %2156 = vmatpush.bf16.msra.mxu0 %v1609
      %2157 = vmatmul.bf16.gmra.mxu0 %v805
      %v2158 = vpop.f32.mrf.mxu0
      %v2159 = vadd.f32 %v2130, %v2158
      %v2160 = vpop.f32.mrf.mxu0
      %v2161 = vadd.f32 %v2132, %v2160
      %2162 = vmatmul.bf16.gmra.mxu0 %v823
      %v2163 = vpop.f32.mrf.mxu0
      %v2164 = vadd.f32 %v2135, %v2163
      %v2165 = vpop.f32.mrf.mxu0
      %v2166 = vadd.f32 %v2137, %v2165
      %2167 = vmatmul.bf16.gmra.mxu0 %v841
      %v2168 = vpop.f32.mrf.mxu0
      %v2169 = vadd.f32 %v2140, %v2168
      %v2170 = vpop.f32.mrf.mxu0
      %v2171 = vadd.f32 %v2142, %v2170
      %2172 = vmatmul.bf16.gmra.mxu0 %v859
      %v2173 = vpop.f32.mrf.mxu0
      %v2174 = vadd.f32 %v2145, %v2173
      %v2175 = vpop.f32.mrf.mxu0
      %v2176 = vadd.f32 %v2147, %v2175
      %2177 = vdwg.mxu0
      %2178 = vmatpush.bf16.msra.mxu0 %v1624
      %2179 = vmatpush.bf16.msra.mxu0 %v1623
      %2180 = vmatpush.bf16.msra.mxu0 %v1622
      %2181 = vmatpush.bf16.msra.mxu0 %v1621
      %2182 = vmatpush.bf16.msra.mxu0 %v1620
      %2183 = vmatpush.bf16.msra.mxu0 %v1619
      %2184 = vmatpush.bf16.msra.mxu0 %v1618
      %2185 = vmatpush.bf16.msra.mxu0 %v1617
      %2186 = vmatmul.bf16.gmra.mxu0 %v806
      %v2187 = vpop.f32.mrf.mxu0
      %v2188 = vadd.f32 %v2159, %v2187
      %v2189 = vpop.f32.mrf.mxu0
      %v2190 = vadd.f32 %v2161, %v2189
      %2191 = vmatmul.bf16.gmra.mxu0 %v824
      %v2192 = vpop.f32.mrf.mxu0
      %v2193 = vadd.f32 %v2164, %v2192
      %v2194 = vpop.f32.mrf.mxu0
      %v2195 = vadd.f32 %v2166, %v2194
      %2196 = vmatmul.bf16.gmra.mxu0 %v842
      %v2197 = vpop.f32.mrf.mxu0
      %v2198 = vadd.f32 %v2169, %v2197
      %v2199 = vpop.f32.mrf.mxu0
      %v2200 = vadd.f32 %v2171, %v2199
      %2201 = vmatmul.bf16.gmra.mxu0 %v860
      %v2202 = vpop.f32.mrf.mxu0
      %v2203 = vadd.f32 %v2174, %v2202
      %v2204 = vpop.f32.mrf.mxu0
      %v2205 = vadd.f32 %v2176, %v2204
      %2206 = vdwg.mxu0
      %2207 = vmatpush.bf16.msra.mxu0 %v1632
      %2208 = vmatpush.bf16.msra.mxu0 %v1631
      %2209 = vmatpush.bf16.msra.mxu0 %v1630
      %2210 = vmatpush.bf16.msra.mxu0 %v1629
      %2211 = vmatpush.bf16.msra.mxu0 %v1628
      %2212 = vmatpush.bf16.msra.mxu0 %v1627
      %2213 = vmatpush.bf16.msra.mxu0 %v1626
      %2214 = vmatpush.bf16.msra.mxu0 %v1625
      %2215 = vmatmul.bf16.gmra.mxu0 %v807
      %v2216 = vpop.f32.mrf.mxu0
      %v2217 = vadd.f32 %v2188, %v2216
      %v2218 = vpop.f32.mrf.mxu0
      %v2219 = vadd.f32 %v2190, %v2218
      %2220 = vmatmul.bf16.gmra.mxu0 %v825
      %v2221 = vpop.f32.mrf.mxu0
      %v2222 = vadd.f32 %v2193, %v2221
      %v2223 = vpop.f32.mrf.mxu0
      %v2224 = vadd.f32 %v2195, %v2223
      %2225 = vmatmul.bf16.gmra.mxu0 %v843
      %v2226 = vpop.f32.mrf.mxu0
      %v2227 = vadd.f32 %v2198, %v2226
      %v2228 = vpop.f32.mrf.mxu0
      %v2229 = vadd.f32 %v2200, %v2228
      %2230 = vmatmul.bf16.gmra.mxu0 %v861
      %v2231 = vpop.f32.mrf.mxu0
      %v2232 = vadd.f32 %v2203, %v2231
      %v2233 = vpop.f32.mrf.mxu0
      %v2234 = vadd.f32 %v2205, %v2233
      %2235 = vdwg.mxu0
      %2236 = vmatpush.bf16.msra.mxu0 %v1640
      %2237 = vmatpush.bf16.msra.mxu0 %v1639
      %2238 = vmatpush.bf16.msra.mxu0 %v1638
      %2239 = vmatpush.bf16.msra.mxu0 %v1637
      %2240 = vmatpush.bf16.msra.mxu0 %v1636
      %2241 = vmatpush.bf16.msra.mxu0 %v1635
      %2242 = vmatpush.bf16.msra.mxu0 %v1634
      %2243 = vmatpush.bf16.msra.mxu0 %v1633
      %2244 = vmatmul.bf16.gmra.mxu0 %v808
      %v2245 = vpop.f32.mrf.mxu0
      %v2246 = vadd.f32 %v2217, %v2245
      %v2247 = vpop.f32.mrf.mxu0
      %v2248 = vadd.f32 %v2219, %v2247
      %2249 = vmatmul.bf16.gmra.mxu0 %v826
      %v2250 = vpop.f32.mrf.mxu0
      %v2251 = vadd.f32 %v2222, %v2250
      %v2252 = vpop.f32.mrf.mxu0
      %v2253 = vadd.f32 %v2224, %v2252
      %2254 = vmatmul.bf16.gmra.mxu0 %v844
      %v2255 = vpop.f32.mrf.mxu0
      %v2256 = vadd.f32 %v2227, %v2255
      %v2257 = vpop.f32.mrf.mxu0
      %v2258 = vadd.f32 %v2229, %v2257
      %2259 = vmatmul.bf16.gmra.mxu0 %v862
      %v2260 = vpop.f32.mrf.mxu0
      %v2261 = vadd.f32 %v2232, %v2260
      %v2262 = vpop.f32.mrf.mxu0
      %v2263 = vadd.f32 %v2234, %v2262
      %2264 = vdwg.mxu0
      %2265 = vmatpush.bf16.msra.mxu0 %v1648
      %2266 = vmatpush.bf16.msra.mxu0 %v1647
      %2267 = vmatpush.bf16.msra.mxu0 %v1646
      %2268 = vmatpush.bf16.msra.mxu0 %v1645
      %2269 = vmatpush.bf16.msra.mxu0 %v1644
      %2270 = vmatpush.bf16.msra.mxu0 %v1643
      %2271 = vmatpush.bf16.msra.mxu0 %v1642
      %2272 = vmatpush.bf16.msra.mxu0 %v1641
      %2273 = vmatmul.bf16.gmra.mxu0 %v809
      %v2274 = vpop.f32.mrf.mxu0
      %v2275 = vadd.f32 %v2246, %v2274
      %v2276 = vpop.f32.mrf.mxu0
      %v2277 = vadd.f32 %v2248, %v2276
      %2278 = vmatmul.bf16.gmra.mxu0 %v827
      %v2279 = vpop.f32.mrf.mxu0
      %v2280 = vadd.f32 %v2251, %v2279
      %v2281 = vpop.f32.mrf.mxu0
      %v2282 = vadd.f32 %v2253, %v2281
      %2283 = vmatmul.bf16.gmra.mxu0 %v845
      %v2284 = vpop.f32.mrf.mxu0
      %v2285 = vadd.f32 %v2256, %v2284
      %v2286 = vpop.f32.mrf.mxu0
      %v2287 = vadd.f32 %v2258, %v2286
      %2288 = vmatmul.bf16.gmra.mxu0 %v863
      %v2289 = vpop.f32.mrf.mxu0
      %v2290 = vadd.f32 %v2261, %v2289
      %v2291 = vpop.f32.mrf.mxu0
      %v2292 = vadd.f32 %v2263, %v2291
      %2293 = vdwg.mxu0
      %2294 = vmatpush.bf16.msra.mxu0 %v1656
      %2295 = vmatpush.bf16.msra.mxu0 %v1655
      %2296 = vmatpush.bf16.msra.mxu0 %v1654
      %2297 = vmatpush.bf16.msra.mxu0 %v1653
      %2298 = vmatpush.bf16.msra.mxu0 %v1652
      %2299 = vmatpush.bf16.msra.mxu0 %v1651
      %2300 = vmatpush.bf16.msra.mxu0 %v1650
      %2301 = vmatpush.bf16.msra.mxu0 %v1649
      %2302 = vmatmul.bf16.gmra.mxu0 %v810
      %v2303 = vpop.f32.mrf.mxu0
      %v2304 = vadd.f32 %v2275, %v2303
      %v2305 = vpop.f32.mrf.mxu0
      %v2306 = vadd.f32 %v2277, %v2305
      %2307 = vmatmul.bf16.gmra.mxu0 %v828
      %v2308 = vpop.f32.mrf.mxu0
      %v2309 = vadd.f32 %v2280, %v2308
      %v2310 = vpop.f32.mrf.mxu0
      %v2311 = vadd.f32 %v2282, %v2310
      %2312 = vmatmul.bf16.gmra.mxu0 %v846
      %v2313 = vpop.f32.mrf.mxu0
      %v2314 = vadd.f32 %v2285, %v2313
      %v2315 = vpop.f32.mrf.mxu0
      %v2316 = vadd.f32 %v2287, %v2315
      %2317 = vmatmul.bf16.gmra.mxu0 %v864
      %v2318 = vpop.f32.mrf.mxu0
      %v2319 = vadd.f32 %v2290, %v2318
      %v2320 = vpop.f32.mrf.mxu0
      %v2321 = vadd.f32 %v2292, %v2320
      %2322 = vdwg.mxu0
      %v2323 = vtanh.pop %v2304
      %v2324 = vtanh.pop %v2306
      %v2325 = vtanh.pop %v2309
      %v2326 = vtanh.pop %v2311
      %v2327 = vtanh.pop %v2314
      %v2328 = vtanh.pop %v2316
      %v2329 = vtanh.pop %v2319
      %v2330 = vtanh.pop %v2321
      %2331 = vst [vmem:[%s211] sm:$0xff] %v2323
      %2332 = vst [vmem:[%s211 + $0x8] sm:$0xff] %v2324
      %2333 = vst [vmem:[%s211 + $0x10] sm:$0xff] %v2325
      %2334 = vst [vmem:[%s211 + $0x18] sm:$0xff] %v2326
      %2335 = vst [vmem:[%s211 + $0x20] sm:$0xff] %v2327
      %2336 = vst [vmem:[%s211 + $0x28] sm:$0xff] %v2328
      %2337 = vst [vmem:[%s211 + $0x30] sm:$0xff] %v2329
      %2338 = vst [vmem:[%s211 + $0x38] sm:$0xff] %v2330
      %s2339 = smul.u32 8, %s19
      %p2340 = scmp.lt.s32.totalorder %s18, 1
      %s2341 = scalar_select %p2340, %s18, 1
      %p2342 = scmp.lt.s32.totalorder %s2339, 7
      %s2343 = scalar_select %p2342, %s2339, 7
      %s2344 = smul.addr %s2341, 8
      %s2345 = sadd.s32 %s2343, %s2344
      %s2346 = smul.addr %s2345, 8
      %s2347 = scalar_lea.vmem %s3, %s2346
      // Predicated region
      $region33: #{zencoder_forward.18} parent=31 // pred_check
        %p2348 = pneg %p116
      $region34: #{zencoder_forward.18} parent=31 // pred_check_branch
        %2350 = sbr.rel (%p2348) target = $region36
      $region35: #{zencoder_forward.18} parent=31 // pred_region
        %s2351 = smul.u32 8, %s19
      $region36: #{zencoder_forward.18} parent=31 // pred_fallthru
        _
    $region32: #{zencoder_forward.18} parent=5 // pred_fallthru
      _
    %p2352 = scmp.le.s32.totalorder 2, %s9
    // Predicated region
    $region37: #{zencoder_forward.18} parent=5 // pred_check
      %p2353 = pneg %p2352
    $region38: #{zencoder_forward.18} parent=5 // pred_check_branch
      %2355 = sbr.rel (%p2353) target = $region40
    $region39: #{zencoder_forward.18} parent=5 // pred_region
      %s2356 = ssub.s32 %s9, 2
      // Predicated region
      $region41: #{zencoder_forward.18} parent=39 // pred_check
        %p2357 = pneg %p122
      $region42: #{zencoder_forward.18} parent=39 // pred_check_branch
        %2359 = sbr.rel (%p2357) target = $region44
      $region43: #{zencoder_forward.18} parent=39 // pred_region
        %s2360 = smul.u32 8, %s21
        %p2361 = scmp.lt.s32.totalorder %s20, 1
        %s2362 = scalar_select %p2361, %s20, 1
        %p2363 = scmp.lt.s32.totalorder %s2360, 7
        %s2364 = scalar_select %p2363, %s2360, 7
        %s2365 = smul.addr %s2362, 8
        %s2366 = sadd.s32 %s2364, %s2365
        %s2367 = smul.addr %s2366, 8
        %s2368 = scalar_lea.vmem %s3, %s2367
      $region44: #{zencoder_forward.18} parent=39 // pred_fallthru
        _
    $region40: #{zencoder_forward.18} parent=5 // pred_fallthru
      _
  $region6: #{zencoder_forward.18} parent=0 // loop_footer
    %s13 = sadd.s32 1, %s9
  $region7: #{zencoder_forward.18} parent=0 // loop_footer_branch
    %8 = sbr.rel target = $region3
  $region8: #{zencoder_forward.18} parent=0 // loop_exit
    _

</llo_original>
